<compile_context>
chip_gen: v5e
topology: v5e:2x2
jax: 0.10.0
libtpu: 0.0.40
codegen_flags: <defaults>
</compile_context>

<pallas_src>
import functools

import jax
import jax.numpy as jnp
from jax.experimental import pallas as pl
from jax.experimental.pallas import tpu as pltpu


# ---------------------------------------------------------------------------
# Stage-1 kernel: y = (x @ w) * scale + shift, with per-column optional ReLU.
# Full K (= Cin) in a single step, so the dot result goes straight through the
# epilogue (no accumulator scratch, no K grid axis).
# ---------------------------------------------------------------------------
def _mm_affine_mask_kernel(x_ref, w_ref, scale_ref, shift_ref, mask_ref, o_ref):
    acc = jnp.dot(x_ref[...], w_ref[...], preferred_element_type=jnp.float32)
    y = acc * scale_ref[...] + shift_ref[...]
    y = jnp.where(mask_ref[...] > 0.5, jnp.maximum(y, 0.0), y)
    o_ref[...] = y.astype(o_ref.dtype)


def matmul_affine_relu(x, w, scale, shift, relu_mask, *, tn=256,
                       out_dtype=jnp.bfloat16):
    M, K = x.shape
    K2, Ntot = w.shape
    assert K == K2 and Ntot % tn == 0, (x.shape, w.shape)
    tm = 256 if M % 256 == 0 else M
    grid = (M // tm, Ntot // tn)
    return pl.pallas_call(
        _mm_affine_mask_kernel,
        out_shape=jax.ShapeDtypeStruct((M, Ntot), out_dtype),
        grid_spec=pltpu.PrefetchScalarGridSpec(
            num_scalar_prefetch=0,
            grid=grid,
            in_specs=[
                # x block index is constant across j -> stays resident in VMEM
                pl.BlockSpec((tm, K), lambda i, j: (i, 0)),
                pl.BlockSpec((K, tn), lambda i, j: (0, j)),   # weights stream
                pl.BlockSpec((1, tn), lambda i, j: (0, j)),
                pl.BlockSpec((1, tn), lambda i, j: (0, j)),
                pl.BlockSpec((1, tn), lambda i, j: (0, j)),
            ],
            out_specs=pl.BlockSpec((tm, tn), lambda i, j: (i, j)),
        ),
        compiler_params=pltpu.CompilerParams(
            dimension_semantics=("parallel", "parallel")),
    )(x.astype(jnp.bfloat16), w.astype(jnp.bfloat16),
      scale.reshape(1, Ntot).astype(jnp.float32),
      shift.reshape(1, Ntot).astype(jnp.float32),
      relu_mask.reshape(1, Ntot).astype(jnp.float32))


# ---------------------------------------------------------------------------
# Stage-2 kernel: fused concat + conv_1x1_3 + BN + ReLU + conv_1x1_4.
# Five branch refs x five W_proj row blocks, affine+ReLU, then the classifier
# matmul against a 128-lane-padded weight (lane-dense output stores).
# ---------------------------------------------------------------------------
def _proj_cls_kernel(b1_ref, b2_ref, b3_ref, b4_ref, b5_ref, wp_ref,
                     scale_ref, shift_ref, wcls_ref, bcls_ref, o_ref):
    acc = jnp.dot(b1_ref[...], wp_ref[0], preferred_element_type=jnp.float32)
    acc = acc + jnp.dot(b2_ref[...], wp_ref[1], preferred_element_type=jnp.float32)
    acc = acc + jnp.dot(b3_ref[...], wp_ref[2], preferred_element_type=jnp.float32)
    acc = acc + jnp.dot(b4_ref[...], wp_ref[3], preferred_element_type=jnp.float32)
    acc = acc + jnp.dot(b5_ref[...], wp_ref[4], preferred_element_type=jnp.float32)
    y = jnp.maximum(acc * scale_ref[...] + shift_ref[...], 0.0)
    logits = jnp.dot(y.astype(jnp.bfloat16), wcls_ref[...],
                     preferred_element_type=jnp.float32) + bcls_ref[...]
    o_ref[...] = logits


def fused_proj_classifier(branches, w_proj, scale, shift, w_cls, b_cls):
    assert len(branches) == 5
    M, C = branches[0].shape
    ncls_pad = w_cls.shape[1]
    tm = 256 if M % 256 == 0 else M
    grid = (M // tm,)
    in_specs = [pl.BlockSpec((tm, C), lambda i: (i, 0)) for _ in range(5)]
    in_specs += [
        pl.BlockSpec((5, C, C), lambda i: (0, 0, 0)),
        pl.BlockSpec((1, C), lambda i: (0, 0)),
        pl.BlockSpec((1, C), lambda i: (0, 0)),
        pl.BlockSpec((C, ncls_pad), lambda i: (0, 0)),
        pl.BlockSpec((1, ncls_pad), lambda i: (0, 0)),
    ]
    return pl.pallas_call(
        _proj_cls_kernel,
        out_shape=jax.ShapeDtypeStruct((M, ncls_pad), jnp.float32),
        grid_spec=pltpu.PrefetchScalarGridSpec(
            num_scalar_prefetch=0,
            grid=grid,
            in_specs=in_specs,
            out_specs=pl.BlockSpec((tm, ncls_pad), lambda i: (i, 0)),
        ),
        compiler_params=pltpu.CompilerParams(
            dimension_semantics=("parallel",)),
    )(*(b.astype(jnp.bfloat16) for b in branches),
      w_proj.astype(jnp.bfloat16),
      scale.reshape(1, C).astype(jnp.float32),
      shift.reshape(1, C).astype(jnp.float32),
      w_cls.astype(jnp.bfloat16),
      b_cls.reshape(1, ncls_pad).astype(jnp.float32))


# ---------------------------------------------------------------------------
# Parameter construction (synthetic, torch layout) + BN folding + fused layout
# ---------------------------------------------------------------------------
def _fold_bn(gamma, beta, mean, var, bias, eps=1e-5):
    scale = gamma / jnp.sqrt(var + eps)
    shift = beta - mean * scale + bias * scale
    return scale.astype(jnp.float32), shift.astype(jnp.float32)


def _active_taps(dilation, H, W):
    # Tap (kh, kw) contributes iff its shifted window overlaps the un-padded
    # image: |kh-1|*d < H and |kw-1|*d < W.  Only drops taps that read pure
    # zero padding, so the result is exact for every spatial size.
    return [(kh, kw) for kh in range(3) for kw in range(3)
            if abs(kh - 1) * dilation < H and abs(kw - 1) * dilation < W]


def init_raw_params(key, num_classes, cin=2048, cmid=256):
    keys = iter(jax.random.split(key, 64))

    def conv(cout, cin_, k):
        fan_in = float(cin_ * k * k)
        w = jax.random.normal(next(keys), (cout, cin_, k, k),
                              jnp.float32) / jnp.sqrt(fan_in)
        b = 0.01 * jax.random.normal(next(keys), (cout,), jnp.float32)
        return w, b

    def bn(c):
        gamma = 1.0 + 0.1 * jax.random.normal(next(keys), (c,), jnp.float32)
        beta = 0.1 * jax.random.normal(next(keys), (c,), jnp.float32)
        mean = 0.1 * jax.random.normal(next(keys), (c,), jnp.float32)
        var = 0.5 + 0.5 * jax.random.uniform(next(keys), (c,), jnp.float32)
        return gamma, beta, mean, var

    return {
        "conv_1x1_1": conv(cmid, cin, 1), "bn_1x1_1": bn(cmid),
        "conv_3x3_1": conv(cmid, cin, 3), "bn_3x3_1": bn(cmid),
        "conv_3x3_2": conv(cmid, cin, 3), "bn_3x3_2": bn(cmid),
        "conv_3x3_3": conv(cmid, cin, 3), "bn_3x3_3": bn(cmid),
        "conv_1x1_2": conv(cmid, cin, 1), "bn_1x1_2": bn(cmid),
        "conv_1x1_3": conv(cmid, 5 * cmid, 1), "bn_1x1_3": bn(cmid),
        "conv_1x1_4": conv(num_classes, cmid, 1),
    }


def prepare_params(raw, H, W):
    cin = raw["conv_1x1_1"][0].shape[1]
    cmid = raw["conv_1x1_1"][0].shape[0]

    cols_w, cols_sc, cols_sh, cols_mask = [], [], [], []
    col = 0

    def add_cols(wmat, sc, sh, relu):
        nonlocal col
        cols_w.append(wmat.astype(jnp.float32))
        cols_sc.append(sc)
        cols_sh.append(sh)
        cols_mask.append(jnp.full((wmat.shape[1],),
                                  1.0 if relu else 0.0, jnp.float32))
        start = col
        col += wmat.shape[1]
        return start

    # conv_1x1_1 + BN + ReLU (fully fused in the stage-1 epilogue)
    w1, b1 = raw["conv_1x1_1"]
    sc1, sh1 = _fold_bn(*raw["bn_1x1_1"], b1)
    col_b1 = add_cols(w1.reshape(cmid, cin).T, sc1, sh1, True)

    branches_cfg, post_affine = [], []
    for name, d in (("3x3_1", 6), ("3x3_2", 12), ("3x3_3", 18)):
        w, b = raw["conv_" + name]
        sc, sh = _fold_bn(*raw["bn_" + name], b)
        taps = _active_taps(d, H, W)
        direct = taps == [(1, 1)]
        if direct:
            # Only the center tap sees real data -> exact 1x1 conv; fold
            # BN + ReLU into the stage-1 epilogue.
            start = add_cols(w[:, :, 1, 1].T, sc, sh, True)
            post_affine.append(None)
        else:
            ones = jnp.ones((cmid,), jnp.float32)
            zeros = jnp.zeros((cmid,), jnp.float32)
            start = col
            for kh, kw in taps:
                add_cols(w[:, :, kh, kw].T, ones, zeros, False)
            post_affine.append((sc, sh))
        branches_cfg.append({"dilation": d, "direct": direct,
                             "col": start, "taps": taps})

    w_big = jnp.concatenate(cols_w, axis=1).astype(jnp.bfloat16)
    scale_big = jnp.concatenate(cols_sc)
    shift_big = jnp.concatenate(cols_sh)
    relu_mask = jnp.concatenate(cols_mask)

    # image-level branch (global pool -> 1x1 conv + BN + ReLU), done in jnp
    w5, b5 = raw["conv_1x1_2"]
    sc5, sh5 = _fold_bn(*raw["bn_1x1_2"], b5)
    w_img = w5.reshape(cmid, cin).T.astype(jnp.bfloat16)

    # conv_1x1_3 (+BN+ReLU) split into the 5 per-branch row blocks
    wp, bp = raw["conv_1x1_3"]
    scp, shp = _fold_bn(*raw["bn_1x1_3"], bp)
    w_proj = wp.reshape(cmid, 5 * cmid).T.reshape(5, cmid, cmid).astype(jnp.bfloat16)

    # classifier conv_1x1_4, lane-padded to a multiple of 128
    wc, bc = raw["conv_1x1_4"]
    ncls = wc.shape[0]
    ncls_pad = max(128, ((ncls + 127) // 128) * 128)
    w_cls = jnp.zeros((cmid, ncls_pad), jnp.float32).at[:, :ncls].set(
        wc.reshape(ncls, cmid).T).astype(jnp.bfloat16)
    b_cls = jnp.zeros((ncls_pad,), jnp.float32).at[:ncls].set(bc)

    arrays = {
        "w_big": w_big, "scale_big": scale_big, "shift_big": shift_big,
        "relu_mask": relu_mask, "post_affine": tuple(post_affine),
        "w_img": w_img, "scale_img": sc5, "shift_img": sh5,
        "w_proj": w_proj, "scale_proj": scp, "shift_proj": shp,
        "w_cls": w_cls, "b_cls": b_cls,
    }
    cfg = {"col_b1": col_b1, "branches": branches_cfg, "cmid": cmid,
           "num_classes": ncls, "ncls_pad": ncls_pad, "ntot": col}
    return arrays, cfg


# ---------------------------------------------------------------------------
# Forward pass
# ---------------------------------------------------------------------------
def aspp_bottleneck_forward(feature_map, arrays, cfg):
    N, cin, H, W = feature_map.shape
    cmid = cfg["cmid"]
    M = N * H * W

    x_nhwc = jnp.transpose(feature_map, (0, 2, 3, 1)).astype(jnp.float32)
    x_flat = x_nhwc.reshape(M, cin).astype(jnp.bfloat16)

    # Stage 1: single fused matmul over all 1x1(-reduced) branches and all
    # active taps of the dilated convs.
    y = matmul_affine_relu(x_flat, arrays["w_big"], arrays["scale_big"],
                           arrays["shift_big"], arrays["relu_mask"])

    c0 = cfg["col_b1"]
    branch_outs = [y[:, c0:c0 + cmid]]                       # conv_1x1_1 branch
    for bi, bcfg in enumerate(cfg["branches"]):
        start = bcfg["col"]
        if bcfg["direct"]:
            branch_outs.append(y[:, start:start + cmid])
            continue
        d, taps = bcfg["dilation"], bcfg["taps"]
        ntaps = len(taps)
        z = y[:, start:start + ntaps * cmid].astype(jnp.float32)
        z = z.reshape(N, H, W, ntaps, cmid)
        # out[n,h,w] = sum_t z_t[n, h+(kh-1)d, w+(kw-1)d]  (zero outside):
        # the dilated-conv shift applied to the small 256-channel tap outputs
        # instead of an im2col of the 2048-channel input.
        acc = jnp.zeros((N, H, W, cmid), jnp.float32)
        for t, (kh, kw) in enumerate(taps):
            dh, dw = (kh - 1) * d, (kw - 1) * d
            zp = jnp.pad(z[:, :, :, t, :], ((0, 0), (d, d), (d, d), (0, 0)))
            acc = acc + zp[:, d + dh:d + dh + H, d + dw:d + dw + W, :]
        sc, sh = arrays["post_affine"][bi]
        out = jnp.maximum(acc * sc + sh, 0.0)
        branch_outs.append(out.reshape(M, cmid).astype(jnp.bfloat16))

    # image-level branch: global average pool -> 1x1 conv + BN + ReLU.
    # (M = batch-size matmul; a dedicated Pallas call would be pure overhead.)
    pooled = jnp.mean(x_nhwc, axis=(1, 2))
    img = jnp.dot(pooled.astype(jnp.bfloat16), arrays["w_img"],
                  preferred_element_type=jnp.float32)
    img = jnp.maximum(img * arrays["scale_img"] + arrays["shift_img"], 0.0)
    # bilinear upsample from 1x1 to HxW (align_corners=True) == broadcast
    img_full = jnp.broadcast_to(img[:, None, None, :],
                                (N, H, W, cmid)).reshape(M, cmid)
    branch_outs.append(img_full.astype(jnp.bfloat16))

    # Stage 2: fused concat + conv_1x1_3 + BN + ReLU + conv_1x1_4.
    logits = fused_proj_classifier(branch_outs, arrays["w_proj"],
                                   arrays["scale_proj"], arrays["shift_proj"],
                                   arrays["w_cls"], arrays["b_cls"])
    ncls = cfg["num_classes"]
    logits = logits[:, :ncls]
    return jnp.transpose(logits.reshape(N, H, W, ncls), (0, 3, 1, 2))


# ---------------------------------------------------------------------------
# Pure-XLA f32 reference (for a loose bf16-level numerical check)
# ---------------------------------------------------------------------------
def reference_forward(x, raw, eps=1e-5):
    hi = jax.lax.Precision.HIGHEST

    def conv(y, wb, dil=1, pad=0):
        w, b = wb
        out = jax.lax.conv_general_dilated(
            y, w, window_strides=(1, 1), padding=[(pad, pad), (pad, pad)],
            rhs_dilation=(dil, dil),
            dimension_numbers=("NCHW", "OIHW", "NCHW"), precision=hi)
        return out + b[None, :, None, None]

    def bn(y, p):
        g, be, m, v = p
        inv = g / jnp.sqrt(v + eps)
        return (y - m[None, :, None, None]) * inv[None, :, None, None] \
            + be[None, :, None, None]

    N, _, H, W = x.shape
    o1 = jax.nn.relu(bn(conv(x, raw["conv_1x1_1"]), raw["bn_1x1_1"]))
    o2 = jax.nn.relu(bn(conv(x, raw["conv_3x3_1"], 6, 6), raw["bn_3x3_1"]))
    o3 = jax.nn.relu(bn(conv(x, raw["conv_3x3_2"], 12, 12), raw["bn_3x3_2"]))
    o4 = jax.nn.relu(bn(conv(x, raw["conv_3x3_3"], 18, 18), raw["bn_3x3_3"]))
    pooled = jnp.mean(x, axis=(2, 3), keepdims=True)
    oi = jax.nn.relu(bn(conv(pooled, raw["conv_1x1_2"]), raw["bn_1x1_2"]))
    oi = jnp.broadcast_to(oi, (N, oi.shape[1], H, W))
    cat = jnp.concatenate([o1, o2, o3, o4, oi], axis=1)
    out = jax.nn.relu(bn(conv(cat, raw["conv_1x1_3"]), raw["bn_1x1_3"]))
    return conv(out, raw["conv_1x1_4"])


if __name__ == "__main__":
    NUM_CLASSES = 4
    N, CIN, H, W = 2, 4 * 512, 8, 8   # CIN is fixed at 4*512 by the module

    key = jax.random.PRNGKey(0)
    k_x, k_p = jax.random.split(key)
    feature_map = jax.random.normal(k_x, (N, CIN, H, W), jnp.float32)

    raw = init_raw_params(k_p, NUM_CLASSES, cin=CIN, cmid=256)
    arrays, cfg = prepare_params(raw, H, W)

    fwd = jax.jit(functools.partial(aspp_bottleneck_forward, cfg=cfg))
    out = jax.block_until_ready(fwd(feature_map, arrays))
    assert out.shape == (N, NUM_CLASSES, H, W), out.shape
    assert bool(jnp.all(jnp.isfinite(out)))

    # bf16-level agreement with a full-precision XLA reference
    ref = reference_forward(feature_map, raw)
    err = float(jnp.max(jnp.abs(out - ref)))
    amp = float(jnp.max(jnp.abs(ref)))
    assert err <= 0.08 * amp + 0.02, ("numerical mismatch", err, amp)
    print("KERNEL_OK")
</pallas_src>

<mosaic_0001>
module attributes {stable_mosaic.version = 11 : i64} {
  func.func @_mm_affine_mask_kernel(%arg0: i32, %arg1: i32, %arg2: memref<128x2048xbf16, #tpu.memory_space<vmem>>, %arg3: memref<2048x256xbf16, #tpu.memory_space<vmem>>, %arg4: memref<1x256xf32, #tpu.memory_space<vmem>>, %arg5: memref<1x256xf32, #tpu.memory_space<vmem>>, %arg6: memref<1x256xf32, #tpu.memory_space<vmem>>, %arg7: memref<128x256xbf16, #tpu.memory_space<vmem>>) attributes {dimension_semantics = [#tpu.dimension_semantics<parallel>, #tpu.dimension_semantics<parallel>], iteration_bounds = array<i64: 1, 12>, scalar_prefetch = 0 : i64, scratch_operands = 0 : i64, tpu.core_type = #tpu.core_type<tc>, window_params = [{transform_indices = @transform_0, window_bounds = array<i64: 128, 2048>}, {transform_indices = @transform_1, window_bounds = array<i64: 2048, 256>}, {transform_indices = @transform_2, window_bounds = array<i64: 1, 256>}, {transform_indices = @transform_3, window_bounds = array<i64: 1, 256>}, {transform_indices = @transform_4, window_bounds = array<i64: 1, 256>}, {transform_indices = @transform_5, window_bounds = array<i64: 128, 256>}]} {
    %c0 = arith.constant 0 : index
    %c0_0 = arith.constant 0 : index
    %0 = vector.load %arg2[%c0, %c0_0] : memref<128x2048xbf16, #tpu.memory_space<vmem>>, vector<128x2048xbf16>
    %c0_1 = arith.constant 0 : index
    %c0_2 = arith.constant 0 : index
    %1 = vector.load %arg3[%c0_1, %c0_2] : memref<2048x256xbf16, #tpu.memory_space<vmem>>, vector<2048x256xbf16>
    %cst = arith.constant dense<0.000000e+00> : vector<128x256xf32>
    %2 = tpu.matmul %0, %1, %cst {dimension_numbers = #tpu.dot_dimension_numbers<[1], [0], [0], [1], [0, 0, 1, 1], [], []>} : vector<128x2048xbf16>, vector<2048x256xbf16>, vector<128x256xf32> -> vector<128x256xf32>
    %c0_3 = arith.constant 0 : index
    %c0_4 = arith.constant 0 : index
    %3 = vector.load %arg4[%c0_3, %c0_4] : memref<1x256xf32, #tpu.memory_space<vmem>>, vector<1x256xf32>
    %4 = vector.broadcast %3 : vector<1x256xf32> to vector<128x256xf32>
    %5 = arith.mulf %2, %4 : vector<128x256xf32>
    %c0_5 = arith.constant 0 : index
    %c0_6 = arith.constant 0 : index
    %6 = vector.load %arg5[%c0_5, %c0_6] : memref<1x256xf32, #tpu.memory_space<vmem>>, vector<1x256xf32>
    %7 = vector.broadcast %6 : vector<1x256xf32> to vector<128x256xf32>
    %8 = arith.addf %5, %7 : vector<128x256xf32>
    %c0_7 = arith.constant 0 : index
    %c0_8 = arith.constant 0 : index
    %9 = vector.load %arg6[%c0_7, %c0_8] : memref<1x256xf32, #tpu.memory_space<vmem>>, vector<1x256xf32>
    %cst_9 = arith.constant 5.000000e-01 : f32
    %10 = vector.broadcast %cst_9 : f32 to vector<1x256xf32>
    %11 = arith.cmpf ogt, %9, %10 : vector<1x256xf32>
    %cst_10 = arith.constant 0.000000e+00 : f32
    %12 = vector.broadcast %cst_10 : f32 to vector<128x256xf32>
    %13 = arith.maximumf %8, %12 : vector<128x256xf32>
    %14 = vector.shape_cast %11 : vector<1x256xi1> to vector<1x256xi1>
    %15 = vector.broadcast %14 : vector<1x256xi1> to vector<128x256xi1>
    %16 = arith.select %15, %13, %8 : vector<128x256xi1>, vector<128x256xf32>
    %17 = arith.truncf %16 : vector<128x256xf32> to vector<128x256xbf16>
    %c0_11 = arith.constant 0 : index
    %c0_12 = arith.constant 0 : index
    %18 = vector.load %arg7[%c0_11, %c0_12] : memref<128x256xbf16, #tpu.memory_space<vmem>>, vector<128x256xbf16>
    tpu.vector_store %arg7[%c0_11, %c0_12], %17 {strides = array<i32>} : memref<128x256xbf16, #tpu.memory_space<vmem>>, vector<128x256xbf16>,
    return
  }
  func.func @transform_0(%arg0: i32, %arg1: i32) -> (i32, i32) {
    %c0_i32 = arith.constant 0 : i32
    %c0_i32_0 = arith.constant 0 : i32
    return %arg0, %c0_i32 : i32, i32
  }
  func.func @transform_1(%arg0: i32, %arg1: i32) -> (i32, i32) {
    %c0_i32 = arith.constant 0 : i32
    %c0_i32_0 = arith.constant 0 : i32
    return %c0_i32, %arg1 : i32, i32
  }
  func.func @transform_2(%arg0: i32, %arg1: i32) -> (i32, i32) {
    %c0_i32 = arith.constant 0 : i32
    %c0_i32_0 = arith.constant 0 : i32
    return %c0_i32, %arg1 : i32, i32
  }
  func.func @transform_3(%arg0: i32, %arg1: i32) -> (i32, i32) {
    %c0_i32 = arith.constant 0 : i32
    %c0_i32_0 = arith.constant 0 : i32
    return %c0_i32, %arg1 : i32, i32
  }
  func.func @transform_4(%arg0: i32, %arg1: i32) -> (i32, i32) {
    %c0_i32 = arith.constant 0 : i32
    %c0_i32_0 = arith.constant 0 : i32
    return %c0_i32, %arg1 : i32, i32
  }
  func.func @transform_5(%arg0: i32, %arg1: i32) -> (i32, i32) {
    %c0_i32 = arith.constant 0 : i32
    return %arg0, %arg1 : i32, i32
  }
}

module attributes {stable_mosaic.version = 11 : i64} {
  func.func @_proj_cls_kernel(%arg0: i32, %arg1: memref<128x256xbf16, #tpu.memory_space<vmem>>, %arg2: memref<128x256xbf16, #tpu.memory_space<vmem>>, %arg3: memref<128x256xbf16, #tpu.memory_space<vmem>>, %arg4: memref<128x256xbf16, #tpu.memory_space<vmem>>, %arg5: memref<128x256xbf16, #tpu.memory_space<vmem>>, %arg6: memref<5x256x256xbf16, #tpu.memory_space<vmem>>, %arg7: memref<1x256xf32, #tpu.memory_space<vmem>>, %arg8: memref<1x256xf32, #tpu.memory_space<vmem>>, %arg9: memref<256x128xbf16, #tpu.memory_space<vmem>>, %arg10: memref<1x128xf32, #tpu.memory_space<vmem>>, %arg11: memref<128x128xf32, #tpu.memory_space<vmem>>) attributes {dimension_semantics = [#tpu.dimension_semantics<parallel>], iteration_bounds = array<i64: 1>, scalar_prefetch = 0 : i64, scratch_operands = 0 : i64, tpu.core_type = #tpu.core_type<tc>, window_params = [{transform_indices = @transform_0, window_bounds = array<i64: 128, 256>}, {transform_indices = @transform_1, window_bounds = array<i64: 128, 256>}, {transform_indices = @transform_2, window_bounds = array<i64: 128, 256>}, {transform_indices = @transform_3, window_bounds = array<i64: 128, 256>}, {transform_indices = @transform_4, window_bounds = array<i64: 128, 256>}, {pipeline_mode = #tpu.pipeline_mode<synchronous>, transform_indices = @transform_5, window_bounds = array<i64: 5, 256, 256>}, {pipeline_mode = #tpu.pipeline_mode<synchronous>, transform_indices = @transform_6, window_bounds = array<i64: 1, 256>}, {pipeline_mode = #tpu.pipeline_mode<synchronous>, transform_indices = @transform_7, window_bounds = array<i64: 1, 256>}, {pipeline_mode = #tpu.pipeline_mode<synchronous>, transform_indices = @transform_8, window_bounds = array<i64: 256, 128>}, {pipeline_mode = #tpu.pipeline_mode<synchronous>, transform_indices = @transform_9, window_bounds = array<i64: 1, 128>}, {transform_indices = @transform_10, window_bounds = array<i64: 128, 128>}]} {
    %c0 = arith.constant 0 : index
    %c0_0 = arith.constant 0 : index
    %0 = vector.load %arg1[%c0, %c0_0] : memref<128x256xbf16, #tpu.memory_space<vmem>>, vector<128x256xbf16>
    %c0_1 = arith.constant 0 : index
    %c0_2 = arith.constant 0 : index
    %c0_3 = arith.constant 0 : index
    %1 = vector.load %arg6[%c0_1, %c0_2, %c0_3] : memref<5x256x256xbf16, #tpu.memory_space<vmem>>, vector<1x256x256xbf16>
    %2 = vector.shape_cast %1 : vector<1x256x256xbf16> to vector<256x256xbf16>
    %cst = arith.constant dense<0.000000e+00> : vector<128x256xf32>
    %3 = tpu.matmul %0, %2, %cst {dimension_numbers = #tpu.dot_dimension_numbers<[1], [0], [0], [1], [0, 0, 1, 1], [], []>} : vector<128x256xbf16>, vector<256x256xbf16>, vector<128x256xf32> -> vector<128x256xf32>
    %c0_4 = arith.constant 0 : index
    %c0_5 = arith.constant 0 : index
    %4 = vector.load %arg2[%c0_4, %c0_5] : memref<128x256xbf16, #tpu.memory_space<vmem>>, vector<128x256xbf16>
    %c1 = arith.constant 1 : index
    %c0_6 = arith.constant 0 : index
    %c0_7 = arith.constant 0 : index
    %5 = vector.load %arg6[%c1, %c0_6, %c0_7] : memref<5x256x256xbf16, #tpu.memory_space<vmem>>, vector<1x256x256xbf16>
    %6 = vector.shape_cast %5 : vector<1x256x256xbf16> to vector<256x256xbf16>
    %cst_8 = arith.constant dense<0.000000e+00> : vector<128x256xf32>
    %7 = tpu.matmul %4, %6, %cst_8 {dimension_numbers = #tpu.dot_dimension_numbers<[1], [0], [0], [1], [0, 0, 1, 1], [], []>} : vector<128x256xbf16>, vector<256x256xbf16>, vector<128x256xf32> -> vector<128x256xf32>
    %8 = arith.addf %3, %7 : vector<128x256xf32>
    %c0_9 = arith.constant 0 : index
    %c0_10 = arith.constant 0 : index
    %9 = vector.load %arg3[%c0_9, %c0_10] : memref<128x256xbf16, #tpu.memory_space<vmem>>, vector<128x256xbf16>
    %c2 = arith.constant 2 : index
    %c0_11 = arith.constant 0 : index
    %c0_12 = arith.constant 0 : index
    %10 = vector.load %arg6[%c2, %c0_11, %c0_12] : memref<5x256x256xbf16, #tpu.memory_space<vmem>>, vector<1x256x256xbf16>
    %11 = vector.shape_cast %10 : vector<1x256x256xbf16> to vector<256x256xbf16>
    %cst_13 = arith.constant dense<0.000000e+00> : vector<128x256xf32>
    %12 = tpu.matmul %9, %11, %cst_13 {dimension_numbers = #tpu.dot_dimension_numbers<[1], [0], [0], [1], [0, 0, 1, 1], [], []>} : vector<128x256xbf16>, vector<256x256xbf16>, vector<128x256xf32> -> vector<128x256xf32>
    %13 = arith.addf %8, %12 : vector<128x256xf32>
    %c0_14 = arith.constant 0 : index
    %c0_15 = arith.constant 0 : index
    %14 = vector.load %arg4[%c0_14, %c0_15] : memref<128x256xbf16, #tpu.memory_space<vmem>>, vector<128x256xbf16>
    %c3 = arith.constant 3 : index
    %c0_16 = arith.constant 0 : index
    %c0_17 = arith.constant 0 : index
    %15 = vector.load %arg6[%c3, %c0_16, %c0_17] : memref<5x256x256xbf16, #tpu.memory_space<vmem>>, vector<1x256x256xbf16>
    %16 = vector.shape_cast %15 : vector<1x256x256xbf16> to vector<256x256xbf16>
    %cst_18 = arith.constant dense<0.000000e+00> : vector<128x256xf32>
    %17 = tpu.matmul %14, %16, %cst_18 {dimension_numbers = #tpu.dot_dimension_numbers<[1], [0], [0], [1], [0, 0, 1, 1], [], []>} : vector<128x256xbf16>, vector<256x256xbf16>, vector<128x256xf32> -> vector<128x256xf32>
    %18 = arith.addf %13, %17 : vector<128x256xf32>
    %c0_19 = arith.constant 0 : index
    %c0_20 = arith.constant 0 : index
    %19 = vector.load %arg5[%c0_19, %c0_20] : memref<128x256xbf16, #tpu.memory_space<vmem>>, vector<128x256xbf16>
    %c4 = arith.constant 4 : index
    %c0_21 = arith.constant 0 : index
    %c0_22 = arith.constant 0 : index
    %20 = vector.load %arg6[%c4, %c0_21, %c0_22] : memref<5x256x256xbf16, #tpu.memory_space<vmem>>, vector<1x256x256xbf16>
    %21 = vector.shape_cast %20 : vector<1x256x256xbf16> to vector<256x256xbf16>
    %cst_23 = arith.constant dense<0.000000e+00> : vector<128x256xf32>
    %22 = tpu.matmul %19, %21, %cst_23 {dimension_numbers = #tpu.dot_dimension_numbers<[1], [0], [0], [1], [0, 0, 1, 1], [], []>} : vector<128x256xbf16>, vector<256x256xbf16>, vector<128x256xf32> -> vector<128x256xf32>
    %23 = arith.addf %18, %22 : vector<128x256xf32>
    %c0_24 = arith.constant 0 : index
    %c0_25 = arith.constant 0 : index
    %24 = vector.load %arg7[%c0_24, %c0_25] : memref<1x256xf32, #tpu.memory_space<vmem>>, vector<1x256xf32>
    %25 = vector.broadcast %24 : vector<1x256xf32> to vector<128x256xf32>
    %26 = arith.mulf %23, %25 : vector<128x256xf32>
    %c0_26 = arith.constant 0 : index
    %c0_27 = arith.constant 0 : index
    %27 = vector.load %arg8[%c0_26, %c0_27] : memref<1x256xf32, #tpu.memory_space<vmem>>, vector<1x256xf32>
    %28 = vector.broadcast %27 : vector<1x256xf32> to vector<128x256xf32>
    %29 = arith.addf %26, %28 : vector<128x256xf32>
    %cst_28 = arith.constant 0.000000e+00 : f32
    %30 = vector.broadcast %cst_28 : f32 to vector<128x256xf32>
    %31 = arith.maximumf %29, %30 : vector<128x256xf32>
    %32 = arith.truncf %31 : vector<128x256xf32> to vector<128x256xbf16>
    %c0_29 = arith.constant 0 : index
    %c0_30 = arith.constant 0 : index
    %33 = vector.load %arg9[%c0_29, %c0_30] : memref<256x128xbf16, #tpu.memory_space<vmem>>, vector<256x128xbf16>
    %cst_31 = arith.constant dense<0.000000e+00> : vector<128x128xf32>
    %34 = tpu.matmul %32, %33, %cst_31 {dimension_numbers = #tpu.dot_dimension_numbers<[1], [0], [0], [1], [0, 0, 1, 1], [], []>} : vector<128x256xbf16>, vector<256x128xbf16>, vector<128x128xf32> -> vector<128x128xf32>
    %c0_32 = arith.constant 0 : index
    %c0_33 = arith.constant 0 : index
    %35 = vector.load %arg10[%c0_32, %c0_33] : memref<1x128xf32, #tpu.memory_space<vmem>>, vector<1x128xf32>
    %36 = vector.broadcast %35 : vector<1x128xf32> to vector<128x128xf32>
    %37 = arith.addf %34, %36 : vector<128x128xf32>
    %c0_34 = arith.constant 0 : index
    %c0_35 = arith.constant 0 : index
    %38 = vector.load %arg11[%c0_34, %c0_35] : memref<128x128xf32, #tpu.memory_space<vmem>>, vector<128x128xf32>
    tpu.vector_store %arg11[%c0_34, %c0_35], %37 {strides = array<i32>} : memref<128x128xf32, #tpu.memory_space<vmem>>, vector<128x128xf32>,
    return
  }
  func.func @transform_0(%arg0: i32) -> (i32, i32) {
    %c0_i32 = arith.constant 0 : i32
    %c0_i32_0 = arith.constant 0 : i32
    return %arg0, %c0_i32 : i32, i32
  }
  func.func @transform_1(%arg0: i32) -> (i32, i32) {
    %c0_i32 = arith.constant 0 : i32
    %c0_i32_0 = arith.constant 0 : i32
    return %arg0, %c0_i32 : i32, i32
  }
  func.func @transform_2(%arg0: i32) -> (i32, i32) {
    %c0_i32 = arith.constant 0 : i32
    %c0_i32_0 = arith.constant 0 : i32
    return %arg0, %c0_i32 : i32, i32
  }
  func.func @transform_3(%arg0: i32) -> (i32, i32) {
    %c0_i32 = arith.constant 0 : i32
    %c0_i32_0 = arith.constant 0 : i32
    return %arg0, %c0_i32 : i32, i32
  }
  func.func @transform_4(%arg0: i32) -> (i32, i32) {
    %c0_i32 = arith.constant 0 : i32
    %c0_i32_0 = arith.constant 0 : i32
    return %arg0, %c0_i32 : i32, i32
  }
  func.func @transform_5(%arg0: i32) -> (i32, i32, i32) {
    %c0_i32 = arith.constant 0 : i32
    %c0_i32_0 = arith.constant 0 : i32
    %c0_i32_1 = arith.constant 0 : i32
    %c0_i32_2 = arith.constant 0 : i32
    return %c0_i32, %c0_i32_0, %c0_i32_1 : i32, i32, i32
  }
  func.func @transform_6(%arg0: i32) -> (i32, i32) {
    %c0_i32 = arith.constant 0 : i32
    %c0_i32_0 = arith.constant 0 : i32
    %c0_i32_1 = arith.constant 0 : i32
    return %c0_i32, %c0_i32_0 : i32, i32
  }
  func.func @transform_7(%arg0: i32) -> (i32, i32) {
    %c0_i32 = arith.constant 0 : i32
    %c0_i32_0 = arith.constant 0 : i32
    %c0_i32_1 = arith.constant 0 : i32
    return %c0_i32, %c0_i32_0 : i32, i32
  }
  func.func @transform_8(%arg0: i32) -> (i32, i32) {
    %c0_i32 = arith.constant 0 : i32
    %c0_i32_0 = arith.constant 0 : i32
    %c0_i32_1 = arith.constant 0 : i32
    return %c0_i32, %c0_i32_0 : i32, i32
  }
  func.func @transform_9(%arg0: i32) -> (i32, i32) {
    %c0_i32 = arith.constant 0 : i32
    %c0_i32_0 = arith.constant 0 : i32
    %c0_i32_1 = arith.constant 0 : i32
    return %c0_i32, %c0_i32_0 : i32, i32
  }
  func.func @transform_10(%arg0: i32) -> (i32, i32) {
    %c0_i32 = arith.constant 0 : i32
    %c0_i32_0 = arith.constant 0 : i32
    return %arg0, %c0_i32 : i32, i32
  }
}

</mosaic_0001>

<llo_original>
// kernel: aspp_bottleneck_forward.3
$region0: #{aspp_bottleneck_forward.3}
  #allocation0 [shape = 'u32[]', space=smem, size = 0x4, offset = 0x4, fixed_abs, tag = 'smem constant byte address 0x4 - core index']
  #allocation1 [shape = 'u32[72,128]{1,0:T(1,128)}', space=vmem, size = 0x9000, scoped, tag = 'internal scratch']
  %s0 = inlined_call_operand.vmem [shape: bf16[128,256], index: 0, kind: input, shape index: {}]
  %s1 = inlined_call_operand.vmem [shape: bf16[128,256], index: 1, kind: input, shape index: {}]
  %s2 = inlined_call_operand.vmem [shape: bf16[128,256], index: 2, kind: input, shape index: {}]
  %s3 = inlined_call_operand.vmem [shape: bf16[128,256], index: 3, kind: input, shape index: {}]
  %s4 = inlined_call_operand.vmem [shape: bf16[128,256], index: 4, kind: input, shape index: {}]
  %s5 = inlined_call_operand.vmem [shape: bf16[5,256,256], index: 5, kind: input, shape index: {}]
  %s6 = inlined_call_operand.vmem [shape: f32[1,256], index: 6, kind: input, shape index: {}]
  %s7 = inlined_call_operand.vmem [shape: f32[1,256], index: 7, kind: input, shape index: {}]
  %s8 = inlined_call_operand.vmem [shape: bf16[256,128], index: 8, kind: input, shape index: {}]
  %s9 = inlined_call_operand.vmem [shape: f32[1,128], index: 9, kind: input, shape index: {}]
  %s10 = inlined_call_operand.vmem [shape: f32[128,128], index: 10, kind: output, shape index: {}]
  %s11 = sld [smem:[#allocation0]]
  $region50: #{aspp_bottleneck_forward.3} parent=0
    _
  %s13 = ssub.s32 1, %s11
  %s14 = scalar_select 0, %s13, %s11
  // Predicated region
  $region2: #{aspp_bottleneck_forward.3} parent=0 // pred_check
    _
  $region3: #{aspp_bottleneck_forward.3} parent=0 // pred_check_branch
    %16 = sbr.rel (0) target = $region5
  $region4: #{aspp_bottleneck_forward.3} parent=0 // pred_region
    _
  $region5: #{aspp_bottleneck_forward.3} parent=0 // pred_fallthru
    _
  // Predicated region
  $region6: #{aspp_bottleneck_forward.3} parent=0 // pred_check
    _
  $region7: #{aspp_bottleneck_forward.3} parent=0 // pred_check_branch
    %18 = sbr.rel (0) target = $region9
  $region8: #{aspp_bottleneck_forward.3} parent=0 // pred_region
    _
  $region9: #{aspp_bottleneck_forward.3} parent=0 // pred_fallthru
    _
  // Predicated region
  $region10: #{aspp_bottleneck_forward.3} parent=0 // pred_check
    _
  $region11: #{aspp_bottleneck_forward.3} parent=0 // pred_check_branch
    %20 = sbr.rel (0) target = $region13
  $region12: #{aspp_bottleneck_forward.3} parent=0 // pred_region
    _
  $region13: #{aspp_bottleneck_forward.3} parent=0 // pred_fallthru
    _
  // Predicated region
  $region14: #{aspp_bottleneck_forward.3} parent=0 // pred_check
    _
  $region15: #{aspp_bottleneck_forward.3} parent=0 // pred_check_branch
    %22 = sbr.rel (0) target = $region17
  $region16: #{aspp_bottleneck_forward.3} parent=0 // pred_region
    _
  $region17: #{aspp_bottleneck_forward.3} parent=0 // pred_fallthru
    _
  // Predicated region
  $region18: #{aspp_bottleneck_forward.3} parent=0 // pred_check
    _
  $region19: #{aspp_bottleneck_forward.3} parent=0 // pred_check_branch
    %24 = sbr.rel (0) target = $region21
  $region20: #{aspp_bottleneck_forward.3} parent=0 // pred_region
    _
  $region21: #{aspp_bottleneck_forward.3} parent=0 // pred_fallthru
    _
  // Predicated region
  $region22: #{aspp_bottleneck_forward.3} parent=0 // pred_check
    _
  $region23: #{aspp_bottleneck_forward.3} parent=0 // pred_check_branch
    %26 = sbr.rel (0) target = $region25
  $region24: #{aspp_bottleneck_forward.3} parent=0 // pred_region
    _
  $region25: #{aspp_bottleneck_forward.3} parent=0 // pred_fallthru
    _
  // Predicated region
  $region26: #{aspp_bottleneck_forward.3} parent=0 // pred_check
    _
  $region27: #{aspp_bottleneck_forward.3} parent=0 // pred_check_branch
    %28 = sbr.rel (0) target = $region29
  $region28: #{aspp_bottleneck_forward.3} parent=0 // pred_region
    _
  $region29: #{aspp_bottleneck_forward.3} parent=0 // pred_fallthru
    _
  // Predicated region
  $region30: #{aspp_bottleneck_forward.3} parent=0 // pred_check
    _
  $region31: #{aspp_bottleneck_forward.3} parent=0 // pred_check_branch
    %30 = sbr.rel (0) target = $region33
  $region32: #{aspp_bottleneck_forward.3} parent=0 // pred_region
    _
  $region33: #{aspp_bottleneck_forward.3} parent=0 // pred_fallthru
    _
  // Predicated region
  $region34: #{aspp_bottleneck_forward.3} parent=0 // pred_check
    _
  $region35: #{aspp_bottleneck_forward.3} parent=0 // pred_check_branch
    %32 = sbr.rel (0) target = $region37
  $region36: #{aspp_bottleneck_forward.3} parent=0 // pred_region
    _
  $region37: #{aspp_bottleneck_forward.3} parent=0 // pred_fallthru
    _
  // Predicated region
  $region38: #{aspp_bottleneck_forward.3} parent=0 // pred_check
    _
  $region39: #{aspp_bottleneck_forward.3} parent=0 // pred_check_branch
    %34 = sbr.rel (0) target = $region41
  $region40: #{aspp_bottleneck_forward.3} parent=0 // pred_region
    _
  $region41: #{aspp_bottleneck_forward.3} parent=0 // pred_fallthru
    _
  %v35 = vld [vmem:[%s0] sm:$0xff]
  %v36 = vld [vmem:[%s0 + $0x8] sm:$0xff]
  %v37 = vld [vmem:[%s0 + $0x10] sm:$0xff]
  %v38 = vld [vmem:[%s0 + $0x18] sm:$0xff]
  %v39 = vld [vmem:[%s0 + $0x20] sm:$0xff]
  %v40 = vld [vmem:[%s0 + $0x28] sm:$0xff]
  %v41 = vld [vmem:[%s0 + $0x30] sm:$0xff]
  %v42 = vld [vmem:[%s0 + $0x38] sm:$0xff]
  %v43 = vld [vmem:[%s0 + $0x40] sm:$0xff]
  %v44 = vld [vmem:[%s0 + $0x48] sm:$0xff]
  %v45 = vld [vmem:[%s0 + $0x50] sm:$0xff]
  %v46 = vld [vmem:[%s0 + $0x58] sm:$0xff]
  %v47 = vld [vmem:[%s0 + $0x60] sm:$0xff]
  %v48 = vld [vmem:[%s0 + $0x68] sm:$0xff]
  %v49 = vld [vmem:[%s0 + $0x70] sm:$0xff]
  %v50 = vld [vmem:[%s0 + $0x78] sm:$0xff]
  %v51 = vld [vmem:[%s5] sm:$0xff]
  %v52 = vld [vmem:[%s5 + $0x8] sm:$0xff]
  %v53 = vld [vmem:[%s5 + $0x10] sm:$0xff]
  %v54 = vld [vmem:[%s5 + $0x18] sm:$0xff]
  %v55 = vld [vmem:[%s5 + $0x20] sm:$0xff]
  %v56 = vld [vmem:[%s5 + $0x28] sm:$0xff]
  %v57 = vld [vmem:[%s5 + $0x30] sm:$0xff]
  %v58 = vld [vmem:[%s5 + $0x38] sm:$0xff]
  %v59 = vld [vmem:[%s5 + $0x40] sm:$0xff]
  %v60 = vld [vmem:[%s5 + $0x48] sm:$0xff]
  %v61 = vld [vmem:[%s5 + $0x50] sm:$0xff]
  %v62 = vld [vmem:[%s5 + $0x58] sm:$0xff]
  %v63 = vld [vmem:[%s5 + $0x60] sm:$0xff]
  %v64 = vld [vmem:[%s5 + $0x68] sm:$0xff]
  %v65 = vld [vmem:[%s5 + $0x70] sm:$0xff]
  %v66 = vld [vmem:[%s5 + $0x78] sm:$0xff]
  %v67 = vld [vmem:[%s5 + $0x80] sm:$0xff]
  %v68 = vld [vmem:[%s5 + $0x88] sm:$0xff]
  %v69 = vld [vmem:[%s5 + $0x90] sm:$0xff]
  %v70 = vld [vmem:[%s5 + $0x98] sm:$0xff]
  %v71 = vld [vmem:[%s5 + $0xa0] sm:$0xff]
  %v72 = vld [vmem:[%s5 + $0xa8] sm:$0xff]
  %v73 = vld [vmem:[%s5 + $0xb0] sm:$0xff]
  %v74 = vld [vmem:[%s5 + $0xb8] sm:$0xff]
  %v75 = vld [vmem:[%s5 + $0xc0] sm:$0xff]
  %v76 = vld [vmem:[%s5 + $0xc8] sm:$0xff]
  %v77 = vld [vmem:[%s5 + $0xd0] sm:$0xff]
  %v78 = vld [vmem:[%s5 + $0xd8] sm:$0xff]
  %v79 = vld [vmem:[%s5 + $0xe0] sm:$0xff]
  %v80 = vld [vmem:[%s5 + $0xe8] sm:$0xff]
  %v81 = vld [vmem:[%s5 + $0xf0] sm:$0xff]
  %v82 = vld [vmem:[%s5 + $0xf8] sm:$0xff]
  %v83 = vld [vmem:[%s1] sm:$0xff]
  %v84 = vld [vmem:[%s1 + $0x8] sm:$0xff]
  %v85 = vld [vmem:[%s1 + $0x10] sm:$0xff]
  %v86 = vld [vmem:[%s1 + $0x18] sm:$0xff]
  %v87 = vld [vmem:[%s1 + $0x20] sm:$0xff]
  %v88 = vld [vmem:[%s1 + $0x28] sm:$0xff]
  %v89 = vld [vmem:[%s1 + $0x30] sm:$0xff]
  %v90 = vld [vmem:[%s1 + $0x38] sm:$0xff]
  %v91 = vld [vmem:[%s1 + $0x40] sm:$0xff]
  %v92 = vld [vmem:[%s1 + $0x48] sm:$0xff]
  %v93 = vld [vmem:[%s1 + $0x50] sm:$0xff]
  %v94 = vld [vmem:[%s1 + $0x58] sm:$0xff]
  %v95 = vld [vmem:[%s1 + $0x60] sm:$0xff]
  %v96 = vld [vmem:[%s1 + $0x68] sm:$0xff]
  %v97 = vld [vmem:[%s1 + $0x70] sm:$0xff]
  %v98 = vld [vmem:[%s1 + $0x78] sm:$0xff]
  %s99 = scalar_lea.vmem %s5, 256
  %v100 = vld [vmem:[%s99] sm:$0xff]
  %v101 = vld [vmem:[%s99 + $0x8] sm:$0xff]
  %v102 = vld [vmem:[%s99 + $0x10] sm:$0xff]
  %v103 = vld [vmem:[%s99 + $0x18] sm:$0xff]
  %v104 = vld [vmem:[%s99 + $0x20] sm:$0xff]
  %v105 = vld [vmem:[%s99 + $0x28] sm:$0xff]
  %v106 = vld [vmem:[%s99 + $0x30] sm:$0xff]
  %v107 = vld [vmem:[%s99 + $0x38] sm:$0xff]
  %v108 = vld [vmem:[%s99 + $0x40] sm:$0xff]
  %v109 = vld [vmem:[%s99 + $0x48] sm:$0xff]
  %v110 = vld [vmem:[%s99 + $0x50] sm:$0xff]
  %v111 = vld [vmem:[%s99 + $0x58] sm:$0xff]
  %v112 = vld [vmem:[%s99 + $0x60] sm:$0xff]
  %v113 = vld [vmem:[%s99 + $0x68] sm:$0xff]
  %v114 = vld [vmem:[%s99 + $0x70] sm:$0xff]
  %v115 = vld [vmem:[%s99 + $0x78] sm:$0xff]
  %v116 = vld [vmem:[%s99 + $0x80] sm:$0xff]
  %v117 = vld [vmem:[%s99 + $0x88] sm:$0xff]
  %v118 = vld [vmem:[%s99 + $0x90] sm:$0xff]
  %v119 = vld [vmem:[%s99 + $0x98] sm:$0xff]
  %v120 = vld [vmem:[%s99 + $0xa0] sm:$0xff]
  %v121 = vld [vmem:[%s99 + $0xa8] sm:$0xff]
  %v122 = vld [vmem:[%s99 + $0xb0] sm:$0xff]
  %v123 = vld [vmem:[%s99 + $0xb8] sm:$0xff]
  %v124 = vld [vmem:[%s99 + $0xc0] sm:$0xff]
  %v125 = vld [vmem:[%s99 + $0xc8] sm:$0xff]
  %v126 = vld [vmem:[%s99 + $0xd0] sm:$0xff]
  %v127 = vld [vmem:[%s99 + $0xd8] sm:$0xff]
  %v128 = vld [vmem:[%s99 + $0xe0] sm:$0xff]
  %v129 = vld [vmem:[%s99 + $0xe8] sm:$0xff]
  %v130 = vld [vmem:[%s99 + $0xf0] sm:$0xff]
  %v131 = vld [vmem:[%s99 + $0xf8] sm:$0xff]
  %v148 = vunpack.c.l.b16 %v83
  %v149 = vunpack.c.h.b16 %v83
  %v150 = vunpack.c.l.b16 %v84
  %v151 = vunpack.c.h.b16 %v84
  %v152 = vunpack.c.l.b16 %v85
  %v153 = vunpack.c.h.b16 %v85
  %v154 = vunpack.c.l.b16 %v86
  %v155 = vunpack.c.h.b16 %v86
  %v156 = vunpack.c.l.b16 %v87
  %v157 = vunpack.c.h.b16 %v87
  %v158 = vunpack.c.l.b16 %v88
  %v159 = vunpack.c.h.b16 %v88
  %v160 = vunpack.c.l.b16 %v89
  %v161 = vunpack.c.h.b16 %v89
  %v162 = vunpack.c.l.b16 %v90
  %v163 = vunpack.c.h.b16 %v90
  %v164 = vunpack.c.l.b16 %v91
  %v165 = vunpack.c.h.b16 %v91
  %v166 = vunpack.c.l.b16 %v92
  %v167 = vunpack.c.h.b16 %v92
  %v168 = vunpack.c.l.b16 %v93
  %v169 = vunpack.c.h.b16 %v93
  %v170 = vunpack.c.l.b16 %v94
  %v171 = vunpack.c.h.b16 %v94
  %v172 = vunpack.c.l.b16 %v95
  %v173 = vunpack.c.h.b16 %v95
  %v174 = vunpack.c.l.b16 %v96
  %v175 = vunpack.c.h.b16 %v96
  %v176 = vunpack.c.l.b16 %v97
  %v177 = vunpack.c.h.b16 %v97
  %v178 = vunpack.c.l.b16 %v98
  %v179 = vunpack.c.h.b16 %v98
  %v180 = vpack.c.b16 %v150, %v148
  %v181 = vpack.c.b16 %v151, %v149
  %v182 = vpack.c.b16 %v154, %v152
  %v183 = vpack.c.b16 %v155, %v153
  %v184 = vpack.c.b16 %v158, %v156
  %v185 = vpack.c.b16 %v159, %v157
  %v186 = vpack.c.b16 %v162, %v160
  %v187 = vpack.c.b16 %v163, %v161
  %v188 = vpack.c.b16 %v166, %v164
  %v189 = vpack.c.b16 %v167, %v165
  %v190 = vpack.c.b16 %v170, %v168
  %v191 = vpack.c.b16 %v171, %v169
  %v192 = vpack.c.b16 %v174, %v172
  %v193 = vpack.c.b16 %v175, %v173
  %v194 = vpack.c.b16 %v178, %v176
  %v195 = vpack.c.b16 %v179, %v177
  %v244 = vunpack.c.l.b16 %v100
  %v245 = vunpack.c.h.b16 %v100
  %v246 = vunpack.c.l.b16 %v101
  %v247 = vunpack.c.h.b16 %v101
  %v248 = vunpack.c.l.b16 %v102
  %v249 = vunpack.c.h.b16 %v102
  %v250 = vunpack.c.l.b16 %v103
  %v251 = vunpack.c.h.b16 %v103
  %v252 = vunpack.c.l.b16 %v104
  %v253 = vunpack.c.h.b16 %v104
  %v254 = vunpack.c.l.b16 %v105
  %v255 = vunpack.c.h.b16 %v105
  %v256 = vunpack.c.l.b16 %v106
  %v257 = vunpack.c.h.b16 %v106
  %v258 = vunpack.c.l.b16 %v107
  %v259 = vunpack.c.h.b16 %v107
  %v260 = vunpack.c.l.b16 %v108
  %v261 = vunpack.c.h.b16 %v108
  %v262 = vunpack.c.l.b16 %v109
  %v263 = vunpack.c.h.b16 %v109
  %v264 = vunpack.c.l.b16 %v110
  %v265 = vunpack.c.h.b16 %v110
  %v266 = vunpack.c.l.b16 %v111
  %v267 = vunpack.c.h.b16 %v111
  %v268 = vunpack.c.l.b16 %v112
  %v269 = vunpack.c.h.b16 %v112
  %v270 = vunpack.c.l.b16 %v113
  %v271 = vunpack.c.h.b16 %v113
  %v272 = vunpack.c.l.b16 %v114
  %v273 = vunpack.c.h.b16 %v114
  %v274 = vunpack.c.l.b16 %v115
  %v275 = vunpack.c.h.b16 %v115
  %v276 = vunpack.c.l.b16 %v116
  %v277 = vunpack.c.h.b16 %v116
  %v278 = vunpack.c.l.b16 %v117
  %v279 = vunpack.c.h.b16 %v117
  %v280 = vunpack.c.l.b16 %v118
  %v281 = vunpack.c.h.b16 %v118
  %v282 = vunpack.c.l.b16 %v119
  %v283 = vunpack.c.h.b16 %v119
  %v284 = vunpack.c.l.b16 %v120
  %v285 = vunpack.c.h.b16 %v120
  %v286 = vunpack.c.l.b16 %v121
  %v287 = vunpack.c.h.b16 %v121
  %v288 = vunpack.c.l.b16 %v122
  %v289 = vunpack.c.h.b16 %v122
  %v290 = vunpack.c.l.b16 %v123
  %v291 = vunpack.c.h.b16 %v123
  %v292 = vunpack.c.l.b16 %v124
  %v293 = vunpack.c.h.b16 %v124
  %v294 = vunpack.c.l.b16 %v125
  %v295 = vunpack.c.h.b16 %v125
  %v296 = vunpack.c.l.b16 %v126
  %v297 = vunpack.c.h.b16 %v126
  %v298 = vunpack.c.l.b16 %v127
  %v299 = vunpack.c.h.b16 %v127
  %v300 = vunpack.c.l.b16 %v128
  %v301 = vunpack.c.h.b16 %v128
  %v302 = vunpack.c.l.b16 %v129
  %v303 = vunpack.c.h.b16 %v129
  %v304 = vunpack.c.l.b16 %v130
  %v305 = vunpack.c.h.b16 %v130
  %v306 = vunpack.c.l.b16 %v131
  %v307 = vunpack.c.h.b16 %v131
  %v308 = vpack.c.b16 %v246, %v244
  %v309 = vpack.c.b16 %v247, %v245
  %v310 = vpack.c.b16 %v250, %v248
  %v311 = vpack.c.b16 %v251, %v249
  %v312 = vpack.c.b16 %v254, %v252
  %v313 = vpack.c.b16 %v255, %v253
  %v314 = vpack.c.b16 %v258, %v256
  %v315 = vpack.c.b16 %v259, %v257
  %v316 = vpack.c.b16 %v262, %v260
  %v317 = vpack.c.b16 %v263, %v261
  %v318 = vpack.c.b16 %v266, %v264
  %v319 = vpack.c.b16 %v267, %v265
  %v320 = vpack.c.b16 %v270, %v268
  %v321 = vpack.c.b16 %v271, %v269
  %v322 = vpack.c.b16 %v274, %v272
  %v323 = vpack.c.b16 %v275, %v273
  %v324 = vpack.c.b16 %v278, %v276
  %v325 = vpack.c.b16 %v279, %v277
  %v326 = vpack.c.b16 %v282, %v280
  %v327 = vpack.c.b16 %v283, %v281
  %v328 = vpack.c.b16 %v286, %v284
  %v329 = vpack.c.b16 %v287, %v285
  %v330 = vpack.c.b16 %v290, %v288
  %v331 = vpack.c.b16 %v291, %v289
  %v332 = vpack.c.b16 %v294, %v292
  %v333 = vpack.c.b16 %v295, %v293
  %v334 = vpack.c.b16 %v298, %v296
  %v335 = vpack.c.b16 %v299, %v297
  %v336 = vpack.c.b16 %v302, %v300
  %v337 = vpack.c.b16 %v303, %v301
  %v338 = vpack.c.b16 %v306, %v304
  %v339 = vpack.c.b16 %v307, %v305
  %372 = vmatpush.bf16.msra.mxu0 %v322
  %373 = vmatpush.bf16.msra.mxu0 %v320
  %374 = vmatpush.bf16.msra.mxu0 %v318
  %375 = vmatpush.bf16.msra.mxu0 %v316
  %376 = vmatpush.bf16.msra.mxu0 %v314
  %377 = vmatpush.bf16.msra.mxu0 %v312
  %378 = vmatpush.bf16.msra.mxu0 %v310
  %379 = vmatpush.bf16.msra.mxu0 %v308
  %380 = vmatmul.bf16.gmra.mxu0 %v180
  %v381 = vpop.f32.mrf.mxu0
  %v382 = vadd.f32 0.0, %v381
  %v383 = vpop.f32.mrf.mxu0
  %v384 = vadd.f32 0.0, %v383
  %385 = vmatmul.bf16.gmra.mxu0 %v182
  %v386 = vpop.f32.mrf.mxu0
  %v387 = vadd.f32 0.0, %v386
  %v388 = vpop.f32.mrf.mxu0
  %v389 = vadd.f32 0.0, %v388
  %390 = vmatmul.bf16.gmra.mxu0 %v184
  %v391 = vpop.f32.mrf.mxu0
  %v392 = vadd.f32 0.0, %v391
  %v393 = vpop.f32.mrf.mxu0
  %v394 = vadd.f32 0.0, %v393
  %395 = vmatmul.bf16.gmra.mxu0 %v186
  %v396 = vpop.f32.mrf.mxu0
  %v397 = vadd.f32 0.0, %v396
  %v398 = vpop.f32.mrf.mxu0
  %v399 = vadd.f32 0.0, %v398
  %400 = vmatmul.bf16.gmra.mxu0 %v188
  %v401 = vpop.f32.mrf.mxu0
  %v402 = vadd.f32 0.0, %v401
  %v403 = vpop.f32.mrf.mxu0
  %v404 = vadd.f32 0.0, %v403
  %405 = vmatmul.bf16.gmra.mxu0 %v190
  %v406 = vpop.f32.mrf.mxu0
  %v407 = vadd.f32 0.0, %v406
  %v408 = vpop.f32.mrf.mxu0
  %v409 = vadd.f32 0.0, %v408
  %410 = vmatmul.bf16.gmra.mxu0 %v192
  %v411 = vpop.f32.mrf.mxu0
  %v412 = vadd.f32 0.0, %v411
  %v413 = vpop.f32.mrf.mxu0
  %v414 = vadd.f32 0.0, %v413
  %415 = vmatmul.bf16.gmra.mxu0 %v194
  %v416 = vpop.f32.mrf.mxu0
  %v417 = vadd.f32 0.0, %v416
  %v418 = vpop.f32.mrf.mxu0
  %v419 = vadd.f32 0.0, %v418
  %420 = vdwg.mxu0
  %421 = vmatpush.bf16.msra.mxu0 %v338
  %422 = vmatpush.bf16.msra.mxu0 %v336
  %423 = vmatpush.bf16.msra.mxu0 %v334
  %424 = vmatpush.bf16.msra.mxu0 %v332
  %425 = vmatpush.bf16.msra.mxu0 %v330
  %426 = vmatpush.bf16.msra.mxu0 %v328
  %427 = vmatpush.bf16.msra.mxu0 %v326
  %428 = vmatpush.bf16.msra.mxu0 %v324
  %429 = vmatmul.bf16.gmra.mxu0 %v181
  %v430 = vpop.f32.mrf.mxu0
  %v431 = vadd.f32 %v382, %v430
  %v432 = vpop.f32.mrf.mxu0
  %v433 = vadd.f32 %v384, %v432
  %434 = vmatmul.bf16.gmra.mxu0 %v183
  %v435 = vpop.f32.mrf.mxu0
  %v436 = vadd.f32 %v387, %v435
  %v437 = vpop.f32.mrf.mxu0
  %v438 = vadd.f32 %v389, %v437
  %439 = vmatmul.bf16.gmra.mxu0 %v185
  %v440 = vpop.f32.mrf.mxu0
  %v441 = vadd.f32 %v392, %v440
  %v442 = vpop.f32.mrf.mxu0
  %v443 = vadd.f32 %v394, %v442
  %444 = vmatmul.bf16.gmra.mxu0 %v187
  %v445 = vpop.f32.mrf.mxu0
  %v446 = vadd.f32 %v397, %v445
  %v447 = vpop.f32.mrf.mxu0
  %v448 = vadd.f32 %v399, %v447
  %449 = vmatmul.bf16.gmra.mxu0 %v189
  %v450 = vpop.f32.mrf.mxu0
  %v451 = vadd.f32 %v402, %v450
  %v452 = vpop.f32.mrf.mxu0
  %v453 = vadd.f32 %v404, %v452
  %454 = vmatmul.bf16.gmra.mxu0 %v191
  %v455 = vpop.f32.mrf.mxu0
  %v456 = vadd.f32 %v407, %v455
  %v457 = vpop.f32.mrf.mxu0
  %v458 = vadd.f32 %v409, %v457
  %459 = vmatmul.bf16.gmra.mxu0 %v193
  %v460 = vpop.f32.mrf.mxu0
  %v461 = vadd.f32 %v412, %v460
  %v462 = vpop.f32.mrf.mxu0
  %v463 = vadd.f32 %v414, %v462
  %464 = vmatmul.bf16.gmra.mxu0 %v195
  %v465 = vpop.f32.mrf.mxu0
  %v466 = vadd.f32 %v417, %v465
  %v467 = vpop.f32.mrf.mxu0
  %v468 = vadd.f32 %v419, %v467
  %469 = vdwg.mxu0
  %470 = vmatpush.bf16.msra.mxu0 %v323
  %471 = vmatpush.bf16.msra.mxu0 %v321
  %472 = vmatpush.bf16.msra.mxu0 %v319
  %473 = vmatpush.bf16.msra.mxu0 %v317
  %474 = vmatpush.bf16.msra.mxu0 %v315
  %475 = vmatpush.bf16.msra.mxu0 %v313
  %476 = vmatpush.bf16.msra.mxu0 %v311
  %477 = vmatpush.bf16.msra.mxu0 %v309
  %478 = vmatmul.bf16.gmra.mxu0 %v180
  %v479 = vpop.f32.mrf.mxu0
  %v480 = vadd.f32 0.0, %v479
  %v481 = vpop.f32.mrf.mxu0
  %v482 = vadd.f32 0.0, %v481
  %483 = vmatmul.bf16.gmra.mxu0 %v182
  %v484 = vpop.f32.mrf.mxu0
  %v485 = vadd.f32 0.0, %v484
  %v486 = vpop.f32.mrf.mxu0
  %v487 = vadd.f32 0.0, %v486
  %488 = vmatmul.bf16.gmra.mxu0 %v184
  %v489 = vpop.f32.mrf.mxu0
  %v490 = vadd.f32 0.0, %v489
  %v491 = vpop.f32.mrf.mxu0
  %v492 = vadd.f32 0.0, %v491
  %493 = vmatmul.bf16.gmra.mxu0 %v186
  %v494 = vpop.f32.mrf.mxu0
  %v495 = vadd.f32 0.0, %v494
  %v496 = vpop.f32.mrf.mxu0
  %v497 = vadd.f32 0.0, %v496
  %498 = vmatmul.bf16.gmra.mxu0 %v188
  %v499 = vpop.f32.mrf.mxu0
  %v500 = vadd.f32 0.0, %v499
  %v501 = vpop.f32.mrf.mxu0
  %v502 = vadd.f32 0.0, %v501
  %503 = vmatmul.bf16.gmra.mxu0 %v190
  %v504 = vpop.f32.mrf.mxu0
  %v505 = vadd.f32 0.0, %v504
  %v506 = vpop.f32.mrf.mxu0
  %v507 = vadd.f32 0.0, %v506
  %508 = vmatmul.bf16.gmra.mxu0 %v192
  %v509 = vpop.f32.mrf.mxu0
  %v510 = vadd.f32 0.0, %v509
  %v511 = vpop.f32.mrf.mxu0
  %v512 = vadd.f32 0.0, %v511
  %513 = vmatmul.bf16.gmra.mxu0 %v194
  %v514 = vpop.f32.mrf.mxu0
  %v515 = vadd.f32 0.0, %v514
  %v516 = vpop.f32.mrf.mxu0
  %v517 = vadd.f32 0.0, %v516
  %518 = vdwg.mxu0
  %519 = vmatpush.bf16.msra.mxu0 %v339
  %520 = vmatpush.bf16.msra.mxu0 %v337
  %521 = vmatpush.bf16.msra.mxu0 %v335
  %522 = vmatpush.bf16.msra.mxu0 %v333
  %523 = vmatpush.bf16.msra.mxu0 %v331
  %524 = vmatpush.bf16.msra.mxu0 %v329
  %525 = vmatpush.bf16.msra.mxu0 %v327
  %526 = vmatpush.bf16.msra.mxu0 %v325
  %527 = vmatmul.bf16.gmra.mxu0 %v181
  %v528 = vpop.f32.mrf.mxu0
  %v529 = vadd.f32 %v480, %v528
  %v530 = vpop.f32.mrf.mxu0
  %v531 = vadd.f32 %v482, %v530
  %532 = vmatmul.bf16.gmra.mxu0 %v183
  %v533 = vpop.f32.mrf.mxu0
  %v534 = vadd.f32 %v485, %v533
  %v535 = vpop.f32.mrf.mxu0
  %v536 = vadd.f32 %v487, %v535
  %537 = vmatmul.bf16.gmra.mxu0 %v185
  %v538 = vpop.f32.mrf.mxu0
  %v539 = vadd.f32 %v490, %v538
  %v540 = vpop.f32.mrf.mxu0
  %v541 = vadd.f32 %v492, %v540
  %542 = vmatmul.bf16.gmra.mxu0 %v187
  %v543 = vpop.f32.mrf.mxu0
  %v544 = vadd.f32 %v495, %v543
  %v545 = vpop.f32.mrf.mxu0
  %v546 = vadd.f32 %v497, %v545
  %547 = vmatmul.bf16.gmra.mxu0 %v189
  %v548 = vpop.f32.mrf.mxu0
  %v549 = vadd.f32 %v500, %v548
  %v550 = vpop.f32.mrf.mxu0
  %v551 = vadd.f32 %v502, %v550
  %552 = vmatmul.bf16.gmra.mxu0 %v191
  %v553 = vpop.f32.mrf.mxu0
  %v554 = vadd.f32 %v505, %v553
  %v555 = vpop.f32.mrf.mxu0
  %v556 = vadd.f32 %v507, %v555
  %557 = vmatmul.bf16.gmra.mxu0 %v193
  %v558 = vpop.f32.mrf.mxu0
  %v559 = vadd.f32 %v510, %v558
  %v560 = vpop.f32.mrf.mxu0
  %v561 = vadd.f32 %v512, %v560
  %562 = vmatmul.bf16.gmra.mxu0 %v195
  %v563 = vpop.f32.mrf.mxu0
  %v564 = vadd.f32 %v515, %v563
  %v565 = vpop.f32.mrf.mxu0
  %v566 = vadd.f32 %v517, %v565
  %567 = vdwg.mxu0
  %v584 = vunpack.c.l.b16 %v35
  %v585 = vunpack.c.h.b16 %v35
  %v586 = vunpack.c.l.b16 %v36
  %v587 = vunpack.c.h.b16 %v36
  %v588 = vunpack.c.l.b16 %v37
  %v589 = vunpack.c.h.b16 %v37
  %v590 = vunpack.c.l.b16 %v38
  %v591 = vunpack.c.h.b16 %v38
  %v592 = vunpack.c.l.b16 %v39
  %v593 = vunpack.c.h.b16 %v39
  %v594 = vunpack.c.l.b16 %v40
  %v595 = vunpack.c.h.b16 %v40
  %v596 = vunpack.c.l.b16 %v41
  %v597 = vunpack.c.h.b16 %v41
  %v598 = vunpack.c.l.b16 %v42
  %v599 = vunpack.c.h.b16 %v42
  %v600 = vunpack.c.l.b16 %v43
  %v601 = vunpack.c.h.b16 %v43
  %v602 = vunpack.c.l.b16 %v44
  %v603 = vunpack.c.h.b16 %v44
  %v604 = vunpack.c.l.b16 %v45
  %v605 = vunpack.c.h.b16 %v45
  %v606 = vunpack.c.l.b16 %v46
  %v607 = vunpack.c.h.b16 %v46
  %v608 = vunpack.c.l.b16 %v47
  %v609 = vunpack.c.h.b16 %v47
  %v610 = vunpack.c.l.b16 %v48
  %v611 = vunpack.c.h.b16 %v48
  %v612 = vunpack.c.l.b16 %v49
  %v613 = vunpack.c.h.b16 %v49
  %v614 = vunpack.c.l.b16 %v50
  %v615 = vunpack.c.h.b16 %v50
  %v616 = vpack.c.b16 %v586, %v584
  %v617 = vpack.c.b16 %v587, %v585
  %v618 = vpack.c.b16 %v590, %v588
  %v619 = vpack.c.b16 %v591, %v589
  %v620 = vpack.c.b16 %v594, %v592
  %v621 = vpack.c.b16 %v595, %v593
  %v622 = vpack.c.b16 %v598, %v596
  %v623 = vpack.c.b16 %v599, %v597
  %v624 = vpack.c.b16 %v602, %v600
  %v625 = vpack.c.b16 %v603, %v601
  %v626 = vpack.c.b16 %v606, %v604
  %v627 = vpack.c.b16 %v607, %v605
  %v628 = vpack.c.b16 %v610, %v608
  %v629 = vpack.c.b16 %v611, %v609
  %v630 = vpack.c.b16 %v614, %v612
  %v631 = vpack.c.b16 %v615, %v613
  %v680 = vunpack.c.l.b16 %v51
  %v681 = vunpack.c.h.b16 %v51
  %v682 = vunpack.c.l.b16 %v52
  %v683 = vunpack.c.h.b16 %v52
  %v684 = vunpack.c.l.b16 %v53
  %v685 = vunpack.c.h.b16 %v53
  %v686 = vunpack.c.l.b16 %v54
  %v687 = vunpack.c.h.b16 %v54
  %v688 = vunpack.c.l.b16 %v55
  %v689 = vunpack.c.h.b16 %v55
  %v690 = vunpack.c.l.b16 %v56
  %v691 = vunpack.c.h.b16 %v56
  %v692 = vunpack.c.l.b16 %v57
  %v693 = vunpack.c.h.b16 %v57
  %v694 = vunpack.c.l.b16 %v58
  %v695 = vunpack.c.h.b16 %v58
  %v696 = vunpack.c.l.b16 %v59
  %v697 = vunpack.c.h.b16 %v59
  %v698 = vunpack.c.l.b16 %v60
  %v699 = vunpack.c.h.b16 %v60
  %v700 = vunpack.c.l.b16 %v61
  %v701 = vunpack.c.h.b16 %v61
  %v702 = vunpack.c.l.b16 %v62
  %v703 = vunpack.c.h.b16 %v62
  %v704 = vunpack.c.l.b16 %v63
  %v705 = vunpack.c.h.b16 %v63
  %v706 = vunpack.c.l.b16 %v64
  %v707 = vunpack.c.h.b16 %v64
  %v708 = vunpack.c.l.b16 %v65
  %v709 = vunpack.c.h.b16 %v65
  %v710 = vunpack.c.l.b16 %v66
  %v711 = vunpack.c.h.b16 %v66
  %v712 = vunpack.c.l.b16 %v67
  %v713 = vunpack.c.h.b16 %v67
  %v714 = vunpack.c.l.b16 %v68
  %v715 = vunpack.c.h.b16 %v68
  %v716 = vunpack.c.l.b16 %v69
  %v717 = vunpack.c.h.b16 %v69
  %v718 = vunpack.c.l.b16 %v70
  %v719 = vunpack.c.h.b16 %v70
  %v720 = vunpack.c.l.b16 %v71
  %v721 = vunpack.c.h.b16 %v71
  %v722 = vunpack.c.l.b16 %v72
  %v723 = vunpack.c.h.b16 %v72
  %v724 = vunpack.c.l.b16 %v73
  %v725 = vunpack.c.h.b16 %v73
  %v726 = vunpack.c.l.b16 %v74
  %v727 = vunpack.c.h.b16 %v74
  %v728 = vunpack.c.l.b16 %v75
  %v729 = vunpack.c.h.b16 %v75
  %v730 = vunpack.c.l.b16 %v76
  %v731 = vunpack.c.h.b16 %v76
  %v732 = vunpack.c.l.b16 %v77
  %v733 = vunpack.c.h.b16 %v77
  %v734 = vunpack.c.l.b16 %v78
  %v735 = vunpack.c.h.b16 %v78
  %v736 = vunpack.c.l.b16 %v79
  %v737 = vunpack.c.h.b16 %v79
  %v738 = vunpack.c.l.b16 %v80
  %v739 = vunpack.c.h.b16 %v80
  %v740 = vunpack.c.l.b16 %v81
  %v741 = vunpack.c.h.b16 %v81
  %v742 = vunpack.c.l.b16 %v82
  %v743 = vunpack.c.h.b16 %v82
  %v744 = vpack.c.b16 %v682, %v680
  %v745 = vpack.c.b16 %v683, %v681
  %v746 = vpack.c.b16 %v686, %v684
  %v747 = vpack.c.b16 %v687, %v685
  %v748 = vpack.c.b16 %v690, %v688
  %v749 = vpack.c.b16 %v691, %v689
  %v750 = vpack.c.b16 %v694, %v692
  %v751 = vpack.c.b16 %v695, %v693
  %v752 = vpack.c.b16 %v698, %v696
  %v753 = vpack.c.b16 %v699, %v697
  %v754 = vpack.c.b16 %v702, %v700
  %v755 = vpack.c.b16 %v703, %v701
  %v756 = vpack.c.b16 %v706, %v704
  %v757 = vpack.c.b16 %v707, %v705
  %v758 = vpack.c.b16 %v710, %v708
  %v759 = vpack.c.b16 %v711, %v709
  %v760 = vpack.c.b16 %v714, %v712
  %v761 = vpack.c.b16 %v715, %v713
  %v762 = vpack.c.b16 %v718, %v716
  %v763 = vpack.c.b16 %v719, %v717
  %v764 = vpack.c.b16 %v722, %v720
  %v765 = vpack.c.b16 %v723, %v721
  %v766 = vpack.c.b16 %v726, %v724
  %v767 = vpack.c.b16 %v727, %v725
  %v768 = vpack.c.b16 %v730, %v728
  %v769 = vpack.c.b16 %v731, %v729
  %v770 = vpack.c.b16 %v734, %v732
  %v771 = vpack.c.b16 %v735, %v733
  %v772 = vpack.c.b16 %v738, %v736
  %v773 = vpack.c.b16 %v739, %v737
  %v774 = vpack.c.b16 %v742, %v740
  %v775 = vpack.c.b16 %v743, %v741
  %808 = vmatpush.bf16.msra.mxu0 %v758
  %809 = vmatpush.bf16.msra.mxu0 %v756
  %810 = vmatpush.bf16.msra.mxu0 %v754
  %811 = vmatpush.bf16.msra.mxu0 %v752
  %812 = vmatpush.bf16.msra.mxu0 %v750
  %813 = vmatpush.bf16.msra.mxu0 %v748
  %814 = vmatpush.bf16.msra.mxu0 %v746
  %815 = vmatpush.bf16.msra.mxu0 %v744
  %816 = vmatmul.bf16.gmra.mxu0 %v616
  %v817 = vpop.f32.mrf.mxu0
  %v818 = vadd.f32 %v431, %v817
  %v819 = vpop.f32.mrf.mxu0
  %v820 = vadd.f32 %v433, %v819
  %821 = vmatmul.bf16.gmra.mxu0 %v618
  %v822 = vpop.f32.mrf.mxu0
  %v823 = vadd.f32 %v436, %v822
  %v824 = vpop.f32.mrf.mxu0
  %v825 = vadd.f32 %v438, %v824
  %826 = vmatmul.bf16.gmra.mxu0 %v620
  %v827 = vpop.f32.mrf.mxu0
  %v828 = vadd.f32 %v441, %v827
  %v829 = vpop.f32.mrf.mxu0
  %v830 = vadd.f32 %v443, %v829
  %831 = vmatmul.bf16.gmra.mxu0 %v622
  %v832 = vpop.f32.mrf.mxu0
  %v833 = vadd.f32 %v446, %v832
  %v834 = vpop.f32.mrf.mxu0
  %v835 = vadd.f32 %v448, %v834
  %836 = vmatmul.bf16.gmra.mxu0 %v624
  %v837 = vpop.f32.mrf.mxu0
  %v838 = vadd.f32 %v451, %v837
  %v839 = vpop.f32.mrf.mxu0
  %v840 = vadd.f32 %v453, %v839
  %841 = vmatmul.bf16.gmra.mxu0 %v626
  %v842 = vpop.f32.mrf.mxu0
  %v843 = vadd.f32 %v456, %v842
  %v844 = vpop.f32.mrf.mxu0
  %v845 = vadd.f32 %v458, %v844
  %846 = vmatmul.bf16.gmra.mxu0 %v628
  %v847 = vpop.f32.mrf.mxu0
  %v848 = vadd.f32 %v461, %v847
  %v849 = vpop.f32.mrf.mxu0
  %v850 = vadd.f32 %v463, %v849
  %851 = vmatmul.bf16.gmra.mxu0 %v630
  %v852 = vpop.f32.mrf.mxu0
  %v853 = vadd.f32 %v466, %v852
  %v854 = vpop.f32.mrf.mxu0
  %v855 = vadd.f32 %v468, %v854
  %856 = vdwg.mxu0
  %857 = vmatpush.bf16.msra.mxu0 %v774
  %858 = vmatpush.bf16.msra.mxu0 %v772
  %859 = vmatpush.bf16.msra.mxu0 %v770
  %860 = vmatpush.bf16.msra.mxu0 %v768
  %861 = vmatpush.bf16.msra.mxu0 %v766
  %862 = vmatpush.bf16.msra.mxu0 %v764
  %863 = vmatpush.bf16.msra.mxu0 %v762
  %864 = vmatpush.bf16.msra.mxu0 %v760
  %865 = vmatmul.bf16.gmra.mxu0 %v617
  %v866 = vpop.f32.mrf.mxu0
  %v867 = vadd.f32 %v818, %v866
  %v868 = vpop.f32.mrf.mxu0
  %v869 = vadd.f32 %v820, %v868
  %870 = vmatmul.bf16.gmra.mxu0 %v619
  %v871 = vpop.f32.mrf.mxu0
  %v872 = vadd.f32 %v823, %v871
  %v873 = vpop.f32.mrf.mxu0
  %v874 = vadd.f32 %v825, %v873
  %875 = vmatmul.bf16.gmra.mxu0 %v621
  %v876 = vpop.f32.mrf.mxu0
  %v877 = vadd.f32 %v828, %v876
  %v878 = vpop.f32.mrf.mxu0
  %v879 = vadd.f32 %v830, %v878
  %880 = vmatmul.bf16.gmra.mxu0 %v623
  %v881 = vpop.f32.mrf.mxu0
  %v882 = vadd.f32 %v833, %v881
  %v883 = vpop.f32.mrf.mxu0
  %v884 = vadd.f32 %v835, %v883
  %885 = vmatmul.bf16.gmra.mxu0 %v625
  %v886 = vpop.f32.mrf.mxu0
  %v887 = vadd.f32 %v838, %v886
  %v888 = vpop.f32.mrf.mxu0
  %v889 = vadd.f32 %v840, %v888
  %890 = vmatmul.bf16.gmra.mxu0 %v627
  %v891 = vpop.f32.mrf.mxu0
  %v892 = vadd.f32 %v843, %v891
  %v893 = vpop.f32.mrf.mxu0
  %v894 = vadd.f32 %v845, %v893
  %895 = vmatmul.bf16.gmra.mxu0 %v629
  %v896 = vpop.f32.mrf.mxu0
  %v897 = vadd.f32 %v848, %v896
  %v898 = vpop.f32.mrf.mxu0
  %v899 = vadd.f32 %v850, %v898
  %900 = vmatmul.bf16.gmra.mxu0 %v631
  %v901 = vpop.f32.mrf.mxu0
  %v902 = vadd.f32 %v853, %v901
  %v903 = vpop.f32.mrf.mxu0
  %v904 = vadd.f32 %v855, %v903
  %905 = vdwg.mxu0
  %906 = vmatpush.bf16.msra.mxu0 %v759
  %907 = vmatpush.bf16.msra.mxu0 %v757
  %908 = vmatpush.bf16.msra.mxu0 %v755
  %909 = vmatpush.bf16.msra.mxu0 %v753
  %910 = vmatpush.bf16.msra.mxu0 %v751
  %911 = vmatpush.bf16.msra.mxu0 %v749
  %912 = vmatpush.bf16.msra.mxu0 %v747
  %913 = vmatpush.bf16.msra.mxu0 %v745
  %914 = vmatmul.bf16.gmra.mxu0 %v616
  %v915 = vpop.f32.mrf.mxu0
  %v916 = vadd.f32 %v529, %v915
  %v917 = vpop.f32.mrf.mxu0
  %v918 = vadd.f32 %v531, %v917
  %919 = vmatmul.bf16.gmra.mxu0 %v618
  %v920 = vpop.f32.mrf.mxu0
  %v921 = vadd.f32 %v534, %v920
  %v922 = vpop.f32.mrf.mxu0
  %v923 = vadd.f32 %v536, %v922
  %924 = vmatmul.bf16.gmra.mxu0 %v620
  %v925 = vpop.f32.mrf.mxu0
  %v926 = vadd.f32 %v539, %v925
  %v927 = vpop.f32.mrf.mxu0
  %v928 = vadd.f32 %v541, %v927
  %929 = vmatmul.bf16.gmra.mxu0 %v622
  %v930 = vpop.f32.mrf.mxu0
  %v931 = vadd.f32 %v544, %v930
  %v932 = vpop.f32.mrf.mxu0
  %v933 = vadd.f32 %v546, %v932
  %934 = vmatmul.bf16.gmra.mxu0 %v624
  %v935 = vpop.f32.mrf.mxu0
  %v936 = vadd.f32 %v549, %v935
  %v937 = vpop.f32.mrf.mxu0
  %v938 = vadd.f32 %v551, %v937
  %939 = vmatmul.bf16.gmra.mxu0 %v626
  %v940 = vpop.f32.mrf.mxu0
  %v941 = vadd.f32 %v554, %v940
  %v942 = vpop.f32.mrf.mxu0
  %v943 = vadd.f32 %v556, %v942
  %944 = vmatmul.bf16.gmra.mxu0 %v628
  %v945 = vpop.f32.mrf.mxu0
  %v946 = vadd.f32 %v559, %v945
  %v947 = vpop.f32.mrf.mxu0
  %v948 = vadd.f32 %v561, %v947
  %949 = vmatmul.bf16.gmra.mxu0 %v630
  %v950 = vpop.f32.mrf.mxu0
  %v951 = vadd.f32 %v564, %v950
  %v952 = vpop.f32.mrf.mxu0
  %v953 = vadd.f32 %v566, %v952
  %954 = vdwg.mxu0
  %955 = vmatpush.bf16.msra.mxu0 %v775
  %956 = vmatpush.bf16.msra.mxu0 %v773
  %957 = vmatpush.bf16.msra.mxu0 %v771
  %958 = vmatpush.bf16.msra.mxu0 %v769
  %959 = vmatpush.bf16.msra.mxu0 %v767
  %960 = vmatpush.bf16.msra.mxu0 %v765
  %961 = vmatpush.bf16.msra.mxu0 %v763
  %962 = vmatpush.bf16.msra.mxu0 %v761
  %963 = vmatmul.bf16.gmra.mxu0 %v617
  %v964 = vpop.f32.mrf.mxu0
  %v965 = vadd.f32 %v916, %v964
  %v966 = vpop.f32.mrf.mxu0
  %v967 = vadd.f32 %v918, %v966
  %968 = vmatmul.bf16.gmra.mxu0 %v619
  %v969 = vpop.f32.mrf.mxu0
  %v970 = vadd.f32 %v921, %v969
  %v971 = vpop.f32.mrf.mxu0
  %v972 = vadd.f32 %v923, %v971
  %973 = vmatmul.bf16.gmra.mxu0 %v621
  %v974 = vpop.f32.mrf.mxu0
  %v975 = vadd.f32 %v926, %v974
  %v976 = vpop.f32.mrf.mxu0
  %v977 = vadd.f32 %v928, %v976
  %978 = vmatmul.bf16.gmra.mxu0 %v623
  %v979 = vpop.f32.mrf.mxu0
  %v980 = vadd.f32 %v931, %v979
  %v981 = vpop.f32.mrf.mxu0
  %v982 = vadd.f32 %v933, %v981
  %983 = vmatmul.bf16.gmra.mxu0 %v625
  %v984 = vpop.f32.mrf.mxu0
  %v985 = vadd.f32 %v936, %v984
  %v986 = vpop.f32.mrf.mxu0
  %v987 = vadd.f32 %v938, %v986
  %988 = vmatmul.bf16.gmra.mxu0 %v627
  %v989 = vpop.f32.mrf.mxu0
  %v990 = vadd.f32 %v941, %v989
  %v991 = vpop.f32.mrf.mxu0
  %v992 = vadd.f32 %v943, %v991
  %993 = vmatmul.bf16.gmra.mxu0 %v629
  %v994 = vpop.f32.mrf.mxu0
  %v995 = vadd.f32 %v946, %v994
  %v996 = vpop.f32.mrf.mxu0
  %v997 = vadd.f32 %v948, %v996
  %998 = vmatmul.bf16.gmra.mxu0 %v631
  %v999 = vpop.f32.mrf.mxu0
  %v1000 = vadd.f32 %v951, %v999
  %v1001 = vpop.f32.mrf.mxu0
  %v1002 = vadd.f32 %v953, %v1001
  %1003 = vdwg.mxu0
  %v1004 = vld [vmem:[%s2] sm:$0xff]
  %v1005 = vld [vmem:[%s2 + $0x8] sm:$0xff]
  %v1006 = vld [vmem:[%s2 + $0x10] sm:$0xff]
  %v1007 = vld [vmem:[%s2 + $0x18] sm:$0xff]
  %v1008 = vld [vmem:[%s2 + $0x20] sm:$0xff]
  %v1009 = vld [vmem:[%s2 + $0x28] sm:$0xff]
  %v1010 = vld [vmem:[%s2 + $0x30] sm:$0xff]
  %v1011 = vld [vmem:[%s2 + $0x38] sm:$0xff]
  %v1012 = vld [vmem:[%s2 + $0x40] sm:$0xff]
  %v1013 = vld [vmem:[%s2 + $0x48] sm:$0xff]
  %v1014 = vld [vmem:[%s2 + $0x50] sm:$0xff]
  %v1015 = vld [vmem:[%s2 + $0x58] sm:$0xff]
  %v1016 = vld [vmem:[%s2 + $0x60] sm:$0xff]
  %v1017 = vld [vmem:[%s2 + $0x68] sm:$0xff]
  %v1018 = vld [vmem:[%s2 + $0x70] sm:$0xff]
  %v1019 = vld [vmem:[%s2 + $0x78] sm:$0xff]
  %s1020 = scalar_lea.vmem %s5, 512
  %v1021 = vld [vmem:[%s1020] sm:$0xff]
  %v1022 = vld [vmem:[%s1020 + $0x8] sm:$0xff]
  %v1023 = vld [vmem:[%s1020 + $0x10] sm:$0xff]
  %v1024 = vld [vmem:[%s1020 + $0x18] sm:$0xff]
  %v1025 = vld [vmem:[%s1020 + $0x20] sm:$0xff]
  %v1026 = vld [vmem:[%s1020 + $0x28] sm:$0xff]
  %v1027 = vld [vmem:[%s1020 + $0x30] sm:$0xff]
  %v1028 = vld [vmem:[%s1020 + $0x38] sm:$0xff]
  %v1029 = vld [vmem:[%s1020 + $0x40] sm:$0xff]
  %v1030 = vld [vmem:[%s1020 + $0x48] sm:$0xff]
  %v1031 = vld [vmem:[%s1020 + $0x50] sm:$0xff]
  %v1032 = vld [vmem:[%s1020 + $0x58] sm:$0xff]
  %v1033 = vld [vmem:[%s1020 + $0x60] sm:$0xff]
  %v1034 = vld [vmem:[%s1020 + $0x68] sm:$0xff]
  %v1035 = vld [vmem:[%s1020 + $0x70] sm:$0xff]
  %v1036 = vld [vmem:[%s1020 + $0x78] sm:$0xff]
  %v1037 = vld [vmem:[%s1020 + $0x80] sm:$0xff]
  %v1038 = vld [vmem:[%s1020 + $0x88] sm:$0xff]
  %v1039 = vld [vmem:[%s1020 + $0x90] sm:$0xff]
  %v1040 = vld [vmem:[%s1020 + $0x98] sm:$0xff]
  %v1041 = vld [vmem:[%s1020 + $0xa0] sm:$0xff]
  %v1042 = vld [vmem:[%s1020 + $0xa8] sm:$0xff]
  %v1043 = vld [vmem:[%s1020 + $0xb0] sm:$0xff]
  %v1044 = vld [vmem:[%s1020 + $0xb8] sm:$0xff]
  %v1045 = vld [vmem:[%s1020 + $0xc0] sm:$0xff]
  %v1046 = vld [vmem:[%s1020 + $0xc8] sm:$0xff]
  %v1047 = vld [vmem:[%s1020 + $0xd0] sm:$0xff]
  %v1048 = vld [vmem:[%s1020 + $0xd8] sm:$0xff]
  %v1049 = vld [vmem:[%s1020 + $0xe0] sm:$0xff]
  %v1050 = vld [vmem:[%s1020 + $0xe8] sm:$0xff]
  %v1051 = vld [vmem:[%s1020 + $0xf0] sm:$0xff]
  %v1052 = vld [vmem:[%s1020 + $0xf8] sm:$0xff]
  %v1069 = vunpack.c.l.b16 %v1004
  %v1070 = vunpack.c.h.b16 %v1004
  %v1071 = vunpack.c.l.b16 %v1005
  %v1072 = vunpack.c.h.b16 %v1005
  %v1073 = vunpack.c.l.b16 %v1006
  %v1074 = vunpack.c.h.b16 %v1006
  %v1075 = vunpack.c.l.b16 %v1007
  %v1076 = vunpack.c.h.b16 %v1007
  %v1077 = vunpack.c.l.b16 %v1008
  %v1078 = vunpack.c.h.b16 %v1008
  %v1079 = vunpack.c.l.b16 %v1009
  %v1080 = vunpack.c.h.b16 %v1009
  %v1081 = vunpack.c.l.b16 %v1010
  %v1082 = vunpack.c.h.b16 %v1010
  %v1083 = vunpack.c.l.b16 %v1011
  %v1084 = vunpack.c.h.b16 %v1011
  %v1085 = vunpack.c.l.b16 %v1012
  %v1086 = vunpack.c.h.b16 %v1012
  %v1087 = vunpack.c.l.b16 %v1013
  %v1088 = vunpack.c.h.b16 %v1013
  %v1089 = vunpack.c.l.b16 %v1014
  %v1090 = vunpack.c.h.b16 %v1014
  %v1091 = vunpack.c.l.b16 %v1015
  %v1092 = vunpack.c.h.b16 %v1015
  %v1093 = vunpack.c.l.b16 %v1016
  %v1094 = vunpack.c.h.b16 %v1016
  %v1095 = vunpack.c.l.b16 %v1017
  %v1096 = vunpack.c.h.b16 %v1017
  %v1097 = vunpack.c.l.b16 %v1018
  %v1098 = vunpack.c.h.b16 %v1018
  %v1099 = vunpack.c.l.b16 %v1019
  %v1100 = vunpack.c.h.b16 %v1019
  %v1101 = vpack.c.b16 %v1071, %v1069
  %v1102 = vpack.c.b16 %v1072, %v1070
  %v1103 = vpack.c.b16 %v1075, %v1073
  %v1104 = vpack.c.b16 %v1076, %v1074
  %v1105 = vpack.c.b16 %v1079, %v1077
  %v1106 = vpack.c.b16 %v1080, %v1078
  %v1107 = vpack.c.b16 %v1083, %v1081
  %v1108 = vpack.c.b16 %v1084, %v1082
  %v1109 = vpack.c.b16 %v1087, %v1085
  %v1110 = vpack.c.b16 %v1088, %v1086
  %v1111 = vpack.c.b16 %v1091, %v1089
  %v1112 = vpack.c.b16 %v1092, %v1090
  %v1113 = vpack.c.b16 %v1095, %v1093
  %v1114 = vpack.c.b16 %v1096, %v1094
  %v1115 = vpack.c.b16 %v1099, %v1097
  %v1116 = vpack.c.b16 %v1100, %v1098
  %v1165 = vunpack.c.l.b16 %v1021
  %v1166 = vunpack.c.h.b16 %v1021
  %v1167 = vunpack.c.l.b16 %v1022
  %v1168 = vunpack.c.h.b16 %v1022
  %v1169 = vunpack.c.l.b16 %v1023
  %v1170 = vunpack.c.h.b16 %v1023
  %v1171 = vunpack.c.l.b16 %v1024
  %v1172 = vunpack.c.h.b16 %v1024
  %v1173 = vunpack.c.l.b16 %v1025
  %v1174 = vunpack.c.h.b16 %v1025
  %v1175 = vunpack.c.l.b16 %v1026
  %v1176 = vunpack.c.h.b16 %v1026
  %v1177 = vunpack.c.l.b16 %v1027
  %v1178 = vunpack.c.h.b16 %v1027
  %v1179 = vunpack.c.l.b16 %v1028
  %v1180 = vunpack.c.h.b16 %v1028
  %v1181 = vunpack.c.l.b16 %v1029
  %v1182 = vunpack.c.h.b16 %v1029
  %v1183 = vunpack.c.l.b16 %v1030
  %v1184 = vunpack.c.h.b16 %v1030
  %v1185 = vunpack.c.l.b16 %v1031
  %v1186 = vunpack.c.h.b16 %v1031
  %v1187 = vunpack.c.l.b16 %v1032
  %v1188 = vunpack.c.h.b16 %v1032
  %v1189 = vunpack.c.l.b16 %v1033
  %v1190 = vunpack.c.h.b16 %v1033
  %v1191 = vunpack.c.l.b16 %v1034
  %v1192 = vunpack.c.h.b16 %v1034
  %v1193 = vunpack.c.l.b16 %v1035
  %v1194 = vunpack.c.h.b16 %v1035
  %v1195 = vunpack.c.l.b16 %v1036
  %v1196 = vunpack.c.h.b16 %v1036
  %v1197 = vunpack.c.l.b16 %v1037
  %v1198 = vunpack.c.h.b16 %v1037
  %v1199 = vunpack.c.l.b16 %v1038
  %v1200 = vunpack.c.h.b16 %v1038
  %v1201 = vunpack.c.l.b16 %v1039
  %v1202 = vunpack.c.h.b16 %v1039
  %v1203 = vunpack.c.l.b16 %v1040
  %v1204 = vunpack.c.h.b16 %v1040
  %v1205 = vunpack.c.l.b16 %v1041
  %v1206 = vunpack.c.h.b16 %v1041
  %v1207 = vunpack.c.l.b16 %v1042
  %v1208 = vunpack.c.h.b16 %v1042
  %v1209 = vunpack.c.l.b16 %v1043
  %v1210 = vunpack.c.h.b16 %v1043
  %v1211 = vunpack.c.l.b16 %v1044
  %v1212 = vunpack.c.h.b16 %v1044
  %v1213 = vunpack.c.l.b16 %v1045
  %v1214 = vunpack.c.h.b16 %v1045
  %v1215 = vunpack.c.l.b16 %v1046
  %v1216 = vunpack.c.h.b16 %v1046
  %v1217 = vunpack.c.l.b16 %v1047
  %v1218 = vunpack.c.h.b16 %v1047
  %v1219 = vunpack.c.l.b16 %v1048
  %v1220 = vunpack.c.h.b16 %v1048
  %v1221 = vunpack.c.l.b16 %v1049
  %v1222 = vunpack.c.h.b16 %v1049
  %v1223 = vunpack.c.l.b16 %v1050
  %v1224 = vunpack.c.h.b16 %v1050
  %v1225 = vunpack.c.l.b16 %v1051
  %v1226 = vunpack.c.h.b16 %v1051
  %v1227 = vunpack.c.l.b16 %v1052
  %v1228 = vunpack.c.h.b16 %v1052
  %v1229 = vpack.c.b16 %v1167, %v1165
  %v1230 = vpack.c.b16 %v1168, %v1166
  %v1231 = vpack.c.b16 %v1171, %v1169
  %v1232 = vpack.c.b16 %v1172, %v1170
  %v1233 = vpack.c.b16 %v1175, %v1173
  %v1234 = vpack.c.b16 %v1176, %v1174
  %v1235 = vpack.c.b16 %v1179, %v1177
  %v1236 = vpack.c.b16 %v1180, %v1178
  %v1237 = vpack.c.b16 %v1183, %v1181
  %v1238 = vpack.c.b16 %v1184, %v1182
  %v1239 = vpack.c.b16 %v1187, %v1185
  %v1240 = vpack.c.b16 %v1188, %v1186
  %v1241 = vpack.c.b16 %v1191, %v1189
  %v1242 = vpack.c.b16 %v1192, %v1190
  %v1243 = vpack.c.b16 %v1195, %v1193
  %v1244 = vpack.c.b16 %v1196, %v1194
  %v1245 = vpack.c.b16 %v1199, %v1197
  %v1246 = vpack.c.b16 %v1200, %v1198
  %v1247 = vpack.c.b16 %v1203, %v1201
  %v1248 = vpack.c.b16 %v1204, %v1202
  %v1249 = vpack.c.b16 %v1207, %v1205
  %v1250 = vpack.c.b16 %v1208, %v1206
  %v1251 = vpack.c.b16 %v1211, %v1209
  %v1252 = vpack.c.b16 %v1212, %v1210
  %v1253 = vpack.c.b16 %v1215, %v1213
  %v1254 = vpack.c.b16 %v1216, %v1214
  %v1255 = vpack.c.b16 %v1219, %v1217
  %v1256 = vpack.c.b16 %v1220, %v1218
  %v1257 = vpack.c.b16 %v1223, %v1221
  %v1258 = vpack.c.b16 %v1224, %v1222
  %v1259 = vpack.c.b16 %v1227, %v1225
  %v1260 = vpack.c.b16 %v1228, %v1226
  %1293 = vmatpush.bf16.msra.mxu0 %v1243
  %1294 = vmatpush.bf16.msra.mxu0 %v1241
  %1295 = vmatpush.bf16.msra.mxu0 %v1239
  %1296 = vmatpush.bf16.msra.mxu0 %v1237
  %1297 = vmatpush.bf16.msra.mxu0 %v1235
  %1298 = vmatpush.bf16.msra.mxu0 %v1233
  %1299 = vmatpush.bf16.msra.mxu0 %v1231
  %1300 = vmatpush.bf16.msra.mxu0 %v1229
  %1301 = vmatmul.bf16.gmra.mxu0 %v1101
  %v1302 = vpop.f32.mrf.mxu0
  %v1303 = vadd.f32 0.0, %v1302
  %v1304 = vpop.f32.mrf.mxu0
  %v1305 = vadd.f32 0.0, %v1304
  %1306 = vmatmul.bf16.gmra.mxu0 %v1103
  %v1307 = vpop.f32.mrf.mxu0
  %v1308 = vadd.f32 0.0, %v1307
  %v1309 = vpop.f32.mrf.mxu0
  %v1310 = vadd.f32 0.0, %v1309
  %1311 = vmatmul.bf16.gmra.mxu0 %v1105
  %v1312 = vpop.f32.mrf.mxu0
  %v1313 = vadd.f32 0.0, %v1312
  %v1314 = vpop.f32.mrf.mxu0
  %v1315 = vadd.f32 0.0, %v1314
  %1316 = vmatmul.bf16.gmra.mxu0 %v1107
  %v1317 = vpop.f32.mrf.mxu0
  %v1318 = vadd.f32 0.0, %v1317
  %v1319 = vpop.f32.mrf.mxu0
  %v1320 = vadd.f32 0.0, %v1319
  %1321 = vmatmul.bf16.gmra.mxu0 %v1109
  %v1322 = vpop.f32.mrf.mxu0
  %v1323 = vadd.f32 0.0, %v1322
  %v1324 = vpop.f32.mrf.mxu0
  %v1325 = vadd.f32 0.0, %v1324
  %1326 = vmatmul.bf16.gmra.mxu0 %v1111
  %v1327 = vpop.f32.mrf.mxu0
  %v1328 = vadd.f32 0.0, %v1327
  %v1329 = vpop.f32.mrf.mxu0
  %v1330 = vadd.f32 0.0, %v1329
  %1331 = vmatmul.bf16.gmra.mxu0 %v1113
  %v1332 = vpop.f32.mrf.mxu0
  %v1333 = vadd.f32 0.0, %v1332
  %v1334 = vpop.f32.mrf.mxu0
  %v1335 = vadd.f32 0.0, %v1334
  %1336 = vmatmul.bf16.gmra.mxu0 %v1115
  %v1337 = vpop.f32.mrf.mxu0
  %v1338 = vadd.f32 0.0, %v1337
  %v1339 = vpop.f32.mrf.mxu0
  %v1340 = vadd.f32 0.0, %v1339
  %1341 = vdwg.mxu0
  %1342 = vmatpush.bf16.msra.mxu0 %v1259
  %1343 = vmatpush.bf16.msra.mxu0 %v1257
  %1344 = vmatpush.bf16.msra.mxu0 %v1255
  %1345 = vmatpush.bf16.msra.mxu0 %v1253
  %1346 = vmatpush.bf16.msra.mxu0 %v1251
  %1347 = vmatpush.bf16.msra.mxu0 %v1249
  %1348 = vmatpush.bf16.msra.mxu0 %v1247
  %1349 = vmatpush.bf16.msra.mxu0 %v1245
  %1350 = vmatmul.bf16.gmra.mxu0 %v1102
  %v1351 = vpop.f32.mrf.mxu0
  %v1352 = vadd.f32 %v1303, %v1351
  %v1353 = vpop.f32.mrf.mxu0
  %v1354 = vadd.f32 %v1305, %v1353
  %1355 = vmatmul.bf16.gmra.mxu0 %v1104
  %v1356 = vpop.f32.mrf.mxu0
  %v1357 = vadd.f32 %v1308, %v1356
  %v1358 = vpop.f32.mrf.mxu0
  %v1359 = vadd.f32 %v1310, %v1358
  %1360 = vmatmul.bf16.gmra.mxu0 %v1106
  %v1361 = vpop.f32.mrf.mxu0
  %v1362 = vadd.f32 %v1313, %v1361
  %v1363 = vpop.f32.mrf.mxu0
  %v1364 = vadd.f32 %v1315, %v1363
  %1365 = vmatmul.bf16.gmra.mxu0 %v1108
  %v1366 = vpop.f32.mrf.mxu0
  %v1367 = vadd.f32 %v1318, %v1366
  %v1368 = vpop.f32.mrf.mxu0
  %v1369 = vadd.f32 %v1320, %v1368
  %1370 = vmatmul.bf16.gmra.mxu0 %v1110
  %v1371 = vpop.f32.mrf.mxu0
  %v1372 = vadd.f32 %v1323, %v1371
  %v1373 = vpop.f32.mrf.mxu0
  %v1374 = vadd.f32 %v1325, %v1373
  %1375 = vmatmul.bf16.gmra.mxu0 %v1112
  %v1376 = vpop.f32.mrf.mxu0
  %v1377 = vadd.f32 %v1328, %v1376
  %v1378 = vpop.f32.mrf.mxu0
  %v1379 = vadd.f32 %v1330, %v1378
  %1380 = vmatmul.bf16.gmra.mxu0 %v1114
  %v1381 = vpop.f32.mrf.mxu0
  %v1382 = vadd.f32 %v1333, %v1381
  %v1383 = vpop.f32.mrf.mxu0
  %v1384 = vadd.f32 %v1335, %v1383
  %1385 = vmatmul.bf16.gmra.mxu0 %v1116
  %v1386 = vpop.f32.mrf.mxu0
  %v1387 = vadd.f32 %v1338, %v1386
  %v1388 = vpop.f32.mrf.mxu0
  %v1389 = vadd.f32 %v1340, %v1388
  %1390 = vdwg.mxu0
  %1391 = vmatpush.bf16.msra.mxu0 %v1244
  %1392 = vmatpush.bf16.msra.mxu0 %v1242
  %1393 = vmatpush.bf16.msra.mxu0 %v1240
  %1394 = vmatpush.bf16.msra.mxu0 %v1238
  %1395 = vmatpush.bf16.msra.mxu0 %v1236
  %1396 = vmatpush.bf16.msra.mxu0 %v1234
  %1397 = vmatpush.bf16.msra.mxu0 %v1232
  %1398 = vmatpush.bf16.msra.mxu0 %v1230
  %1399 = vmatmul.bf16.gmra.mxu0 %v1101
  %v1400 = vpop.f32.mrf.mxu0
  %v1401 = vadd.f32 0.0, %v1400
  %v1402 = vpop.f32.mrf.mxu0
  %v1403 = vadd.f32 0.0, %v1402
  %1404 = vmatmul.bf16.gmra.mxu0 %v1103
  %v1405 = vpop.f32.mrf.mxu0
  %v1406 = vadd.f32 0.0, %v1405
  %v1407 = vpop.f32.mrf.mxu0
  %v1408 = vadd.f32 0.0, %v1407
  %1409 = vmatmul.bf16.gmra.mxu0 %v1105
  %v1410 = vpop.f32.mrf.mxu0
  %v1411 = vadd.f32 0.0, %v1410
  %v1412 = vpop.f32.mrf.mxu0
  %v1413 = vadd.f32 0.0, %v1412
  %1414 = vmatmul.bf16.gmra.mxu0 %v1107
  %v1415 = vpop.f32.mrf.mxu0
  %v1416 = vadd.f32 0.0, %v1415
  %v1417 = vpop.f32.mrf.mxu0
  %v1418 = vadd.f32 0.0, %v1417
  %1419 = vmatmul.bf16.gmra.mxu0 %v1109
  %v1420 = vpop.f32.mrf.mxu0
  %v1421 = vadd.f32 0.0, %v1420
  %v1422 = vpop.f32.mrf.mxu0
  %v1423 = vadd.f32 0.0, %v1422
  %1424 = vmatmul.bf16.gmra.mxu0 %v1111
  %v1425 = vpop.f32.mrf.mxu0
  %v1426 = vadd.f32 0.0, %v1425
  %v1427 = vpop.f32.mrf.mxu0
  %v1428 = vadd.f32 0.0, %v1427
  %1429 = vmatmul.bf16.gmra.mxu0 %v1113
  %v1430 = vpop.f32.mrf.mxu0
  %v1431 = vadd.f32 0.0, %v1430
  %v1432 = vpop.f32.mrf.mxu0
  %v1433 = vadd.f32 0.0, %v1432
  %1434 = vmatmul.bf16.gmra.mxu0 %v1115
  %v1435 = vpop.f32.mrf.mxu0
  %v1436 = vadd.f32 0.0, %v1435
  %v1437 = vpop.f32.mrf.mxu0
  %v1438 = vadd.f32 0.0, %v1437
  %1439 = vdwg.mxu0
  %1440 = vmatpush.bf16.msra.mxu0 %v1260
  %1441 = vmatpush.bf16.msra.mxu0 %v1258
  %1442 = vmatpush.bf16.msra.mxu0 %v1256
  %1443 = vmatpush.bf16.msra.mxu0 %v1254
  %1444 = vmatpush.bf16.msra.mxu0 %v1252
  %1445 = vmatpush.bf16.msra.mxu0 %v1250
  %1446 = vmatpush.bf16.msra.mxu0 %v1248
  %1447 = vmatpush.bf16.msra.mxu0 %v1246
  %1448 = vmatmul.bf16.gmra.mxu0 %v1102
  %v1449 = vpop.f32.mrf.mxu0
  %v1450 = vadd.f32 %v1401, %v1449
  %v1451 = vpop.f32.mrf.mxu0
  %v1452 = vadd.f32 %v1403, %v1451
  %1453 = vmatmul.bf16.gmra.mxu0 %v1104
  %v1454 = vpop.f32.mrf.mxu0
  %v1455 = vadd.f32 %v1406, %v1454
  %v1456 = vpop.f32.mrf.mxu0
  %v1457 = vadd.f32 %v1408, %v1456
  %1458 = vmatmul.bf16.gmra.mxu0 %v1106
  %v1459 = vpop.f32.mrf.mxu0
  %v1460 = vadd.f32 %v1411, %v1459
  %v1461 = vpop.f32.mrf.mxu0
  %v1462 = vadd.f32 %v1413, %v1461
  %1463 = vmatmul.bf16.gmra.mxu0 %v1108
  %v1464 = vpop.f32.mrf.mxu0
  %v1465 = vadd.f32 %v1416, %v1464
  %v1466 = vpop.f32.mrf.mxu0
  %v1467 = vadd.f32 %v1418, %v1466
  %1468 = vmatmul.bf16.gmra.mxu0 %v1110
  %v1469 = vpop.f32.mrf.mxu0
  %v1470 = vadd.f32 %v1421, %v1469
  %v1471 = vpop.f32.mrf.mxu0
  %v1472 = vadd.f32 %v1423, %v1471
  %1473 = vmatmul.bf16.gmra.mxu0 %v1112
  %v1474 = vpop.f32.mrf.mxu0
  %v1475 = vadd.f32 %v1426, %v1474
  %v1476 = vpop.f32.mrf.mxu0
  %v1477 = vadd.f32 %v1428, %v1476
  %1478 = vmatmul.bf16.gmra.mxu0 %v1114
  %v1479 = vpop.f32.mrf.mxu0
  %v1480 = vadd.f32 %v1431, %v1479
  %v1481 = vpop.f32.mrf.mxu0
  %v1482 = vadd.f32 %v1433, %v1481
  %1483 = vmatmul.bf16.gmra.mxu0 %v1116
  %v1484 = vpop.f32.mrf.mxu0
  %v1485 = vadd.f32 %v1436, %v1484
  %v1486 = vpop.f32.mrf.mxu0
  %v1487 = vadd.f32 %v1438, %v1486
  %1488 = vdwg.mxu0
  %v1489 = vadd.f32 %v867, %v1352
  %v1490 = vadd.f32 %v965, %v1450
  %v1491 = vadd.f32 %v869, %v1354
  %v1492 = vadd.f32 %v967, %v1452
  %v1493 = vadd.f32 %v872, %v1357
  %v1494 = vadd.f32 %v970, %v1455
  %v1495 = vadd.f32 %v874, %v1359
  %v1496 = vadd.f32 %v972, %v1457
  %v1497 = vadd.f32 %v877, %v1362
  %v1498 = vadd.f32 %v975, %v1460
  %v1499 = vadd.f32 %v879, %v1364
  %v1500 = vadd.f32 %v977, %v1462
  %v1501 = vadd.f32 %v882, %v1367
  %v1502 = vadd.f32 %v980, %v1465
  %v1503 = vadd.f32 %v884, %v1369
  %v1504 = vadd.f32 %v982, %v1467
  %v1505 = vadd.f32 %v887, %v1372
  %v1506 = vadd.f32 %v985, %v1470
  %v1507 = vadd.f32 %v889, %v1374
  %v1508 = vadd.f32 %v987, %v1472
  %v1509 = vadd.f32 %v892, %v1377
  %v1510 = vadd.f32 %v990, %v1475
  %v1511 = vadd.f32 %v894, %v1379
  %v1512 = vadd.f32 %v992, %v1477
  %v1513 = vadd.f32 %v897, %v1382
  %v1514 = vadd.f32 %v995, %v1480
  %v1515 = vadd.f32 %v899, %v1384
  %v1516 = vadd.f32 %v997, %v1482
  %v1517 = vadd.f32 %v902, %v1387
  %v1518 = vadd.f32 %v1000, %v1485
  %v1519 = vadd.f32 %v904, %v1389
  %v1520 = vadd.f32 %v1002, %v1487
  %v1521 = vld [vmem:[%s3] sm:$0xff]
  %v1522 = vld [vmem:[%s3 + $0x8] sm:$0xff]
  %v1523 = vld [vmem:[%s3 + $0x10] sm:$0xff]
  %v1524 = vld [vmem:[%s3 + $0x18] sm:$0xff]
  %v1525 = vld [vmem:[%s3 + $0x20] sm:$0xff]
  %v1526 = vld [vmem:[%s3 + $0x28] sm:$0xff]
  %v1527 = vld [vmem:[%s3 + $0x30] sm:$0xff]
  %v1528 = vld [vmem:[%s3 + $0x38] sm:$0xff]
  %v1529 = vld [vmem:[%s3 + $0x40] sm:$0xff]
  %v1530 = vld [vmem:[%s3 + $0x48] sm:$0xff]
  %v1531 = vld [vmem:[%s3 + $0x50] sm:$0xff]
  %v1532 = vld [vmem:[%s3 + $0x58] sm:$0xff]
  %v1533 = vld [vmem:[%s3 + $0x60] sm:$0xff]
  %v1534 = vld [vmem:[%s3 + $0x68] sm:$0xff]
  %v1535 = vld [vmem:[%s3 + $0x70] sm:$0xff]
  %v1536 = vld [vmem:[%s3 + $0x78] sm:$0xff]
  %s1537 = scalar_lea.vmem %s5, 768
  %v1538 = vld [vmem:[%s1537] sm:$0xff]
  %v1539 = vld [vmem:[%s1537 + $0x8] sm:$0xff]
  %v1540 = vld [vmem:[%s1537 + $0x10] sm:$0xff]
  %v1541 = vld [vmem:[%s1537 + $0x18] sm:$0xff]
  %v1542 = vld [vmem:[%s1537 + $0x20] sm:$0xff]
  %v1543 = vld [vmem:[%s1537 + $0x28] sm:$0xff]
  %v1544 = vld [vmem:[%s1537 + $0x30] sm:$0xff]
  %v1545 = vld [vmem:[%s1537 + $0x38] sm:$0xff]
  %v1546 = vld [vmem:[%s1537 + $0x40] sm:$0xff]
  %v1547 = vld [vmem:[%s1537 + $0x48] sm:$0xff]
  %v1548 = vld [vmem:[%s1537 + $0x50] sm:$0xff]
  %v1549 = vld [vmem:[%s1537 + $0x58] sm:$0xff]
  %v1550 = vld [vmem:[%s1537 + $0x60] sm:$0xff]
  %v1551 = vld [vmem:[%s1537 + $0x68] sm:$0xff]
  %v1552 = vld [vmem:[%s1537 + $0x70] sm:$0xff]
  %v1553 = vld [vmem:[%s1537 + $0x78] sm:$0xff]
  %v1554 = vld [vmem:[%s1537 + $0x80] sm:$0xff]
  %v1555 = vld [vmem:[%s1537 + $0x88] sm:$0xff]
  %v1556 = vld [vmem:[%s1537 + $0x90] sm:$0xff]
  %v1557 = vld [vmem:[%s1537 + $0x98] sm:$0xff]
  %v1558 = vld [vmem:[%s1537 + $0xa0] sm:$0xff]
  %v1559 = vld [vmem:[%s1537 + $0xa8] sm:$0xff]
  %v1560 = vld [vmem:[%s1537 + $0xb0] sm:$0xff]
  %v1561 = vld [vmem:[%s1537 + $0xb8] sm:$0xff]
  %v1562 = vld [vmem:[%s1537 + $0xc0] sm:$0xff]
  %v1563 = vld [vmem:[%s1537 + $0xc8] sm:$0xff]
  %v1564 = vld [vmem:[%s1537 + $0xd0] sm:$0xff]
  %v1565 = vld [vmem:[%s1537 + $0xd8] sm:$0xff]
  %v1566 = vld [vmem:[%s1537 + $0xe0] sm:$0xff]
  %v1567 = vld [vmem:[%s1537 + $0xe8] sm:$0xff]
  %v1568 = vld [vmem:[%s1537 + $0xf0] sm:$0xff]
  %v1569 = vld [vmem:[%s1537 + $0xf8] sm:$0xff]
  %v1586 = vunpack.c.l.b16 %v1521
  %v1587 = vunpack.c.h.b16 %v1521
  %v1588 = vunpack.c.l.b16 %v1522
  %v1589 = vunpack.c.h.b16 %v1522
  %v1590 = vunpack.c.l.b16 %v1523
  %v1591 = vunpack.c.h.b16 %v1523
  %v1592 = vunpack.c.l.b16 %v1524
  %v1593 = vunpack.c.h.b16 %v1524
  %v1594 = vunpack.c.l.b16 %v1525
  %v1595 = vunpack.c.h.b16 %v1525
  %v1596 = vunpack.c.l.b16 %v1526
  %v1597 = vunpack.c.h.b16 %v1526
  %v1598 = vunpack.c.l.b16 %v1527
  %v1599 = vunpack.c.h.b16 %v1527
  %v1600 = vunpack.c.l.b16 %v1528
  %v1601 = vunpack.c.h.b16 %v1528
  %v1602 = vunpack.c.l.b16 %v1529
  %v1603 = vunpack.c.h.b16 %v1529
  %v1604 = vunpack.c.l.b16 %v1530
  %v1605 = vunpack.c.h.b16 %v1530
  %v1606 = vunpack.c.l.b16 %v1531
  %v1607 = vunpack.c.h.b16 %v1531
  %v1608 = vunpack.c.l.b16 %v1532
  %v1609 = vunpack.c.h.b16 %v1532
  %v1610 = vunpack.c.l.b16 %v1533
  %v1611 = vunpack.c.h.b16 %v1533
  %v1612 = vunpack.c.l.b16 %v1534
  %v1613 = vunpack.c.h.b16 %v1534
  %v1614 = vunpack.c.l.b16 %v1535
  %v1615 = vunpack.c.h.b16 %v1535
  %v1616 = vunpack.c.l.b16 %v1536
  %v1617 = vunpack.c.h.b16 %v1536
  %v1618 = vpack.c.b16 %v1588, %v1586
  %v1619 = vpack.c.b16 %v1589, %v1587
  %v1620 = vpack.c.b16 %v1592, %v1590
  %v1621 = vpack.c.b16 %v1593, %v1591
  %v1622 = vpack.c.b16 %v1596, %v1594
  %v1623 = vpack.c.b16 %v1597, %v1595
  %v1624 = vpack.c.b16 %v1600, %v1598
  %v1625 = vpack.c.b16 %v1601, %v1599
  %v1626 = vpack.c.b16 %v1604, %v1602
  %v1627 = vpack.c.b16 %v1605, %v1603
  %v1628 = vpack.c.b16 %v1608, %v1606
  %v1629 = vpack.c.b16 %v1609, %v1607
  %v1630 = vpack.c.b16 %v1612, %v1610
  %v1631 = vpack.c.b16 %v1613, %v1611
  %v1632 = vpack.c.b16 %v1616, %v1614
  %v1633 = vpack.c.b16 %v1617, %v1615
  %v1682 = vunpack.c.l.b16 %v1538
  %v1683 = vunpack.c.h.b16 %v1538
  %v1684 = vunpack.c.l.b16 %v1539
  %v1685 = vunpack.c.h.b16 %v1539
  %v1686 = vunpack.c.l.b16 %v1540
  %v1687 = vunpack.c.h.b16 %v1540
  %v1688 = vunpack.c.l.b16 %v1541
  %v1689 = vunpack.c.h.b16 %v1541
  %v1690 = vunpack.c.l.b16 %v1542
  %v1691 = vunpack.c.h.b16 %v1542
  %v1692 = vunpack.c.l.b16 %v1543
  %v1693 = vunpack.c.h.b16 %v1543
  %v1694 = vunpack.c.l.b16 %v1544
  %v1695 = vunpack.c.h.b16 %v1544
  %v1696 = vunpack.c.l.b16 %v1545
  %v1697 = vunpack.c.h.b16 %v1545
  %v1698 = vunpack.c.l.b16 %v1546
  %v1699 = vunpack.c.h.b16 %v1546
  %v1700 = vunpack.c.l.b16 %v1547
  %v1701 = vunpack.c.h.b16 %v1547
  %v1702 = vunpack.c.l.b16 %v1548
  %v1703 = vunpack.c.h.b16 %v1548
  %v1704 = vunpack.c.l.b16 %v1549
  %v1705 = vunpack.c.h.b16 %v1549
  %v1706 = vunpack.c.l.b16 %v1550
  %v1707 = vunpack.c.h.b16 %v1550
  %v1708 = vunpack.c.l.b16 %v1551
  %v1709 = vunpack.c.h.b16 %v1551
  %v1710 = vunpack.c.l.b16 %v1552
  %v1711 = vunpack.c.h.b16 %v1552
  %v1712 = vunpack.c.l.b16 %v1553
  %v1713 = vunpack.c.h.b16 %v1553
  %v1714 = vunpack.c.l.b16 %v1554
  %v1715 = vunpack.c.h.b16 %v1554
  %v1716 = vunpack.c.l.b16 %v1555
  %v1717 = vunpack.c.h.b16 %v1555
  %v1718 = vunpack.c.l.b16 %v1556
  %v1719 = vunpack.c.h.b16 %v1556
  %v1720 = vunpack.c.l.b16 %v1557
  %v1721 = vunpack.c.h.b16 %v1557
  %v1722 = vunpack.c.l.b16 %v1558
  %v1723 = vunpack.c.h.b16 %v1558
  %v1724 = vunpack.c.l.b16 %v1559
  %v1725 = vunpack.c.h.b16 %v1559
  %v1726 = vunpack.c.l.b16 %v1560
  %v1727 = vunpack.c.h.b16 %v1560
  %v1728 = vunpack.c.l.b16 %v1561
  %v1729 = vunpack.c.h.b16 %v1561
  %v1730 = vunpack.c.l.b16 %v1562
  %v1731 = vunpack.c.h.b16 %v1562
  %v1732 = vunpack.c.l.b16 %v1563
  %v1733 = vunpack.c.h.b16 %v1563
  %v1734 = vunpack.c.l.b16 %v1564
  %v1735 = vunpack.c.h.b16 %v1564
  %v1736 = vunpack.c.l.b16 %v1565
  %v1737 = vunpack.c.h.b16 %v1565
  %v1738 = vunpack.c.l.b16 %v1566
  %v1739 = vunpack.c.h.b16 %v1566
  %v1740 = vunpack.c.l.b16 %v1567
  %v1741 = vunpack.c.h.b16 %v1567
  %v1742 = vunpack.c.l.b16 %v1568
  %v1743 = vunpack.c.h.b16 %v1568
  %v1744 = vunpack.c.l.b16 %v1569
  %v1745 = vunpack.c.h.b16 %v1569
  %v1746 = vpack.c.b16 %v1684, %v1682
  %v1747 = vpack.c.b16 %v1685, %v1683
  %v1748 = vpack.c.b16 %v1688, %v1686
  %v1749 = vpack.c.b16 %v1689, %v1687
  %v1750 = vpack.c.b16 %v1692, %v1690
  %v1751 = vpack.c.b16 %v1693, %v1691
  %v1752 = vpack.c.b16 %v1696, %v1694
  %v1753 = vpack.c.b16 %v1697, %v1695
  %v1754 = vpack.c.b16 %v1700, %v1698
  %v1755 = vpack.c.b16 %v1701, %v1699
  %v1756 = vpack.c.b16 %v1704, %v1702
  %v1757 = vpack.c.b16 %v1705, %v1703
  %v1758 = vpack.c.b16 %v1708, %v1706
  %v1759 = vpack.c.b16 %v1709, %v1707
  %v1760 = vpack.c.b16 %v1712, %v1710
  %v1761 = vpack.c.b16 %v1713, %v1711
  %v1762 = vpack.c.b16 %v1716, %v1714
  %v1763 = vpack.c.b16 %v1717, %v1715
  %v1764 = vpack.c.b16 %v1720, %v1718
  %v1765 = vpack.c.b16 %v1721, %v1719
  %v1766 = vpack.c.b16 %v1724, %v1722
  %v1767 = vpack.c.b16 %v1725, %v1723
  %v1768 = vpack.c.b16 %v1728, %v1726
  %v1769 = vpack.c.b16 %v1729, %v1727
  %v1770 = vpack.c.b16 %v1732, %v1730
  %v1771 = vpack.c.b16 %v1733, %v1731
  %v1772 = vpack.c.b16 %v1736, %v1734
  %v1773 = vpack.c.b16 %v1737, %v1735
  %v1774 = vpack.c.b16 %v1740, %v1738
  %v1775 = vpack.c.b16 %v1741, %v1739
  %v1776 = vpack.c.b16 %v1744, %v1742
  %v1777 = vpack.c.b16 %v1745, %v1743
  %1810 = vmatpush.bf16.msra.mxu0 %v1760
  %1811 = vmatpush.bf16.msra.mxu0 %v1758
  %1812 = vmatpush.bf16.msra.mxu0 %v1756
  %1813 = vmatpush.bf16.msra.mxu0 %v1754
  %1814 = vmatpush.bf16.msra.mxu0 %v1752
  %1815 = vmatpush.bf16.msra.mxu0 %v1750
  %1816 = vmatpush.bf16.msra.mxu0 %v1748
  %1817 = vmatpush.bf16.msra.mxu0 %v1746
  %1818 = vmatmul.bf16.gmra.mxu0 %v1618
  %v1819 = vpop.f32.mrf.mxu0
  %v1820 = vadd.f32 0.0, %v1819
  %v1821 = vpop.f32.mrf.mxu0
  %v1822 = vadd.f32 0.0, %v1821
  %1823 = vmatmul.bf16.gmra.mxu0 %v1620
  %v1824 = vpop.f32.mrf.mxu0
  %v1825 = vadd.f32 0.0, %v1824
  %v1826 = vpop.f32.mrf.mxu0
  %v1827 = vadd.f32 0.0, %v1826
  %1828 = vmatmul.bf16.gmra.mxu0 %v1622
  %v1829 = vpop.f32.mrf.mxu0
  %v1830 = vadd.f32 0.0, %v1829
  %v1831 = vpop.f32.mrf.mxu0
  %v1832 = vadd.f32 0.0, %v1831
  %1833 = vmatmul.bf16.gmra.mxu0 %v1624
  %v1834 = vpop.f32.mrf.mxu0
  %v1835 = vadd.f32 0.0, %v1834
  %v1836 = vpop.f32.mrf.mxu0
  %v1837 = vadd.f32 0.0, %v1836
  %1838 = vmatmul.bf16.gmra.mxu0 %v1626
  %v1839 = vpop.f32.mrf.mxu0
  %v1840 = vadd.f32 0.0, %v1839
  %v1841 = vpop.f32.mrf.mxu0
  %v1842 = vadd.f32 0.0, %v1841
  %1843 = vmatmul.bf16.gmra.mxu0 %v1628
  %v1844 = vpop.f32.mrf.mxu0
  %v1845 = vadd.f32 0.0, %v1844
  %v1846 = vpop.f32.mrf.mxu0
  %v1847 = vadd.f32 0.0, %v1846
  %1848 = vmatmul.bf16.gmra.mxu0 %v1630
  %v1849 = vpop.f32.mrf.mxu0
  %v1850 = vadd.f32 0.0, %v1849
  %v1851 = vpop.f32.mrf.mxu0
  %v1852 = vadd.f32 0.0, %v1851
  %1853 = vmatmul.bf16.gmra.mxu0 %v1632
  %v1854 = vpop.f32.mrf.mxu0
  %v1855 = vadd.f32 0.0, %v1854
  %v1856 = vpop.f32.mrf.mxu0
  %v1857 = vadd.f32 0.0, %v1856
  %1858 = vdwg.mxu0
  %1859 = vmatpush.bf16.msra.mxu0 %v1776
  %1860 = vmatpush.bf16.msra.mxu0 %v1774
  %1861 = vmatpush.bf16.msra.mxu0 %v1772
  %1862 = vmatpush.bf16.msra.mxu0 %v1770
  %1863 = vmatpush.bf16.msra.mxu0 %v1768
  %1864 = vmatpush.bf16.msra.mxu0 %v1766
  %1865 = vmatpush.bf16.msra.mxu0 %v1764
  %1866 = vmatpush.bf16.msra.mxu0 %v1762
  %1867 = vmatmul.bf16.gmra.mxu0 %v1619
  %v1868 = vpop.f32.mrf.mxu0
  %v1869 = vadd.f32 %v1820, %v1868
  %v1870 = vpop.f32.mrf.mxu0
  %v1871 = vadd.f32 %v1822, %v1870
  %1872 = vmatmul.bf16.gmra.mxu0 %v1621
  %v1873 = vpop.f32.mrf.mxu0
  %v1874 = vadd.f32 %v1825, %v1873
  %v1875 = vpop.f32.mrf.mxu0
  %v1876 = vadd.f32 %v1827, %v1875
  %1877 = vmatmul.bf16.gmra.mxu0 %v1623
  %v1878 = vpop.f32.mrf.mxu0
  %v1879 = vadd.f32 %v1830, %v1878
  %v1880 = vpop.f32.mrf.mxu0
  %v1881 = vadd.f32 %v1832, %v1880
  %1882 = vmatmul.bf16.gmra.mxu0 %v1625
  %v1883 = vpop.f32.mrf.mxu0
  %v1884 = vadd.f32 %v1835, %v1883
  %v1885 = vpop.f32.mrf.mxu0
  %v1886 = vadd.f32 %v1837, %v1885
  %1887 = vmatmul.bf16.gmra.mxu0 %v1627
  %v1888 = vpop.f32.mrf.mxu0
  %v1889 = vadd.f32 %v1840, %v1888
  %v1890 = vpop.f32.mrf.mxu0
  %v1891 = vadd.f32 %v1842, %v1890
  %1892 = vmatmul.bf16.gmra.mxu0 %v1629
  %v1893 = vpop.f32.mrf.mxu0
  %v1894 = vadd.f32 %v1845, %v1893
  %v1895 = vpop.f32.mrf.mxu0
  %v1896 = vadd.f32 %v1847, %v1895
  %1897 = vmatmul.bf16.gmra.mxu0 %v1631
  %v1898 = vpop.f32.mrf.mxu0
  %v1899 = vadd.f32 %v1850, %v1898
  %v1900 = vpop.f32.mrf.mxu0
  %v1901 = vadd.f32 %v1852, %v1900
  %1902 = vmatmul.bf16.gmra.mxu0 %v1633
  %v1903 = vpop.f32.mrf.mxu0
  %v1904 = vadd.f32 %v1855, %v1903
  %v1905 = vpop.f32.mrf.mxu0
  %v1906 = vadd.f32 %v1857, %v1905
  %1907 = vdwg.mxu0
  %1908 = vmatpush.bf16.msra.mxu0 %v1761
  %1909 = vmatpush.bf16.msra.mxu0 %v1759
  %1910 = vmatpush.bf16.msra.mxu0 %v1757
  %1911 = vmatpush.bf16.msra.mxu0 %v1755
  %1912 = vmatpush.bf16.msra.mxu0 %v1753
  %1913 = vmatpush.bf16.msra.mxu0 %v1751
  %1914 = vmatpush.bf16.msra.mxu0 %v1749
  %1915 = vmatpush.bf16.msra.mxu0 %v1747
  %1916 = vmatmul.bf16.gmra.mxu0 %v1618
  %v1917 = vpop.f32.mrf.mxu0
  %v1918 = vadd.f32 0.0, %v1917
  %v1919 = vpop.f32.mrf.mxu0
  %v1920 = vadd.f32 0.0, %v1919
  %1921 = vmatmul.bf16.gmra.mxu0 %v1620
  %v1922 = vpop.f32.mrf.mxu0
  %v1923 = vadd.f32 0.0, %v1922
  %v1924 = vpop.f32.mrf.mxu0
  %v1925 = vadd.f32 0.0, %v1924
  %1926 = vmatmul.bf16.gmra.mxu0 %v1622
  %v1927 = vpop.f32.mrf.mxu0
  %v1928 = vadd.f32 0.0, %v1927
  %v1929 = vpop.f32.mrf.mxu0
  %v1930 = vadd.f32 0.0, %v1929
  %1931 = vmatmul.bf16.gmra.mxu0 %v1624
  %v1932 = vpop.f32.mrf.mxu0
  %v1933 = vadd.f32 0.0, %v1932
  %v1934 = vpop.f32.mrf.mxu0
  %v1935 = vadd.f32 0.0, %v1934
  %1936 = vmatmul.bf16.gmra.mxu0 %v1626
  %v1937 = vpop.f32.mrf.mxu0
  %v1938 = vadd.f32 0.0, %v1937
  %v1939 = vpop.f32.mrf.mxu0
  %v1940 = vadd.f32 0.0, %v1939
  %1941 = vmatmul.bf16.gmra.mxu0 %v1628
  %v1942 = vpop.f32.mrf.mxu0
  %v1943 = vadd.f32 0.0, %v1942
  %v1944 = vpop.f32.mrf.mxu0
  %v1945 = vadd.f32 0.0, %v1944
  %1946 = vmatmul.bf16.gmra.mxu0 %v1630
  %v1947 = vpop.f32.mrf.mxu0
  %v1948 = vadd.f32 0.0, %v1947
  %v1949 = vpop.f32.mrf.mxu0
  %v1950 = vadd.f32 0.0, %v1949
  %1951 = vmatmul.bf16.gmra.mxu0 %v1632
  %v1952 = vpop.f32.mrf.mxu0
  %v1953 = vadd.f32 0.0, %v1952
  %v1954 = vpop.f32.mrf.mxu0
  %v1955 = vadd.f32 0.0, %v1954
  %1956 = vdwg.mxu0
  %1957 = vmatpush.bf16.msra.mxu0 %v1777
  %1958 = vmatpush.bf16.msra.mxu0 %v1775
  %1959 = vmatpush.bf16.msra.mxu0 %v1773
  %1960 = vmatpush.bf16.msra.mxu0 %v1771
  %1961 = vmatpush.bf16.msra.mxu0 %v1769
  %1962 = vmatpush.bf16.msra.mxu0 %v1767
  %1963 = vmatpush.bf16.msra.mxu0 %v1765
  %1964 = vmatpush.bf16.msra.mxu0 %v1763
  %1965 = vmatmul.bf16.gmra.mxu0 %v1619
  %v1966 = vpop.f32.mrf.mxu0
  %v1967 = vadd.f32 %v1918, %v1966
  %v1968 = vpop.f32.mrf.mxu0
  %v1969 = vadd.f32 %v1920, %v1968
  %1970 = vmatmul.bf16.gmra.mxu0 %v1621
  %v1971 = vpop.f32.mrf.mxu0
  %v1972 = vadd.f32 %v1923, %v1971
  %v1973 = vpop.f32.mrf.mxu0
  %v1974 = vadd.f32 %v1925, %v1973
  %1975 = vmatmul.bf16.gmra.mxu0 %v1623
  %v1976 = vpop.f32.mrf.mxu0
  %v1977 = vadd.f32 %v1928, %v1976
  %v1978 = vpop.f32.mrf.mxu0
  %v1979 = vadd.f32 %v1930, %v1978
  %1980 = vmatmul.bf16.gmra.mxu0 %v1625
  %v1981 = vpop.f32.mrf.mxu0
  %v1982 = vadd.f32 %v1933, %v1981
  %v1983 = vpop.f32.mrf.mxu0
  %v1984 = vadd.f32 %v1935, %v1983
  %1985 = vmatmul.bf16.gmra.mxu0 %v1627
  %v1986 = vpop.f32.mrf.mxu0
  %v1987 = vadd.f32 %v1938, %v1986
  %v1988 = vpop.f32.mrf.mxu0
  %v1989 = vadd.f32 %v1940, %v1988
  %1990 = vmatmul.bf16.gmra.mxu0 %v1629
  %v1991 = vpop.f32.mrf.mxu0
  %v1992 = vadd.f32 %v1943, %v1991
  %v1993 = vpop.f32.mrf.mxu0
  %v1994 = vadd.f32 %v1945, %v1993
  %1995 = vmatmul.bf16.gmra.mxu0 %v1631
  %v1996 = vpop.f32.mrf.mxu0
  %v1997 = vadd.f32 %v1948, %v1996
  %v1998 = vpop.f32.mrf.mxu0
  %v1999 = vadd.f32 %v1950, %v1998
  %2000 = vmatmul.bf16.gmra.mxu0 %v1633
  %v2001 = vpop.f32.mrf.mxu0
  %v2002 = vadd.f32 %v1953, %v2001
  %v2003 = vpop.f32.mrf.mxu0
  %v2004 = vadd.f32 %v1955, %v2003
  %2005 = vdwg.mxu0
  %v2006 = vadd.f32 %v1489, %v1869
  %v2007 = vadd.f32 %v1490, %v1967
  %v2008 = vadd.f32 %v1491, %v1871
  %v2009 = vadd.f32 %v1492, %v1969
  %v2010 = vadd.f32 %v1493, %v1874
  %v2011 = vadd.f32 %v1494, %v1972
  %v2012 = vadd.f32 %v1495, %v1876
  %v2013 = vadd.f32 %v1496, %v1974
  %v2014 = vadd.f32 %v1497, %v1879
  %v2015 = vadd.f32 %v1498, %v1977
  %v2016 = vadd.f32 %v1499, %v1881
  %v2017 = vadd.f32 %v1500, %v1979
  %v2018 = vadd.f32 %v1501, %v1884
  %v2019 = vadd.f32 %v1502, %v1982
  %v2020 = vadd.f32 %v1503, %v1886
  %v2021 = vadd.f32 %v1504, %v1984
  %v2022 = vadd.f32 %v1505, %v1889
  %v2023 = vadd.f32 %v1506, %v1987
  %v2024 = vadd.f32 %v1507, %v1891
  %v2025 = vadd.f32 %v1508, %v1989
  %v2026 = vadd.f32 %v1509, %v1894
  %v2027 = vadd.f32 %v1510, %v1992
  %v2028 = vadd.f32 %v1511, %v1896
  %v2029 = vadd.f32 %v1512, %v1994
  %v2030 = vadd.f32 %v1513, %v1899
  %v2031 = vadd.f32 %v1514, %v1997
  %v2032 = vadd.f32 %v1515, %v1901
  %v2033 = vadd.f32 %v1516, %v1999
  %v2034 = vadd.f32 %v1517, %v1904
  %v2035 = vadd.f32 %v1518, %v2002
  %v2036 = vadd.f32 %v1519, %v1906
  %v2037 = vadd.f32 %v1520, %v2004
  %v2038 = vld [vmem:[%s4] sm:$0xff]
  %v2039 = vld [vmem:[%s4 + $0x8] sm:$0xff]
  %v2040 = vld [vmem:[%s4 + $0x10] sm:$0xff]
  %v2041 = vld [vmem:[%s4 + $0x18] sm:$0xff]
  %v2042 = vld [vmem:[%s4 + $0x20] sm:$0xff]
  %v2043 = vld [vmem:[%s4 + $0x28] sm:$0xff]
  %v2044 = vld [vmem:[%s4 + $0x30] sm:$0xff]
  %v2045 = vld [vmem:[%s4 + $0x38] sm:$0xff]
  %v2046 = vld [vmem:[%s4 + $0x40] sm:$0xff]
  %v2047 = vld [vmem:[%s4 + $0x48] sm:$0xff]
  %v2048 = vld [vmem:[%s4 + $0x50] sm:$0xff]
  %v2049 = vld [vmem:[%s4 + $0x58] sm:$0xff]
  %v2050 = vld [vmem:[%s4 + $0x60] sm:$0xff]
  %v2051 = vld [vmem:[%s4 + $0x68] sm:$0xff]
  %v2052 = vld [vmem:[%s4 + $0x70] sm:$0xff]
  %v2053 = vld [vmem:[%s4 + $0x78] sm:$0xff]
  %s2054 = scalar_lea.vmem %s5, 1024
  %v2055 = vld [vmem:[%s2054] sm:$0xff]
  %v2056 = vld [vmem:[%s2054 + $0x8] sm:$0xff]
  %v2057 = vld [vmem:[%s2054 + $0x10] sm:$0xff]
  %v2058 = vld [vmem:[%s2054 + $0x18] sm:$0xff]
  %v2059 = vld [vmem:[%s2054 + $0x20] sm:$0xff]
  %v2060 = vld [vmem:[%s2054 + $0x28] sm:$0xff]
  %v2061 = vld [vmem:[%s2054 + $0x30] sm:$0xff]
  %v2062 = vld [vmem:[%s2054 + $0x38] sm:$0xff]
  %v2063 = vld [vmem:[%s2054 + $0x40] sm:$0xff]
  %v2064 = vld [vmem:[%s2054 + $0x48] sm:$0xff]
  %v2065 = vld [vmem:[%s2054 + $0x50] sm:$0xff]
  %v2066 = vld [vmem:[%s2054 + $0x58] sm:$0xff]
  %v2067 = vld [vmem:[%s2054 + $0x60] sm:$0xff]
  %v2068 = vld [vmem:[%s2054 + $0x68] sm:$0xff]
  %v2069 = vld [vmem:[%s2054 + $0x70] sm:$0xff]
  %v2070 = vld [vmem:[%s2054 + $0x78] sm:$0xff]
  %v2071 = vld [vmem:[%s2054 + $0x80] sm:$0xff]
  %v2072 = vld [vmem:[%s2054 + $0x88] sm:$0xff]
  %v2073 = vld [vmem:[%s2054 + $0x90] sm:$0xff]
  %v2074 = vld [vmem:[%s2054 + $0x98] sm:$0xff]
  %v2075 = vld [vmem:[%s2054 + $0xa0] sm:$0xff]
  %v2076 = vld [vmem:[%s2054 + $0xa8] sm:$0xff]
  %v2077 = vld [vmem:[%s2054 + $0xb0] sm:$0xff]
  %v2078 = vld [vmem:[%s2054 + $0xb8] sm:$0xff]
  %v2079 = vld [vmem:[%s2054 + $0xc0] sm:$0xff]
  %v2080 = vld [vmem:[%s2054 + $0xc8] sm:$0xff]
  %v2081 = vld [vmem:[%s2054 + $0xd0] sm:$0xff]
  %v2082 = vld [vmem:[%s2054 + $0xd8] sm:$0xff]
  %v2083 = vld [vmem:[%s2054 + $0xe0] sm:$0xff]
  %v2084 = vld [vmem:[%s2054 + $0xe8] sm:$0xff]
  %v2085 = vld [vmem:[%s2054 + $0xf0] sm:$0xff]
  %v2086 = vld [vmem:[%s2054 + $0xf8] sm:$0xff]
  %v2103 = vunpack.c.l.b16 %v2038
  %v2104 = vunpack.c.h.b16 %v2038
  %v2105 = vunpack.c.l.b16 %v2039
  %v2106 = vunpack.c.h.b16 %v2039
  %v2107 = vunpack.c.l.b16 %v2040
  %v2108 = vunpack.c.h.b16 %v2040
  %v2109 = vunpack.c.l.b16 %v2041
  %v2110 = vunpack.c.h.b16 %v2041
  %v2111 = vunpack.c.l.b16 %v2042
  %v2112 = vunpack.c.h.b16 %v2042
  %v2113 = vunpack.c.l.b16 %v2043
  %v2114 = vunpack.c.h.b16 %v2043
  %v2115 = vunpack.c.l.b16 %v2044
  %v2116 = vunpack.c.h.b16 %v2044
  %v2117 = vunpack.c.l.b16 %v2045
  %v2118 = vunpack.c.h.b16 %v2045
  %v2119 = vunpack.c.l.b16 %v2046
  %v2120 = vunpack.c.h.b16 %v2046
  %v2121 = vunpack.c.l.b16 %v2047
  %v2122 = vunpack.c.h.b16 %v2047
  %v2123 = vunpack.c.l.b16 %v2048
  %v2124 = vunpack.c.h.b16 %v2048
  %v2125 = vunpack.c.l.b16 %v2049
  %v2126 = vunpack.c.h.b16 %v2049
  %v2127 = vunpack.c.l.b16 %v2050
  %v2128 = vunpack.c.h.b16 %v2050
  %v2129 = vunpack.c.l.b16 %v2051
  %v2130 = vunpack.c.h.b16 %v2051
  %v2131 = vunpack.c.l.b16 %v2052
  %v2132 = vunpack.c.h.b16 %v2052
  %v2133 = vunpack.c.l.b16 %v2053
  %v2134 = vunpack.c.h.b16 %v2053
  %v2135 = vpack.c.b16 %v2105, %v2103
  %v2136 = vpack.c.b16 %v2106, %v2104
  %v2137 = vpack.c.b16 %v2109, %v2107
  %v2138 = vpack.c.b16 %v2110, %v2108
  %v2139 = vpack.c.b16 %v2113, %v2111
  %v2140 = vpack.c.b16 %v2114, %v2112
  %v2141 = vpack.c.b16 %v2117, %v2115
  %v2142 = vpack.c.b16 %v2118, %v2116
  %v2143 = vpack.c.b16 %v2121, %v2119
  %v2144 = vpack.c.b16 %v2122, %v2120
  %v2145 = vpack.c.b16 %v2125, %v2123
  %v2146 = vpack.c.b16 %v2126, %v2124
  %v2147 = vpack.c.b16 %v2129, %v2127
  %v2148 = vpack.c.b16 %v2130, %v2128
  %v2149 = vpack.c.b16 %v2133, %v2131
  %v2150 = vpack.c.b16 %v2134, %v2132
  %v2199 = vunpack.c.l.b16 %v2055
  %v2200 = vunpack.c.h.b16 %v2055
  %v2201 = vunpack.c.l.b16 %v2056
  %v2202 = vunpack.c.h.b16 %v2056
  %v2203 = vunpack.c.l.b16 %v2057
  %v2204 = vunpack.c.h.b16 %v2057
  %v2205 = vunpack.c.l.b16 %v2058
  %v2206 = vunpack.c.h.b16 %v2058
  %v2207 = vunpack.c.l.b16 %v2059
  %v2208 = vunpack.c.h.b16 %v2059
  %v2209 = vunpack.c.l.b16 %v2060
  %v2210 = vunpack.c.h.b16 %v2060
  %v2211 = vunpack.c.l.b16 %v2061
  %v2212 = vunpack.c.h.b16 %v2061
  %v2213 = vunpack.c.l.b16 %v2062
  %v2214 = vunpack.c.h.b16 %v2062
  %v2215 = vunpack.c.l.b16 %v2063
  %v2216 = vunpack.c.h.b16 %v2063
  %v2217 = vunpack.c.l.b16 %v2064
  %v2218 = vunpack.c.h.b16 %v2064
  %v2219 = vunpack.c.l.b16 %v2065
  %v2220 = vunpack.c.h.b16 %v2065
  %v2221 = vunpack.c.l.b16 %v2066
  %v2222 = vunpack.c.h.b16 %v2066
  %v2223 = vunpack.c.l.b16 %v2067
  %v2224 = vunpack.c.h.b16 %v2067
  %v2225 = vunpack.c.l.b16 %v2068
  %v2226 = vunpack.c.h.b16 %v2068
  %v2227 = vunpack.c.l.b16 %v2069
  %v2228 = vunpack.c.h.b16 %v2069
  %v2229 = vunpack.c.l.b16 %v2070
  %v2230 = vunpack.c.h.b16 %v2070
  %v2231 = vunpack.c.l.b16 %v2071
  %v2232 = vunpack.c.h.b16 %v2071
  %v2233 = vunpack.c.l.b16 %v2072
  %v2234 = vunpack.c.h.b16 %v2072
  %v2235 = vunpack.c.l.b16 %v2073
  %v2236 = vunpack.c.h.b16 %v2073
  %v2237 = vunpack.c.l.b16 %v2074
  %v2238 = vunpack.c.h.b16 %v2074
  %v2239 = vunpack.c.l.b16 %v2075
  %v2240 = vunpack.c.h.b16 %v2075
  %v2241 = vunpack.c.l.b16 %v2076
  %v2242 = vunpack.c.h.b16 %v2076
  %v2243 = vunpack.c.l.b16 %v2077
  %v2244 = vunpack.c.h.b16 %v2077
  %v2245 = vunpack.c.l.b16 %v2078
  %v2246 = vunpack.c.h.b16 %v2078
  %v2247 = vunpack.c.l.b16 %v2079
  %v2248 = vunpack.c.h.b16 %v2079
  %v2249 = vunpack.c.l.b16 %v2080
  %v2250 = vunpack.c.h.b16 %v2080
  %v2251 = vunpack.c.l.b16 %v2081
  %v2252 = vunpack.c.h.b16 %v2081
  %v2253 = vunpack.c.l.b16 %v2082
  %v2254 = vunpack.c.h.b16 %v2082
  %v2255 = vunpack.c.l.b16 %v2083
  %v2256 = vunpack.c.h.b16 %v2083
  %v2257 = vunpack.c.l.b16 %v2084
  %v2258 = vunpack.c.h.b16 %v2084
  %v2259 = vunpack.c.l.b16 %v2085
  %v2260 = vunpack.c.h.b16 %v2085
  %v2261 = vunpack.c.l.b16 %v2086
  %v2262 = vunpack.c.h.b16 %v2086
  %v2263 = vpack.c.b16 %v2201, %v2199
  %v2264 = vpack.c.b16 %v2202, %v2200
  %v2265 = vpack.c.b16 %v2205, %v2203
  %v2266 = vpack.c.b16 %v2206, %v2204
  %v2267 = vpack.c.b16 %v2209, %v2207
  %v2268 = vpack.c.b16 %v2210, %v2208
  %v2269 = vpack.c.b16 %v2213, %v2211
  %v2270 = vpack.c.b16 %v2214, %v2212
  %v2271 = vpack.c.b16 %v2217, %v2215
  %v2272 = vpack.c.b16 %v2218, %v2216
  %v2273 = vpack.c.b16 %v2221, %v2219
  %v2274 = vpack.c.b16 %v2222, %v2220
  %v2275 = vpack.c.b16 %v2225, %v2223
  %v2276 = vpack.c.b16 %v2226, %v2224
  %v2277 = vpack.c.b16 %v2229, %v2227
  %v2278 = vpack.c.b16 %v2230, %v2228
  %v2279 = vpack.c.b16 %v2233, %v2231
  %v2280 = vpack.c.b16 %v2234, %v2232
  %v2281 = vpack.c.b16 %v2237, %v2235
  %v2282 = vpack.c.b16 %v2238, %v2236
  %v2283 = vpack.c.b16 %v2241, %v2239
  %v2284 = vpack.c.b16 %v2242, %v2240
  %v2285 = vpack.c.b16 %v2245, %v2243
  %v2286 = vpack.c.b16 %v2246, %v2244
  %v2287 = vpack.c.b16 %v2249, %v2247
  %v2288 = vpack.c.b16 %v2250, %v2248
  %v2289 = vpack.c.b16 %v2253, %v2251
  %v2290 = vpack.c.b16 %v2254, %v2252
  %v2291 = vpack.c.b16 %v2257, %v2255
  %v2292 = vpack.c.b16 %v2258, %v2256
  %v2293 = vpack.c.b16 %v2261, %v2259
  %v2294 = vpack.c.b16 %v2262, %v2260
  %2327 = vmatpush.bf16.msra.mxu0 %v2277
  %2328 = vmatpush.bf16.msra.mxu0 %v2275
  %2329 = vmatpush.bf16.msra.mxu0 %v2273
  %2330 = vmatpush.bf16.msra.mxu0 %v2271
  %2331 = vmatpush.bf16.msra.mxu0 %v2269
  %2332 = vmatpush.bf16.msra.mxu0 %v2267
  %2333 = vmatpush.bf16.msra.mxu0 %v2265
  %2334 = vmatpush.bf16.msra.mxu0 %v2263
  %2335 = vmatmul.bf16.gmra.mxu0 %v2135
  %v2336 = vpop.f32.mrf.mxu0
  %v2337 = vadd.f32 0.0, %v2336
  %v2338 = vpop.f32.mrf.mxu0
  %v2339 = vadd.f32 0.0, %v2338
  %2340 = vmatmul.bf16.gmra.mxu0 %v2137
  %v2341 = vpop.f32.mrf.mxu0
  %v2342 = vadd.f32 0.0, %v2341
  %v2343 = vpop.f32.mrf.mxu0
  %v2344 = vadd.f32 0.0, %v2343
  %2345 = vmatmul.bf16.gmra.mxu0 %v2139
  %v2346 = vpop.f32.mrf.mxu0
  %v2347 = vadd.f32 0.0, %v2346
  %v2348 = vpop.f32.mrf.mxu0
  %v2349 = vadd.f32 0.0, %v2348
  %2350 = vmatmul.bf16.gmra.mxu0 %v2141
  %v2351 = vpop.f32.mrf.mxu0
  %v2352 = vadd.f32 0.0, %v2351
  %v2353 = vpop.f32.mrf.mxu0
  %v2354 = vadd.f32 0.0, %v2353
  %2355 = vmatmul.bf16.gmra.mxu0 %v2143
  %v2356 = vpop.f32.mrf.mxu0
  %v2357 = vadd.f32 0.0, %v2356
  %v2358 = vpop.f32.mrf.mxu0
  %v2359 = vadd.f32 0.0, %v2358
  %2360 = vmatmul.bf16.gmra.mxu0 %v2145
  %v2361 = vpop.f32.mrf.mxu0
  %v2362 = vadd.f32 0.0, %v2361
  %v2363 = vpop.f32.mrf.mxu0
  %v2364 = vadd.f32 0.0, %v2363
  %2365 = vmatmul.bf16.gmra.mxu0 %v2147
  %v2366 = vpop.f32.mrf.mxu0
  %v2367 = vadd.f32 0.0, %v2366
  %v2368 = vpop.f32.mrf.mxu0
  %v2369 = vadd.f32 0.0, %v2368
  %2370 = vmatmul.bf16.gmra.mxu0 %v2149
  %v2371 = vpop.f32.mrf.mxu0
  %v2372 = vadd.f32 0.0, %v2371
  %v2373 = vpop.f32.mrf.mxu0
  %v2374 = vadd.f32 0.0, %v2373
  %2375 = vdwg.mxu0
  %2376 = vmatpush.bf16.msra.mxu0 %v2293
  %2377 = vmatpush.bf16.msra.mxu0 %v2291
  %2378 = vmatpush.bf16.msra.mxu0 %v2289
  %2379 = vmatpush.bf16.msra.mxu0 %v2287
  %2380 = vmatpush.bf16.msra.mxu0 %v2285
  %2381 = vmatpush.bf16.msra.mxu0 %v2283
  %2382 = vmatpush.bf16.msra.mxu0 %v2281
  %2383 = vmatpush.bf16.msra.mxu0 %v2279
  %2384 = vmatmul.bf16.gmra.mxu0 %v2136
  %v2385 = vpop.f32.mrf.mxu0
  %v2386 = vadd.f32 %v2337, %v2385
  %v2387 = vpop.f32.mrf.mxu0
  %v2388 = vadd.f32 %v2339, %v2387
  %2389 = vmatmul.bf16.gmra.mxu0 %v2138
  %v2390 = vpop.f32.mrf.mxu0
  %v2391 = vadd.f32 %v2342, %v2390
  %v2392 = vpop.f32.mrf.mxu0
  %v2393 = vadd.f32 %v2344, %v2392
  %2394 = vmatmul.bf16.gmra.mxu0 %v2140
  %v2395 = vpop.f32.mrf.mxu0
  %v2396 = vadd.f32 %v2347, %v2395
  %v2397 = vpop.f32.mrf.mxu0
  %v2398 = vadd.f32 %v2349, %v2397
  %2399 = vmatmul.bf16.gmra.mxu0 %v2142
  %v2400 = vpop.f32.mrf.mxu0
  %v2401 = vadd.f32 %v2352, %v2400
  %v2402 = vpop.f32.mrf.mxu0
  %v2403 = vadd.f32 %v2354, %v2402
  %2404 = vmatmul.bf16.gmra.mxu0 %v2144
  %v2405 = vpop.f32.mrf.mxu0
  %v2406 = vadd.f32 %v2357, %v2405
  %v2407 = vpop.f32.mrf.mxu0
  %v2408 = vadd.f32 %v2359, %v2407
  %2409 = vmatmul.bf16.gmra.mxu0 %v2146
  %v2410 = vpop.f32.mrf.mxu0
  %v2411 = vadd.f32 %v2362, %v2410
  %v2412 = vpop.f32.mrf.mxu0
  %v2413 = vadd.f32 %v2364, %v2412
  %2414 = vmatmul.bf16.gmra.mxu0 %v2148
  %v2415 = vpop.f32.mrf.mxu0
  %v2416 = vadd.f32 %v2367, %v2415
  %v2417 = vpop.f32.mrf.mxu0
  %v2418 = vadd.f32 %v2369, %v2417
  %2419 = vmatmul.bf16.gmra.mxu0 %v2150
  %v2420 = vpop.f32.mrf.mxu0
  %v2421 = vadd.f32 %v2372, %v2420
  %v2422 = vpop.f32.mrf.mxu0
  %v2423 = vadd.f32 %v2374, %v2422
  %2424 = vdwg.mxu0
  %2425 = vmatpush.bf16.msra.mxu0 %v2278
  %2426 = vmatpush.bf16.msra.mxu0 %v2276
  %2427 = vmatpush.bf16.msra.mxu0 %v2274
  %2428 = vmatpush.bf16.msra.mxu0 %v2272
  %2429 = vmatpush.bf16.msra.mxu0 %v2270
  %2430 = vmatpush.bf16.msra.mxu0 %v2268
  %2431 = vmatpush.bf16.msra.mxu0 %v2266
  %2432 = vmatpush.bf16.msra.mxu0 %v2264
  %2433 = vmatmul.bf16.gmra.mxu0 %v2135
  %v2434 = vpop.f32.mrf.mxu0
  %v2435 = vadd.f32 0.0, %v2434
  %v2436 = vpop.f32.mrf.mxu0
  %v2437 = vadd.f32 0.0, %v2436
  %2438 = vmatmul.bf16.gmra.mxu0 %v2137
  %v2439 = vpop.f32.mrf.mxu0
  %v2440 = vadd.f32 0.0, %v2439
  %v2441 = vpop.f32.mrf.mxu0
  %v2442 = vadd.f32 0.0, %v2441
  %2443 = vmatmul.bf16.gmra.mxu0 %v2139
  %v2444 = vpop.f32.mrf.mxu0
  %v2445 = vadd.f32 0.0, %v2444
  %v2446 = vpop.f32.mrf.mxu0
  %v2447 = vadd.f32 0.0, %v2446
  %2448 = vmatmul.bf16.gmra.mxu0 %v2141
  %v2449 = vpop.f32.mrf.mxu0
  %v2450 = vadd.f32 0.0, %v2449
  %v2451 = vpop.f32.mrf.mxu0
  %v2452 = vadd.f32 0.0, %v2451
  %2453 = vmatmul.bf16.gmra.mxu0 %v2143
  %v2454 = vpop.f32.mrf.mxu0
  %v2455 = vadd.f32 0.0, %v2454
  %v2456 = vpop.f32.mrf.mxu0
  %v2457 = vadd.f32 0.0, %v2456
  %2458 = vmatmul.bf16.gmra.mxu0 %v2145
  %v2459 = vpop.f32.mrf.mxu0
  %v2460 = vadd.f32 0.0, %v2459
  %v2461 = vpop.f32.mrf.mxu0
  %v2462 = vadd.f32 0.0, %v2461
  %2463 = vmatmul.bf16.gmra.mxu0 %v2147
  %v2464 = vpop.f32.mrf.mxu0
  %v2465 = vadd.f32 0.0, %v2464
  %v2466 = vpop.f32.mrf.mxu0
  %v2467 = vadd.f32 0.0, %v2466
  %2468 = vmatmul.bf16.gmra.mxu0 %v2149
  %v2469 = vpop.f32.mrf.mxu0
  %v2470 = vadd.f32 0.0, %v2469
  %v2471 = vpop.f32.mrf.mxu0
  %v2472 = vadd.f32 0.0, %v2471
  %2473 = vdwg.mxu0
  %2474 = vmatpush.bf16.msra.mxu0 %v2294
  %2475 = vmatpush.bf16.msra.mxu0 %v2292
  %2476 = vmatpush.bf16.msra.mxu0 %v2290
  %2477 = vmatpush.bf16.msra.mxu0 %v2288
  %2478 = vmatpush.bf16.msra.mxu0 %v2286
  %2479 = vmatpush.bf16.msra.mxu0 %v2284
  %2480 = vmatpush.bf16.msra.mxu0 %v2282
  %2481 = vmatpush.bf16.msra.mxu0 %v2280
  %2482 = vmatmul.bf16.gmra.mxu0 %v2136
  %v2483 = vpop.f32.mrf.mxu0
  %v2484 = vadd.f32 %v2435, %v2483
  %v2485 = vpop.f32.mrf.mxu0
  %v2486 = vadd.f32 %v2437, %v2485
  %2487 = vmatmul.bf16.gmra.mxu0 %v2138
  %v2488 = vpop.f32.mrf.mxu0
  %v2489 = vadd.f32 %v2440, %v2488
  %v2490 = vpop.f32.mrf.mxu0
  %v2491 = vadd.f32 %v2442, %v2490
  %2492 = vmatmul.bf16.gmra.mxu0 %v2140
  %v2493 = vpop.f32.mrf.mxu0
  %v2494 = vadd.f32 %v2445, %v2493
  %v2495 = vpop.f32.mrf.mxu0
  %v2496 = vadd.f32 %v2447, %v2495
  %2497 = vmatmul.bf16.gmra.mxu0 %v2142
  %v2498 = vpop.f32.mrf.mxu0
  %v2499 = vadd.f32 %v2450, %v2498
  %v2500 = vpop.f32.mrf.mxu0
  %v2501 = vadd.f32 %v2452, %v2500
  %2502 = vmatmul.bf16.gmra.mxu0 %v2144
  %v2503 = vpop.f32.mrf.mxu0
  %v2504 = vadd.f32 %v2455, %v2503
  %v2505 = vpop.f32.mrf.mxu0
  %v2506 = vadd.f32 %v2457, %v2505
  %2507 = vmatmul.bf16.gmra.mxu0 %v2146
  %v2508 = vpop.f32.mrf.mxu0
  %v2509 = vadd.f32 %v2460, %v2508
  %v2510 = vpop.f32.mrf.mxu0
  %v2511 = vadd.f32 %v2462, %v2510
  %2512 = vmatmul.bf16.gmra.mxu0 %v2148
  %v2513 = vpop.f32.mrf.mxu0
  %v2514 = vadd.f32 %v2465, %v2513
  %v2515 = vpop.f32.mrf.mxu0
  %v2516 = vadd.f32 %v2467, %v2515
  %2517 = vmatmul.bf16.gmra.mxu0 %v2150
  %v2518 = vpop.f32.mrf.mxu0
  %v2519 = vadd.f32 %v2470, %v2518
  %v2520 = vpop.f32.mrf.mxu0
  %v2521 = vadd.f32 %v2472, %v2520
  %2522 = vdwg.mxu0
  %v2523 = vadd.f32 %v2006, %v2386
  %v2524 = vadd.f32 %v2007, %v2484
  %v2525 = vadd.f32 %v2008, %v2388
  %v2526 = vadd.f32 %v2009, %v2486
  %v2527 = vadd.f32 %v2010, %v2391
  %v2528 = vadd.f32 %v2011, %v2489
  %v2529 = vadd.f32 %v2012, %v2393
  %v2530 = vadd.f32 %v2013, %v2491
  %v2531 = vadd.f32 %v2014, %v2396
  %v2532 = vadd.f32 %v2015, %v2494
  %v2533 = vadd.f32 %v2016, %v2398
  %v2534 = vadd.f32 %v2017, %v2496
  %v2535 = vadd.f32 %v2018, %v2401
  %v2536 = vadd.f32 %v2019, %v2499
  %v2537 = vadd.f32 %v2020, %v2403
  %v2538 = vadd.f32 %v2021, %v2501
  %v2539 = vadd.f32 %v2022, %v2406
  %v2540 = vadd.f32 %v2023, %v2504
  %v2541 = vadd.f32 %v2024, %v2408
  %v2542 = vadd.f32 %v2025, %v2506
  %v2543 = vadd.f32 %v2026, %v2411
  %v2544 = vadd.f32 %v2027, %v2509
  %v2545 = vadd.f32 %v2028, %v2413
  %v2546 = vadd.f32 %v2029, %v2511
  %v2547 = vadd.f32 %v2030, %v2416
  %v2548 = vadd.f32 %v2031, %v2514
  %v2549 = vadd.f32 %v2032, %v2418
  %v2550 = vadd.f32 %v2033, %v2516
  %v2551 = vadd.f32 %v2034, %v2421
  %v2552 = vadd.f32 %v2035, %v2519
  %v2553 = vadd.f32 %v2036, %v2423
  %v2554 = vadd.f32 %v2037, %v2521
  %v2555 = vld [vmem:[%s6] sm:$0x3]
  %v2557 = vperm.slane %v2555, 0
  %v2558 = vperm.slane %v2555, 1
  %v2561 = vmul.f32 %v2523, %v2557
  %v2562 = vmul.f32 %v2524, %v2558
  %v2563 = vmul.f32 %v2525, %v2557
  %v2564 = vmul.f32 %v2526, %v2558
  %v2565 = vmul.f32 %v2527, %v2557
  %v2566 = vmul.f32 %v2528, %v2558
  %v2567 = vmul.f32 %v2529, %v2557
  %v2568 = vmul.f32 %v2530, %v2558
  %v2569 = vmul.f32 %v2531, %v2557
  %v2570 = vmul.f32 %v2532, %v2558
  %v2571 = vmul.f32 %v2533, %v2557
  %v2572 = vmul.f32 %v2534, %v2558
  %v2573 = vmul.f32 %v2535, %v2557
  %v2574 = vmul.f32 %v2536, %v2558
  %v2575 = vmul.f32 %v2537, %v2557
  %v2576 = vmul.f32 %v2538, %v2558
  %v2577 = vmul.f32 %v2539, %v2557
  %v2578 = vmul.f32 %v2540, %v2558
  %v2579 = vmul.f32 %v2541, %v2557
  %v2580 = vmul.f32 %v2542, %v2558
  %v2581 = vmul.f32 %v2543, %v2557
  %v2582 = vmul.f32 %v2544, %v2558
  %v2583 = vmul.f32 %v2545, %v2557
  %v2584 = vmul.f32 %v2546, %v2558
  %v2585 = vmul.f32 %v2547, %v2557
  %v2586 = vmul.f32 %v2548, %v2558
  %v2587 = vmul.f32 %v2549, %v2557
  %v2588 = vmul.f32 %v2550, %v2558
  %v2589 = vmul.f32 %v2551, %v2557
  %v2590 = vmul.f32 %v2552, %v2558
  %v2591 = vmul.f32 %v2553, %v2557
  %v2592 = vmul.f32 %v2554, %v2558
  %v2593 = vld [vmem:[%s7] sm:$0x3]
  %v2595 = vperm.slane %v2593, 0
  %v2596 = vperm.slane %v2593, 1
  %v2599 = vadd.f32 %v2561, %v2595
  %v2600 = vadd.f32 %v2562, %v2596
  %v2601 = vadd.f32 %v2563, %v2595
  %v2602 = vadd.f32 %v2564, %v2596
  %v2603 = vadd.f32 %v2565, %v2595
  %v2604 = vadd.f32 %v2566, %v2596
  %v2605 = vadd.f32 %v2567, %v2595
  %v2606 = vadd.f32 %v2568, %v2596
  %v2607 = vadd.f32 %v2569, %v2595
  %v2608 = vadd.f32 %v2570, %v2596
  %v2609 = vadd.f32 %v2571, %v2595
  %v2610 = vadd.f32 %v2572, %v2596
  %v2611 = vadd.f32 %v2573, %v2595
  %v2612 = vadd.f32 %v2574, %v2596
  %v2613 = vadd.f32 %v2575, %v2595
  %v2614 = vadd.f32 %v2576, %v2596
  %v2615 = vadd.f32 %v2577, %v2595
  %v2616 = vadd.f32 %v2578, %v2596
  %v2617 = vadd.f32 %v2579, %v2595
  %v2618 = vadd.f32 %v2580, %v2596
  %v2619 = vadd.f32 %v2581, %v2595
  %v2620 = vadd.f32 %v2582, %v2596
  %v2621 = vadd.f32 %v2583, %v2595
  %v2622 = vadd.f32 %v2584, %v2596
  %v2623 = vadd.f32 %v2585, %v2595
  %v2624 = vadd.f32 %v2586, %v2596
  %v2625 = vadd.f32 %v2587, %v2595
  %v2626 = vadd.f32 %v2588, %v2596
  %v2627 = vadd.f32 %v2589, %v2595
  %v2628 = vadd.f32 %v2590, %v2596
  %v2629 = vadd.f32 %v2591, %v2595
  %v2630 = vadd.f32 %v2592, %v2596
  %v2631 = vmax.f32 %v2599, 0.0
  %v2632 = vmax.f32 %v2600, 0.0
  %v2633 = vmax.f32 %v2601, 0.0
  %v2634 = vmax.f32 %v2602, 0.0
  %v2635 = vmax.f32 %v2603, 0.0
  %v2636 = vmax.f32 %v2604, 0.0
  %v2637 = vmax.f32 %v2605, 0.0
  %v2638 = vmax.f32 %v2606, 0.0
  %v2639 = vmax.f32 %v2607, 0.0
  %v2640 = vmax.f32 %v2608, 0.0
  %v2641 = vmax.f32 %v2609, 0.0
  %v2642 = vmax.f32 %v2610, 0.0
  %v2643 = vmax.f32 %v2611, 0.0
  %v2644 = vmax.f32 %v2612, 0.0
  %v2645 = vmax.f32 %v2613, 0.0
  %v2646 = vmax.f32 %v2614, 0.0
  %v2647 = vmax.f32 %v2615, 0.0
  %v2648 = vmax.f32 %v2616, 0.0
  %v2649 = vmax.f32 %v2617, 0.0
  %v2650 = vmax.f32 %v2618, 0.0
  %v2651 = vmax.f32 %v2619, 0.0
  %v2652 = vmax.f32 %v2620, 0.0
  %v2653 = vmax.f32 %v2621, 0.0
  %v2654 = vmax.f32 %v2622, 0.0
  %v2655 = vmax.f32 %v2623, 0.0
  %v2656 = vmax.f32 %v2624, 0.0
  %v2657 = vmax.f32 %v2625, 0.0
  %v2658 = vmax.f32 %v2626, 0.0
  %v2659 = vmax.f32 %v2627, 0.0
  %v2660 = vmax.f32 %v2628, 0.0
  %v2661 = vmax.f32 %v2629, 0.0
  %v2662 = vmax.f32 %v2630, 0.0
  %v2663 = vpack.c.bf16 %v2633, %v2631
  %v2664 = vpack.c.bf16 %v2634, %v2632
  %v2665 = vpack.c.bf16 %v2637, %v2635
  %v2666 = vpack.c.bf16 %v2638, %v2636
  %v2667 = vpack.c.bf16 %v2641, %v2639
  %v2668 = vpack.c.bf16 %v2642, %v2640
  %v2669 = vpack.c.bf16 %v2645, %v2643
  %v2670 = vpack.c.bf16 %v2646, %v2644
  %v2671 = vpack.c.bf16 %v2649, %v2647
  %v2672 = vpack.c.bf16 %v2650, %v2648
  %v2673 = vpack.c.bf16 %v2653, %v2651
  %v2674 = vpack.c.bf16 %v2654, %v2652
  %v2675 = vpack.c.bf16 %v2657, %v2655
  %v2676 = vpack.c.bf16 %v2658, %v2656
  %v2677 = vpack.c.bf16 %v2661, %v2659
  %v2678 = vpack.c.bf16 %v2662, %v2660
  %v2679 = vld [vmem:[%s8] sm:$0xf]
  %v2680 = vld [vmem:[%s8 + $0x4] sm:$0xf]
  %v2681 = vld [vmem:[%s8 + $0x8] sm:$0xf]
  %v2682 = vld [vmem:[%s8 + $0xc] sm:$0xf]
  %v2683 = vld [vmem:[%s8 + $0x10] sm:$0xf]
  %v2684 = vld [vmem:[%s8 + $0x14] sm:$0xf]
  %v2685 = vld [vmem:[%s8 + $0x18] sm:$0xf]
  %v2686 = vld [vmem:[%s8 + $0x1c] sm:$0xf]
  %v2687 = vld [vmem:[%s8 + $0x20] sm:$0xf]
  %v2688 = vld [vmem:[%s8 + $0x24] sm:$0xf]
  %v2689 = vld [vmem:[%s8 + $0x28] sm:$0xf]
  %v2690 = vld [vmem:[%s8 + $0x2c] sm:$0xf]
  %v2691 = vld [vmem:[%s8 + $0x30] sm:$0xf]
  %v2692 = vld [vmem:[%s8 + $0x34] sm:$0xf]
  %v2693 = vld [vmem:[%s8 + $0x38] sm:$0xf]
  %v2694 = vld [vmem:[%s8 + $0x3c] sm:$0xf]
  %v2695 = vld [vmem:[%s8 + $0x40] sm:$0xf]
  %v2696 = vld [vmem:[%s8 + $0x44] sm:$0xf]
  %v2697 = vld [vmem:[%s8 + $0x48] sm:$0xf]
  %v2698 = vld [vmem:[%s8 + $0x4c] sm:$0xf]
  %v2699 = vld [vmem:[%s8 + $0x50] sm:$0xf]
  %v2700 = vld [vmem:[%s8 + $0x54] sm:$0xf]
  %v2701 = vld [vmem:[%s8 + $0x58] sm:$0xf]
  %v2702 = vld [vmem:[%s8 + $0x5c] sm:$0xf]
  %v2703 = vld [vmem:[%s8 + $0x60] sm:$0xf]
  %v2704 = vld [vmem:[%s8 + $0x64] sm:$0xf]
  %v2705 = vld [vmem:[%s8 + $0x68] sm:$0xf]
  %v2706 = vld [vmem:[%s8 + $0x6c] sm:$0xf]
  %v2707 = vld [vmem:[%s8 + $0x70] sm:$0xf]
  %v2708 = vld [vmem:[%s8 + $0x74] sm:$0xf]
  %v2709 = vld [vmem:[%s8 + $0x78] sm:$0xf]
  %v2710 = vld [vmem:[%s8 + $0x7c] sm:$0xf]
  %v2711 = vld [vmem:[%s9] sm:$0x1]
  %v2713 = vperm.slane %v2711, 0
  %v2747 = vunpack.c.l.b16 %v2679
  %v2748 = vunpack.c.l.b16 %v2680
  %v2749 = vunpack.c.l.b16 %v2681
  %v2750 = vunpack.c.l.b16 %v2682
  %v2751 = vunpack.c.l.b16 %v2683
  %v2752 = vunpack.c.l.b16 %v2684
  %v2753 = vunpack.c.l.b16 %v2685
  %v2754 = vunpack.c.l.b16 %v2686
  %v2755 = vunpack.c.l.b16 %v2687
  %v2756 = vunpack.c.l.b16 %v2688
  %v2757 = vunpack.c.l.b16 %v2689
  %v2758 = vunpack.c.l.b16 %v2690
  %v2759 = vunpack.c.l.b16 %v2691
  %v2760 = vunpack.c.l.b16 %v2692
  %v2761 = vunpack.c.l.b16 %v2693
  %v2762 = vunpack.c.l.b16 %v2694
  %v2763 = vunpack.c.l.b16 %v2695
  %v2764 = vunpack.c.l.b16 %v2696
  %v2765 = vunpack.c.l.b16 %v2697
  %v2766 = vunpack.c.l.b16 %v2698
  %v2767 = vunpack.c.l.b16 %v2699
  %v2768 = vunpack.c.l.b16 %v2700
  %v2769 = vunpack.c.l.b16 %v2701
  %v2770 = vunpack.c.l.b16 %v2702
  %v2771 = vunpack.c.l.b16 %v2703
  %v2772 = vunpack.c.l.b16 %v2704
  %v2773 = vunpack.c.l.b16 %v2705
  %v2774 = vunpack.c.l.b16 %v2706
  %v2775 = vunpack.c.l.b16 %v2707
  %v2776 = vunpack.c.l.b16 %v2708
  %v2777 = vunpack.c.l.b16 %v2709
  %v2778 = vunpack.c.l.b16 %v2710
  %v2779 = vpack.c.b16 %v2748, %v2747
  %v2780 = vpack.c.b16 %v2750, %v2749
  %v2781 = vpack.c.b16 %v2752, %v2751
  %v2782 = vpack.c.b16 %v2754, %v2753
  %v2783 = vpack.c.b16 %v2756, %v2755
  %v2784 = vpack.c.b16 %v2758, %v2757
  %v2785 = vpack.c.b16 %v2760, %v2759
  %v2786 = vpack.c.b16 %v2762, %v2761
  %v2787 = vpack.c.b16 %v2764, %v2763
  %v2788 = vpack.c.b16 %v2766, %v2765
  %v2789 = vpack.c.b16 %v2768, %v2767
  %v2790 = vpack.c.b16 %v2770, %v2769
  %v2791 = vpack.c.b16 %v2772, %v2771
  %v2792 = vpack.c.b16 %v2774, %v2773
  %v2793 = vpack.c.b16 %v2776, %v2775
  %v2794 = vpack.c.b16 %v2778, %v2777
  %2811 = vmatpush.bf16.msra.mxu0 %v2786
  %2812 = vmatpush.bf16.msra.mxu0 %v2785
  %2813 = vmatpush.bf16.msra.mxu0 %v2784
  %2814 = vmatpush.bf16.msra.mxu0 %v2783
  %2815 = vmatpush.bf16.msra.mxu0 %v2782
  %2816 = vmatpush.bf16.msra.mxu0 %v2781
  %2817 = vmatpush.bf16.msra.mxu0 %v2780
  %2818 = vmatpush.bf16.msra.mxu0 %v2779
  %2819 = vmatmul.bf16.gmra.mxu0 %v2663
  %v2820 = vpop.f32.mrf.mxu0
  %v2821 = vadd.f32 %v2713, %v2820
  %v2822 = vpop.f32.mrf.mxu0
  %v2823 = vadd.f32 %v2713, %v2822
  %2824 = vmatmul.bf16.gmra.mxu0 %v2665
  %v2825 = vpop.f32.mrf.mxu0
  %v2826 = vadd.f32 %v2713, %v2825
  %v2827 = vpop.f32.mrf.mxu0
  %v2828 = vadd.f32 %v2713, %v2827
  %2829 = vmatmul.bf16.gmra.mxu0 %v2667
  %v2830 = vpop.f32.mrf.mxu0
  %v2831 = vadd.f32 %v2713, %v2830
  %v2832 = vpop.f32.mrf.mxu0
  %v2833 = vadd.f32 %v2713, %v2832
  %2834 = vmatmul.bf16.gmra.mxu0 %v2669
  %v2835 = vpop.f32.mrf.mxu0
  %v2836 = vadd.f32 %v2713, %v2835
  %v2837 = vpop.f32.mrf.mxu0
  %v2838 = vadd.f32 %v2713, %v2837
  %2839 = vmatmul.bf16.gmra.mxu0 %v2671
  %v2840 = vpop.f32.mrf.mxu0
  %v2841 = vadd.f32 %v2713, %v2840
  %v2842 = vpop.f32.mrf.mxu0
  %v2843 = vadd.f32 %v2713, %v2842
  %2844 = vmatmul.bf16.gmra.mxu0 %v2673
  %v2845 = vpop.f32.mrf.mxu0
  %v2846 = vadd.f32 %v2713, %v2845
  %v2847 = vpop.f32.mrf.mxu0
  %v2848 = vadd.f32 %v2713, %v2847
  %2849 = vmatmul.bf16.gmra.mxu0 %v2675
  %v2850 = vpop.f32.mrf.mxu0
  %v2851 = vadd.f32 %v2713, %v2850
  %v2852 = vpop.f32.mrf.mxu0
  %v2853 = vadd.f32 %v2713, %v2852
  %2854 = vmatmul.bf16.gmra.mxu0 %v2677
  %v2855 = vpop.f32.mrf.mxu0
  %v2856 = vadd.f32 %v2713, %v2855
  %v2857 = vpop.f32.mrf.mxu0
  %v2858 = vadd.f32 %v2713, %v2857
  %2859 = vdwg.mxu0
  %2860 = vmatpush.bf16.msra.mxu0 %v2794
  %2861 = vmatpush.bf16.msra.mxu0 %v2793
  %2862 = vmatpush.bf16.msra.mxu0 %v2792
  %2863 = vmatpush.bf16.msra.mxu0 %v2791
  %2864 = vmatpush.bf16.msra.mxu0 %v2790
  %2865 = vmatpush.bf16.msra.mxu0 %v2789
  %2866 = vmatpush.bf16.msra.mxu0 %v2788
  %2867 = vmatpush.bf16.msra.mxu0 %v2787
  %2868 = vmatmul.bf16.gmra.mxu0 %v2664
  %v2869 = vpop.f32.mrf.mxu0
  %v2870 = vadd.f32 %v2821, %v2869
  %v2871 = vpop.f32.mrf.mxu0
  %v2872 = vadd.f32 %v2823, %v2871
  %2873 = vmatmul.bf16.gmra.mxu0 %v2666
  %v2874 = vpop.f32.mrf.mxu0
  %v2875 = vadd.f32 %v2826, %v2874
  %v2876 = vpop.f32.mrf.mxu0
  %v2877 = vadd.f32 %v2828, %v2876
  %2878 = vmatmul.bf16.gmra.mxu0 %v2668
  %v2879 = vpop.f32.mrf.mxu0
  %v2880 = vadd.f32 %v2831, %v2879
  %v2881 = vpop.f32.mrf.mxu0
  %v2882 = vadd.f32 %v2833, %v2881
  %2883 = vmatmul.bf16.gmra.mxu0 %v2670
  %v2884 = vpop.f32.mrf.mxu0
  %v2885 = vadd.f32 %v2836, %v2884
  %v2886 = vpop.f32.mrf.mxu0
  %v2887 = vadd.f32 %v2838, %v2886
  %2888 = vmatmul.bf16.gmra.mxu0 %v2672
  %v2889 = vpop.f32.mrf.mxu0
  %v2890 = vadd.f32 %v2841, %v2889
  %v2891 = vpop.f32.mrf.mxu0
  %v2892 = vadd.f32 %v2843, %v2891
  %2893 = vmatmul.bf16.gmra.mxu0 %v2674
  %v2894 = vpop.f32.mrf.mxu0
  %v2895 = vadd.f32 %v2846, %v2894
  %v2896 = vpop.f32.mrf.mxu0
  %v2897 = vadd.f32 %v2848, %v2896
  %2898 = vmatmul.bf16.gmra.mxu0 %v2676
  %v2899 = vpop.f32.mrf.mxu0
  %v2900 = vadd.f32 %v2851, %v2899
  %v2901 = vpop.f32.mrf.mxu0
  %v2902 = vadd.f32 %v2853, %v2901
  %2903 = vmatmul.bf16.gmra.mxu0 %v2678
  %v2904 = vpop.f32.mrf.mxu0
  %v2905 = vadd.f32 %v2856, %v2904
  %v2906 = vpop.f32.mrf.mxu0
  %v2907 = vadd.f32 %v2858, %v2906
  %2908 = vdwg.mxu0
  %2909 = vst [vmem:[%s10] sm:$0xff] %v2870
  %2910 = vst [vmem:[%s10 + $0x8] sm:$0xff] %v2872
  %2911 = vst [vmem:[%s10 + $0x10] sm:$0xff] %v2875
  %2912 = vst [vmem:[%s10 + $0x18] sm:$0xff] %v2877
  %2913 = vst [vmem:[%s10 + $0x20] sm:$0xff] %v2880
  %2914 = vst [vmem:[%s10 + $0x28] sm:$0xff] %v2882
  %2915 = vst [vmem:[%s10 + $0x30] sm:$0xff] %v2885
  %2916 = vst [vmem:[%s10 + $0x38] sm:$0xff] %v2887
  %2917 = vst [vmem:[%s10 + $0x40] sm:$0xff] %v2890
  %2918 = vst [vmem:[%s10 + $0x48] sm:$0xff] %v2892
  %2919 = vst [vmem:[%s10 + $0x50] sm:$0xff] %v2895
  %2920 = vst [vmem:[%s10 + $0x58] sm:$0xff] %v2897
  %2921 = vst [vmem:[%s10 + $0x60] sm:$0xff] %v2900
  %2922 = vst [vmem:[%s10 + $0x68] sm:$0xff] %v2902
  %2923 = vst [vmem:[%s10 + $0x70] sm:$0xff] %v2905
  %2924 = vst [vmem:[%s10 + $0x78] sm:$0xff] %v2907
  // Predicated region
  $region42: #{aspp_bottleneck_forward.3} parent=0 // pred_check
    _
  $region43: #{aspp_bottleneck_forward.3} parent=0 // pred_check_branch
    %2926 = sbr.rel (0) target = $region45
  $region44: #{aspp_bottleneck_forward.3} parent=0 // pred_region
    _
  $region45: #{aspp_bottleneck_forward.3} parent=0 // pred_fallthru
    _
  // Predicated region
  $region46: #{aspp_bottleneck_forward.3} parent=0 // pred_check
    _
  $region47: #{aspp_bottleneck_forward.3} parent=0 // pred_check_branch
    %2928 = sbr.rel (0) target = $region49
  $region48: #{aspp_bottleneck_forward.3} parent=0 // pred_region
    _
  $region49: #{aspp_bottleneck_forward.3} parent=0 // pred_fallthru
    _

// kernel: aspp_bottleneck_forward.2
$region0: #{aspp_bottleneck_forward.2}
  #allocation0 [shape = 'u32[]', space=smem, size = 0x4, offset = 0x4, fixed_abs, tag = 'smem constant byte address 0x4 - core index']
  #allocation1 [shape = 'u32[72,128]{1,0:T(1,128)}', space=vmem, size = 0x9000, scoped, tag = 'internal scratch']
  %s0 = inlined_call_operand.vmem [shape: bf16[128,2048], index: 0, kind: input, shape index: {}]
  %s1 = inlined_call_operand.hbm [shape: bf16[2048,3072], index: 1, kind: input, shape index: {}]
  %s2 = inlined_call_operand.vmem [shape: f32[1,3072], index: 2, kind: input, shape index: {}]
  %s3 = inlined_call_operand.vmem [shape: f32[1,3072], index: 3, kind: input, shape index: {}]
  %s4 = inlined_call_operand.vmem [shape: f32[1,3072], index: 4, kind: input, shape index: {}]
  %s5 = inlined_call_operand.vmem [shape: bf16[128,3072], index: 5, kind: output, shape index: {}]
  %s6 = sld [smem:[#allocation0]]
  $region91: #{aspp_bottleneck_forward.2} parent=0
    _
  %s8 = ssub.s32 1, %s6
  %s9 = scalar_select 0, %s8, %s6
  $region1: #{aspp_bottleneck_forward.2} parent=0
    #allocation2 [shape = 'u8[2097152]{0}', space=vmem, size = 0x200000, scoped, tag = 'input window, operand 1']
    #allocation3 [shape = 's32[2]{0}', space=sflag, size = 0x8, scoped, tag = 'scoped memory for aspp_bottleneck_forward.2']
    #allocation4 [shape = 'u8[131072]{0}', space=vmem, size = 0x20000, scoped, tag = 'output window, operand 0']
    %10 = vsyncpa [#allocation3], 0
    %s11 = scalar_lea.sflag [#allocation3], 1
    %12 = vsyncpa %s11, 0
    loop: start=0, step=1, limit=14
    $region2: #{aspp_bottleneck_forward.2} parent=1 // loop_pre_header
      _
    $region3: #{aspp_bottleneck_forward.2} parent=1 // loop_header
      %s14 = sphi 0, %s18
      %p15 = scmp.ge.s32.totalorder %s14, 14
      %s21 = sphi 0, %s33
      %s22 = sphi 0, %s29
      %s23 = sphi 0, %s21
      %s24 = sphi 0, %s22
      %s25 = sphi 0, %s23
      %s26 = sphi 0, %s24
      %s36 = sphi 0, %s38
      %s39 = sphi 0, %s36
      %s40 = sphi 0, %s39
      %s56 = sphi 0, %s40
      %s62 = sphi 0, %s64
      %s65 = sphi 0, %s62
      %s66 = sphi 0, %s65
      %s82 = sphi 0, %s66
      %s88 = sphi 0, %s90
      %s91 = sphi 0, %s88
      %s92 = sphi 0, %s91
      %s108 = sphi 0, %s92
      %s114 = sphi 0, %s116
      %s117 = sphi 0, %s114
      %s118 = sphi 0, %s117
      %s134 = sphi 0, %s118
      %s140 = sphi 0, %s142
      %s143 = sphi 0, %s140
      %s144 = sphi 0, %s143
      %s160 = sphi 0, %s144
      %s168 = sphi 0, %s170
      %s171 = sphi 0, %s168
      %s172 = sphi 0, %s171
      %s188 = sphi 0, %s172
    $region4: #{aspp_bottleneck_forward.2} parent=1 // loop_header_branch
      %17 = sbr.rel (%p15) target = $region8
    $region5: #{aspp_bottleneck_forward.2} parent=1 // loop_body
      %s19 = ssub.s32 %s14, 1
      %s20 = ssub.s32 %s14, 2
      %s27 = sadd.s32 1, %s22
      %p28 = scmp.ge.s32.totalorder %s27, 12
      %s29 = scalar_select %p28, 0, %s27
      %s30 = sadd.s32 1, %s21
      %s31 = scalar_select %p28, %s30, %s21
      %p32 = scmp.ge.s32.totalorder %s31, 1
      %s33 = scalar_select %p32, 0, %s31
      %s34 = ssub.s32 %s21, %s33
      %p35 = scmp.eq.s32.totalorder %s34, 0
      %s37 = sadd.s32 %s36, 1
      %s38 = scalar_select %p35, %s36, %s37
      %p41 = pneg %p35
      %p42 = scmp.eq.s32.totalorder %s14, 11
      %p43 = por %p41, %p42
      %p44 = scmp.ne.s32.totalorder %s36, %s39
      %p45 = scmp.eq.s32.totalorder %s14, 0
      %p46 = por %p44, %p45
      %p47 = scmp.ne.s32.totalorder %s36, %s39
      %p48 = scmp.eq.s32.totalorder %s19, 11
      %p49 = por %p47, %p48
      %p50 = scmp.ne.s32.totalorder %s39, %s40
      %p51 = scmp.eq.s32.totalorder %s19, 0
      %p52 = por %p50, %p51
      %p53 = scmp.ne.s32.totalorder %s39, %s40
      %p54 = scmp.eq.s32.totalorder %s20, 11
      %p55 = por %p53, %p54
      %p57 = scmp.ne.s32.totalorder %s40, %s56
      %p58 = scmp.eq.s32.totalorder %s20, 0
      %p59 = por %p57, %p58
      %s60 = ssub.s32 %s22, %s29
      %p61 = scmp.eq.s32.totalorder %s60, 0
      %s63 = sadd.s32 %s62, 1
      %s64 = scalar_select %p61, %s62, %s63
      %p67 = pneg %p61
      %p68 = scmp.eq.s32.totalorder %s14, 11
      %p69 = por %p67, %p68
      %p70 = scmp.ne.s32.totalorder %s62, %s65
      %p71 = scmp.eq.s32.totalorder %s14, 0
      %p72 = por %p70, %p71
      %p73 = scmp.ne.s32.totalorder %s62, %s65
      %p74 = scmp.eq.s32.totalorder %s19, 11
      %p75 = por %p73, %p74
      %p76 = scmp.ne.s32.totalorder %s65, %s66
      %p77 = scmp.eq.s32.totalorder %s19, 0
      %p78 = por %p76, %p77
      %p79 = scmp.ne.s32.totalorder %s65, %s66
      %p80 = scmp.eq.s32.totalorder %s20, 11
      %p81 = por %p79, %p80
      %p83 = scmp.ne.s32.totalorder %s66, %s82
      %p84 = scmp.eq.s32.totalorder %s20, 0
      %p85 = por %p83, %p84
      %s86 = ssub.s32 %s22, %s29
      %p87 = scmp.eq.s32.totalorder %s86, 0
      %s89 = sadd.s32 %s88, 1
      %s90 = scalar_select %p87, %s88, %s89
      %p93 = pneg %p87
      %p94 = scmp.eq.s32.totalorder %s14, 11
      %p95 = por %p93, %p94
      %p96 = scmp.ne.s32.totalorder %s88, %s91
      %p97 = scmp.eq.s32.totalorder %s14, 0
      %p98 = por %p96, %p97
      %p99 = scmp.ne.s32.totalorder %s88, %s91
      %p100 = scmp.eq.s32.totalorder %s19, 11
      %p101 = por %p99, %p100
      %p102 = scmp.ne.s32.totalorder %s91, %s92
      %p103 = scmp.eq.s32.totalorder %s19, 0
      %p104 = por %p102, %p103
      %p105 = scmp.ne.s32.totalorder %s91, %s92
      %p106 = scmp.eq.s32.totalorder %s20, 11
      %p107 = por %p105, %p106
      %p109 = scmp.ne.s32.totalorder %s92, %s108
      %p110 = scmp.eq.s32.totalorder %s20, 0
      %p111 = por %p109, %p110
      %s112 = ssub.s32 %s22, %s29
      %p113 = scmp.eq.s32.totalorder %s112, 0
      %s115 = sadd.s32 %s114, 1
      %s116 = scalar_select %p113, %s114, %s115
      %p119 = pneg %p113
      %p120 = scmp.eq.s32.totalorder %s14, 11
      %p121 = por %p119, %p120
      %p122 = scmp.ne.s32.totalorder %s114, %s117
      %p123 = scmp.eq.s32.totalorder %s14, 0
      %p124 = por %p122, %p123
      %p125 = scmp.ne.s32.totalorder %s114, %s117
      %p126 = scmp.eq.s32.totalorder %s19, 11
      %p127 = por %p125, %p126
      %p128 = scmp.ne.s32.totalorder %s117, %s118
      %p129 = scmp.eq.s32.totalorder %s19, 0
      %p130 = por %p128, %p129
      %p131 = scmp.ne.s32.totalorder %s117, %s118
      %p132 = scmp.eq.s32.totalorder %s20, 11
      %p133 = por %p131, %p132
      %p135 = scmp.ne.s32.totalorder %s118, %s134
      %p136 = scmp.eq.s32.totalorder %s20, 0
      %p137 = por %p135, %p136
      %s138 = ssub.s32 %s22, %s29
      %p139 = scmp.eq.s32.totalorder %s138, 0
      %s141 = sadd.s32 %s140, 1
      %s142 = scalar_select %p139, %s140, %s141
      %p145 = pneg %p139
      %p146 = scmp.eq.s32.totalorder %s14, 11
      %p147 = por %p145, %p146
      %p148 = scmp.ne.s32.totalorder %s140, %s143
      %p149 = scmp.eq.s32.totalorder %s14, 0
      %p150 = por %p148, %p149
      %p151 = scmp.ne.s32.totalorder %s140, %s143
      %p152 = scmp.eq.s32.totalorder %s19, 11
      %p153 = por %p151, %p152
      %p154 = scmp.ne.s32.totalorder %s143, %s144
      %p155 = scmp.eq.s32.totalorder %s19, 0
      %p156 = por %p154, %p155
      %p157 = scmp.ne.s32.totalorder %s143, %s144
      %p158 = scmp.eq.s32.totalorder %s20, 11
      %p159 = por %p157, %p158
      %p161 = scmp.ne.s32.totalorder %s144, %s160
      %p162 = scmp.eq.s32.totalorder %s20, 0
      %p163 = por %p161, %p162
      %s164 = ssub.s32 %s21, %s33
      %s165 = ssub.s32 %s22, %s29
      %s166 = sor.u32 %s164, %s165
      %p167 = scmp.eq.s32.totalorder %s166, 0
      %s169 = sadd.s32 %s168, 1
      %s170 = scalar_select %p167, %s168, %s169
      %p173 = pneg %p167
      %p174 = scmp.eq.s32.totalorder %s14, 11
      %p175 = por %p173, %p174
      %p176 = scmp.ne.s32.totalorder %s168, %s171
      %p177 = scmp.eq.s32.totalorder %s14, 0
      %p178 = por %p176, %p177
      %p179 = scmp.ne.s32.totalorder %s168, %s171
      %p180 = scmp.eq.s32.totalorder %s19, 11
      %p181 = por %p179, %p180
      %p182 = scmp.ne.s32.totalorder %s171, %s172
      %p183 = scmp.eq.s32.totalorder %s19, 0
      %p184 = por %p182, %p183
      %p185 = scmp.ne.s32.totalorder %s171, %s172
      %p186 = scmp.eq.s32.totalorder %s20, 11
      %p187 = por %p185, %p186
      %p189 = scmp.ne.s32.totalorder %s172, %s188
      %p190 = scmp.eq.s32.totalorder %s20, 0
      %p191 = por %p189, %p190
      %p192 = scmp.le.s32.totalorder 1, %s14
      %p193 = scmp.lt.s32.totalorder %s14, 13
      %p194 = pnand %p192, %p193
      %p195 = pneg %p194
      // Predicated region
      $region9: #{aspp_bottleneck_forward.2} parent=5 // pred_check
        _
      $region10: #{aspp_bottleneck_forward.2} parent=5 // pred_check_branch
        %197 = sbr.rel (%p194) target = $region12
      $region11: #{aspp_bottleneck_forward.2} parent=5 // pred_region
        %s198 = ssub.s32 %s14, 1
        // Predicated region
        $region13: #{aspp_bottleneck_forward.2} parent=11 // pred_check
          %p199 = pneg %p52
        $region14: #{aspp_bottleneck_forward.2} parent=11 // pred_check_branch
          %201 = sbr.rel (%p199) target = $region16
        $region15: #{aspp_bottleneck_forward.2} parent=11 // pred_region
          %s202 = smul.u32 16, %s23
          %p203 = scmp.lt.s32.totalorder %s202, 15
          %s204 = scalar_select %p203, %s202, 15
          %s205 = smul.addr %s204, 16
          %s206 = smul.addr %s205, 4
          %s207 = scalar_lea.vmem %s0, %s206
          %s208 = smul.u32 16, %s23
        $region16: #{aspp_bottleneck_forward.2} parent=11 // pred_fallthru
          _
      $region12: #{aspp_bottleneck_forward.2} parent=5 // pred_fallthru
        _
      %p209 = scmp.lt.s32.totalorder %s14, 12
      // Predicated region
      $region17: #{aspp_bottleneck_forward.2} parent=5 // pred_check
        %p210 = pneg %p209
      $region18: #{aspp_bottleneck_forward.2} parent=5 // pred_check_branch
        %212 = sbr.rel (%p210) target = $region20
      $region19: #{aspp_bottleneck_forward.2} parent=5 // pred_region
        // Predicated region
        $region21: #{aspp_bottleneck_forward.2} parent=19 // pred_check
          %p213 = pneg %p72
        $region22: #{aspp_bottleneck_forward.2} parent=19 // pred_check_branch
          %215 = sbr.rel (%p213) target = $region24
        $region23: #{aspp_bottleneck_forward.2} parent=19 // pred_region
          %s216 = sand.u32 %s62, 1
          %s217 = scalar_lea.sflag [#allocation3], %s216
          %s218 = sand.u32 %s62, 1
          %s219 = smul.addr %s218, 2048
          %s220 = scalar_lea.vmem [#allocation2], %s219
          %s221 = smul.u32 2, %s22
          %223 = vsyncadd %s217, 0
          %s224 = smul.addr %s221, 4
          %s225 = scalar_lea.hbm %s1, %s224
          %s226 = sshll.u32 %s225, 4
          %s227 = int_to_ptr.hbm [resolvable:$true] %s226
          %s228 = sshll.u32 %s220, 4
          %s229 = int_to_ptr.vmem [resolvable:$true] %s228
          %234 = dma.hbm_to_vmem [thread:$0]  %s227, 32768, %s229, %s217, 1536, 128, 8
        $region24: #{aspp_bottleneck_forward.2} parent=19 // pred_fallthru
          _
        // Predicated region
        $region25: #{aspp_bottleneck_forward.2} parent=19 // pred_check
          %p235 = pneg %p98
        $region26: #{aspp_bottleneck_forward.2} parent=19 // pred_check_branch
          %237 = sbr.rel (%p235) target = $region28
        $region27: #{aspp_bottleneck_forward.2} parent=19 // pred_region
          %s238 = smul.u32 2, %s22
          %p239 = scmp.lt.s32.totalorder %s238, 23
          %s240 = scalar_select %p239, %s238, 23
          %s241 = scalar_lea.vmem %s2, %s240
          %s242 = smul.u32 2, %s22
        $region28: #{aspp_bottleneck_forward.2} parent=19 // pred_fallthru
          _
        // Predicated region
        $region29: #{aspp_bottleneck_forward.2} parent=19 // pred_check
          %p243 = pneg %p124
        $region30: #{aspp_bottleneck_forward.2} parent=19 // pred_check_branch
          %245 = sbr.rel (%p243) target = $region32
        $region31: #{aspp_bottleneck_forward.2} parent=19 // pred_region
          %s246 = smul.u32 2, %s22
          %p247 = scmp.lt.s32.totalorder %s246, 23
          %s248 = scalar_select %p247, %s246, 23
          %s249 = scalar_lea.vmem %s3, %s248
          %s250 = smul.u32 2, %s22
        $region32: #{aspp_bottleneck_forward.2} parent=19 // pred_fallthru
          _
        // Predicated region
        $region33: #{aspp_bottleneck_forward.2} parent=19 // pred_check
          %p251 = pneg %p150
        $region34: #{aspp_bottleneck_forward.2} parent=19 // pred_check_branch
          %253 = sbr.rel (%p251) target = $region36
        $region35: #{aspp_bottleneck_forward.2} parent=19 // pred_region
          %s254 = smul.u32 2, %s22
          %p255 = scmp.lt.s32.totalorder %s254, 23
          %s256 = scalar_select %p255, %s254, 23
          %s257 = scalar_lea.vmem %s4, %s256
          %s258 = smul.u32 2, %s22
        $region36: #{aspp_bottleneck_forward.2} parent=19 // pred_fallthru
          _
      $region20: #{aspp_bottleneck_forward.2} parent=5 // pred_fallthru
        _
      %p259 = scmp.le.s32.totalorder 1, %s14
      %p260 = scmp.lt.s32.totalorder %s14, 13
      %p261 = pnand %p259, %p260
      %p262 = pneg %p261
      // Predicated region
      $region37: #{aspp_bottleneck_forward.2} parent=5 // pred_check
        _
      $region38: #{aspp_bottleneck_forward.2} parent=5 // pred_check_branch
        %264 = sbr.rel (%p261) target = $region40
      $region39: #{aspp_bottleneck_forward.2} parent=5 // pred_region
        %s265 = ssub.s32 %s14, 1
        %s266 = sand.u32 %s65, 1
        %s267 = scalar_lea.sflag [#allocation3], %s266
        %s268 = sand.u32 %s65, 1
        %s269 = smul.addr %s268, 2048
        %s270 = scalar_lea.vmem [#allocation2], %s269
        // Predicated region
        $region41: #{aspp_bottleneck_forward.2} parent=39 // pred_check
          %p271 = pneg %p78
        $region42: #{aspp_bottleneck_forward.2} parent=39 // pred_check_branch
          %273 = sbr.rel (%p271) target = $region44
        $region43: #{aspp_bottleneck_forward.2} parent=39 // pred_region
          %275 = dma.done %s267, 32768
        $region44: #{aspp_bottleneck_forward.2} parent=39 // pred_fallthru
          _
        %s276 = smul.u32 16, %s23
        %p277 = scmp.lt.s32.totalorder %s276, 15
        %s278 = scalar_select %p277, %s276, 15
        %s279 = smul.addr %s278, 16
        %s280 = smul.addr %s279, 4
        %s281 = scalar_lea.vmem %s0, %s280
        %p282 = pneg %p52
        %p283 = pneg %p49
        %s284 = sand.u32 %s65, 1
        %s285 = scalar_lea.sflag [#allocation3], %s284
        %s286 = sand.u32 %s65, 1
        %s287 = smul.addr %s286, 2048
        %s288 = scalar_lea.vmem [#allocation2], %s287
        %p289 = pneg %p78
        %p290 = pneg %p75
        %s291 = smul.u32 2, %s24
        %p292 = scmp.lt.s32.totalorder %s291, 23
        %s293 = scalar_select %p292, %s291, 23
        %s294 = scalar_lea.vmem %s2, %s293
        %p295 = pneg %p104
        %p296 = pneg %p101
        %s297 = smul.u32 2, %s24
        %p298 = scmp.lt.s32.totalorder %s297, 23
        %s299 = scalar_select %p298, %s297, 23
        %s300 = scalar_lea.vmem %s3, %s299
        %p301 = pneg %p130
        %p302 = pneg %p127
        %s303 = smul.u32 2, %s24
        %p304 = scmp.lt.s32.totalorder %s303, 23
        %s305 = scalar_select %p304, %s303, 23
        %s306 = scalar_lea.vmem %s4, %s305
        %p307 = pneg %p156
        %p308 = pneg %p153
        %p309 = pneg %p184
        %p310 = pneg %p181
        %s311 = sand.u32 %s171, 1
        %s312 = sand.u32 %s171, 1
        %s313 = smul.addr %s312, 128
        %s314 = scalar_lea.vmem [#allocation4], %s313
        %s315 = smul.u32 16, %s23
        %p316 = scmp.lt.s32.totalorder %s315, 15
        %s317 = scalar_select %p316, %s315, 15
        %s318 = smul.addr %s317, 16
        %s319 = smul.addr %s318, 4
        %s320 = scalar_lea.vmem %s0, %s319
        %s321 = smul.u32 16, %s23
        %s322 = smul.u32 2, %s24
        %s323 = smul.u32 2, %s24
        %p324 = scmp.lt.s32.totalorder %s323, 23
        %s325 = scalar_select %p324, %s323, 23
        %s326 = scalar_lea.vmem %s2, %s325
        %s327 = smul.u32 2, %s24
        %s328 = smul.u32 2, %s24
        %p329 = scmp.lt.s32.totalorder %s328, 23
        %s330 = scalar_select %p329, %s328, 23
        %s331 = scalar_lea.vmem %s3, %s330
        %s332 = smul.u32 2, %s24
        %s333 = smul.u32 2, %s24
        %p334 = scmp.lt.s32.totalorder %s333, 23
        %s335 = scalar_select %p334, %s333, 23
        %s336 = scalar_lea.vmem %s4, %s335
        %s337 = smul.u32 2, %s24
        %s338 = smul.u32 16, %s23
        %s339 = smul.u32 2, %s24
        %v340 = vld [vmem:[%s320] sm:$0xff]
        %v341 = vld [vmem:[%s320 + $0x8] sm:$0xff]
        %v342 = vld [vmem:[%s320 + $0x10] sm:$0xff]
        %v343 = vld [vmem:[%s320 + $0x18] sm:$0xff]
        %v344 = vld [vmem:[%s320 + $0x20] sm:$0xff]
        %v345 = vld [vmem:[%s320 + $0x28] sm:$0xff]
        %v346 = vld [vmem:[%s320 + $0x30] sm:$0xff]
        %v347 = vld [vmem:[%s320 + $0x38] sm:$0xff]
        %v348 = vld [vmem:[%s320 + $0x40] sm:$0xff]
        %v349 = vld [vmem:[%s320 + $0x48] sm:$0xff]
        %v350 = vld [vmem:[%s320 + $0x50] sm:$0xff]
        %v351 = vld [vmem:[%s320 + $0x58] sm:$0xff]
        %v352 = vld [vmem:[%s320 + $0x60] sm:$0xff]
        %v353 = vld [vmem:[%s320 + $0x68] sm:$0xff]
        %v354 = vld [vmem:[%s320 + $0x70] sm:$0xff]
        %v355 = vld [vmem:[%s320 + $0x78] sm:$0xff]
        %v356 = vld [vmem:[%s320 + $0x80] sm:$0xff]
        %v357 = vld [vmem:[%s320 + $0x88] sm:$0xff]
        %v358 = vld [vmem:[%s320 + $0x90] sm:$0xff]
        %v359 = vld [vmem:[%s320 + $0x98] sm:$0xff]
        %v360 = vld [vmem:[%s320 + $0xa0] sm:$0xff]
        %v361 = vld [vmem:[%s320 + $0xa8] sm:$0xff]
        %v362 = vld [vmem:[%s320 + $0xb0] sm:$0xff]
        %v363 = vld [vmem:[%s320 + $0xb8] sm:$0xff]
        %v364 = vld [vmem:[%s320 + $0xc0] sm:$0xff]
        %v365 = vld [vmem:[%s320 + $0xc8] sm:$0xff]
        %v366 = vld [vmem:[%s320 + $0xd0] sm:$0xff]
        %v367 = vld [vmem:[%s320 + $0xd8] sm:$0xff]
        %v368 = vld [vmem:[%s320 + $0xe0] sm:$0xff]
        %v369 = vld [vmem:[%s320 + $0xe8] sm:$0xff]
        %v370 = vld [vmem:[%s320 + $0xf0] sm:$0xff]
        %v371 = vld [vmem:[%s320 + $0xf8] sm:$0xff]
        %v372 = vld [vmem:[%s320 + $0x100] sm:$0xff]
        %v373 = vld [vmem:[%s320 + $0x108] sm:$0xff]
        %v374 = vld [vmem:[%s320 + $0x110] sm:$0xff]
        %v375 = vld [vmem:[%s320 + $0x118] sm:$0xff]
        %v376 = vld [vmem:[%s320 + $0x120] sm:$0xff]
        %v377 = vld [vmem:[%s320 + $0x128] sm:$0xff]
        %v378 = vld [vmem:[%s320 + $0x130] sm:$0xff]
        %v379 = vld [vmem:[%s320 + $0x138] sm:$0xff]
        %v380 = vld [vmem:[%s320 + $0x140] sm:$0xff]
        %v381 = vld [vmem:[%s320 + $0x148] sm:$0xff]
        %v382 = vld [vmem:[%s320 + $0x150] sm:$0xff]
        %v383 = vld [vmem:[%s320 + $0x158] sm:$0xff]
        %v384 = vld [vmem:[%s320 + $0x160] sm:$0xff]
        %v385 = vld [vmem:[%s320 + $0x168] sm:$0xff]
        %v386 = vld [vmem:[%s320 + $0x170] sm:$0xff]
        %v387 = vld [vmem:[%s320 + $0x178] sm:$0xff]
        %v388 = vld [vmem:[%s320 + $0x180] sm:$0xff]
        %v389 = vld [vmem:[%s320 + $0x188] sm:$0xff]
        %v390 = vld [vmem:[%s320 + $0x190] sm:$0xff]
        %v391 = vld [vmem:[%s320 + $0x198] sm:$0xff]
        %v392 = vld [vmem:[%s320 + $0x1a0] sm:$0xff]
        %v393 = vld [vmem:[%s320 + $0x1a8] sm:$0xff]
        %v394 = vld [vmem:[%s320 + $0x1b0] sm:$0xff]
        %v395 = vld [vmem:[%s320 + $0x1b8] sm:$0xff]
        %v396 = vld [vmem:[%s320 + $0x1c0] sm:$0xff]
        %v397 = vld [vmem:[%s320 + $0x1c8] sm:$0xff]
        %v398 = vld [vmem:[%s320 + $0x1d0] sm:$0xff]
        %v399 = vld [vmem:[%s320 + $0x1d8] sm:$0xff]
        %v400 = vld [vmem:[%s320 + $0x1e0] sm:$0xff]
        %v401 = vld [vmem:[%s320 + $0x1e8] sm:$0xff]
        %v402 = vld [vmem:[%s320 + $0x1f0] sm:$0xff]
        %v403 = vld [vmem:[%s320 + $0x1f8] sm:$0xff]
        %v404 = vld [vmem:[%s320 + $0x200] sm:$0xff]
        %v405 = vld [vmem:[%s320 + $0x208] sm:$0xff]
        %v406 = vld [vmem:[%s320 + $0x210] sm:$0xff]
        %v407 = vld [vmem:[%s320 + $0x218] sm:$0xff]
        %v408 = vld [vmem:[%s320 + $0x220] sm:$0xff]
        %v409 = vld [vmem:[%s320 + $0x228] sm:$0xff]
        %v410 = vld [vmem:[%s320 + $0x230] sm:$0xff]
        %v411 = vld [vmem:[%s320 + $0x238] sm:$0xff]
        %v412 = vld [vmem:[%s320 + $0x240] sm:$0xff]
        %v413 = vld [vmem:[%s320 + $0x248] sm:$0xff]
        %v414 = vld [vmem:[%s320 + $0x250] sm:$0xff]
        %v415 = vld [vmem:[%s320 + $0x258] sm:$0xff]
        %v416 = vld [vmem:[%s320 + $0x260] sm:$0xff]
        %v417 = vld [vmem:[%s320 + $0x268] sm:$0xff]
        %v418 = vld [vmem:[%s320 + $0x270] sm:$0xff]
        %v419 = vld [vmem:[%s320 + $0x278] sm:$0xff]
        %v420 = vld [vmem:[%s320 + $0x280] sm:$0xff]
        %v421 = vld [vmem:[%s320 + $0x288] sm:$0xff]
        %v422 = vld [vmem:[%s320 + $0x290] sm:$0xff]
        %v423 = vld [vmem:[%s320 + $0x298] sm:$0xff]
        %v424 = vld [vmem:[%s320 + $0x2a0] sm:$0xff]
        %v425 = vld [vmem:[%s320 + $0x2a8] sm:$0xff]
        %v426 = vld [vmem:[%s320 + $0x2b0] sm:$0xff]
        %v427 = vld [vmem:[%s320 + $0x2b8] sm:$0xff]
        %v428 = vld [vmem:[%s320 + $0x2c0] sm:$0xff]
        %v429 = vld [vmem:[%s320 + $0x2c8] sm:$0xff]
        %v430 = vld [vmem:[%s320 + $0x2d0] sm:$0xff]
        %v431 = vld [vmem:[%s320 + $0x2d8] sm:$0xff]
        %v432 = vld [vmem:[%s320 + $0x2e0] sm:$0xff]
        %v433 = vld [vmem:[%s320 + $0x2e8] sm:$0xff]
        %v434 = vld [vmem:[%s320 + $0x2f0] sm:$0xff]
        %v435 = vld [vmem:[%s320 + $0x2f8] sm:$0xff]
        %v436 = vld [vmem:[%s320 + $0x300] sm:$0xff]
        %v437 = vld [vmem:[%s320 + $0x308] sm:$0xff]
        %v438 = vld [vmem:[%s320 + $0x310] sm:$0xff]
        %v439 = vld [vmem:[%s320 + $0x318] sm:$0xff]
        %v440 = vld [vmem:[%s320 + $0x320] sm:$0xff]
        %v441 = vld [vmem:[%s320 + $0x328] sm:$0xff]
        %v442 = vld [vmem:[%s320 + $0x330] sm:$0xff]
        %v443 = vld [vmem:[%s320 + $0x338] sm:$0xff]
        %v444 = vld [vmem:[%s320 + $0x340] sm:$0xff]
        %v445 = vld [vmem:[%s320 + $0x348] sm:$0xff]
        %v446 = vld [vmem:[%s320 + $0x350] sm:$0xff]
        %v447 = vld [vmem:[%s320 + $0x358] sm:$0xff]
        %v448 = vld [vmem:[%s320 + $0x360] sm:$0xff]
        %v449 = vld [vmem:[%s320 + $0x368] sm:$0xff]
        %v450 = vld [vmem:[%s320 + $0x370] sm:$0xff]
        %v451 = vld [vmem:[%s320 + $0x378] sm:$0xff]
        %v452 = vld [vmem:[%s320 + $0x380] sm:$0xff]
        %v453 = vld [vmem:[%s320 + $0x388] sm:$0xff]
        %v454 = vld [vmem:[%s320 + $0x390] sm:$0xff]
        %v455 = vld [vmem:[%s320 + $0x398] sm:$0xff]
        %v456 = vld [vmem:[%s320 + $0x3a0] sm:$0xff]
        %v457 = vld [vmem:[%s320 + $0x3a8] sm:$0xff]
        %v458 = vld [vmem:[%s320 + $0x3b0] sm:$0xff]
        %v459 = vld [vmem:[%s320 + $0x3b8] sm:$0xff]
        %v460 = vld [vmem:[%s320 + $0x3c0] sm:$0xff]
        %v461 = vld [vmem:[%s320 + $0x3c8] sm:$0xff]
        %v462 = vld [vmem:[%s320 + $0x3d0] sm:$0xff]
        %v463 = vld [vmem:[%s320 + $0x3d8] sm:$0xff]
        %v464 = vld [vmem:[%s320 + $0x3e0] sm:$0xff]
        %v465 = vld [vmem:[%s320 + $0x3e8] sm:$0xff]
        %v466 = vld [vmem:[%s320 + $0x3f0] sm:$0xff]
        %v467 = vld [vmem:[%s320 + $0x3f8] sm:$0xff]
        %v468 = vld [vmem:[%s270] sm:$0xff]
        %v469 = vld [vmem:[%s270 + $0x8] sm:$0xff]
        %v470 = vld [vmem:[%s270 + $0x10] sm:$0xff]
        %v471 = vld [vmem:[%s270 + $0x18] sm:$0xff]
        %v472 = vld [vmem:[%s270 + $0x20] sm:$0xff]
        %v473 = vld [vmem:[%s270 + $0x28] sm:$0xff]
        %v474 = vld [vmem:[%s270 + $0x30] sm:$0xff]
        %v475 = vld [vmem:[%s270 + $0x38] sm:$0xff]
        %v476 = vld [vmem:[%s270 + $0x40] sm:$0xff]
        %v477 = vld [vmem:[%s270 + $0x48] sm:$0xff]
        %v478 = vld [vmem:[%s270 + $0x50] sm:$0xff]
        %v479 = vld [vmem:[%s270 + $0x58] sm:$0xff]
        %v480 = vld [vmem:[%s270 + $0x60] sm:$0xff]
        %v481 = vld [vmem:[%s270 + $0x68] sm:$0xff]
        %v482 = vld [vmem:[%s270 + $0x70] sm:$0xff]
        %v483 = vld [vmem:[%s270 + $0x78] sm:$0xff]
        %v484 = vld [vmem:[%s270 + $0x80] sm:$0xff]
        %v485 = vld [vmem:[%s270 + $0x88] sm:$0xff]
        %v486 = vld [vmem:[%s270 + $0x90] sm:$0xff]
        %v487 = vld [vmem:[%s270 + $0x98] sm:$0xff]
        %v488 = vld [vmem:[%s270 + $0xa0] sm:$0xff]
        %v489 = vld [vmem:[%s270 + $0xa8] sm:$0xff]
        %v490 = vld [vmem:[%s270 + $0xb0] sm:$0xff]
        %v491 = vld [vmem:[%s270 + $0xb8] sm:$0xff]
        %v492 = vld [vmem:[%s270 + $0xc0] sm:$0xff]
        %v493 = vld [vmem:[%s270 + $0xc8] sm:$0xff]
        %v494 = vld [vmem:[%s270 + $0xd0] sm:$0xff]
        %v495 = vld [vmem:[%s270 + $0xd8] sm:$0xff]
        %v496 = vld [vmem:[%s270 + $0xe0] sm:$0xff]
        %v497 = vld [vmem:[%s270 + $0xe8] sm:$0xff]
        %v498 = vld [vmem:[%s270 + $0xf0] sm:$0xff]
        %v499 = vld [vmem:[%s270 + $0xf8] sm:$0xff]
        %v500 = vld [vmem:[%s270 + $0x100] sm:$0xff]
        %v501 = vld [vmem:[%s270 + $0x108] sm:$0xff]
        %v502 = vld [vmem:[%s270 + $0x110] sm:$0xff]
        %v503 = vld [vmem:[%s270 + $0x118] sm:$0xff]
        %v504 = vld [vmem:[%s270 + $0x120] sm:$0xff]
        %v505 = vld [vmem:[%s270 + $0x128] sm:$0xff]
        %v506 = vld [vmem:[%s270 + $0x130] sm:$0xff]
        %v507 = vld [vmem:[%s270 + $0x138] sm:$0xff]
        %v508 = vld [vmem:[%s270 + $0x140] sm:$0xff]
        %v509 = vld [vmem:[%s270 + $0x148] sm:$0xff]
        %v510 = vld [vmem:[%s270 + $0x150] sm:$0xff]
        %v511 = vld [vmem:[%s270 + $0x158] sm:$0xff]
        %v512 = vld [vmem:[%s270 + $0x160] sm:$0xff]
        %v513 = vld [vmem:[%s270 + $0x168] sm:$0xff]
        %v514 = vld [vmem:[%s270 + $0x170] sm:$0xff]
        %v515 = vld [vmem:[%s270 + $0x178] sm:$0xff]
        %v516 = vld [vmem:[%s270 + $0x180] sm:$0xff]
        %v517 = vld [vmem:[%s270 + $0x188] sm:$0xff]
        %v518 = vld [vmem:[%s270 + $0x190] sm:$0xff]
        %v519 = vld [vmem:[%s270 + $0x198] sm:$0xff]
        %v520 = vld [vmem:[%s270 + $0x1a0] sm:$0xff]
        %v521 = vld [vmem:[%s270 + $0x1a8] sm:$0xff]
        %v522 = vld [vmem:[%s270 + $0x1b0] sm:$0xff]
        %v523 = vld [vmem:[%s270 + $0x1b8] sm:$0xff]
        %v524 = vld [vmem:[%s270 + $0x1c0] sm:$0xff]
        %v525 = vld [vmem:[%s270 + $0x1c8] sm:$0xff]
        %v526 = vld [vmem:[%s270 + $0x1d0] sm:$0xff]
        %v527 = vld [vmem:[%s270 + $0x1d8] sm:$0xff]
        %v528 = vld [vmem:[%s270 + $0x1e0] sm:$0xff]
        %v529 = vld [vmem:[%s270 + $0x1e8] sm:$0xff]
        %v530 = vld [vmem:[%s270 + $0x1f0] sm:$0xff]
        %v531 = vld [vmem:[%s270 + $0x1f8] sm:$0xff]
        %v532 = vld [vmem:[%s270 + $0x200] sm:$0xff]
        %v533 = vld [vmem:[%s270 + $0x208] sm:$0xff]
        %v534 = vld [vmem:[%s270 + $0x210] sm:$0xff]
        %v535 = vld [vmem:[%s270 + $0x218] sm:$0xff]
        %v536 = vld [vmem:[%s270 + $0x220] sm:$0xff]
        %v537 = vld [vmem:[%s270 + $0x228] sm:$0xff]
        %v538 = vld [vmem:[%s270 + $0x230] sm:$0xff]
        %v539 = vld [vmem:[%s270 + $0x238] sm:$0xff]
        %v540 = vld [vmem:[%s270 + $0x240] sm:$0xff]
        %v541 = vld [vmem:[%s270 + $0x248] sm:$0xff]
        %v542 = vld [vmem:[%s270 + $0x250] sm:$0xff]
        %v543 = vld [vmem:[%s270 + $0x258] sm:$0xff]
        %v544 = vld [vmem:[%s270 + $0x260] sm:$0xff]
        %v545 = vld [vmem:[%s270 + $0x268] sm:$0xff]
        %v546 = vld [vmem:[%s270 + $0x270] sm:$0xff]
        %v547 = vld [vmem:[%s270 + $0x278] sm:$0xff]
        %v548 = vld [vmem:[%s270 + $0x280] sm:$0xff]
        %v549 = vld [vmem:[%s270 + $0x288] sm:$0xff]
        %v550 = vld [vmem:[%s270 + $0x290] sm:$0xff]
        %v551 = vld [vmem:[%s270 + $0x298] sm:$0xff]
        %v552 = vld [vmem:[%s270 + $0x2a0] sm:$0xff]
        %v553 = vld [vmem:[%s270 + $0x2a8] sm:$0xff]
        %v554 = vld [vmem:[%s270 + $0x2b0] sm:$0xff]
        %v555 = vld [vmem:[%s270 + $0x2b8] sm:$0xff]
        %v556 = vld [vmem:[%s270 + $0x2c0] sm:$0xff]
        %v557 = vld [vmem:[%s270 + $0x2c8] sm:$0xff]
        %v558 = vld [vmem:[%s270 + $0x2d0] sm:$0xff]
        %v559 = vld [vmem:[%s270 + $0x2d8] sm:$0xff]
        %v560 = vld [vmem:[%s270 + $0x2e0] sm:$0xff]
        %v561 = vld [vmem:[%s270 + $0x2e8] sm:$0xff]
        %v562 = vld [vmem:[%s270 + $0x2f0] sm:$0xff]
        %v563 = vld [vmem:[%s270 + $0x2f8] sm:$0xff]
        %v564 = vld [vmem:[%s270 + $0x300] sm:$0xff]
        %v565 = vld [vmem:[%s270 + $0x308] sm:$0xff]
        %v566 = vld [vmem:[%s270 + $0x310] sm:$0xff]
        %v567 = vld [vmem:[%s270 + $0x318] sm:$0xff]
        %v568 = vld [vmem:[%s270 + $0x320] sm:$0xff]
        %v569 = vld [vmem:[%s270 + $0x328] sm:$0xff]
        %v570 = vld [vmem:[%s270 + $0x330] sm:$0xff]
        %v571 = vld [vmem:[%s270 + $0x338] sm:$0xff]
        %v572 = vld [vmem:[%s270 + $0x340] sm:$0xff]
        %v573 = vld [vmem:[%s270 + $0x348] sm:$0xff]
        %v574 = vld [vmem:[%s270 + $0x350] sm:$0xff]
        %v575 = vld [vmem:[%s270 + $0x358] sm:$0xff]
        %v576 = vld [vmem:[%s270 + $0x360] sm:$0xff]
        %v577 = vld [vmem:[%s270 + $0x368] sm:$0xff]
        %v578 = vld [vmem:[%s270 + $0x370] sm:$0xff]
        %v579 = vld [vmem:[%s270 + $0x378] sm:$0xff]
        %v580 = vld [vmem:[%s270 + $0x380] sm:$0xff]
        %v581 = vld [vmem:[%s270 + $0x388] sm:$0xff]
        %v582 = vld [vmem:[%s270 + $0x390] sm:$0xff]
        %v583 = vld [vmem:[%s270 + $0x398] sm:$0xff]
        %v584 = vld [vmem:[%s270 + $0x3a0] sm:$0xff]
        %v585 = vld [vmem:[%s270 + $0x3a8] sm:$0xff]
        %v586 = vld [vmem:[%s270 + $0x3b0] sm:$0xff]
        %v587 = vld [vmem:[%s270 + $0x3b8] sm:$0xff]
        %v588 = vld [vmem:[%s270 + $0x3c0] sm:$0xff]
        %v589 = vld [vmem:[%s270 + $0x3c8] sm:$0xff]
        %v590 = vld [vmem:[%s270 + $0x3d0] sm:$0xff]
        %v591 = vld [vmem:[%s270 + $0x3d8] sm:$0xff]
        %v592 = vld [vmem:[%s270 + $0x3e0] sm:$0xff]
        %v593 = vld [vmem:[%s270 + $0x3e8] sm:$0xff]
        %v594 = vld [vmem:[%s270 + $0x3f0] sm:$0xff]
        %v595 = vld [vmem:[%s270 + $0x3f8] sm:$0xff]
        %v596 = vld [vmem:[%s270 + $0x400] sm:$0xff]
        %v597 = vld [vmem:[%s270 + $0x408] sm:$0xff]
        %v598 = vld [vmem:[%s270 + $0x410] sm:$0xff]
        %v599 = vld [vmem:[%s270 + $0x418] sm:$0xff]
        %v600 = vld [vmem:[%s270 + $0x420] sm:$0xff]
        %v601 = vld [vmem:[%s270 + $0x428] sm:$0xff]
        %v602 = vld [vmem:[%s270 + $0x430] sm:$0xff]
        %v603 = vld [vmem:[%s270 + $0x438] sm:$0xff]
        %v604 = vld [vmem:[%s270 + $0x440] sm:$0xff]
        %v605 = vld [vmem:[%s270 + $0x448] sm:$0xff]
        %v606 = vld [vmem:[%s270 + $0x450] sm:$0xff]
        %v607 = vld [vmem:[%s270 + $0x458] sm:$0xff]
        %v608 = vld [vmem:[%s270 + $0x460] sm:$0xff]
        %v609 = vld [vmem:[%s270 + $0x468] sm:$0xff]
        %v610 = vld [vmem:[%s270 + $0x470] sm:$0xff]
        %v611 = vld [vmem:[%s270 + $0x478] sm:$0xff]
        %v612 = vld [vmem:[%s270 + $0x480] sm:$0xff]
        %v613 = vld [vmem:[%s270 + $0x488] sm:$0xff]
        %v614 = vld [vmem:[%s270 + $0x490] sm:$0xff]
        %v615 = vld [vmem:[%s270 + $0x498] sm:$0xff]
        %v616 = vld [vmem:[%s270 + $0x4a0] sm:$0xff]
        %v617 = vld [vmem:[%s270 + $0x4a8] sm:$0xff]
        %v618 = vld [vmem:[%s270 + $0x4b0] sm:$0xff]
        %v619 = vld [vmem:[%s270 + $0x4b8] sm:$0xff]
        %v620 = vld [vmem:[%s270 + $0x4c0] sm:$0xff]
        %v621 = vld [vmem:[%s270 + $0x4c8] sm:$0xff]
        %v622 = vld [vmem:[%s270 + $0x4d0] sm:$0xff]
        %v623 = vld [vmem:[%s270 + $0x4d8] sm:$0xff]
        %v624 = vld [vmem:[%s270 + $0x4e0] sm:$0xff]
        %v625 = vld [vmem:[%s270 + $0x4e8] sm:$0xff]
        %v626 = vld [vmem:[%s270 + $0x4f0] sm:$0xff]
        %v627 = vld [vmem:[%s270 + $0x4f8] sm:$0xff]
        %v628 = vld [vmem:[%s270 + $0x500] sm:$0xff]
        %v629 = vld [vmem:[%s270 + $0x508] sm:$0xff]
        %v630 = vld [vmem:[%s270 + $0x510] sm:$0xff]
        %v631 = vld [vmem:[%s270 + $0x518] sm:$0xff]
        %v632 = vld [vmem:[%s270 + $0x520] sm:$0xff]
        %v633 = vld [vmem:[%s270 + $0x528] sm:$0xff]
        %v634 = vld [vmem:[%s270 + $0x530] sm:$0xff]
        %v635 = vld [vmem:[%s270 + $0x538] sm:$0xff]
        %v636 = vld [vmem:[%s270 + $0x540] sm:$0xff]
        %v637 = vld [vmem:[%s270 + $0x548] sm:$0xff]
        %v638 = vld [vmem:[%s270 + $0x550] sm:$0xff]
        %v639 = vld [vmem:[%s270 + $0x558] sm:$0xff]
        %v640 = vld [vmem:[%s270 + $0x560] sm:$0xff]
        %v641 = vld [vmem:[%s270 + $0x568] sm:$0xff]
        %v642 = vld [vmem:[%s270 + $0x570] sm:$0xff]
        %v643 = vld [vmem:[%s270 + $0x578] sm:$0xff]
        %v644 = vld [vmem:[%s270 + $0x580] sm:$0xff]
        %v645 = vld [vmem:[%s270 + $0x588] sm:$0xff]
        %v646 = vld [vmem:[%s270 + $0x590] sm:$0xff]
        %v647 = vld [vmem:[%s270 + $0x598] sm:$0xff]
        %v648 = vld [vmem:[%s270 + $0x5a0] sm:$0xff]
        %v649 = vld [vmem:[%s270 + $0x5a8] sm:$0xff]
        %v650 = vld [vmem:[%s270 + $0x5b0] sm:$0xff]
        %v651 = vld [vmem:[%s270 + $0x5b8] sm:$0xff]
        %v652 = vld [vmem:[%s270 + $0x5c0] sm:$0xff]
        %v653 = vld [vmem:[%s270 + $0x5c8] sm:$0xff]
        %v654 = vld [vmem:[%s270 + $0x5d0] sm:$0xff]
        %v655 = vld [vmem:[%s270 + $0x5d8] sm:$0xff]
        %v656 = vld [vmem:[%s270 + $0x5e0] sm:$0xff]
        %v657 = vld [vmem:[%s270 + $0x5e8] sm:$0xff]
        %v658 = vld [vmem:[%s270 + $0x5f0] sm:$0xff]
        %v659 = vld [vmem:[%s270 + $0x5f8] sm:$0xff]
        %v660 = vld [vmem:[%s270 + $0x600] sm:$0xff]
        %v661 = vld [vmem:[%s270 + $0x608] sm:$0xff]
        %v662 = vld [vmem:[%s270 + $0x610] sm:$0xff]
        %v663 = vld [vmem:[%s270 + $0x618] sm:$0xff]
        %v664 = vld [vmem:[%s270 + $0x620] sm:$0xff]
        %v665 = vld [vmem:[%s270 + $0x628] sm:$0xff]
        %v666 = vld [vmem:[%s270 + $0x630] sm:$0xff]
        %v667 = vld [vmem:[%s270 + $0x638] sm:$0xff]
        %v668 = vld [vmem:[%s270 + $0x640] sm:$0xff]
        %v669 = vld [vmem:[%s270 + $0x648] sm:$0xff]
        %v670 = vld [vmem:[%s270 + $0x650] sm:$0xff]
        %v671 = vld [vmem:[%s270 + $0x658] sm:$0xff]
        %v672 = vld [vmem:[%s270 + $0x660] sm:$0xff]
        %v673 = vld [vmem:[%s270 + $0x668] sm:$0xff]
        %v674 = vld [vmem:[%s270 + $0x670] sm:$0xff]
        %v675 = vld [vmem:[%s270 + $0x678] sm:$0xff]
        %v676 = vld [vmem:[%s270 + $0x680] sm:$0xff]
        %v677 = vld [vmem:[%s270 + $0x688] sm:$0xff]
        %v678 = vld [vmem:[%s270 + $0x690] sm:$0xff]
        %v679 = vld [vmem:[%s270 + $0x698] sm:$0xff]
        %v680 = vld [vmem:[%s270 + $0x6a0] sm:$0xff]
        %v681 = vld [vmem:[%s270 + $0x6a8] sm:$0xff]
        %v682 = vld [vmem:[%s270 + $0x6b0] sm:$0xff]
        %v683 = vld [vmem:[%s270 + $0x6b8] sm:$0xff]
        %v684 = vld [vmem:[%s270 + $0x6c0] sm:$0xff]
        %v685 = vld [vmem:[%s270 + $0x6c8] sm:$0xff]
        %v686 = vld [vmem:[%s270 + $0x6d0] sm:$0xff]
        %v687 = vld [vmem:[%s270 + $0x6d8] sm:$0xff]
        %v688 = vld [vmem:[%s270 + $0x6e0] sm:$0xff]
        %v689 = vld [vmem:[%s270 + $0x6e8] sm:$0xff]
        %v690 = vld [vmem:[%s270 + $0x6f0] sm:$0xff]
        %v691 = vld [vmem:[%s270 + $0x6f8] sm:$0xff]
        %v692 = vld [vmem:[%s270 + $0x700] sm:$0xff]
        %v693 = vld [vmem:[%s270 + $0x708] sm:$0xff]
        %v694 = vld [vmem:[%s270 + $0x710] sm:$0xff]
        %v695 = vld [vmem:[%s270 + $0x718] sm:$0xff]
        %v696 = vld [vmem:[%s270 + $0x720] sm:$0xff]
        %v697 = vld [vmem:[%s270 + $0x728] sm:$0xff]
        %v698 = vld [vmem:[%s270 + $0x730] sm:$0xff]
        %v699 = vld [vmem:[%s270 + $0x738] sm:$0xff]
        %v700 = vld [vmem:[%s270 + $0x740] sm:$0xff]
        %v701 = vld [vmem:[%s270 + $0x748] sm:$0xff]
        %v702 = vld [vmem:[%s270 + $0x750] sm:$0xff]
        %v703 = vld [vmem:[%s270 + $0x758] sm:$0xff]
        %v704 = vld [vmem:[%s270 + $0x760] sm:$0xff]
        %v705 = vld [vmem:[%s270 + $0x768] sm:$0xff]
        %v706 = vld [vmem:[%s270 + $0x770] sm:$0xff]
        %v707 = vld [vmem:[%s270 + $0x778] sm:$0xff]
        %v708 = vld [vmem:[%s270 + $0x780] sm:$0xff]
        %v709 = vld [vmem:[%s270 + $0x788] sm:$0xff]
        %v710 = vld [vmem:[%s270 + $0x790] sm:$0xff]
        %v711 = vld [vmem:[%s270 + $0x798] sm:$0xff]
        %v712 = vld [vmem:[%s270 + $0x7a0] sm:$0xff]
        %v713 = vld [vmem:[%s270 + $0x7a8] sm:$0xff]
        %v714 = vld [vmem:[%s270 + $0x7b0] sm:$0xff]
        %v715 = vld [vmem:[%s270 + $0x7b8] sm:$0xff]
        %v716 = vld [vmem:[%s270 + $0x7c0] sm:$0xff]
        %v717 = vld [vmem:[%s270 + $0x7c8] sm:$0xff]
        %v718 = vld [vmem:[%s270 + $0x7d0] sm:$0xff]
        %v719 = vld [vmem:[%s270 + $0x7d8] sm:$0xff]
        %v720 = vld [vmem:[%s270 + $0x7e0] sm:$0xff]
        %v721 = vld [vmem:[%s270 + $0x7e8] sm:$0xff]
        %v722 = vld [vmem:[%s270 + $0x7f0] sm:$0xff]
        %v723 = vld [vmem:[%s270 + $0x7f8] sm:$0xff]
        %v852 = vunpack.c.l.b16 %v340
        %v853 = vunpack.c.h.b16 %v340
        %v854 = vunpack.c.l.b16 %v341
        %v855 = vunpack.c.h.b16 %v341
        %v856 = vunpack.c.l.b16 %v342
        %v857 = vunpack.c.h.b16 %v342
        %v858 = vunpack.c.l.b16 %v343
        %v859 = vunpack.c.h.b16 %v343
        %v860 = vunpack.c.l.b16 %v344
        %v861 = vunpack.c.h.b16 %v344
        %v862 = vunpack.c.l.b16 %v345
        %v863 = vunpack.c.h.b16 %v345
        %v864 = vunpack.c.l.b16 %v346
        %v865 = vunpack.c.h.b16 %v346
        %v866 = vunpack.c.l.b16 %v347
        %v867 = vunpack.c.h.b16 %v347
        %v868 = vunpack.c.l.b16 %v348
        %v869 = vunpack.c.h.b16 %v348
        %v870 = vunpack.c.l.b16 %v349
        %v871 = vunpack.c.h.b16 %v349
        %v872 = vunpack.c.l.b16 %v350
        %v873 = vunpack.c.h.b16 %v350
        %v874 = vunpack.c.l.b16 %v351
        %v875 = vunpack.c.h.b16 %v351
        %v876 = vunpack.c.l.b16 %v352
        %v877 = vunpack.c.h.b16 %v352
        %v878 = vunpack.c.l.b16 %v353
        %v879 = vunpack.c.h.b16 %v353
        %v880 = vunpack.c.l.b16 %v354
        %v881 = vunpack.c.h.b16 %v354
        %v882 = vunpack.c.l.b16 %v355
        %v883 = vunpack.c.h.b16 %v355
        %v884 = vunpack.c.l.b16 %v356
        %v885 = vunpack.c.h.b16 %v356
        %v886 = vunpack.c.l.b16 %v357
        %v887 = vunpack.c.h.b16 %v357
        %v888 = vunpack.c.l.b16 %v358
        %v889 = vunpack.c.h.b16 %v358
        %v890 = vunpack.c.l.b16 %v359
        %v891 = vunpack.c.h.b16 %v359
        %v892 = vunpack.c.l.b16 %v360
        %v893 = vunpack.c.h.b16 %v360
        %v894 = vunpack.c.l.b16 %v361
        %v895 = vunpack.c.h.b16 %v361
        %v896 = vunpack.c.l.b16 %v362
        %v897 = vunpack.c.h.b16 %v362
        %v898 = vunpack.c.l.b16 %v363
        %v899 = vunpack.c.h.b16 %v363
        %v900 = vunpack.c.l.b16 %v364
        %v901 = vunpack.c.h.b16 %v364
        %v902 = vunpack.c.l.b16 %v365
        %v903 = vunpack.c.h.b16 %v365
        %v904 = vunpack.c.l.b16 %v366
        %v905 = vunpack.c.h.b16 %v366
        %v906 = vunpack.c.l.b16 %v367
        %v907 = vunpack.c.h.b16 %v367
        %v908 = vunpack.c.l.b16 %v368
        %v909 = vunpack.c.h.b16 %v368
        %v910 = vunpack.c.l.b16 %v369
        %v911 = vunpack.c.h.b16 %v369
        %v912 = vunpack.c.l.b16 %v370
        %v913 = vunpack.c.h.b16 %v370
        %v914 = vunpack.c.l.b16 %v371
        %v915 = vunpack.c.h.b16 %v371
        %v916 = vunpack.c.l.b16 %v372
        %v917 = vunpack.c.h.b16 %v372
        %v918 = vunpack.c.l.b16 %v373
        %v919 = vunpack.c.h.b16 %v373
        %v920 = vunpack.c.l.b16 %v374
        %v921 = vunpack.c.h.b16 %v374
        %v922 = vunpack.c.l.b16 %v375
        %v923 = vunpack.c.h.b16 %v375
        %v924 = vunpack.c.l.b16 %v376
        %v925 = vunpack.c.h.b16 %v376
        %v926 = vunpack.c.l.b16 %v377
        %v927 = vunpack.c.h.b16 %v377
        %v928 = vunpack.c.l.b16 %v378
        %v929 = vunpack.c.h.b16 %v378
        %v930 = vunpack.c.l.b16 %v379
        %v931 = vunpack.c.h.b16 %v379
        %v932 = vunpack.c.l.b16 %v380
        %v933 = vunpack.c.h.b16 %v380
        %v934 = vunpack.c.l.b16 %v381
        %v935 = vunpack.c.h.b16 %v381
        %v936 = vunpack.c.l.b16 %v382
        %v937 = vunpack.c.h.b16 %v382
        %v938 = vunpack.c.l.b16 %v383
        %v939 = vunpack.c.h.b16 %v383
        %v940 = vunpack.c.l.b16 %v384
        %v941 = vunpack.c.h.b16 %v384
        %v942 = vunpack.c.l.b16 %v385
        %v943 = vunpack.c.h.b16 %v385
        %v944 = vunpack.c.l.b16 %v386
        %v945 = vunpack.c.h.b16 %v386
        %v946 = vunpack.c.l.b16 %v387
        %v947 = vunpack.c.h.b16 %v387
        %v948 = vunpack.c.l.b16 %v388
        %v949 = vunpack.c.h.b16 %v388
        %v950 = vunpack.c.l.b16 %v389
        %v951 = vunpack.c.h.b16 %v389
        %v952 = vunpack.c.l.b16 %v390
        %v953 = vunpack.c.h.b16 %v390
        %v954 = vunpack.c.l.b16 %v391
        %v955 = vunpack.c.h.b16 %v391
        %v956 = vunpack.c.l.b16 %v392
        %v957 = vunpack.c.h.b16 %v392
        %v958 = vunpack.c.l.b16 %v393
        %v959 = vunpack.c.h.b16 %v393
        %v960 = vunpack.c.l.b16 %v394
        %v961 = vunpack.c.h.b16 %v394
        %v962 = vunpack.c.l.b16 %v395
        %v963 = vunpack.c.h.b16 %v395
        %v964 = vunpack.c.l.b16 %v396
        %v965 = vunpack.c.h.b16 %v396
        %v966 = vunpack.c.l.b16 %v397
        %v967 = vunpack.c.h.b16 %v397
        %v968 = vunpack.c.l.b16 %v398
        %v969 = vunpack.c.h.b16 %v398
        %v970 = vunpack.c.l.b16 %v399
        %v971 = vunpack.c.h.b16 %v399
        %v972 = vunpack.c.l.b16 %v400
        %v973 = vunpack.c.h.b16 %v400
        %v974 = vunpack.c.l.b16 %v401
        %v975 = vunpack.c.h.b16 %v401
        %v976 = vunpack.c.l.b16 %v402
        %v977 = vunpack.c.h.b16 %v402
        %v978 = vunpack.c.l.b16 %v403
        %v979 = vunpack.c.h.b16 %v403
        %v980 = vunpack.c.l.b16 %v404
        %v981 = vunpack.c.h.b16 %v404
        %v982 = vunpack.c.l.b16 %v405
        %v983 = vunpack.c.h.b16 %v405
        %v984 = vunpack.c.l.b16 %v406
        %v985 = vunpack.c.h.b16 %v406
        %v986 = vunpack.c.l.b16 %v407
        %v987 = vunpack.c.h.b16 %v407
        %v988 = vunpack.c.l.b16 %v408
        %v989 = vunpack.c.h.b16 %v408
        %v990 = vunpack.c.l.b16 %v409
        %v991 = vunpack.c.h.b16 %v409
        %v992 = vunpack.c.l.b16 %v410
        %v993 = vunpack.c.h.b16 %v410
        %v994 = vunpack.c.l.b16 %v411
        %v995 = vunpack.c.h.b16 %v411
        %v996 = vunpack.c.l.b16 %v412
        %v997 = vunpack.c.h.b16 %v412
        %v998 = vunpack.c.l.b16 %v413
        %v999 = vunpack.c.h.b16 %v413
        %v1000 = vunpack.c.l.b16 %v414
        %v1001 = vunpack.c.h.b16 %v414
        %v1002 = vunpack.c.l.b16 %v415
        %v1003 = vunpack.c.h.b16 %v415
        %v1004 = vunpack.c.l.b16 %v416
        %v1005 = vunpack.c.h.b16 %v416
        %v1006 = vunpack.c.l.b16 %v417
        %v1007 = vunpack.c.h.b16 %v417
        %v1008 = vunpack.c.l.b16 %v418
        %v1009 = vunpack.c.h.b16 %v418
        %v1010 = vunpack.c.l.b16 %v419
        %v1011 = vunpack.c.h.b16 %v419
        %v1012 = vunpack.c.l.b16 %v420
        %v1013 = vunpack.c.h.b16 %v420
        %v1014 = vunpack.c.l.b16 %v421
        %v1015 = vunpack.c.h.b16 %v421
        %v1016 = vunpack.c.l.b16 %v422
        %v1017 = vunpack.c.h.b16 %v422
        %v1018 = vunpack.c.l.b16 %v423
        %v1019 = vunpack.c.h.b16 %v423
        %v1020 = vunpack.c.l.b16 %v424
        %v1021 = vunpack.c.h.b16 %v424
        %v1022 = vunpack.c.l.b16 %v425
        %v1023 = vunpack.c.h.b16 %v425
        %v1024 = vunpack.c.l.b16 %v426
        %v1025 = vunpack.c.h.b16 %v426
        %v1026 = vunpack.c.l.b16 %v427
        %v1027 = vunpack.c.h.b16 %v427
        %v1028 = vunpack.c.l.b16 %v428
        %v1029 = vunpack.c.h.b16 %v428
        %v1030 = vunpack.c.l.b16 %v429
        %v1031 = vunpack.c.h.b16 %v429
        %v1032 = vunpack.c.l.b16 %v430
        %v1033 = vunpack.c.h.b16 %v430
        %v1034 = vunpack.c.l.b16 %v431
        %v1035 = vunpack.c.h.b16 %v431
        %v1036 = vunpack.c.l.b16 %v432
        %v1037 = vunpack.c.h.b16 %v432
        %v1038 = vunpack.c.l.b16 %v433
        %v1039 = vunpack.c.h.b16 %v433
        %v1040 = vunpack.c.l.b16 %v434
        %v1041 = vunpack.c.h.b16 %v434
        %v1042 = vunpack.c.l.b16 %v435
        %v1043 = vunpack.c.h.b16 %v435
        %v1044 = vunpack.c.l.b16 %v436
        %v1045 = vunpack.c.h.b16 %v436
        %v1046 = vunpack.c.l.b16 %v437
        %v1047 = vunpack.c.h.b16 %v437
        %v1048 = vunpack.c.l.b16 %v438
        %v1049 = vunpack.c.h.b16 %v438
        %v1050 = vunpack.c.l.b16 %v439
        %v1051 = vunpack.c.h.b16 %v439
        %v1052 = vunpack.c.l.b16 %v440
        %v1053 = vunpack.c.h.b16 %v440
        %v1054 = vunpack.c.l.b16 %v441
        %v1055 = vunpack.c.h.b16 %v441
        %v1056 = vunpack.c.l.b16 %v442
        %v1057 = vunpack.c.h.b16 %v442
        %v1058 = vunpack.c.l.b16 %v443
        %v1059 = vunpack.c.h.b16 %v443
        %v1060 = vunpack.c.l.b16 %v444
        %v1061 = vunpack.c.h.b16 %v444
        %v1062 = vunpack.c.l.b16 %v445
        %v1063 = vunpack.c.h.b16 %v445
        %v1064 = vunpack.c.l.b16 %v446
        %v1065 = vunpack.c.h.b16 %v446
        %v1066 = vunpack.c.l.b16 %v447
        %v1067 = vunpack.c.h.b16 %v447
        %v1068 = vunpack.c.l.b16 %v448
        %v1069 = vunpack.c.h.b16 %v448
        %v1070 = vunpack.c.l.b16 %v449
        %v1071 = vunpack.c.h.b16 %v449
        %v1072 = vunpack.c.l.b16 %v450
        %v1073 = vunpack.c.h.b16 %v450
        %v1074 = vunpack.c.l.b16 %v451
        %v1075 = vunpack.c.h.b16 %v451
        %v1076 = vunpack.c.l.b16 %v452
        %v1077 = vunpack.c.h.b16 %v452
        %v1078 = vunpack.c.l.b16 %v453
        %v1079 = vunpack.c.h.b16 %v453
        %v1080 = vunpack.c.l.b16 %v454
        %v1081 = vunpack.c.h.b16 %v454
        %v1082 = vunpack.c.l.b16 %v455
        %v1083 = vunpack.c.h.b16 %v455
        %v1084 = vunpack.c.l.b16 %v456
        %v1085 = vunpack.c.h.b16 %v456
        %v1086 = vunpack.c.l.b16 %v457
        %v1087 = vunpack.c.h.b16 %v457
        %v1088 = vunpack.c.l.b16 %v458
        %v1089 = vunpack.c.h.b16 %v458
        %v1090 = vunpack.c.l.b16 %v459
        %v1091 = vunpack.c.h.b16 %v459
        %v1092 = vunpack.c.l.b16 %v460
        %v1093 = vunpack.c.h.b16 %v460
        %v1094 = vunpack.c.l.b16 %v461
        %v1095 = vunpack.c.h.b16 %v461
        %v1096 = vunpack.c.l.b16 %v462
        %v1097 = vunpack.c.h.b16 %v462
        %v1098 = vunpack.c.l.b16 %v463
        %v1099 = vunpack.c.h.b16 %v463
        %v1100 = vunpack.c.l.b16 %v464
        %v1101 = vunpack.c.h.b16 %v464
        %v1102 = vunpack.c.l.b16 %v465
        %v1103 = vunpack.c.h.b16 %v465
        %v1104 = vunpack.c.l.b16 %v466
        %v1105 = vunpack.c.h.b16 %v466
        %v1106 = vunpack.c.l.b16 %v467
        %v1107 = vunpack.c.h.b16 %v467
        %v1108 = vpack.c.b16 %v868, %v852
        %v1109 = vpack.c.b16 %v869, %v853
        %v1110 = vpack.c.b16 %v870, %v854
        %v1111 = vpack.c.b16 %v871, %v855
        %v1112 = vpack.c.b16 %v872, %v856
        %v1113 = vpack.c.b16 %v873, %v857
        %v1114 = vpack.c.b16 %v874, %v858
        %v1115 = vpack.c.b16 %v875, %v859
        %v1116 = vpack.c.b16 %v876, %v860
        %v1117 = vpack.c.b16 %v877, %v861
        %v1118 = vpack.c.b16 %v878, %v862
        %v1119 = vpack.c.b16 %v879, %v863
        %v1120 = vpack.c.b16 %v880, %v864
        %v1121 = vpack.c.b16 %v881, %v865
        %v1122 = vpack.c.b16 %v882, %v866
        %v1123 = vpack.c.b16 %v883, %v867
        %v1124 = vpack.c.b16 %v900, %v884
        %v1125 = vpack.c.b16 %v901, %v885
        %v1126 = vpack.c.b16 %v902, %v886
        %v1127 = vpack.c.b16 %v903, %v887
        %v1128 = vpack.c.b16 %v904, %v888
        %v1129 = vpack.c.b16 %v905, %v889
        %v1130 = vpack.c.b16 %v906, %v890
        %v1131 = vpack.c.b16 %v907, %v891
        %v1132 = vpack.c.b16 %v908, %v892
        %v1133 = vpack.c.b16 %v909, %v893
        %v1134 = vpack.c.b16 %v910, %v894
        %v1135 = vpack.c.b16 %v911, %v895
        %v1136 = vpack.c.b16 %v912, %v896
        %v1137 = vpack.c.b16 %v913, %v897
        %v1138 = vpack.c.b16 %v914, %v898
        %v1139 = vpack.c.b16 %v915, %v899
        %v1140 = vpack.c.b16 %v932, %v916
        %v1141 = vpack.c.b16 %v933, %v917
        %v1142 = vpack.c.b16 %v934, %v918
        %v1143 = vpack.c.b16 %v935, %v919
        %v1144 = vpack.c.b16 %v936, %v920
        %v1145 = vpack.c.b16 %v937, %v921
        %v1146 = vpack.c.b16 %v938, %v922
        %v1147 = vpack.c.b16 %v939, %v923
        %v1148 = vpack.c.b16 %v940, %v924
        %v1149 = vpack.c.b16 %v941, %v925
        %v1150 = vpack.c.b16 %v942, %v926
        %v1151 = vpack.c.b16 %v943, %v927
        %v1152 = vpack.c.b16 %v944, %v928
        %v1153 = vpack.c.b16 %v945, %v929
        %v1154 = vpack.c.b16 %v946, %v930
        %v1155 = vpack.c.b16 %v947, %v931
        %v1156 = vpack.c.b16 %v964, %v948
        %v1157 = vpack.c.b16 %v965, %v949
        %v1158 = vpack.c.b16 %v966, %v950
        %v1159 = vpack.c.b16 %v967, %v951
        %v1160 = vpack.c.b16 %v968, %v952
        %v1161 = vpack.c.b16 %v969, %v953
        %v1162 = vpack.c.b16 %v970, %v954
        %v1163 = vpack.c.b16 %v971, %v955
        %v1164 = vpack.c.b16 %v972, %v956
        %v1165 = vpack.c.b16 %v973, %v957
        %v1166 = vpack.c.b16 %v974, %v958
        %v1167 = vpack.c.b16 %v975, %v959
        %v1168 = vpack.c.b16 %v976, %v960
        %v1169 = vpack.c.b16 %v977, %v961
        %v1170 = vpack.c.b16 %v978, %v962
        %v1171 = vpack.c.b16 %v979, %v963
        %v1172 = vpack.c.b16 %v996, %v980
        %v1173 = vpack.c.b16 %v997, %v981
        %v1174 = vpack.c.b16 %v998, %v982
        %v1175 = vpack.c.b16 %v999, %v983
        %v1176 = vpack.c.b16 %v1000, %v984
        %v1177 = vpack.c.b16 %v1001, %v985
        %v1178 = vpack.c.b16 %v1002, %v986
        %v1179 = vpack.c.b16 %v1003, %v987
        %v1180 = vpack.c.b16 %v1004, %v988
        %v1181 = vpack.c.b16 %v1005, %v989
        %v1182 = vpack.c.b16 %v1006, %v990
        %v1183 = vpack.c.b16 %v1007, %v991
        %v1184 = vpack.c.b16 %v1008, %v992
        %v1185 = vpack.c.b16 %v1009, %v993
        %v1186 = vpack.c.b16 %v1010, %v994
        %v1187 = vpack.c.b16 %v1011, %v995
        %v1188 = vpack.c.b16 %v1028, %v1012
        %v1189 = vpack.c.b16 %v1029, %v1013
        %v1190 = vpack.c.b16 %v1030, %v1014
        %v1191 = vpack.c.b16 %v1031, %v1015
        %v1192 = vpack.c.b16 %v1032, %v1016
        %v1193 = vpack.c.b16 %v1033, %v1017
        %v1194 = vpack.c.b16 %v1034, %v1018
        %v1195 = vpack.c.b16 %v1035, %v1019
        %v1196 = vpack.c.b16 %v1036, %v1020
        %v1197 = vpack.c.b16 %v1037, %v1021
        %v1198 = vpack.c.b16 %v1038, %v1022
        %v1199 = vpack.c.b16 %v1039, %v1023
        %v1200 = vpack.c.b16 %v1040, %v1024
        %v1201 = vpack.c.b16 %v1041, %v1025
        %v1202 = vpack.c.b16 %v1042, %v1026
        %v1203 = vpack.c.b16 %v1043, %v1027
        %v1204 = vpack.c.b16 %v1060, %v1044
        %v1205 = vpack.c.b16 %v1061, %v1045
        %v1206 = vpack.c.b16 %v1062, %v1046
        %v1207 = vpack.c.b16 %v1063, %v1047
        %v1208 = vpack.c.b16 %v1064, %v1048
        %v1209 = vpack.c.b16 %v1065, %v1049
        %v1210 = vpack.c.b16 %v1066, %v1050
        %v1211 = vpack.c.b16 %v1067, %v1051
        %v1212 = vpack.c.b16 %v1068, %v1052
        %v1213 = vpack.c.b16 %v1069, %v1053
        %v1214 = vpack.c.b16 %v1070, %v1054
        %v1215 = vpack.c.b16 %v1071, %v1055
        %v1216 = vpack.c.b16 %v1072, %v1056
        %v1217 = vpack.c.b16 %v1073, %v1057
        %v1218 = vpack.c.b16 %v1074, %v1058
        %v1219 = vpack.c.b16 %v1075, %v1059
        %v1220 = vpack.c.b16 %v1092, %v1076
        %v1221 = vpack.c.b16 %v1093, %v1077
        %v1222 = vpack.c.b16 %v1094, %v1078
        %v1223 = vpack.c.b16 %v1095, %v1079
        %v1224 = vpack.c.b16 %v1096, %v1080
        %v1225 = vpack.c.b16 %v1097, %v1081
        %v1226 = vpack.c.b16 %v1098, %v1082
        %v1227 = vpack.c.b16 %v1099, %v1083
        %v1228 = vpack.c.b16 %v1100, %v1084
        %v1229 = vpack.c.b16 %v1101, %v1085
        %v1230 = vpack.c.b16 %v1102, %v1086
        %v1231 = vpack.c.b16 %v1103, %v1087
        %v1232 = vpack.c.b16 %v1104, %v1088
        %v1233 = vpack.c.b16 %v1105, %v1089
        %v1234 = vpack.c.b16 %v1106, %v1090
        %v1235 = vpack.c.b16 %v1107, %v1091
        %v1620 = vunpack.c.l.b16 %v468
        %v1621 = vunpack.c.h.b16 %v468
        %v1622 = vunpack.c.l.b16 %v469
        %v1623 = vunpack.c.h.b16 %v469
        %v1624 = vunpack.c.l.b16 %v470
        %v1625 = vunpack.c.h.b16 %v470
        %v1626 = vunpack.c.l.b16 %v471
        %v1627 = vunpack.c.h.b16 %v471
        %v1628 = vunpack.c.l.b16 %v472
        %v1629 = vunpack.c.h.b16 %v472
        %v1630 = vunpack.c.l.b16 %v473
        %v1631 = vunpack.c.h.b16 %v473
        %v1632 = vunpack.c.l.b16 %v474
        %v1633 = vunpack.c.h.b16 %v474
        %v1634 = vunpack.c.l.b16 %v475
        %v1635 = vunpack.c.h.b16 %v475
        %v1636 = vunpack.c.l.b16 %v476
        %v1637 = vunpack.c.h.b16 %v476
        %v1638 = vunpack.c.l.b16 %v477
        %v1639 = vunpack.c.h.b16 %v477
        %v1640 = vunpack.c.l.b16 %v478
        %v1641 = vunpack.c.h.b16 %v478
        %v1642 = vunpack.c.l.b16 %v479
        %v1643 = vunpack.c.h.b16 %v479
        %v1644 = vunpack.c.l.b16 %v480
        %v1645 = vunpack.c.h.b16 %v480
        %v1646 = vunpack.c.l.b16 %v481
        %v1647 = vunpack.c.h.b16 %v481
        %v1648 = vunpack.c.l.b16 %v482
        %v1649 = vunpack.c.h.b16 %v482
        %v1650 = vunpack.c.l.b16 %v483
        %v1651 = vunpack.c.h.b16 %v483
        %v1652 = vunpack.c.l.b16 %v484
        %v1653 = vunpack.c.h.b16 %v484
        %v1654 = vunpack.c.l.b16 %v485
        %v1655 = vunpack.c.h.b16 %v485
        %v1656 = vunpack.c.l.b16 %v486
        %v1657 = vunpack.c.h.b16 %v486
        %v1658 = vunpack.c.l.b16 %v487
        %v1659 = vunpack.c.h.b16 %v487
        %v1660 = vunpack.c.l.b16 %v488
        %v1661 = vunpack.c.h.b16 %v488
        %v1662 = vunpack.c.l.b16 %v489
        %v1663 = vunpack.c.h.b16 %v489
        %v1664 = vunpack.c.l.b16 %v490
        %v1665 = vunpack.c.h.b16 %v490
        %v1666 = vunpack.c.l.b16 %v491
        %v1667 = vunpack.c.h.b16 %v491
        %v1668 = vunpack.c.l.b16 %v492
        %v1669 = vunpack.c.h.b16 %v492
        %v1670 = vunpack.c.l.b16 %v493
        %v1671 = vunpack.c.h.b16 %v493
        %v1672 = vunpack.c.l.b16 %v494
        %v1673 = vunpack.c.h.b16 %v494
        %v1674 = vunpack.c.l.b16 %v495
        %v1675 = vunpack.c.h.b16 %v495
        %v1676 = vunpack.c.l.b16 %v496
        %v1677 = vunpack.c.h.b16 %v496
        %v1678 = vunpack.c.l.b16 %v497
        %v1679 = vunpack.c.h.b16 %v497
        %v1680 = vunpack.c.l.b16 %v498
        %v1681 = vunpack.c.h.b16 %v498
        %v1682 = vunpack.c.l.b16 %v499
        %v1683 = vunpack.c.h.b16 %v499
        %v1684 = vunpack.c.l.b16 %v500
        %v1685 = vunpack.c.h.b16 %v500
        %v1686 = vunpack.c.l.b16 %v501
        %v1687 = vunpack.c.h.b16 %v501
        %v1688 = vunpack.c.l.b16 %v502
        %v1689 = vunpack.c.h.b16 %v502
        %v1690 = vunpack.c.l.b16 %v503
        %v1691 = vunpack.c.h.b16 %v503
        %v1692 = vunpack.c.l.b16 %v504
        %v1693 = vunpack.c.h.b16 %v504
        %v1694 = vunpack.c.l.b16 %v505
        %v1695 = vunpack.c.h.b16 %v505
        %v1696 = vunpack.c.l.b16 %v506
        %v1697 = vunpack.c.h.b16 %v506
        %v1698 = vunpack.c.l.b16 %v507
        %v1699 = vunpack.c.h.b16 %v507
        %v1700 = vunpack.c.l.b16 %v508
        %v1701 = vunpack.c.h.b16 %v508
        %v1702 = vunpack.c.l.b16 %v509
        %v1703 = vunpack.c.h.b16 %v509
        %v1704 = vunpack.c.l.b16 %v510
        %v1705 = vunpack.c.h.b16 %v510
        %v1706 = vunpack.c.l.b16 %v511
        %v1707 = vunpack.c.h.b16 %v511
        %v1708 = vunpack.c.l.b16 %v512
        %v1709 = vunpack.c.h.b16 %v512
        %v1710 = vunpack.c.l.b16 %v513
        %v1711 = vunpack.c.h.b16 %v513
        %v1712 = vunpack.c.l.b16 %v514
        %v1713 = vunpack.c.h.b16 %v514
        %v1714 = vunpack.c.l.b16 %v515
        %v1715 = vunpack.c.h.b16 %v515
        %v1716 = vunpack.c.l.b16 %v516
        %v1717 = vunpack.c.h.b16 %v516
        %v1718 = vunpack.c.l.b16 %v517
        %v1719 = vunpack.c.h.b16 %v517
        %v1720 = vunpack.c.l.b16 %v518
        %v1721 = vunpack.c.h.b16 %v518
        %v1722 = vunpack.c.l.b16 %v519
        %v1723 = vunpack.c.h.b16 %v519
        %v1724 = vunpack.c.l.b16 %v520
        %v1725 = vunpack.c.h.b16 %v520
        %v1726 = vunpack.c.l.b16 %v521
        %v1727 = vunpack.c.h.b16 %v521
        %v1728 = vunpack.c.l.b16 %v522
        %v1729 = vunpack.c.h.b16 %v522
        %v1730 = vunpack.c.l.b16 %v523
        %v1731 = vunpack.c.h.b16 %v523
        %v1732 = vunpack.c.l.b16 %v524
        %v1733 = vunpack.c.h.b16 %v524
        %v1734 = vunpack.c.l.b16 %v525
        %v1735 = vunpack.c.h.b16 %v525
        %v1736 = vunpack.c.l.b16 %v526
        %v1737 = vunpack.c.h.b16 %v526
        %v1738 = vunpack.c.l.b16 %v527
        %v1739 = vunpack.c.h.b16 %v527
        %v1740 = vunpack.c.l.b16 %v528
        %v1741 = vunpack.c.h.b16 %v528
        %v1742 = vunpack.c.l.b16 %v529
        %v1743 = vunpack.c.h.b16 %v529
        %v1744 = vunpack.c.l.b16 %v530
        %v1745 = vunpack.c.h.b16 %v530
        %v1746 = vunpack.c.l.b16 %v531
        %v1747 = vunpack.c.h.b16 %v531
        %v1748 = vunpack.c.l.b16 %v532
        %v1749 = vunpack.c.h.b16 %v532
        %v1750 = vunpack.c.l.b16 %v533
        %v1751 = vunpack.c.h.b16 %v533
        %v1752 = vunpack.c.l.b16 %v534
        %v1753 = vunpack.c.h.b16 %v534
        %v1754 = vunpack.c.l.b16 %v535
        %v1755 = vunpack.c.h.b16 %v535
        %v1756 = vunpack.c.l.b16 %v536
        %v1757 = vunpack.c.h.b16 %v536
        %v1758 = vunpack.c.l.b16 %v537
        %v1759 = vunpack.c.h.b16 %v537
        %v1760 = vunpack.c.l.b16 %v538
        %v1761 = vunpack.c.h.b16 %v538
        %v1762 = vunpack.c.l.b16 %v539
        %v1763 = vunpack.c.h.b16 %v539
        %v1764 = vunpack.c.l.b16 %v540
        %v1765 = vunpack.c.h.b16 %v540
        %v1766 = vunpack.c.l.b16 %v541
        %v1767 = vunpack.c.h.b16 %v541
        %v1768 = vunpack.c.l.b16 %v542
        %v1769 = vunpack.c.h.b16 %v542
        %v1770 = vunpack.c.l.b16 %v543
        %v1771 = vunpack.c.h.b16 %v543
        %v1772 = vunpack.c.l.b16 %v544
        %v1773 = vunpack.c.h.b16 %v544
        %v1774 = vunpack.c.l.b16 %v545
        %v1775 = vunpack.c.h.b16 %v545
        %v1776 = vunpack.c.l.b16 %v546
        %v1777 = vunpack.c.h.b16 %v546
        %v1778 = vunpack.c.l.b16 %v547
        %v1779 = vunpack.c.h.b16 %v547
        %v1780 = vunpack.c.l.b16 %v548
        %v1781 = vunpack.c.h.b16 %v548
        %v1782 = vunpack.c.l.b16 %v549
        %v1783 = vunpack.c.h.b16 %v549
        %v1784 = vunpack.c.l.b16 %v550
        %v1785 = vunpack.c.h.b16 %v550
        %v1786 = vunpack.c.l.b16 %v551
        %v1787 = vunpack.c.h.b16 %v551
        %v1788 = vunpack.c.l.b16 %v552
        %v1789 = vunpack.c.h.b16 %v552
        %v1790 = vunpack.c.l.b16 %v553
        %v1791 = vunpack.c.h.b16 %v553
        %v1792 = vunpack.c.l.b16 %v554
        %v1793 = vunpack.c.h.b16 %v554
        %v1794 = vunpack.c.l.b16 %v555
        %v1795 = vunpack.c.h.b16 %v555
        %v1796 = vunpack.c.l.b16 %v556
        %v1797 = vunpack.c.h.b16 %v556
        %v1798 = vunpack.c.l.b16 %v557
        %v1799 = vunpack.c.h.b16 %v557
        %v1800 = vunpack.c.l.b16 %v558
        %v1801 = vunpack.c.h.b16 %v558
        %v1802 = vunpack.c.l.b16 %v559
        %v1803 = vunpack.c.h.b16 %v559
        %v1804 = vunpack.c.l.b16 %v560
        %v1805 = vunpack.c.h.b16 %v560
        %v1806 = vunpack.c.l.b16 %v561
        %v1807 = vunpack.c.h.b16 %v561
        %v1808 = vunpack.c.l.b16 %v562
        %v1809 = vunpack.c.h.b16 %v562
        %v1810 = vunpack.c.l.b16 %v563
        %v1811 = vunpack.c.h.b16 %v563
        %v1812 = vunpack.c.l.b16 %v564
        %v1813 = vunpack.c.h.b16 %v564
        %v1814 = vunpack.c.l.b16 %v565
        %v1815 = vunpack.c.h.b16 %v565
        %v1816 = vunpack.c.l.b16 %v566
        %v1817 = vunpack.c.h.b16 %v566
        %v1818 = vunpack.c.l.b16 %v567
        %v1819 = vunpack.c.h.b16 %v567
        %v1820 = vunpack.c.l.b16 %v568
        %v1821 = vunpack.c.h.b16 %v568
        %v1822 = vunpack.c.l.b16 %v569
        %v1823 = vunpack.c.h.b16 %v569
        %v1824 = vunpack.c.l.b16 %v570
        %v1825 = vunpack.c.h.b16 %v570
        %v1826 = vunpack.c.l.b16 %v571
        %v1827 = vunpack.c.h.b16 %v571
        %v1828 = vunpack.c.l.b16 %v572
        %v1829 = vunpack.c.h.b16 %v572
        %v1830 = vunpack.c.l.b16 %v573
        %v1831 = vunpack.c.h.b16 %v573
        %v1832 = vunpack.c.l.b16 %v574
        %v1833 = vunpack.c.h.b16 %v574
        %v1834 = vunpack.c.l.b16 %v575
        %v1835 = vunpack.c.h.b16 %v575
        %v1836 = vunpack.c.l.b16 %v576
        %v1837 = vunpack.c.h.b16 %v576
        %v1838 = vunpack.c.l.b16 %v577
        %v1839 = vunpack.c.h.b16 %v577
        %v1840 = vunpack.c.l.b16 %v578
        %v1841 = vunpack.c.h.b16 %v578
        %v1842 = vunpack.c.l.b16 %v579
        %v1843 = vunpack.c.h.b16 %v579
        %v1844 = vunpack.c.l.b16 %v580
        %v1845 = vunpack.c.h.b16 %v580
        %v1846 = vunpack.c.l.b16 %v581
        %v1847 = vunpack.c.h.b16 %v581
        %v1848 = vunpack.c.l.b16 %v582
        %v1849 = vunpack.c.h.b16 %v582
        %v1850 = vunpack.c.l.b16 %v583
        %v1851 = vunpack.c.h.b16 %v583
        %v1852 = vunpack.c.l.b16 %v584
        %v1853 = vunpack.c.h.b16 %v584
        %v1854 = vunpack.c.l.b16 %v585
        %v1855 = vunpack.c.h.b16 %v585
        %v1856 = vunpack.c.l.b16 %v586
        %v1857 = vunpack.c.h.b16 %v586
        %v1858 = vunpack.c.l.b16 %v587
        %v1859 = vunpack.c.h.b16 %v587
        %v1860 = vunpack.c.l.b16 %v588
        %v1861 = vunpack.c.h.b16 %v588
        %v1862 = vunpack.c.l.b16 %v589
        %v1863 = vunpack.c.h.b16 %v589
        %v1864 = vunpack.c.l.b16 %v590
        %v1865 = vunpack.c.h.b16 %v590
        %v1866 = vunpack.c.l.b16 %v591
        %v1867 = vunpack.c.h.b16 %v591
        %v1868 = vunpack.c.l.b16 %v592
        %v1869 = vunpack.c.h.b16 %v592
        %v1870 = vunpack.c.l.b16 %v593
        %v1871 = vunpack.c.h.b16 %v593
        %v1872 = vunpack.c.l.b16 %v594
        %v1873 = vunpack.c.h.b16 %v594
        %v1874 = vunpack.c.l.b16 %v595
        %v1875 = vunpack.c.h.b16 %v595
        %v1876 = vunpack.c.l.b16 %v596
        %v1877 = vunpack.c.h.b16 %v596
        %v1878 = vunpack.c.l.b16 %v597
        %v1879 = vunpack.c.h.b16 %v597
        %v1880 = vunpack.c.l.b16 %v598
        %v1881 = vunpack.c.h.b16 %v598
        %v1882 = vunpack.c.l.b16 %v599
        %v1883 = vunpack.c.h.b16 %v599
        %v1884 = vunpack.c.l.b16 %v600
        %v1885 = vunpack.c.h.b16 %v600
        %v1886 = vunpack.c.l.b16 %v601
        %v1887 = vunpack.c.h.b16 %v601
        %v1888 = vunpack.c.l.b16 %v602
        %v1889 = vunpack.c.h.b16 %v602
        %v1890 = vunpack.c.l.b16 %v603
        %v1891 = vunpack.c.h.b16 %v603
        %v1892 = vunpack.c.l.b16 %v604
        %v1893 = vunpack.c.h.b16 %v604
        %v1894 = vunpack.c.l.b16 %v605
        %v1895 = vunpack.c.h.b16 %v605
        %v1896 = vunpack.c.l.b16 %v606
        %v1897 = vunpack.c.h.b16 %v606
        %v1898 = vunpack.c.l.b16 %v607
        %v1899 = vunpack.c.h.b16 %v607
        %v1900 = vunpack.c.l.b16 %v608
        %v1901 = vunpack.c.h.b16 %v608
        %v1902 = vunpack.c.l.b16 %v609
        %v1903 = vunpack.c.h.b16 %v609
        %v1904 = vunpack.c.l.b16 %v610
        %v1905 = vunpack.c.h.b16 %v610
        %v1906 = vunpack.c.l.b16 %v611
        %v1907 = vunpack.c.h.b16 %v611
        %v1908 = vunpack.c.l.b16 %v612
        %v1909 = vunpack.c.h.b16 %v612
        %v1910 = vunpack.c.l.b16 %v613
        %v1911 = vunpack.c.h.b16 %v613
        %v1912 = vunpack.c.l.b16 %v614
        %v1913 = vunpack.c.h.b16 %v614
        %v1914 = vunpack.c.l.b16 %v615
        %v1915 = vunpack.c.h.b16 %v615
        %v1916 = vunpack.c.l.b16 %v616
        %v1917 = vunpack.c.h.b16 %v616
        %v1918 = vunpack.c.l.b16 %v617
        %v1919 = vunpack.c.h.b16 %v617
        %v1920 = vunpack.c.l.b16 %v618
        %v1921 = vunpack.c.h.b16 %v618
        %v1922 = vunpack.c.l.b16 %v619
        %v1923 = vunpack.c.h.b16 %v619
        %v1924 = vunpack.c.l.b16 %v620
        %v1925 = vunpack.c.h.b16 %v620
        %v1926 = vunpack.c.l.b16 %v621
        %v1927 = vunpack.c.h.b16 %v621
        %v1928 = vunpack.c.l.b16 %v622
        %v1929 = vunpack.c.h.b16 %v622
        %v1930 = vunpack.c.l.b16 %v623
        %v1931 = vunpack.c.h.b16 %v623
        %v1932 = vunpack.c.l.b16 %v624
        %v1933 = vunpack.c.h.b16 %v624
        %v1934 = vunpack.c.l.b16 %v625
        %v1935 = vunpack.c.h.b16 %v625
        %v1936 = vunpack.c.l.b16 %v626
        %v1937 = vunpack.c.h.b16 %v626
        %v1938 = vunpack.c.l.b16 %v627
        %v1939 = vunpack.c.h.b16 %v627
        %v1940 = vunpack.c.l.b16 %v628
        %v1941 = vunpack.c.h.b16 %v628
        %v1942 = vunpack.c.l.b16 %v629
        %v1943 = vunpack.c.h.b16 %v629
        %v1944 = vunpack.c.l.b16 %v630
        %v1945 = vunpack.c.h.b16 %v630
        %v1946 = vunpack.c.l.b16 %v631
        %v1947 = vunpack.c.h.b16 %v631
        %v1948 = vunpack.c.l.b16 %v632
        %v1949 = vunpack.c.h.b16 %v632
        %v1950 = vunpack.c.l.b16 %v633
        %v1951 = vunpack.c.h.b16 %v633
        %v1952 = vunpack.c.l.b16 %v634
        %v1953 = vunpack.c.h.b16 %v634
        %v1954 = vunpack.c.l.b16 %v635
        %v1955 = vunpack.c.h.b16 %v635
        %v1956 = vunpack.c.l.b16 %v636
        %v1957 = vunpack.c.h.b16 %v636
        %v1958 = vunpack.c.l.b16 %v637
        %v1959 = vunpack.c.h.b16 %v637
        %v1960 = vunpack.c.l.b16 %v638
        %v1961 = vunpack.c.h.b16 %v638
        %v1962 = vunpack.c.l.b16 %v639
        %v1963 = vunpack.c.h.b16 %v639
        %v1964 = vunpack.c.l.b16 %v640
        %v1965 = vunpack.c.h.b16 %v640
        %v1966 = vunpack.c.l.b16 %v641
        %v1967 = vunpack.c.h.b16 %v641
        %v1968 = vunpack.c.l.b16 %v642
        %v1969 = vunpack.c.h.b16 %v642
        %v1970 = vunpack.c.l.b16 %v643
        %v1971 = vunpack.c.h.b16 %v643
        %v1972 = vunpack.c.l.b16 %v644
        %v1973 = vunpack.c.h.b16 %v644
        %v1974 = vunpack.c.l.b16 %v645
        %v1975 = vunpack.c.h.b16 %v645
        %v1976 = vunpack.c.l.b16 %v646
        %v1977 = vunpack.c.h.b16 %v646
        %v1978 = vunpack.c.l.b16 %v647
        %v1979 = vunpack.c.h.b16 %v647
        %v1980 = vunpack.c.l.b16 %v648
        %v1981 = vunpack.c.h.b16 %v648
        %v1982 = vunpack.c.l.b16 %v649
        %v1983 = vunpack.c.h.b16 %v649
        %v1984 = vunpack.c.l.b16 %v650
        %v1985 = vunpack.c.h.b16 %v650
        %v1986 = vunpack.c.l.b16 %v651
        %v1987 = vunpack.c.h.b16 %v651
        %v1988 = vunpack.c.l.b16 %v652
        %v1989 = vunpack.c.h.b16 %v652
        %v1990 = vunpack.c.l.b16 %v653
        %v1991 = vunpack.c.h.b16 %v653
        %v1992 = vunpack.c.l.b16 %v654
        %v1993 = vunpack.c.h.b16 %v654
        %v1994 = vunpack.c.l.b16 %v655
        %v1995 = vunpack.c.h.b16 %v655
        %v1996 = vunpack.c.l.b16 %v656
        %v1997 = vunpack.c.h.b16 %v656
        %v1998 = vunpack.c.l.b16 %v657
        %v1999 = vunpack.c.h.b16 %v657
        %v2000 = vunpack.c.l.b16 %v658
        %v2001 = vunpack.c.h.b16 %v658
        %v2002 = vunpack.c.l.b16 %v659
        %v2003 = vunpack.c.h.b16 %v659
        %v2004 = vunpack.c.l.b16 %v660
        %v2005 = vunpack.c.h.b16 %v660
        %v2006 = vunpack.c.l.b16 %v661
        %v2007 = vunpack.c.h.b16 %v661
        %v2008 = vunpack.c.l.b16 %v662
        %v2009 = vunpack.c.h.b16 %v662
        %v2010 = vunpack.c.l.b16 %v663
        %v2011 = vunpack.c.h.b16 %v663
        %v2012 = vunpack.c.l.b16 %v664
        %v2013 = vunpack.c.h.b16 %v664
        %v2014 = vunpack.c.l.b16 %v665
        %v2015 = vunpack.c.h.b16 %v665
        %v2016 = vunpack.c.l.b16 %v666
        %v2017 = vunpack.c.h.b16 %v666
        %v2018 = vunpack.c.l.b16 %v667
        %v2019 = vunpack.c.h.b16 %v667
        %v2020 = vunpack.c.l.b16 %v668
        %v2021 = vunpack.c.h.b16 %v668
        %v2022 = vunpack.c.l.b16 %v669
        %v2023 = vunpack.c.h.b16 %v669
        %v2024 = vunpack.c.l.b16 %v670
        %v2025 = vunpack.c.h.b16 %v670
        %v2026 = vunpack.c.l.b16 %v671
        %v2027 = vunpack.c.h.b16 %v671
        %v2028 = vunpack.c.l.b16 %v672
        %v2029 = vunpack.c.h.b16 %v672
        %v2030 = vunpack.c.l.b16 %v673
        %v2031 = vunpack.c.h.b16 %v673
        %v2032 = vunpack.c.l.b16 %v674
        %v2033 = vunpack.c.h.b16 %v674
        %v2034 = vunpack.c.l.b16 %v675
        %v2035 = vunpack.c.h.b16 %v675
        %v2036 = vunpack.c.l.b16 %v676
        %v2037 = vunpack.c.h.b16 %v676
        %v2038 = vunpack.c.l.b16 %v677
        %v2039 = vunpack.c.h.b16 %v677
        %v2040 = vunpack.c.l.b16 %v678
        %v2041 = vunpack.c.h.b16 %v678
        %v2042 = vunpack.c.l.b16 %v679
        %v2043 = vunpack.c.h.b16 %v679
        %v2044 = vunpack.c.l.b16 %v680
        %v2045 = vunpack.c.h.b16 %v680
        %v2046 = vunpack.c.l.b16 %v681
        %v2047 = vunpack.c.h.b16 %v681
        %v2048 = vunpack.c.l.b16 %v682
        %v2049 = vunpack.c.h.b16 %v682
        %v2050 = vunpack.c.l.b16 %v683
        %v2051 = vunpack.c.h.b16 %v683
        %v2052 = vunpack.c.l.b16 %v684
        %v2053 = vunpack.c.h.b16 %v684
        %v2054 = vunpack.c.l.b16 %v685
        %v2055 = vunpack.c.h.b16 %v685
        %v2056 = vunpack.c.l.b16 %v686
        %v2057 = vunpack.c.h.b16 %v686
        %v2058 = vunpack.c.l.b16 %v687
        %v2059 = vunpack.c.h.b16 %v687
        %v2060 = vunpack.c.l.b16 %v688
        %v2061 = vunpack.c.h.b16 %v688
        %v2062 = vunpack.c.l.b16 %v689
        %v2063 = vunpack.c.h.b16 %v689
        %v2064 = vunpack.c.l.b16 %v690
        %v2065 = vunpack.c.h.b16 %v690
        %v2066 = vunpack.c.l.b16 %v691
        %v2067 = vunpack.c.h.b16 %v691
        %v2068 = vunpack.c.l.b16 %v692
        %v2069 = vunpack.c.h.b16 %v692
        %v2070 = vunpack.c.l.b16 %v693
        %v2071 = vunpack.c.h.b16 %v693
        %v2072 = vunpack.c.l.b16 %v694
        %v2073 = vunpack.c.h.b16 %v694
        %v2074 = vunpack.c.l.b16 %v695
        %v2075 = vunpack.c.h.b16 %v695
        %v2076 = vunpack.c.l.b16 %v696
        %v2077 = vunpack.c.h.b16 %v696
        %v2078 = vunpack.c.l.b16 %v697
        %v2079 = vunpack.c.h.b16 %v697
        %v2080 = vunpack.c.l.b16 %v698
        %v2081 = vunpack.c.h.b16 %v698
        %v2082 = vunpack.c.l.b16 %v699
        %v2083 = vunpack.c.h.b16 %v699
        %v2084 = vunpack.c.l.b16 %v700
        %v2085 = vunpack.c.h.b16 %v700
        %v2086 = vunpack.c.l.b16 %v701
        %v2087 = vunpack.c.h.b16 %v701
        %v2088 = vunpack.c.l.b16 %v702
        %v2089 = vunpack.c.h.b16 %v702
        %v2090 = vunpack.c.l.b16 %v703
        %v2091 = vunpack.c.h.b16 %v703
        %v2092 = vunpack.c.l.b16 %v704
        %v2093 = vunpack.c.h.b16 %v704
        %v2094 = vunpack.c.l.b16 %v705
        %v2095 = vunpack.c.h.b16 %v705
        %v2096 = vunpack.c.l.b16 %v706
        %v2097 = vunpack.c.h.b16 %v706
        %v2098 = vunpack.c.l.b16 %v707
        %v2099 = vunpack.c.h.b16 %v707
        %v2100 = vunpack.c.l.b16 %v708
        %v2101 = vunpack.c.h.b16 %v708
        %v2102 = vunpack.c.l.b16 %v709
        %v2103 = vunpack.c.h.b16 %v709
        %v2104 = vunpack.c.l.b16 %v710
        %v2105 = vunpack.c.h.b16 %v710
        %v2106 = vunpack.c.l.b16 %v711
        %v2107 = vunpack.c.h.b16 %v711
        %v2108 = vunpack.c.l.b16 %v712
        %v2109 = vunpack.c.h.b16 %v712
        %v2110 = vunpack.c.l.b16 %v713
        %v2111 = vunpack.c.h.b16 %v713
        %v2112 = vunpack.c.l.b16 %v714
        %v2113 = vunpack.c.h.b16 %v714
        %v2114 = vunpack.c.l.b16 %v715
        %v2115 = vunpack.c.h.b16 %v715
        %v2116 = vunpack.c.l.b16 %v716
        %v2117 = vunpack.c.h.b16 %v716
        %v2118 = vunpack.c.l.b16 %v717
        %v2119 = vunpack.c.h.b16 %v717
        %v2120 = vunpack.c.l.b16 %v718
        %v2121 = vunpack.c.h.b16 %v718
        %v2122 = vunpack.c.l.b16 %v719
        %v2123 = vunpack.c.h.b16 %v719
        %v2124 = vunpack.c.l.b16 %v720
        %v2125 = vunpack.c.h.b16 %v720
        %v2126 = vunpack.c.l.b16 %v721
        %v2127 = vunpack.c.h.b16 %v721
        %v2128 = vunpack.c.l.b16 %v722
        %v2129 = vunpack.c.h.b16 %v722
        %v2130 = vunpack.c.l.b16 %v723
        %v2131 = vunpack.c.h.b16 %v723
        %v2132 = vpack.c.b16 %v1622, %v1620
        %v2133 = vpack.c.b16 %v1623, %v1621
        %v2134 = vpack.c.b16 %v1626, %v1624
        %v2135 = vpack.c.b16 %v1627, %v1625
        %v2136 = vpack.c.b16 %v1630, %v1628
        %v2137 = vpack.c.b16 %v1631, %v1629
        %v2138 = vpack.c.b16 %v1634, %v1632
        %v2139 = vpack.c.b16 %v1635, %v1633
        %v2140 = vpack.c.b16 %v1638, %v1636
        %v2141 = vpack.c.b16 %v1639, %v1637
        %v2142 = vpack.c.b16 %v1642, %v1640
        %v2143 = vpack.c.b16 %v1643, %v1641
        %v2144 = vpack.c.b16 %v1646, %v1644
        %v2145 = vpack.c.b16 %v1647, %v1645
        %v2146 = vpack.c.b16 %v1650, %v1648
        %v2147 = vpack.c.b16 %v1651, %v1649
        %v2148 = vpack.c.b16 %v1654, %v1652
        %v2149 = vpack.c.b16 %v1655, %v1653
        %v2150 = vpack.c.b16 %v1658, %v1656
        %v2151 = vpack.c.b16 %v1659, %v1657
        %v2152 = vpack.c.b16 %v1662, %v1660
        %v2153 = vpack.c.b16 %v1663, %v1661
        %v2154 = vpack.c.b16 %v1666, %v1664
        %v2155 = vpack.c.b16 %v1667, %v1665
        %v2156 = vpack.c.b16 %v1670, %v1668
        %v2157 = vpack.c.b16 %v1671, %v1669
        %v2158 = vpack.c.b16 %v1674, %v1672
        %v2159 = vpack.c.b16 %v1675, %v1673
        %v2160 = vpack.c.b16 %v1678, %v1676
        %v2161 = vpack.c.b16 %v1679, %v1677
        %v2162 = vpack.c.b16 %v1682, %v1680
        %v2163 = vpack.c.b16 %v1683, %v1681
        %v2164 = vpack.c.b16 %v1686, %v1684
        %v2165 = vpack.c.b16 %v1687, %v1685
        %v2166 = vpack.c.b16 %v1690, %v1688
        %v2167 = vpack.c.b16 %v1691, %v1689
        %v2168 = vpack.c.b16 %v1694, %v1692
        %v2169 = vpack.c.b16 %v1695, %v1693
        %v2170 = vpack.c.b16 %v1698, %v1696
        %v2171 = vpack.c.b16 %v1699, %v1697
        %v2172 = vpack.c.b16 %v1702, %v1700
        %v2173 = vpack.c.b16 %v1703, %v1701
        %v2174 = vpack.c.b16 %v1706, %v1704
        %v2175 = vpack.c.b16 %v1707, %v1705
        %v2176 = vpack.c.b16 %v1710, %v1708
        %v2177 = vpack.c.b16 %v1711, %v1709
        %v2178 = vpack.c.b16 %v1714, %v1712
        %v2179 = vpack.c.b16 %v1715, %v1713
        %v2180 = vpack.c.b16 %v1718, %v1716
        %v2181 = vpack.c.b16 %v1719, %v1717
        %v2182 = vpack.c.b16 %v1722, %v1720
        %v2183 = vpack.c.b16 %v1723, %v1721
        %v2184 = vpack.c.b16 %v1726, %v1724
        %v2185 = vpack.c.b16 %v1727, %v1725
        %v2186 = vpack.c.b16 %v1730, %v1728
        %v2187 = vpack.c.b16 %v1731, %v1729
        %v2188 = vpack.c.b16 %v1734, %v1732
        %v2189 = vpack.c.b16 %v1735, %v1733
        %v2190 = vpack.c.b16 %v1738, %v1736
        %v2191 = vpack.c.b16 %v1739, %v1737
        %v2192 = vpack.c.b16 %v1742, %v1740
        %v2193 = vpack.c.b16 %v1743, %v1741
        %v2194 = vpack.c.b16 %v1746, %v1744
        %v2195 = vpack.c.b16 %v1747, %v1745
        %v2196 = vpack.c.b16 %v1750, %v1748
        %v2197 = vpack.c.b16 %v1751, %v1749
        %v2198 = vpack.c.b16 %v1754, %v1752
        %v2199 = vpack.c.b16 %v1755, %v1753
        %v2200 = vpack.c.b16 %v1758, %v1756
        %v2201 = vpack.c.b16 %v1759, %v1757
        %v2202 = vpack.c.b16 %v1762, %v1760
        %v2203 = vpack.c.b16 %v1763, %v1761
        %v2204 = vpack.c.b16 %v1766, %v1764
        %v2205 = vpack.c.b16 %v1767, %v1765
        %v2206 = vpack.c.b16 %v1770, %v1768
        %v2207 = vpack.c.b16 %v1771, %v1769
        %v2208 = vpack.c.b16 %v1774, %v1772
        %v2209 = vpack.c.b16 %v1775, %v1773
        %v2210 = vpack.c.b16 %v1778, %v1776
        %v2211 = vpack.c.b16 %v1779, %v1777
        %v2212 = vpack.c.b16 %v1782, %v1780
        %v2213 = vpack.c.b16 %v1783, %v1781
        %v2214 = vpack.c.b16 %v1786, %v1784
        %v2215 = vpack.c.b16 %v1787, %v1785
        %v2216 = vpack.c.b16 %v1790, %v1788
        %v2217 = vpack.c.b16 %v1791, %v1789
        %v2218 = vpack.c.b16 %v1794, %v1792
        %v2219 = vpack.c.b16 %v1795, %v1793
        %v2220 = vpack.c.b16 %v1798, %v1796
        %v2221 = vpack.c.b16 %v1799, %v1797
        %v2222 = vpack.c.b16 %v1802, %v1800
        %v2223 = vpack.c.b16 %v1803, %v1801
        %v2224 = vpack.c.b16 %v1806, %v1804
        %v2225 = vpack.c.b16 %v1807, %v1805
        %v2226 = vpack.c.b16 %v1810, %v1808
        %v2227 = vpack.c.b16 %v1811, %v1809
        %v2228 = vpack.c.b16 %v1814, %v1812
        %v2229 = vpack.c.b16 %v1815, %v1813
        %v2230 = vpack.c.b16 %v1818, %v1816
        %v2231 = vpack.c.b16 %v1819, %v1817
        %v2232 = vpack.c.b16 %v1822, %v1820
        %v2233 = vpack.c.b16 %v1823, %v1821
        %v2234 = vpack.c.b16 %v1826, %v1824
        %v2235 = vpack.c.b16 %v1827, %v1825
        %v2236 = vpack.c.b16 %v1830, %v1828
        %v2237 = vpack.c.b16 %v1831, %v1829
        %v2238 = vpack.c.b16 %v1834, %v1832
        %v2239 = vpack.c.b16 %v1835, %v1833
        %v2240 = vpack.c.b16 %v1838, %v1836
        %v2241 = vpack.c.b16 %v1839, %v1837
        %v2242 = vpack.c.b16 %v1842, %v1840
        %v2243 = vpack.c.b16 %v1843, %v1841
        %v2244 = vpack.c.b16 %v1846, %v1844
        %v2245 = vpack.c.b16 %v1847, %v1845
        %v2246 = vpack.c.b16 %v1850, %v1848
        %v2247 = vpack.c.b16 %v1851, %v1849
        %v2248 = vpack.c.b16 %v1854, %v1852
        %v2249 = vpack.c.b16 %v1855, %v1853
        %v2250 = vpack.c.b16 %v1858, %v1856
        %v2251 = vpack.c.b16 %v1859, %v1857
        %v2252 = vpack.c.b16 %v1862, %v1860
        %v2253 = vpack.c.b16 %v1863, %v1861
        %v2254 = vpack.c.b16 %v1866, %v1864
        %v2255 = vpack.c.b16 %v1867, %v1865
        %v2256 = vpack.c.b16 %v1870, %v1868
        %v2257 = vpack.c.b16 %v1871, %v1869
        %v2258 = vpack.c.b16 %v1874, %v1872
        %v2259 = vpack.c.b16 %v1875, %v1873
        %v2260 = vpack.c.b16 %v1878, %v1876
        %v2261 = vpack.c.b16 %v1879, %v1877
        %v2262 = vpack.c.b16 %v1882, %v1880
        %v2263 = vpack.c.b16 %v1883, %v1881
        %v2264 = vpack.c.b16 %v1886, %v1884
        %v2265 = vpack.c.b16 %v1887, %v1885
        %v2266 = vpack.c.b16 %v1890, %v1888
        %v2267 = vpack.c.b16 %v1891, %v1889
        %v2268 = vpack.c.b16 %v1894, %v1892
        %v2269 = vpack.c.b16 %v1895, %v1893
        %v2270 = vpack.c.b16 %v1898, %v1896
        %v2271 = vpack.c.b16 %v1899, %v1897
        %v2272 = vpack.c.b16 %v1902, %v1900
        %v2273 = vpack.c.b16 %v1903, %v1901
        %v2274 = vpack.c.b16 %v1906, %v1904
        %v2275 = vpack.c.b16 %v1907, %v1905
        %v2276 = vpack.c.b16 %v1910, %v1908
        %v2277 = vpack.c.b16 %v1911, %v1909
        %v2278 = vpack.c.b16 %v1914, %v1912
        %v2279 = vpack.c.b16 %v1915, %v1913
        %v2280 = vpack.c.b16 %v1918, %v1916
        %v2281 = vpack.c.b16 %v1919, %v1917
        %v2282 = vpack.c.b16 %v1922, %v1920
        %v2283 = vpack.c.b16 %v1923, %v1921
        %v2284 = vpack.c.b16 %v1926, %v1924
        %v2285 = vpack.c.b16 %v1927, %v1925
        %v2286 = vpack.c.b16 %v1930, %v1928
        %v2287 = vpack.c.b16 %v1931, %v1929
        %v2288 = vpack.c.b16 %v1934, %v1932
        %v2289 = vpack.c.b16 %v1935, %v1933
        %v2290 = vpack.c.b16 %v1938, %v1936
        %v2291 = vpack.c.b16 %v1939, %v1937
        %v2292 = vpack.c.b16 %v1942, %v1940
        %v2293 = vpack.c.b16 %v1943, %v1941
        %v2294 = vpack.c.b16 %v1946, %v1944
        %v2295 = vpack.c.b16 %v1947, %v1945
        %v2296 = vpack.c.b16 %v1950, %v1948
        %v2297 = vpack.c.b16 %v1951, %v1949
        %v2298 = vpack.c.b16 %v1954, %v1952
        %v2299 = vpack.c.b16 %v1955, %v1953
        %v2300 = vpack.c.b16 %v1958, %v1956
        %v2301 = vpack.c.b16 %v1959, %v1957
        %v2302 = vpack.c.b16 %v1962, %v1960
        %v2303 = vpack.c.b16 %v1963, %v1961
        %v2304 = vpack.c.b16 %v1966, %v1964
        %v2305 = vpack.c.b16 %v1967, %v1965
        %v2306 = vpack.c.b16 %v1970, %v1968
        %v2307 = vpack.c.b16 %v1971, %v1969
        %v2308 = vpack.c.b16 %v1974, %v1972
        %v2309 = vpack.c.b16 %v1975, %v1973
        %v2310 = vpack.c.b16 %v1978, %v1976
        %v2311 = vpack.c.b16 %v1979, %v1977
        %v2312 = vpack.c.b16 %v1982, %v1980
        %v2313 = vpack.c.b16 %v1983, %v1981
        %v2314 = vpack.c.b16 %v1986, %v1984
        %v2315 = vpack.c.b16 %v1987, %v1985
        %v2316 = vpack.c.b16 %v1990, %v1988
        %v2317 = vpack.c.b16 %v1991, %v1989
        %v2318 = vpack.c.b16 %v1994, %v1992
        %v2319 = vpack.c.b16 %v1995, %v1993
        %v2320 = vpack.c.b16 %v1998, %v1996
        %v2321 = vpack.c.b16 %v1999, %v1997
        %v2322 = vpack.c.b16 %v2002, %v2000
        %v2323 = vpack.c.b16 %v2003, %v2001
        %v2324 = vpack.c.b16 %v2006, %v2004
        %v2325 = vpack.c.b16 %v2007, %v2005
        %v2326 = vpack.c.b16 %v2010, %v2008
        %v2327 = vpack.c.b16 %v2011, %v2009
        %v2328 = vpack.c.b16 %v2014, %v2012
        %v2329 = vpack.c.b16 %v2015, %v2013
        %v2330 = vpack.c.b16 %v2018, %v2016
        %v2331 = vpack.c.b16 %v2019, %v2017
        %v2332 = vpack.c.b16 %v2022, %v2020
        %v2333 = vpack.c.b16 %v2023, %v2021
        %v2334 = vpack.c.b16 %v2026, %v2024
        %v2335 = vpack.c.b16 %v2027, %v2025
        %v2336 = vpack.c.b16 %v2030, %v2028
        %v2337 = vpack.c.b16 %v2031, %v2029
        %v2338 = vpack.c.b16 %v2034, %v2032
        %v2339 = vpack.c.b16 %v2035, %v2033
        %v2340 = vpack.c.b16 %v2038, %v2036
        %v2341 = vpack.c.b16 %v2039, %v2037
        %v2342 = vpack.c.b16 %v2042, %v2040
        %v2343 = vpack.c.b16 %v2043, %v2041
        %v2344 = vpack.c.b16 %v2046, %v2044
        %v2345 = vpack.c.b16 %v2047, %v2045
        %v2346 = vpack.c.b16 %v2050, %v2048
        %v2347 = vpack.c.b16 %v2051, %v2049
        %v2348 = vpack.c.b16 %v2054, %v2052
        %v2349 = vpack.c.b16 %v2055, %v2053
        %v2350 = vpack.c.b16 %v2058, %v2056
        %v2351 = vpack.c.b16 %v2059, %v2057
        %v2352 = vpack.c.b16 %v2062, %v2060
        %v2353 = vpack.c.b16 %v2063, %v2061
        %v2354 = vpack.c.b16 %v2066, %v2064
        %v2355 = vpack.c.b16 %v2067, %v2065
        %v2356 = vpack.c.b16 %v2070, %v2068
        %v2357 = vpack.c.b16 %v2071, %v2069
        %v2358 = vpack.c.b16 %v2074, %v2072
        %v2359 = vpack.c.b16 %v2075, %v2073
        %v2360 = vpack.c.b16 %v2078, %v2076
        %v2361 = vpack.c.b16 %v2079, %v2077
        %v2362 = vpack.c.b16 %v2082, %v2080
        %v2363 = vpack.c.b16 %v2083, %v2081
        %v2364 = vpack.c.b16 %v2086, %v2084
        %v2365 = vpack.c.b16 %v2087, %v2085
        %v2366 = vpack.c.b16 %v2090, %v2088
        %v2367 = vpack.c.b16 %v2091, %v2089
        %v2368 = vpack.c.b16 %v2094, %v2092
        %v2369 = vpack.c.b16 %v2095, %v2093
        %v2370 = vpack.c.b16 %v2098, %v2096
        %v2371 = vpack.c.b16 %v2099, %v2097
        %v2372 = vpack.c.b16 %v2102, %v2100
        %v2373 = vpack.c.b16 %v2103, %v2101
        %v2374 = vpack.c.b16 %v2106, %v2104
        %v2375 = vpack.c.b16 %v2107, %v2105
        %v2376 = vpack.c.b16 %v2110, %v2108
        %v2377 = vpack.c.b16 %v2111, %v2109
        %v2378 = vpack.c.b16 %v2114, %v2112
        %v2379 = vpack.c.b16 %v2115, %v2113
        %v2380 = vpack.c.b16 %v2118, %v2116
        %v2381 = vpack.c.b16 %v2119, %v2117
        %v2382 = vpack.c.b16 %v2122, %v2120
        %v2383 = vpack.c.b16 %v2123, %v2121
        %v2384 = vpack.c.b16 %v2126, %v2124
        %v2385 = vpack.c.b16 %v2127, %v2125
        %v2386 = vpack.c.b16 %v2130, %v2128
        %v2387 = vpack.c.b16 %v2131, %v2129
        %2644 = vmatpush.bf16.msra.mxu0 %v2146
        %2645 = vmatpush.bf16.msra.mxu0 %v2144
        %2646 = vmatpush.bf16.msra.mxu0 %v2142
        %2647 = vmatpush.bf16.msra.mxu0 %v2140
        %2648 = vmatpush.bf16.msra.mxu0 %v2138
        %2649 = vmatpush.bf16.msra.mxu0 %v2136
        %2650 = vmatpush.bf16.msra.mxu0 %v2134
        %2651 = vmatpush.bf16.msra.mxu0 %v2132
        %2652 = vmatmul.bf16.gmra.mxu0 %v1108
        %v2653 = vpop.f32.mrf.mxu0
        %v2654 = vadd.f32 0.0, %v2653
        %v2655 = vpop.f32.mrf.mxu0
        %v2656 = vadd.f32 0.0, %v2655
        %2657 = vmatmul.bf16.gmra.mxu0 %v1124
        %v2658 = vpop.f32.mrf.mxu0
        %v2659 = vadd.f32 0.0, %v2658
        %v2660 = vpop.f32.mrf.mxu0
        %v2661 = vadd.f32 0.0, %v2660
        %2662 = vmatmul.bf16.gmra.mxu0 %v1140
        %v2663 = vpop.f32.mrf.mxu0
        %v2664 = vadd.f32 0.0, %v2663
        %v2665 = vpop.f32.mrf.mxu0
        %v2666 = vadd.f32 0.0, %v2665
        %2667 = vmatmul.bf16.gmra.mxu0 %v1156
        %v2668 = vpop.f32.mrf.mxu0
        %v2669 = vadd.f32 0.0, %v2668
        %v2670 = vpop.f32.mrf.mxu0
        %v2671 = vadd.f32 0.0, %v2670
        %2672 = vmatmul.bf16.gmra.mxu0 %v1172
        %v2673 = vpop.f32.mrf.mxu0
        %v2674 = vadd.f32 0.0, %v2673
        %v2675 = vpop.f32.mrf.mxu0
        %v2676 = vadd.f32 0.0, %v2675
        %2677 = vmatmul.bf16.gmra.mxu0 %v1188
        %v2678 = vpop.f32.mrf.mxu0
        %v2679 = vadd.f32 0.0, %v2678
        %v2680 = vpop.f32.mrf.mxu0
        %v2681 = vadd.f32 0.0, %v2680
        %2682 = vmatmul.bf16.gmra.mxu0 %v1204
        %v2683 = vpop.f32.mrf.mxu0
        %v2684 = vadd.f32 0.0, %v2683
        %v2685 = vpop.f32.mrf.mxu0
        %v2686 = vadd.f32 0.0, %v2685
        %2687 = vmatmul.bf16.gmra.mxu0 %v1220
        %v2688 = vpop.f32.mrf.mxu0
        %v2689 = vadd.f32 0.0, %v2688
        %v2690 = vpop.f32.mrf.mxu0
        %v2691 = vadd.f32 0.0, %v2690
        %2692 = vdwg.mxu0
        %2693 = vmatpush.bf16.msra.mxu0 %v2162
        %2694 = vmatpush.bf16.msra.mxu0 %v2160
        %2695 = vmatpush.bf16.msra.mxu0 %v2158
        %2696 = vmatpush.bf16.msra.mxu0 %v2156
        %2697 = vmatpush.bf16.msra.mxu0 %v2154
        %2698 = vmatpush.bf16.msra.mxu0 %v2152
        %2699 = vmatpush.bf16.msra.mxu0 %v2150
        %2700 = vmatpush.bf16.msra.mxu0 %v2148
        %2701 = vmatmul.bf16.gmra.mxu0 %v1109
        %v2702 = vpop.f32.mrf.mxu0
        %v2703 = vadd.f32 %v2654, %v2702
        %v2704 = vpop.f32.mrf.mxu0
        %v2705 = vadd.f32 %v2656, %v2704
        %2706 = vmatmul.bf16.gmra.mxu0 %v1125
        %v2707 = vpop.f32.mrf.mxu0
        %v2708 = vadd.f32 %v2659, %v2707
        %v2709 = vpop.f32.mrf.mxu0
        %v2710 = vadd.f32 %v2661, %v2709
        %2711 = vmatmul.bf16.gmra.mxu0 %v1141
        %v2712 = vpop.f32.mrf.mxu0
        %v2713 = vadd.f32 %v2664, %v2712
        %v2714 = vpop.f32.mrf.mxu0
        %v2715 = vadd.f32 %v2666, %v2714
        %2716 = vmatmul.bf16.gmra.mxu0 %v1157
        %v2717 = vpop.f32.mrf.mxu0
        %v2718 = vadd.f32 %v2669, %v2717
        %v2719 = vpop.f32.mrf.mxu0
        %v2720 = vadd.f32 %v2671, %v2719
        %2721 = vmatmul.bf16.gmra.mxu0 %v1173
        %v2722 = vpop.f32.mrf.mxu0
        %v2723 = vadd.f32 %v2674, %v2722
        %v2724 = vpop.f32.mrf.mxu0
        %v2725 = vadd.f32 %v2676, %v2724
        %2726 = vmatmul.bf16.gmra.mxu0 %v1189
        %v2727 = vpop.f32.mrf.mxu0
        %v2728 = vadd.f32 %v2679, %v2727
        %v2729 = vpop.f32.mrf.mxu0
        %v2730 = vadd.f32 %v2681, %v2729
        %2731 = vmatmul.bf16.gmra.mxu0 %v1205
        %v2732 = vpop.f32.mrf.mxu0
        %v2733 = vadd.f32 %v2684, %v2732
        %v2734 = vpop.f32.mrf.mxu0
        %v2735 = vadd.f32 %v2686, %v2734
        %2736 = vmatmul.bf16.gmra.mxu0 %v1221
        %v2737 = vpop.f32.mrf.mxu0
        %v2738 = vadd.f32 %v2689, %v2737
        %v2739 = vpop.f32.mrf.mxu0
        %v2740 = vadd.f32 %v2691, %v2739
        %2741 = vdwg.mxu0
        %2742 = vmatpush.bf16.msra.mxu0 %v2178
        %2743 = vmatpush.bf16.msra.mxu0 %v2176
        %2744 = vmatpush.bf16.msra.mxu0 %v2174
        %2745 = vmatpush.bf16.msra.mxu0 %v2172
        %2746 = vmatpush.bf16.msra.mxu0 %v2170
        %2747 = vmatpush.bf16.msra.mxu0 %v2168
        %2748 = vmatpush.bf16.msra.mxu0 %v2166
        %2749 = vmatpush.bf16.msra.mxu0 %v2164
        %2750 = vmatmul.bf16.gmra.mxu0 %v1110
        %v2751 = vpop.f32.mrf.mxu0
        %v2752 = vadd.f32 %v2703, %v2751
        %v2753 = vpop.f32.mrf.mxu0
        %v2754 = vadd.f32 %v2705, %v2753
        %2755 = vmatmul.bf16.gmra.mxu0 %v1126
        %v2756 = vpop.f32.mrf.mxu0
        %v2757 = vadd.f32 %v2708, %v2756
        %v2758 = vpop.f32.mrf.mxu0
        %v2759 = vadd.f32 %v2710, %v2758
        %2760 = vmatmul.bf16.gmra.mxu0 %v1142
        %v2761 = vpop.f32.mrf.mxu0
        %v2762 = vadd.f32 %v2713, %v2761
        %v2763 = vpop.f32.mrf.mxu0
        %v2764 = vadd.f32 %v2715, %v2763
        %2765 = vmatmul.bf16.gmra.mxu0 %v1158
        %v2766 = vpop.f32.mrf.mxu0
        %v2767 = vadd.f32 %v2718, %v2766
        %v2768 = vpop.f32.mrf.mxu0
        %v2769 = vadd.f32 %v2720, %v2768
        %2770 = vmatmul.bf16.gmra.mxu0 %v1174
        %v2771 = vpop.f32.mrf.mxu0
        %v2772 = vadd.f32 %v2723, %v2771
        %v2773 = vpop.f32.mrf.mxu0
        %v2774 = vadd.f32 %v2725, %v2773
        %2775 = vmatmul.bf16.gmra.mxu0 %v1190
        %v2776 = vpop.f32.mrf.mxu0
        %v2777 = vadd.f32 %v2728, %v2776
        %v2778 = vpop.f32.mrf.mxu0
        %v2779 = vadd.f32 %v2730, %v2778
        %2780 = vmatmul.bf16.gmra.mxu0 %v1206
        %v2781 = vpop.f32.mrf.mxu0
        %v2782 = vadd.f32 %v2733, %v2781
        %v2783 = vpop.f32.mrf.mxu0
        %v2784 = vadd.f32 %v2735, %v2783
        %2785 = vmatmul.bf16.gmra.mxu0 %v1222
        %v2786 = vpop.f32.mrf.mxu0
        %v2787 = vadd.f32 %v2738, %v2786
        %v2788 = vpop.f32.mrf.mxu0
        %v2789 = vadd.f32 %v2740, %v2788
        %2790 = vdwg.mxu0
        %2791 = vmatpush.bf16.msra.mxu0 %v2194
        %2792 = vmatpush.bf16.msra.mxu0 %v2192
        %2793 = vmatpush.bf16.msra.mxu0 %v2190
        %2794 = vmatpush.bf16.msra.mxu0 %v2188
        %2795 = vmatpush.bf16.msra.mxu0 %v2186
        %2796 = vmatpush.bf16.msra.mxu0 %v2184
        %2797 = vmatpush.bf16.msra.mxu0 %v2182
        %2798 = vmatpush.bf16.msra.mxu0 %v2180
        %2799 = vmatmul.bf16.gmra.mxu0 %v1111
        %v2800 = vpop.f32.mrf.mxu0
        %v2801 = vadd.f32 %v2752, %v2800
        %v2802 = vpop.f32.mrf.mxu0
        %v2803 = vadd.f32 %v2754, %v2802
        %2804 = vmatmul.bf16.gmra.mxu0 %v1127
        %v2805 = vpop.f32.mrf.mxu0
        %v2806 = vadd.f32 %v2757, %v2805
        %v2807 = vpop.f32.mrf.mxu0
        %v2808 = vadd.f32 %v2759, %v2807
        %2809 = vmatmul.bf16.gmra.mxu0 %v1143
        %v2810 = vpop.f32.mrf.mxu0
        %v2811 = vadd.f32 %v2762, %v2810
        %v2812 = vpop.f32.mrf.mxu0
        %v2813 = vadd.f32 %v2764, %v2812
        %2814 = vmatmul.bf16.gmra.mxu0 %v1159
        %v2815 = vpop.f32.mrf.mxu0
        %v2816 = vadd.f32 %v2767, %v2815
        %v2817 = vpop.f32.mrf.mxu0
        %v2818 = vadd.f32 %v2769, %v2817
        %2819 = vmatmul.bf16.gmra.mxu0 %v1175
        %v2820 = vpop.f32.mrf.mxu0
        %v2821 = vadd.f32 %v2772, %v2820
        %v2822 = vpop.f32.mrf.mxu0
        %v2823 = vadd.f32 %v2774, %v2822
        %2824 = vmatmul.bf16.gmra.mxu0 %v1191
        %v2825 = vpop.f32.mrf.mxu0
        %v2826 = vadd.f32 %v2777, %v2825
        %v2827 = vpop.f32.mrf.mxu0
        %v2828 = vadd.f32 %v2779, %v2827
        %2829 = vmatmul.bf16.gmra.mxu0 %v1207
        %v2830 = vpop.f32.mrf.mxu0
        %v2831 = vadd.f32 %v2782, %v2830
        %v2832 = vpop.f32.mrf.mxu0
        %v2833 = vadd.f32 %v2784, %v2832
        %2834 = vmatmul.bf16.gmra.mxu0 %v1223
        %v2835 = vpop.f32.mrf.mxu0
        %v2836 = vadd.f32 %v2787, %v2835
        %v2837 = vpop.f32.mrf.mxu0
        %v2838 = vadd.f32 %v2789, %v2837
        %2839 = vdwg.mxu0
        %2840 = vmatpush.bf16.msra.mxu0 %v2210
        %2841 = vmatpush.bf16.msra.mxu0 %v2208
        %2842 = vmatpush.bf16.msra.mxu0 %v2206
        %2843 = vmatpush.bf16.msra.mxu0 %v2204
        %2844 = vmatpush.bf16.msra.mxu0 %v2202
        %2845 = vmatpush.bf16.msra.mxu0 %v2200
        %2846 = vmatpush.bf16.msra.mxu0 %v2198
        %2847 = vmatpush.bf16.msra.mxu0 %v2196
        %2848 = vmatmul.bf16.gmra.mxu0 %v1112
        %v2849 = vpop.f32.mrf.mxu0
        %v2850 = vadd.f32 %v2801, %v2849
        %v2851 = vpop.f32.mrf.mxu0
        %v2852 = vadd.f32 %v2803, %v2851
        %2853 = vmatmul.bf16.gmra.mxu0 %v1128
        %v2854 = vpop.f32.mrf.mxu0
        %v2855 = vadd.f32 %v2806, %v2854
        %v2856 = vpop.f32.mrf.mxu0
        %v2857 = vadd.f32 %v2808, %v2856
        %2858 = vmatmul.bf16.gmra.mxu0 %v1144
        %v2859 = vpop.f32.mrf.mxu0
        %v2860 = vadd.f32 %v2811, %v2859
        %v2861 = vpop.f32.mrf.mxu0
        %v2862 = vadd.f32 %v2813, %v2861
        %2863 = vmatmul.bf16.gmra.mxu0 %v1160
        %v2864 = vpop.f32.mrf.mxu0
        %v2865 = vadd.f32 %v2816, %v2864
        %v2866 = vpop.f32.mrf.mxu0
        %v2867 = vadd.f32 %v2818, %v2866
        %2868 = vmatmul.bf16.gmra.mxu0 %v1176
        %v2869 = vpop.f32.mrf.mxu0
        %v2870 = vadd.f32 %v2821, %v2869
        %v2871 = vpop.f32.mrf.mxu0
        %v2872 = vadd.f32 %v2823, %v2871
        %2873 = vmatmul.bf16.gmra.mxu0 %v1192
        %v2874 = vpop.f32.mrf.mxu0
        %v2875 = vadd.f32 %v2826, %v2874
        %v2876 = vpop.f32.mrf.mxu0
        %v2877 = vadd.f32 %v2828, %v2876
        %2878 = vmatmul.bf16.gmra.mxu0 %v1208
        %v2879 = vpop.f32.mrf.mxu0
        %v2880 = vadd.f32 %v2831, %v2879
        %v2881 = vpop.f32.mrf.mxu0
        %v2882 = vadd.f32 %v2833, %v2881
        %2883 = vmatmul.bf16.gmra.mxu0 %v1224
        %v2884 = vpop.f32.mrf.mxu0
        %v2885 = vadd.f32 %v2836, %v2884
        %v2886 = vpop.f32.mrf.mxu0
        %v2887 = vadd.f32 %v2838, %v2886
        %2888 = vdwg.mxu0
        %2889 = vmatpush.bf16.msra.mxu0 %v2226
        %2890 = vmatpush.bf16.msra.mxu0 %v2224
        %2891 = vmatpush.bf16.msra.mxu0 %v2222
        %2892 = vmatpush.bf16.msra.mxu0 %v2220
        %2893 = vmatpush.bf16.msra.mxu0 %v2218
        %2894 = vmatpush.bf16.msra.mxu0 %v2216
        %2895 = vmatpush.bf16.msra.mxu0 %v2214
        %2896 = vmatpush.bf16.msra.mxu0 %v2212
        %2897 = vmatmul.bf16.gmra.mxu0 %v1113
        %v2898 = vpop.f32.mrf.mxu0
        %v2899 = vadd.f32 %v2850, %v2898
        %v2900 = vpop.f32.mrf.mxu0
        %v2901 = vadd.f32 %v2852, %v2900
        %2902 = vmatmul.bf16.gmra.mxu0 %v1129
        %v2903 = vpop.f32.mrf.mxu0
        %v2904 = vadd.f32 %v2855, %v2903
        %v2905 = vpop.f32.mrf.mxu0
        %v2906 = vadd.f32 %v2857, %v2905
        %2907 = vmatmul.bf16.gmra.mxu0 %v1145
        %v2908 = vpop.f32.mrf.mxu0
        %v2909 = vadd.f32 %v2860, %v2908
        %v2910 = vpop.f32.mrf.mxu0
        %v2911 = vadd.f32 %v2862, %v2910
        %2912 = vmatmul.bf16.gmra.mxu0 %v1161
        %v2913 = vpop.f32.mrf.mxu0
        %v2914 = vadd.f32 %v2865, %v2913
        %v2915 = vpop.f32.mrf.mxu0
        %v2916 = vadd.f32 %v2867, %v2915
        %2917 = vmatmul.bf16.gmra.mxu0 %v1177
        %v2918 = vpop.f32.mrf.mxu0
        %v2919 = vadd.f32 %v2870, %v2918
        %v2920 = vpop.f32.mrf.mxu0
        %v2921 = vadd.f32 %v2872, %v2920
        %2922 = vmatmul.bf16.gmra.mxu0 %v1193
        %v2923 = vpop.f32.mrf.mxu0
        %v2924 = vadd.f32 %v2875, %v2923
        %v2925 = vpop.f32.mrf.mxu0
        %v2926 = vadd.f32 %v2877, %v2925
        %2927 = vmatmul.bf16.gmra.mxu0 %v1209
        %v2928 = vpop.f32.mrf.mxu0
        %v2929 = vadd.f32 %v2880, %v2928
        %v2930 = vpop.f32.mrf.mxu0
        %v2931 = vadd.f32 %v2882, %v2930
        %2932 = vmatmul.bf16.gmra.mxu0 %v1225
        %v2933 = vpop.f32.mrf.mxu0
        %v2934 = vadd.f32 %v2885, %v2933
        %v2935 = vpop.f32.mrf.mxu0
        %v2936 = vadd.f32 %v2887, %v2935
        %2937 = vdwg.mxu0
        %2938 = vmatpush.bf16.msra.mxu0 %v2242
        %2939 = vmatpush.bf16.msra.mxu0 %v2240
        %2940 = vmatpush.bf16.msra.mxu0 %v2238
        %2941 = vmatpush.bf16.msra.mxu0 %v2236
        %2942 = vmatpush.bf16.msra.mxu0 %v2234
        %2943 = vmatpush.bf16.msra.mxu0 %v2232
        %2944 = vmatpush.bf16.msra.mxu0 %v2230
        %2945 = vmatpush.bf16.msra.mxu0 %v2228
        %2946 = vmatmul.bf16.gmra.mxu0 %v1114
        %v2947 = vpop.f32.mrf.mxu0
        %v2948 = vadd.f32 %v2899, %v2947
        %v2949 = vpop.f32.mrf.mxu0
        %v2950 = vadd.f32 %v2901, %v2949
        %2951 = vmatmul.bf16.gmra.mxu0 %v1130
        %v2952 = vpop.f32.mrf.mxu0
        %v2953 = vadd.f32 %v2904, %v2952
        %v2954 = vpop.f32.mrf.mxu0
        %v2955 = vadd.f32 %v2906, %v2954
        %2956 = vmatmul.bf16.gmra.mxu0 %v1146
        %v2957 = vpop.f32.mrf.mxu0
        %v2958 = vadd.f32 %v2909, %v2957
        %v2959 = vpop.f32.mrf.mxu0
        %v2960 = vadd.f32 %v2911, %v2959
        %2961 = vmatmul.bf16.gmra.mxu0 %v1162
        %v2962 = vpop.f32.mrf.mxu0
        %v2963 = vadd.f32 %v2914, %v2962
        %v2964 = vpop.f32.mrf.mxu0
        %v2965 = vadd.f32 %v2916, %v2964
        %2966 = vmatmul.bf16.gmra.mxu0 %v1178
        %v2967 = vpop.f32.mrf.mxu0
        %v2968 = vadd.f32 %v2919, %v2967
        %v2969 = vpop.f32.mrf.mxu0
        %v2970 = vadd.f32 %v2921, %v2969
        %2971 = vmatmul.bf16.gmra.mxu0 %v1194
        %v2972 = vpop.f32.mrf.mxu0
        %v2973 = vadd.f32 %v2924, %v2972
        %v2974 = vpop.f32.mrf.mxu0
        %v2975 = vadd.f32 %v2926, %v2974
        %2976 = vmatmul.bf16.gmra.mxu0 %v1210
        %v2977 = vpop.f32.mrf.mxu0
        %v2978 = vadd.f32 %v2929, %v2977
        %v2979 = vpop.f32.mrf.mxu0
        %v2980 = vadd.f32 %v2931, %v2979
        %2981 = vmatmul.bf16.gmra.mxu0 %v1226
        %v2982 = vpop.f32.mrf.mxu0
        %v2983 = vadd.f32 %v2934, %v2982
        %v2984 = vpop.f32.mrf.mxu0
        %v2985 = vadd.f32 %v2936, %v2984
        %2986 = vdwg.mxu0
        %2987 = vmatpush.bf16.msra.mxu0 %v2258
        %2988 = vmatpush.bf16.msra.mxu0 %v2256
        %2989 = vmatpush.bf16.msra.mxu0 %v2254
        %2990 = vmatpush.bf16.msra.mxu0 %v2252
        %2991 = vmatpush.bf16.msra.mxu0 %v2250
        %2992 = vmatpush.bf16.msra.mxu0 %v2248
        %2993 = vmatpush.bf16.msra.mxu0 %v2246
        %2994 = vmatpush.bf16.msra.mxu0 %v2244
        %2995 = vmatmul.bf16.gmra.mxu0 %v1115
        %v2996 = vpop.f32.mrf.mxu0
        %v2997 = vadd.f32 %v2948, %v2996
        %v2998 = vpop.f32.mrf.mxu0
        %v2999 = vadd.f32 %v2950, %v2998
        %3000 = vmatmul.bf16.gmra.mxu0 %v1131
        %v3001 = vpop.f32.mrf.mxu0
        %v3002 = vadd.f32 %v2953, %v3001
        %v3003 = vpop.f32.mrf.mxu0
        %v3004 = vadd.f32 %v2955, %v3003
        %3005 = vmatmul.bf16.gmra.mxu0 %v1147
        %v3006 = vpop.f32.mrf.mxu0
        %v3007 = vadd.f32 %v2958, %v3006
        %v3008 = vpop.f32.mrf.mxu0
        %v3009 = vadd.f32 %v2960, %v3008
        %3010 = vmatmul.bf16.gmra.mxu0 %v1163
        %v3011 = vpop.f32.mrf.mxu0
        %v3012 = vadd.f32 %v2963, %v3011
        %v3013 = vpop.f32.mrf.mxu0
        %v3014 = vadd.f32 %v2965, %v3013
        %3015 = vmatmul.bf16.gmra.mxu0 %v1179
        %v3016 = vpop.f32.mrf.mxu0
        %v3017 = vadd.f32 %v2968, %v3016
        %v3018 = vpop.f32.mrf.mxu0
        %v3019 = vadd.f32 %v2970, %v3018
        %3020 = vmatmul.bf16.gmra.mxu0 %v1195
        %v3021 = vpop.f32.mrf.mxu0
        %v3022 = vadd.f32 %v2973, %v3021
        %v3023 = vpop.f32.mrf.mxu0
        %v3024 = vadd.f32 %v2975, %v3023
        %3025 = vmatmul.bf16.gmra.mxu0 %v1211
        %v3026 = vpop.f32.mrf.mxu0
        %v3027 = vadd.f32 %v2978, %v3026
        %v3028 = vpop.f32.mrf.mxu0
        %v3029 = vadd.f32 %v2980, %v3028
        %3030 = vmatmul.bf16.gmra.mxu0 %v1227
        %v3031 = vpop.f32.mrf.mxu0
        %v3032 = vadd.f32 %v2983, %v3031
        %v3033 = vpop.f32.mrf.mxu0
        %v3034 = vadd.f32 %v2985, %v3033
        %3035 = vdwg.mxu0
        %3036 = vmatpush.bf16.msra.mxu0 %v2274
        %3037 = vmatpush.bf16.msra.mxu0 %v2272
        %3038 = vmatpush.bf16.msra.mxu0 %v2270
        %3039 = vmatpush.bf16.msra.mxu0 %v2268
        %3040 = vmatpush.bf16.msra.mxu0 %v2266
        %3041 = vmatpush.bf16.msra.mxu0 %v2264
        %3042 = vmatpush.bf16.msra.mxu0 %v2262
        %3043 = vmatpush.bf16.msra.mxu0 %v2260
        %3044 = vmatmul.bf16.gmra.mxu0 %v1116
        %v3045 = vpop.f32.mrf.mxu0
        %v3046 = vadd.f32 %v2997, %v3045
        %v3047 = vpop.f32.mrf.mxu0
        %v3048 = vadd.f32 %v2999, %v3047
        %3049 = vmatmul.bf16.gmra.mxu0 %v1132
        %v3050 = vpop.f32.mrf.mxu0
        %v3051 = vadd.f32 %v3002, %v3050
        %v3052 = vpop.f32.mrf.mxu0
        %v3053 = vadd.f32 %v3004, %v3052
        %3054 = vmatmul.bf16.gmra.mxu0 %v1148
        %v3055 = vpop.f32.mrf.mxu0
        %v3056 = vadd.f32 %v3007, %v3055
        %v3057 = vpop.f32.mrf.mxu0
        %v3058 = vadd.f32 %v3009, %v3057
        %3059 = vmatmul.bf16.gmra.mxu0 %v1164
        %v3060 = vpop.f32.mrf.mxu0
        %v3061 = vadd.f32 %v3012, %v3060
        %v3062 = vpop.f32.mrf.mxu0
        %v3063 = vadd.f32 %v3014, %v3062
        %3064 = vmatmul.bf16.gmra.mxu0 %v1180
        %v3065 = vpop.f32.mrf.mxu0
        %v3066 = vadd.f32 %v3017, %v3065
        %v3067 = vpop.f32.mrf.mxu0
        %v3068 = vadd.f32 %v3019, %v3067
        %3069 = vmatmul.bf16.gmra.mxu0 %v1196
        %v3070 = vpop.f32.mrf.mxu0
        %v3071 = vadd.f32 %v3022, %v3070
        %v3072 = vpop.f32.mrf.mxu0
        %v3073 = vadd.f32 %v3024, %v3072
        %3074 = vmatmul.bf16.gmra.mxu0 %v1212
        %v3075 = vpop.f32.mrf.mxu0
        %v3076 = vadd.f32 %v3027, %v3075
        %v3077 = vpop.f32.mrf.mxu0
        %v3078 = vadd.f32 %v3029, %v3077
        %3079 = vmatmul.bf16.gmra.mxu0 %v1228
        %v3080 = vpop.f32.mrf.mxu0
        %v3081 = vadd.f32 %v3032, %v3080
        %v3082 = vpop.f32.mrf.mxu0
        %v3083 = vadd.f32 %v3034, %v3082
        %3084 = vdwg.mxu0
        %3085 = vmatpush.bf16.msra.mxu0 %v2290
        %3086 = vmatpush.bf16.msra.mxu0 %v2288
        %3087 = vmatpush.bf16.msra.mxu0 %v2286
        %3088 = vmatpush.bf16.msra.mxu0 %v2284
        %3089 = vmatpush.bf16.msra.mxu0 %v2282
        %3090 = vmatpush.bf16.msra.mxu0 %v2280
        %3091 = vmatpush.bf16.msra.mxu0 %v2278
        %3092 = vmatpush.bf16.msra.mxu0 %v2276
        %3093 = vmatmul.bf16.gmra.mxu0 %v1117
        %v3094 = vpop.f32.mrf.mxu0
        %v3095 = vadd.f32 %v3046, %v3094
        %v3096 = vpop.f32.mrf.mxu0
        %v3097 = vadd.f32 %v3048, %v3096
        %3098 = vmatmul.bf16.gmra.mxu0 %v1133
        %v3099 = vpop.f32.mrf.mxu0
        %v3100 = vadd.f32 %v3051, %v3099
        %v3101 = vpop.f32.mrf.mxu0
        %v3102 = vadd.f32 %v3053, %v3101
        %3103 = vmatmul.bf16.gmra.mxu0 %v1149
        %v3104 = vpop.f32.mrf.mxu0
        %v3105 = vadd.f32 %v3056, %v3104
        %v3106 = vpop.f32.mrf.mxu0
        %v3107 = vadd.f32 %v3058, %v3106
        %3108 = vmatmul.bf16.gmra.mxu0 %v1165
        %v3109 = vpop.f32.mrf.mxu0
        %v3110 = vadd.f32 %v3061, %v3109
        %v3111 = vpop.f32.mrf.mxu0
        %v3112 = vadd.f32 %v3063, %v3111
        %3113 = vmatmul.bf16.gmra.mxu0 %v1181
        %v3114 = vpop.f32.mrf.mxu0
        %v3115 = vadd.f32 %v3066, %v3114
        %v3116 = vpop.f32.mrf.mxu0
        %v3117 = vadd.f32 %v3068, %v3116
        %3118 = vmatmul.bf16.gmra.mxu0 %v1197
        %v3119 = vpop.f32.mrf.mxu0
        %v3120 = vadd.f32 %v3071, %v3119
        %v3121 = vpop.f32.mrf.mxu0
        %v3122 = vadd.f32 %v3073, %v3121
        %3123 = vmatmul.bf16.gmra.mxu0 %v1213
        %v3124 = vpop.f32.mrf.mxu0
        %v3125 = vadd.f32 %v3076, %v3124
        %v3126 = vpop.f32.mrf.mxu0
        %v3127 = vadd.f32 %v3078, %v3126
        %3128 = vmatmul.bf16.gmra.mxu0 %v1229
        %v3129 = vpop.f32.mrf.mxu0
        %v3130 = vadd.f32 %v3081, %v3129
        %v3131 = vpop.f32.mrf.mxu0
        %v3132 = vadd.f32 %v3083, %v3131
        %3133 = vdwg.mxu0
        %3134 = vmatpush.bf16.msra.mxu0 %v2306
        %3135 = vmatpush.bf16.msra.mxu0 %v2304
        %3136 = vmatpush.bf16.msra.mxu0 %v2302
        %3137 = vmatpush.bf16.msra.mxu0 %v2300
        %3138 = vmatpush.bf16.msra.mxu0 %v2298
        %3139 = vmatpush.bf16.msra.mxu0 %v2296
        %3140 = vmatpush.bf16.msra.mxu0 %v2294
        %3141 = vmatpush.bf16.msra.mxu0 %v2292
        %3142 = vmatmul.bf16.gmra.mxu0 %v1118
        %v3143 = vpop.f32.mrf.mxu0
        %v3144 = vadd.f32 %v3095, %v3143
        %v3145 = vpop.f32.mrf.mxu0
        %v3146 = vadd.f32 %v3097, %v3145
        %3147 = vmatmul.bf16.gmra.mxu0 %v1134
        %v3148 = vpop.f32.mrf.mxu0
        %v3149 = vadd.f32 %v3100, %v3148
        %v3150 = vpop.f32.mrf.mxu0
        %v3151 = vadd.f32 %v3102, %v3150
        %3152 = vmatmul.bf16.gmra.mxu0 %v1150
        %v3153 = vpop.f32.mrf.mxu0
        %v3154 = vadd.f32 %v3105, %v3153
        %v3155 = vpop.f32.mrf.mxu0
        %v3156 = vadd.f32 %v3107, %v3155
        %3157 = vmatmul.bf16.gmra.mxu0 %v1166
        %v3158 = vpop.f32.mrf.mxu0
        %v3159 = vadd.f32 %v3110, %v3158
        %v3160 = vpop.f32.mrf.mxu0
        %v3161 = vadd.f32 %v3112, %v3160
        %3162 = vmatmul.bf16.gmra.mxu0 %v1182
        %v3163 = vpop.f32.mrf.mxu0
        %v3164 = vadd.f32 %v3115, %v3163
        %v3165 = vpop.f32.mrf.mxu0
        %v3166 = vadd.f32 %v3117, %v3165
        %3167 = vmatmul.bf16.gmra.mxu0 %v1198
        %v3168 = vpop.f32.mrf.mxu0
        %v3169 = vadd.f32 %v3120, %v3168
        %v3170 = vpop.f32.mrf.mxu0
        %v3171 = vadd.f32 %v3122, %v3170
        %3172 = vmatmul.bf16.gmra.mxu0 %v1214
        %v3173 = vpop.f32.mrf.mxu0
        %v3174 = vadd.f32 %v3125, %v3173
        %v3175 = vpop.f32.mrf.mxu0
        %v3176 = vadd.f32 %v3127, %v3175
        %3177 = vmatmul.bf16.gmra.mxu0 %v1230
        %v3178 = vpop.f32.mrf.mxu0
        %v3179 = vadd.f32 %v3130, %v3178
        %v3180 = vpop.f32.mrf.mxu0
        %v3181 = vadd.f32 %v3132, %v3180
        %3182 = vdwg.mxu0
        %3183 = vmatpush.bf16.msra.mxu0 %v2322
        %3184 = vmatpush.bf16.msra.mxu0 %v2320
        %3185 = vmatpush.bf16.msra.mxu0 %v2318
        %3186 = vmatpush.bf16.msra.mxu0 %v2316
        %3187 = vmatpush.bf16.msra.mxu0 %v2314
        %3188 = vmatpush.bf16.msra.mxu0 %v2312
        %3189 = vmatpush.bf16.msra.mxu0 %v2310
        %3190 = vmatpush.bf16.msra.mxu0 %v2308
        %3191 = vmatmul.bf16.gmra.mxu0 %v1119
        %v3192 = vpop.f32.mrf.mxu0
        %v3193 = vadd.f32 %v3144, %v3192
        %v3194 = vpop.f32.mrf.mxu0
        %v3195 = vadd.f32 %v3146, %v3194
        %3196 = vmatmul.bf16.gmra.mxu0 %v1135
        %v3197 = vpop.f32.mrf.mxu0
        %v3198 = vadd.f32 %v3149, %v3197
        %v3199 = vpop.f32.mrf.mxu0
        %v3200 = vadd.f32 %v3151, %v3199
        %3201 = vmatmul.bf16.gmra.mxu0 %v1151
        %v3202 = vpop.f32.mrf.mxu0
        %v3203 = vadd.f32 %v3154, %v3202
        %v3204 = vpop.f32.mrf.mxu0
        %v3205 = vadd.f32 %v3156, %v3204
        %3206 = vmatmul.bf16.gmra.mxu0 %v1167
        %v3207 = vpop.f32.mrf.mxu0
        %v3208 = vadd.f32 %v3159, %v3207
        %v3209 = vpop.f32.mrf.mxu0
        %v3210 = vadd.f32 %v3161, %v3209
        %3211 = vmatmul.bf16.gmra.mxu0 %v1183
        %v3212 = vpop.f32.mrf.mxu0
        %v3213 = vadd.f32 %v3164, %v3212
        %v3214 = vpop.f32.mrf.mxu0
        %v3215 = vadd.f32 %v3166, %v3214
        %3216 = vmatmul.bf16.gmra.mxu0 %v1199
        %v3217 = vpop.f32.mrf.mxu0
        %v3218 = vadd.f32 %v3169, %v3217
        %v3219 = vpop.f32.mrf.mxu0
        %v3220 = vadd.f32 %v3171, %v3219
        %3221 = vmatmul.bf16.gmra.mxu0 %v1215
        %v3222 = vpop.f32.mrf.mxu0
        %v3223 = vadd.f32 %v3174, %v3222
        %v3224 = vpop.f32.mrf.mxu0
        %v3225 = vadd.f32 %v3176, %v3224
        %3226 = vmatmul.bf16.gmra.mxu0 %v1231
        %v3227 = vpop.f32.mrf.mxu0
        %v3228 = vadd.f32 %v3179, %v3227
        %v3229 = vpop.f32.mrf.mxu0
        %v3230 = vadd.f32 %v3181, %v3229
        %3231 = vdwg.mxu0
        %3232 = vmatpush.bf16.msra.mxu0 %v2338
        %3233 = vmatpush.bf16.msra.mxu0 %v2336
        %3234 = vmatpush.bf16.msra.mxu0 %v2334
        %3235 = vmatpush.bf16.msra.mxu0 %v2332
        %3236 = vmatpush.bf16.msra.mxu0 %v2330
        %3237 = vmatpush.bf16.msra.mxu0 %v2328
        %3238 = vmatpush.bf16.msra.mxu0 %v2326
        %3239 = vmatpush.bf16.msra.mxu0 %v2324
        %3240 = vmatmul.bf16.gmra.mxu0 %v1120
        %v3241 = vpop.f32.mrf.mxu0
        %v3242 = vadd.f32 %v3193, %v3241
        %v3243 = vpop.f32.mrf.mxu0
        %v3244 = vadd.f32 %v3195, %v3243
        %3245 = vmatmul.bf16.gmra.mxu0 %v1136
        %v3246 = vpop.f32.mrf.mxu0
        %v3247 = vadd.f32 %v3198, %v3246
        %v3248 = vpop.f32.mrf.mxu0
        %v3249 = vadd.f32 %v3200, %v3248
        %3250 = vmatmul.bf16.gmra.mxu0 %v1152
        %v3251 = vpop.f32.mrf.mxu0
        %v3252 = vadd.f32 %v3203, %v3251
        %v3253 = vpop.f32.mrf.mxu0
        %v3254 = vadd.f32 %v3205, %v3253
        %3255 = vmatmul.bf16.gmra.mxu0 %v1168
        %v3256 = vpop.f32.mrf.mxu0
        %v3257 = vadd.f32 %v3208, %v3256
        %v3258 = vpop.f32.mrf.mxu0
        %v3259 = vadd.f32 %v3210, %v3258
        %3260 = vmatmul.bf16.gmra.mxu0 %v1184
        %v3261 = vpop.f32.mrf.mxu0
        %v3262 = vadd.f32 %v3213, %v3261
        %v3263 = vpop.f32.mrf.mxu0
        %v3264 = vadd.f32 %v3215, %v3263
        %3265 = vmatmul.bf16.gmra.mxu0 %v1200
        %v3266 = vpop.f32.mrf.mxu0
        %v3267 = vadd.f32 %v3218, %v3266
        %v3268 = vpop.f32.mrf.mxu0
        %v3269 = vadd.f32 %v3220, %v3268
        %3270 = vmatmul.bf16.gmra.mxu0 %v1216
        %v3271 = vpop.f32.mrf.mxu0
        %v3272 = vadd.f32 %v3223, %v3271
        %v3273 = vpop.f32.mrf.mxu0
        %v3274 = vadd.f32 %v3225, %v3273
        %3275 = vmatmul.bf16.gmra.mxu0 %v1232
        %v3276 = vpop.f32.mrf.mxu0
        %v3277 = vadd.f32 %v3228, %v3276
        %v3278 = vpop.f32.mrf.mxu0
        %v3279 = vadd.f32 %v3230, %v3278
        %3280 = vdwg.mxu0
        %3281 = vmatpush.bf16.msra.mxu0 %v2354
        %3282 = vmatpush.bf16.msra.mxu0 %v2352
        %3283 = vmatpush.bf16.msra.mxu0 %v2350
        %3284 = vmatpush.bf16.msra.mxu0 %v2348
        %3285 = vmatpush.bf16.msra.mxu0 %v2346
        %3286 = vmatpush.bf16.msra.mxu0 %v2344
        %3287 = vmatpush.bf16.msra.mxu0 %v2342
        %3288 = vmatpush.bf16.msra.mxu0 %v2340
        %3289 = vmatmul.bf16.gmra.mxu0 %v1121
        %v3290 = vpop.f32.mrf.mxu0
        %v3291 = vadd.f32 %v3242, %v3290
        %v3292 = vpop.f32.mrf.mxu0
        %v3293 = vadd.f32 %v3244, %v3292
        %3294 = vmatmul.bf16.gmra.mxu0 %v1137
        %v3295 = vpop.f32.mrf.mxu0
        %v3296 = vadd.f32 %v3247, %v3295
        %v3297 = vpop.f32.mrf.mxu0
        %v3298 = vadd.f32 %v3249, %v3297
        %3299 = vmatmul.bf16.gmra.mxu0 %v1153
        %v3300 = vpop.f32.mrf.mxu0
        %v3301 = vadd.f32 %v3252, %v3300
        %v3302 = vpop.f32.mrf.mxu0
        %v3303 = vadd.f32 %v3254, %v3302
        %3304 = vmatmul.bf16.gmra.mxu0 %v1169
        %v3305 = vpop.f32.mrf.mxu0
        %v3306 = vadd.f32 %v3257, %v3305
        %v3307 = vpop.f32.mrf.mxu0
        %v3308 = vadd.f32 %v3259, %v3307
        %3309 = vmatmul.bf16.gmra.mxu0 %v1185
        %v3310 = vpop.f32.mrf.mxu0
        %v3311 = vadd.f32 %v3262, %v3310
        %v3312 = vpop.f32.mrf.mxu0
        %v3313 = vadd.f32 %v3264, %v3312
        %3314 = vmatmul.bf16.gmra.mxu0 %v1201
        %v3315 = vpop.f32.mrf.mxu0
        %v3316 = vadd.f32 %v3267, %v3315
        %v3317 = vpop.f32.mrf.mxu0
        %v3318 = vadd.f32 %v3269, %v3317
        %3319 = vmatmul.bf16.gmra.mxu0 %v1217
        %v3320 = vpop.f32.mrf.mxu0
        %v3321 = vadd.f32 %v3272, %v3320
        %v3322 = vpop.f32.mrf.mxu0
        %v3323 = vadd.f32 %v3274, %v3322
        %3324 = vmatmul.bf16.gmra.mxu0 %v1233
        %v3325 = vpop.f32.mrf.mxu0
        %v3326 = vadd.f32 %v3277, %v3325
        %v3327 = vpop.f32.mrf.mxu0
        %v3328 = vadd.f32 %v3279, %v3327
        %3329 = vdwg.mxu0
        %3330 = vmatpush.bf16.msra.mxu0 %v2370
        %3331 = vmatpush.bf16.msra.mxu0 %v2368
        %3332 = vmatpush.bf16.msra.mxu0 %v2366
        %3333 = vmatpush.bf16.msra.mxu0 %v2364
        %3334 = vmatpush.bf16.msra.mxu0 %v2362
        %3335 = vmatpush.bf16.msra.mxu0 %v2360
        %3336 = vmatpush.bf16.msra.mxu0 %v2358
        %3337 = vmatpush.bf16.msra.mxu0 %v2356
        %3338 = vmatmul.bf16.gmra.mxu0 %v1122
        %v3339 = vpop.f32.mrf.mxu0
        %v3340 = vadd.f32 %v3291, %v3339
        %v3341 = vpop.f32.mrf.mxu0
        %v3342 = vadd.f32 %v3293, %v3341
        %3343 = vmatmul.bf16.gmra.mxu0 %v1138
        %v3344 = vpop.f32.mrf.mxu0
        %v3345 = vadd.f32 %v3296, %v3344
        %v3346 = vpop.f32.mrf.mxu0
        %v3347 = vadd.f32 %v3298, %v3346
        %3348 = vmatmul.bf16.gmra.mxu0 %v1154
        %v3349 = vpop.f32.mrf.mxu0
        %v3350 = vadd.f32 %v3301, %v3349
        %v3351 = vpop.f32.mrf.mxu0
        %v3352 = vadd.f32 %v3303, %v3351
        %3353 = vmatmul.bf16.gmra.mxu0 %v1170
        %v3354 = vpop.f32.mrf.mxu0
        %v3355 = vadd.f32 %v3306, %v3354
        %v3356 = vpop.f32.mrf.mxu0
        %v3357 = vadd.f32 %v3308, %v3356
        %3358 = vmatmul.bf16.gmra.mxu0 %v1186
        %v3359 = vpop.f32.mrf.mxu0
        %v3360 = vadd.f32 %v3311, %v3359
        %v3361 = vpop.f32.mrf.mxu0
        %v3362 = vadd.f32 %v3313, %v3361
        %3363 = vmatmul.bf16.gmra.mxu0 %v1202
        %v3364 = vpop.f32.mrf.mxu0
        %v3365 = vadd.f32 %v3316, %v3364
        %v3366 = vpop.f32.mrf.mxu0
        %v3367 = vadd.f32 %v3318, %v3366
        %3368 = vmatmul.bf16.gmra.mxu0 %v1218
        %v3369 = vpop.f32.mrf.mxu0
        %v3370 = vadd.f32 %v3321, %v3369
        %v3371 = vpop.f32.mrf.mxu0
        %v3372 = vadd.f32 %v3323, %v3371
        %3373 = vmatmul.bf16.gmra.mxu0 %v1234
        %v3374 = vpop.f32.mrf.mxu0
        %v3375 = vadd.f32 %v3326, %v3374
        %v3376 = vpop.f32.mrf.mxu0
        %v3377 = vadd.f32 %v3328, %v3376
        %3378 = vdwg.mxu0
        %3379 = vmatpush.bf16.msra.mxu0 %v2386
        %3380 = vmatpush.bf16.msra.mxu0 %v2384
        %3381 = vmatpush.bf16.msra.mxu0 %v2382
        %3382 = vmatpush.bf16.msra.mxu0 %v2380
        %3383 = vmatpush.bf16.msra.mxu0 %v2378
        %3384 = vmatpush.bf16.msra.mxu0 %v2376
        %3385 = vmatpush.bf16.msra.mxu0 %v2374
        %3386 = vmatpush.bf16.msra.mxu0 %v2372
        %3387 = vmatmul.bf16.gmra.mxu0 %v1123
        %v3388 = vpop.f32.mrf.mxu0
        %v3389 = vadd.f32 %v3340, %v3388
        %v3390 = vpop.f32.mrf.mxu0
        %v3391 = vadd.f32 %v3342, %v3390
        %3392 = vmatmul.bf16.gmra.mxu0 %v1139
        %v3393 = vpop.f32.mrf.mxu0
        %v3394 = vadd.f32 %v3345, %v3393
        %v3395 = vpop.f32.mrf.mxu0
        %v3396 = vadd.f32 %v3347, %v3395
        %3397 = vmatmul.bf16.gmra.mxu0 %v1155
        %v3398 = vpop.f32.mrf.mxu0
        %v3399 = vadd.f32 %v3350, %v3398
        %v3400 = vpop.f32.mrf.mxu0
        %v3401 = vadd.f32 %v3352, %v3400
        %3402 = vmatmul.bf16.gmra.mxu0 %v1171
        %v3403 = vpop.f32.mrf.mxu0
        %v3404 = vadd.f32 %v3355, %v3403
        %v3405 = vpop.f32.mrf.mxu0
        %v3406 = vadd.f32 %v3357, %v3405
        %3407 = vmatmul.bf16.gmra.mxu0 %v1187
        %v3408 = vpop.f32.mrf.mxu0
        %v3409 = vadd.f32 %v3360, %v3408
        %v3410 = vpop.f32.mrf.mxu0
        %v3411 = vadd.f32 %v3362, %v3410
        %3412 = vmatmul.bf16.gmra.mxu0 %v1203
        %v3413 = vpop.f32.mrf.mxu0
        %v3414 = vadd.f32 %v3365, %v3413
        %v3415 = vpop.f32.mrf.mxu0
        %v3416 = vadd.f32 %v3367, %v3415
        %3417 = vmatmul.bf16.gmra.mxu0 %v1219
        %v3418 = vpop.f32.mrf.mxu0
        %v3419 = vadd.f32 %v3370, %v3418
        %v3420 = vpop.f32.mrf.mxu0
        %v3421 = vadd.f32 %v3372, %v3420
        %3422 = vmatmul.bf16.gmra.mxu0 %v1235
        %v3423 = vpop.f32.mrf.mxu0
        %v3424 = vadd.f32 %v3375, %v3423
        %v3425 = vpop.f32.mrf.mxu0
        %v3426 = vadd.f32 %v3377, %v3425
        %3427 = vdwg.mxu0
        %3428 = vmatpush.bf16.msra.mxu0 %v2147
        %3429 = vmatpush.bf16.msra.mxu0 %v2145
        %3430 = vmatpush.bf16.msra.mxu0 %v2143
        %3431 = vmatpush.bf16.msra.mxu0 %v2141
        %3432 = vmatpush.bf16.msra.mxu0 %v2139
        %3433 = vmatpush.bf16.msra.mxu0 %v2137
        %3434 = vmatpush.bf16.msra.mxu0 %v2135
        %3435 = vmatpush.bf16.msra.mxu0 %v2133
        %3436 = vmatmul.bf16.gmra.mxu0 %v1108
        %v3437 = vpop.f32.mrf.mxu0
        %v3438 = vadd.f32 0.0, %v3437
        %v3439 = vpop.f32.mrf.mxu0
        %v3440 = vadd.f32 0.0, %v3439
        %3441 = vmatmul.bf16.gmra.mxu0 %v1124
        %v3442 = vpop.f32.mrf.mxu0
        %v3443 = vadd.f32 0.0, %v3442
        %v3444 = vpop.f32.mrf.mxu0
        %v3445 = vadd.f32 0.0, %v3444
        %3446 = vmatmul.bf16.gmra.mxu0 %v1140
        %v3447 = vpop.f32.mrf.mxu0
        %v3448 = vadd.f32 0.0, %v3447
        %v3449 = vpop.f32.mrf.mxu0
        %v3450 = vadd.f32 0.0, %v3449
        %3451 = vmatmul.bf16.gmra.mxu0 %v1156
        %v3452 = vpop.f32.mrf.mxu0
        %v3453 = vadd.f32 0.0, %v3452
        %v3454 = vpop.f32.mrf.mxu0
        %v3455 = vadd.f32 0.0, %v3454
        %3456 = vmatmul.bf16.gmra.mxu0 %v1172
        %v3457 = vpop.f32.mrf.mxu0
        %v3458 = vadd.f32 0.0, %v3457
        %v3459 = vpop.f32.mrf.mxu0
        %v3460 = vadd.f32 0.0, %v3459
        %3461 = vmatmul.bf16.gmra.mxu0 %v1188
        %v3462 = vpop.f32.mrf.mxu0
        %v3463 = vadd.f32 0.0, %v3462
        %v3464 = vpop.f32.mrf.mxu0
        %v3465 = vadd.f32 0.0, %v3464
        %3466 = vmatmul.bf16.gmra.mxu0 %v1204
        %v3467 = vpop.f32.mrf.mxu0
        %v3468 = vadd.f32 0.0, %v3467
        %v3469 = vpop.f32.mrf.mxu0
        %v3470 = vadd.f32 0.0, %v3469
        %3471 = vmatmul.bf16.gmra.mxu0 %v1220
        %v3472 = vpop.f32.mrf.mxu0
        %v3473 = vadd.f32 0.0, %v3472
        %v3474 = vpop.f32.mrf.mxu0
        %v3475 = vadd.f32 0.0, %v3474
        %3476 = vdwg.mxu0
        %3477 = vmatpush.bf16.msra.mxu0 %v2163
        %3478 = vmatpush.bf16.msra.mxu0 %v2161
        %3479 = vmatpush.bf16.msra.mxu0 %v2159
        %3480 = vmatpush.bf16.msra.mxu0 %v2157
        %3481 = vmatpush.bf16.msra.mxu0 %v2155
        %3482 = vmatpush.bf16.msra.mxu0 %v2153
        %3483 = vmatpush.bf16.msra.mxu0 %v2151
        %3484 = vmatpush.bf16.msra.mxu0 %v2149
        %3485 = vmatmul.bf16.gmra.mxu0 %v1109
        %v3486 = vpop.f32.mrf.mxu0
        %v3487 = vadd.f32 %v3438, %v3486
        %v3488 = vpop.f32.mrf.mxu0
        %v3489 = vadd.f32 %v3440, %v3488
        %3490 = vmatmul.bf16.gmra.mxu0 %v1125
        %v3491 = vpop.f32.mrf.mxu0
        %v3492 = vadd.f32 %v3443, %v3491
        %v3493 = vpop.f32.mrf.mxu0
        %v3494 = vadd.f32 %v3445, %v3493
        %3495 = vmatmul.bf16.gmra.mxu0 %v1141
        %v3496 = vpop.f32.mrf.mxu0
        %v3497 = vadd.f32 %v3448, %v3496
        %v3498 = vpop.f32.mrf.mxu0
        %v3499 = vadd.f32 %v3450, %v3498
        %3500 = vmatmul.bf16.gmra.mxu0 %v1157
        %v3501 = vpop.f32.mrf.mxu0
        %v3502 = vadd.f32 %v3453, %v3501
        %v3503 = vpop.f32.mrf.mxu0
        %v3504 = vadd.f32 %v3455, %v3503
        %3505 = vmatmul.bf16.gmra.mxu0 %v1173
        %v3506 = vpop.f32.mrf.mxu0
        %v3507 = vadd.f32 %v3458, %v3506
        %v3508 = vpop.f32.mrf.mxu0
        %v3509 = vadd.f32 %v3460, %v3508
        %3510 = vmatmul.bf16.gmra.mxu0 %v1189
        %v3511 = vpop.f32.mrf.mxu0
        %v3512 = vadd.f32 %v3463, %v3511
        %v3513 = vpop.f32.mrf.mxu0
        %v3514 = vadd.f32 %v3465, %v3513
        %3515 = vmatmul.bf16.gmra.mxu0 %v1205
        %v3516 = vpop.f32.mrf.mxu0
        %v3517 = vadd.f32 %v3468, %v3516
        %v3518 = vpop.f32.mrf.mxu0
        %v3519 = vadd.f32 %v3470, %v3518
        %3520 = vmatmul.bf16.gmra.mxu0 %v1221
        %v3521 = vpop.f32.mrf.mxu0
        %v3522 = vadd.f32 %v3473, %v3521
        %v3523 = vpop.f32.mrf.mxu0
        %v3524 = vadd.f32 %v3475, %v3523
        %3525 = vdwg.mxu0
        %3526 = vmatpush.bf16.msra.mxu0 %v2179
        %3527 = vmatpush.bf16.msra.mxu0 %v2177
        %3528 = vmatpush.bf16.msra.mxu0 %v2175
        %3529 = vmatpush.bf16.msra.mxu0 %v2173
        %3530 = vmatpush.bf16.msra.mxu0 %v2171
        %3531 = vmatpush.bf16.msra.mxu0 %v2169
        %3532 = vmatpush.bf16.msra.mxu0 %v2167
        %3533 = vmatpush.bf16.msra.mxu0 %v2165
        %3534 = vmatmul.bf16.gmra.mxu0 %v1110
        %v3535 = vpop.f32.mrf.mxu0
        %v3536 = vadd.f32 %v3487, %v3535
        %v3537 = vpop.f32.mrf.mxu0
        %v3538 = vadd.f32 %v3489, %v3537
        %3539 = vmatmul.bf16.gmra.mxu0 %v1126
        %v3540 = vpop.f32.mrf.mxu0
        %v3541 = vadd.f32 %v3492, %v3540
        %v3542 = vpop.f32.mrf.mxu0
        %v3543 = vadd.f32 %v3494, %v3542
        %3544 = vmatmul.bf16.gmra.mxu0 %v1142
        %v3545 = vpop.f32.mrf.mxu0
        %v3546 = vadd.f32 %v3497, %v3545
        %v3547 = vpop.f32.mrf.mxu0
        %v3548 = vadd.f32 %v3499, %v3547
        %3549 = vmatmul.bf16.gmra.mxu0 %v1158
        %v3550 = vpop.f32.mrf.mxu0
        %v3551 = vadd.f32 %v3502, %v3550
        %v3552 = vpop.f32.mrf.mxu0
        %v3553 = vadd.f32 %v3504, %v3552
        %3554 = vmatmul.bf16.gmra.mxu0 %v1174
        %v3555 = vpop.f32.mrf.mxu0
        %v3556 = vadd.f32 %v3507, %v3555
        %v3557 = vpop.f32.mrf.mxu0
        %v3558 = vadd.f32 %v3509, %v3557
        %3559 = vmatmul.bf16.gmra.mxu0 %v1190
        %v3560 = vpop.f32.mrf.mxu0
        %v3561 = vadd.f32 %v3512, %v3560
        %v3562 = vpop.f32.mrf.mxu0
        %v3563 = vadd.f32 %v3514, %v3562
        %3564 = vmatmul.bf16.gmra.mxu0 %v1206
        %v3565 = vpop.f32.mrf.mxu0
        %v3566 = vadd.f32 %v3517, %v3565
        %v3567 = vpop.f32.mrf.mxu0
        %v3568 = vadd.f32 %v3519, %v3567
        %3569 = vmatmul.bf16.gmra.mxu0 %v1222
        %v3570 = vpop.f32.mrf.mxu0
        %v3571 = vadd.f32 %v3522, %v3570
        %v3572 = vpop.f32.mrf.mxu0
        %v3573 = vadd.f32 %v3524, %v3572
        %3574 = vdwg.mxu0
        %3575 = vmatpush.bf16.msra.mxu0 %v2195
        %3576 = vmatpush.bf16.msra.mxu0 %v2193
        %3577 = vmatpush.bf16.msra.mxu0 %v2191
        %3578 = vmatpush.bf16.msra.mxu0 %v2189
        %3579 = vmatpush.bf16.msra.mxu0 %v2187
        %3580 = vmatpush.bf16.msra.mxu0 %v2185
        %3581 = vmatpush.bf16.msra.mxu0 %v2183
        %3582 = vmatpush.bf16.msra.mxu0 %v2181
        %3583 = vmatmul.bf16.gmra.mxu0 %v1111
        %v3584 = vpop.f32.mrf.mxu0
        %v3585 = vadd.f32 %v3536, %v3584
        %v3586 = vpop.f32.mrf.mxu0
        %v3587 = vadd.f32 %v3538, %v3586
        %3588 = vmatmul.bf16.gmra.mxu0 %v1127
        %v3589 = vpop.f32.mrf.mxu0
        %v3590 = vadd.f32 %v3541, %v3589
        %v3591 = vpop.f32.mrf.mxu0
        %v3592 = vadd.f32 %v3543, %v3591
        %3593 = vmatmul.bf16.gmra.mxu0 %v1143
        %v3594 = vpop.f32.mrf.mxu0
        %v3595 = vadd.f32 %v3546, %v3594
        %v3596 = vpop.f32.mrf.mxu0
        %v3597 = vadd.f32 %v3548, %v3596
        %3598 = vmatmul.bf16.gmra.mxu0 %v1159
        %v3599 = vpop.f32.mrf.mxu0
        %v3600 = vadd.f32 %v3551, %v3599
        %v3601 = vpop.f32.mrf.mxu0
        %v3602 = vadd.f32 %v3553, %v3601
        %3603 = vmatmul.bf16.gmra.mxu0 %v1175
        %v3604 = vpop.f32.mrf.mxu0
        %v3605 = vadd.f32 %v3556, %v3604
        %v3606 = vpop.f32.mrf.mxu0
        %v3607 = vadd.f32 %v3558, %v3606
        %3608 = vmatmul.bf16.gmra.mxu0 %v1191
        %v3609 = vpop.f32.mrf.mxu0
        %v3610 = vadd.f32 %v3561, %v3609
        %v3611 = vpop.f32.mrf.mxu0
        %v3612 = vadd.f32 %v3563, %v3611
        %3613 = vmatmul.bf16.gmra.mxu0 %v1207
        %v3614 = vpop.f32.mrf.mxu0
        %v3615 = vadd.f32 %v3566, %v3614
        %v3616 = vpop.f32.mrf.mxu0
        %v3617 = vadd.f32 %v3568, %v3616
        %3618 = vmatmul.bf16.gmra.mxu0 %v1223
        %v3619 = vpop.f32.mrf.mxu0
        %v3620 = vadd.f32 %v3571, %v3619
        %v3621 = vpop.f32.mrf.mxu0
        %v3622 = vadd.f32 %v3573, %v3621
        %3623 = vdwg.mxu0
        %3624 = vmatpush.bf16.msra.mxu0 %v2211
        %3625 = vmatpush.bf16.msra.mxu0 %v2209
        %3626 = vmatpush.bf16.msra.mxu0 %v2207
        %3627 = vmatpush.bf16.msra.mxu0 %v2205
        %3628 = vmatpush.bf16.msra.mxu0 %v2203
        %3629 = vmatpush.bf16.msra.mxu0 %v2201
        %3630 = vmatpush.bf16.msra.mxu0 %v2199
        %3631 = vmatpush.bf16.msra.mxu0 %v2197
        %3632 = vmatmul.bf16.gmra.mxu0 %v1112
        %v3633 = vpop.f32.mrf.mxu0
        %v3634 = vadd.f32 %v3585, %v3633
        %v3635 = vpop.f32.mrf.mxu0
        %v3636 = vadd.f32 %v3587, %v3635
        %3637 = vmatmul.bf16.gmra.mxu0 %v1128
        %v3638 = vpop.f32.mrf.mxu0
        %v3639 = vadd.f32 %v3590, %v3638
        %v3640 = vpop.f32.mrf.mxu0
        %v3641 = vadd.f32 %v3592, %v3640
        %3642 = vmatmul.bf16.gmra.mxu0 %v1144
        %v3643 = vpop.f32.mrf.mxu0
        %v3644 = vadd.f32 %v3595, %v3643
        %v3645 = vpop.f32.mrf.mxu0
        %v3646 = vadd.f32 %v3597, %v3645
        %3647 = vmatmul.bf16.gmra.mxu0 %v1160
        %v3648 = vpop.f32.mrf.mxu0
        %v3649 = vadd.f32 %v3600, %v3648
        %v3650 = vpop.f32.mrf.mxu0
        %v3651 = vadd.f32 %v3602, %v3650
        %3652 = vmatmul.bf16.gmra.mxu0 %v1176
        %v3653 = vpop.f32.mrf.mxu0
        %v3654 = vadd.f32 %v3605, %v3653
        %v3655 = vpop.f32.mrf.mxu0
        %v3656 = vadd.f32 %v3607, %v3655
        %3657 = vmatmul.bf16.gmra.mxu0 %v1192
        %v3658 = vpop.f32.mrf.mxu0
        %v3659 = vadd.f32 %v3610, %v3658
        %v3660 = vpop.f32.mrf.mxu0
        %v3661 = vadd.f32 %v3612, %v3660
        %3662 = vmatmul.bf16.gmra.mxu0 %v1208
        %v3663 = vpop.f32.mrf.mxu0
        %v3664 = vadd.f32 %v3615, %v3663
        %v3665 = vpop.f32.mrf.mxu0
        %v3666 = vadd.f32 %v3617, %v3665
        %3667 = vmatmul.bf16.gmra.mxu0 %v1224
        %v3668 = vpop.f32.mrf.mxu0
        %v3669 = vadd.f32 %v3620, %v3668
        %v3670 = vpop.f32.mrf.mxu0
        %v3671 = vadd.f32 %v3622, %v3670
        %3672 = vdwg.mxu0
        %3673 = vmatpush.bf16.msra.mxu0 %v2227
        %3674 = vmatpush.bf16.msra.mxu0 %v2225
        %3675 = vmatpush.bf16.msra.mxu0 %v2223
        %3676 = vmatpush.bf16.msra.mxu0 %v2221
        %3677 = vmatpush.bf16.msra.mxu0 %v2219
        %3678 = vmatpush.bf16.msra.mxu0 %v2217
        %3679 = vmatpush.bf16.msra.mxu0 %v2215
        %3680 = vmatpush.bf16.msra.mxu0 %v2213
        %3681 = vmatmul.bf16.gmra.mxu0 %v1113
        %v3682 = vpop.f32.mrf.mxu0
        %v3683 = vadd.f32 %v3634, %v3682
        %v3684 = vpop.f32.mrf.mxu0
        %v3685 = vadd.f32 %v3636, %v3684
        %3686 = vmatmul.bf16.gmra.mxu0 %v1129
        %v3687 = vpop.f32.mrf.mxu0
        %v3688 = vadd.f32 %v3639, %v3687
        %v3689 = vpop.f32.mrf.mxu0
        %v3690 = vadd.f32 %v3641, %v3689
        %3691 = vmatmul.bf16.gmra.mxu0 %v1145
        %v3692 = vpop.f32.mrf.mxu0
        %v3693 = vadd.f32 %v3644, %v3692
        %v3694 = vpop.f32.mrf.mxu0
        %v3695 = vadd.f32 %v3646, %v3694
        %3696 = vmatmul.bf16.gmra.mxu0 %v1161
        %v3697 = vpop.f32.mrf.mxu0
        %v3698 = vadd.f32 %v3649, %v3697
        %v3699 = vpop.f32.mrf.mxu0
        %v3700 = vadd.f32 %v3651, %v3699
        %3701 = vmatmul.bf16.gmra.mxu0 %v1177
        %v3702 = vpop.f32.mrf.mxu0
        %v3703 = vadd.f32 %v3654, %v3702
        %v3704 = vpop.f32.mrf.mxu0
        %v3705 = vadd.f32 %v3656, %v3704
        %3706 = vmatmul.bf16.gmra.mxu0 %v1193
        %v3707 = vpop.f32.mrf.mxu0
        %v3708 = vadd.f32 %v3659, %v3707
        %v3709 = vpop.f32.mrf.mxu0
        %v3710 = vadd.f32 %v3661, %v3709
        %3711 = vmatmul.bf16.gmra.mxu0 %v1209
        %v3712 = vpop.f32.mrf.mxu0
        %v3713 = vadd.f32 %v3664, %v3712
        %v3714 = vpop.f32.mrf.mxu0
        %v3715 = vadd.f32 %v3666, %v3714
        %3716 = vmatmul.bf16.gmra.mxu0 %v1225
        %v3717 = vpop.f32.mrf.mxu0
        %v3718 = vadd.f32 %v3669, %v3717
        %v3719 = vpop.f32.mrf.mxu0
        %v3720 = vadd.f32 %v3671, %v3719
        %3721 = vdwg.mxu0
        %3722 = vmatpush.bf16.msra.mxu0 %v2243
        %3723 = vmatpush.bf16.msra.mxu0 %v2241
        %3724 = vmatpush.bf16.msra.mxu0 %v2239
        %3725 = vmatpush.bf16.msra.mxu0 %v2237
        %3726 = vmatpush.bf16.msra.mxu0 %v2235
        %3727 = vmatpush.bf16.msra.mxu0 %v2233
        %3728 = vmatpush.bf16.msra.mxu0 %v2231
        %3729 = vmatpush.bf16.msra.mxu0 %v2229
        %3730 = vmatmul.bf16.gmra.mxu0 %v1114
        %v3731 = vpop.f32.mrf.mxu0
        %v3732 = vadd.f32 %v3683, %v3731
        %v3733 = vpop.f32.mrf.mxu0
        %v3734 = vadd.f32 %v3685, %v3733
        %3735 = vmatmul.bf16.gmra.mxu0 %v1130
        %v3736 = vpop.f32.mrf.mxu0
        %v3737 = vadd.f32 %v3688, %v3736
        %v3738 = vpop.f32.mrf.mxu0
        %v3739 = vadd.f32 %v3690, %v3738
        %3740 = vmatmul.bf16.gmra.mxu0 %v1146
        %v3741 = vpop.f32.mrf.mxu0
        %v3742 = vadd.f32 %v3693, %v3741
        %v3743 = vpop.f32.mrf.mxu0
        %v3744 = vadd.f32 %v3695, %v3743
        %3745 = vmatmul.bf16.gmra.mxu0 %v1162
        %v3746 = vpop.f32.mrf.mxu0
        %v3747 = vadd.f32 %v3698, %v3746
        %v3748 = vpop.f32.mrf.mxu0
        %v3749 = vadd.f32 %v3700, %v3748
        %3750 = vmatmul.bf16.gmra.mxu0 %v1178
        %v3751 = vpop.f32.mrf.mxu0
        %v3752 = vadd.f32 %v3703, %v3751
        %v3753 = vpop.f32.mrf.mxu0
        %v3754 = vadd.f32 %v3705, %v3753
        %3755 = vmatmul.bf16.gmra.mxu0 %v1194
        %v3756 = vpop.f32.mrf.mxu0
        %v3757 = vadd.f32 %v3708, %v3756
        %v3758 = vpop.f32.mrf.mxu0
        %v3759 = vadd.f32 %v3710, %v3758
        %3760 = vmatmul.bf16.gmra.mxu0 %v1210
        %v3761 = vpop.f32.mrf.mxu0
        %v3762 = vadd.f32 %v3713, %v3761
        %v3763 = vpop.f32.mrf.mxu0
        %v3764 = vadd.f32 %v3715, %v3763
        %3765 = vmatmul.bf16.gmra.mxu0 %v1226
        %v3766 = vpop.f32.mrf.mxu0
        %v3767 = vadd.f32 %v3718, %v3766
        %v3768 = vpop.f32.mrf.mxu0
        %v3769 = vadd.f32 %v3720, %v3768
        %3770 = vdwg.mxu0
        %3771 = vmatpush.bf16.msra.mxu0 %v2259
        %3772 = vmatpush.bf16.msra.mxu0 %v2257
        %3773 = vmatpush.bf16.msra.mxu0 %v2255
        %3774 = vmatpush.bf16.msra.mxu0 %v2253
        %3775 = vmatpush.bf16.msra.mxu0 %v2251
        %3776 = vmatpush.bf16.msra.mxu0 %v2249
        %3777 = vmatpush.bf16.msra.mxu0 %v2247
        %3778 = vmatpush.bf16.msra.mxu0 %v2245
        %3779 = vmatmul.bf16.gmra.mxu0 %v1115
        %v3780 = vpop.f32.mrf.mxu0
        %v3781 = vadd.f32 %v3732, %v3780
        %v3782 = vpop.f32.mrf.mxu0
        %v3783 = vadd.f32 %v3734, %v3782
        %3784 = vmatmul.bf16.gmra.mxu0 %v1131
        %v3785 = vpop.f32.mrf.mxu0
        %v3786 = vadd.f32 %v3737, %v3785
        %v3787 = vpop.f32.mrf.mxu0
        %v3788 = vadd.f32 %v3739, %v3787
        %3789 = vmatmul.bf16.gmra.mxu0 %v1147
        %v3790 = vpop.f32.mrf.mxu0
        %v3791 = vadd.f32 %v3742, %v3790
        %v3792 = vpop.f32.mrf.mxu0
        %v3793 = vadd.f32 %v3744, %v3792
        %3794 = vmatmul.bf16.gmra.mxu0 %v1163
        %v3795 = vpop.f32.mrf.mxu0
        %v3796 = vadd.f32 %v3747, %v3795
        %v3797 = vpop.f32.mrf.mxu0
        %v3798 = vadd.f32 %v3749, %v3797
        %3799 = vmatmul.bf16.gmra.mxu0 %v1179
        %v3800 = vpop.f32.mrf.mxu0
        %v3801 = vadd.f32 %v3752, %v3800
        %v3802 = vpop.f32.mrf.mxu0
        %v3803 = vadd.f32 %v3754, %v3802
        %3804 = vmatmul.bf16.gmra.mxu0 %v1195
        %v3805 = vpop.f32.mrf.mxu0
        %v3806 = vadd.f32 %v3757, %v3805
        %v3807 = vpop.f32.mrf.mxu0
        %v3808 = vadd.f32 %v3759, %v3807
        %3809 = vmatmul.bf16.gmra.mxu0 %v1211
        %v3810 = vpop.f32.mrf.mxu0
        %v3811 = vadd.f32 %v3762, %v3810
        %v3812 = vpop.f32.mrf.mxu0
        %v3813 = vadd.f32 %v3764, %v3812
        %3814 = vmatmul.bf16.gmra.mxu0 %v1227
        %v3815 = vpop.f32.mrf.mxu0
        %v3816 = vadd.f32 %v3767, %v3815
        %v3817 = vpop.f32.mrf.mxu0
        %v3818 = vadd.f32 %v3769, %v3817
        %3819 = vdwg.mxu0
        %3820 = vmatpush.bf16.msra.mxu0 %v2275
        %3821 = vmatpush.bf16.msra.mxu0 %v2273
        %3822 = vmatpush.bf16.msra.mxu0 %v2271
        %3823 = vmatpush.bf16.msra.mxu0 %v2269
        %3824 = vmatpush.bf16.msra.mxu0 %v2267
        %3825 = vmatpush.bf16.msra.mxu0 %v2265
        %3826 = vmatpush.bf16.msra.mxu0 %v2263
        %3827 = vmatpush.bf16.msra.mxu0 %v2261
        %3828 = vmatmul.bf16.gmra.mxu0 %v1116
        %v3829 = vpop.f32.mrf.mxu0
        %v3830 = vadd.f32 %v3781, %v3829
        %v3831 = vpop.f32.mrf.mxu0
        %v3832 = vadd.f32 %v3783, %v3831
        %3833 = vmatmul.bf16.gmra.mxu0 %v1132
        %v3834 = vpop.f32.mrf.mxu0
        %v3835 = vadd.f32 %v3786, %v3834
        %v3836 = vpop.f32.mrf.mxu0
        %v3837 = vadd.f32 %v3788, %v3836
        %3838 = vmatmul.bf16.gmra.mxu0 %v1148
        %v3839 = vpop.f32.mrf.mxu0
        %v3840 = vadd.f32 %v3791, %v3839
        %v3841 = vpop.f32.mrf.mxu0
        %v3842 = vadd.f32 %v3793, %v3841
        %3843 = vmatmul.bf16.gmra.mxu0 %v1164
        %v3844 = vpop.f32.mrf.mxu0
        %v3845 = vadd.f32 %v3796, %v3844
        %v3846 = vpop.f32.mrf.mxu0
        %v3847 = vadd.f32 %v3798, %v3846
        %3848 = vmatmul.bf16.gmra.mxu0 %v1180
        %v3849 = vpop.f32.mrf.mxu0
        %v3850 = vadd.f32 %v3801, %v3849
        %v3851 = vpop.f32.mrf.mxu0
        %v3852 = vadd.f32 %v3803, %v3851
        %3853 = vmatmul.bf16.gmra.mxu0 %v1196
        %v3854 = vpop.f32.mrf.mxu0
        %v3855 = vadd.f32 %v3806, %v3854
        %v3856 = vpop.f32.mrf.mxu0
        %v3857 = vadd.f32 %v3808, %v3856
        %3858 = vmatmul.bf16.gmra.mxu0 %v1212
        %v3859 = vpop.f32.mrf.mxu0
        %v3860 = vadd.f32 %v3811, %v3859
        %v3861 = vpop.f32.mrf.mxu0
        %v3862 = vadd.f32 %v3813, %v3861
        %3863 = vmatmul.bf16.gmra.mxu0 %v1228
        %v3864 = vpop.f32.mrf.mxu0
        %v3865 = vadd.f32 %v3816, %v3864
        %v3866 = vpop.f32.mrf.mxu0
        %v3867 = vadd.f32 %v3818, %v3866
        %3868 = vdwg.mxu0
        %3869 = vmatpush.bf16.msra.mxu0 %v2291
        %3870 = vmatpush.bf16.msra.mxu0 %v2289
        %3871 = vmatpush.bf16.msra.mxu0 %v2287
        %3872 = vmatpush.bf16.msra.mxu0 %v2285
        %3873 = vmatpush.bf16.msra.mxu0 %v2283
        %3874 = vmatpush.bf16.msra.mxu0 %v2281
        %3875 = vmatpush.bf16.msra.mxu0 %v2279
        %3876 = vmatpush.bf16.msra.mxu0 %v2277
        %3877 = vmatmul.bf16.gmra.mxu0 %v1117
        %v3878 = vpop.f32.mrf.mxu0
        %v3879 = vadd.f32 %v3830, %v3878
        %v3880 = vpop.f32.mrf.mxu0
        %v3881 = vadd.f32 %v3832, %v3880
        %3882 = vmatmul.bf16.gmra.mxu0 %v1133
        %v3883 = vpop.f32.mrf.mxu0
        %v3884 = vadd.f32 %v3835, %v3883
        %v3885 = vpop.f32.mrf.mxu0
        %v3886 = vadd.f32 %v3837, %v3885
        %3887 = vmatmul.bf16.gmra.mxu0 %v1149
        %v3888 = vpop.f32.mrf.mxu0
        %v3889 = vadd.f32 %v3840, %v3888
        %v3890 = vpop.f32.mrf.mxu0
        %v3891 = vadd.f32 %v3842, %v3890
        %3892 = vmatmul.bf16.gmra.mxu0 %v1165
        %v3893 = vpop.f32.mrf.mxu0
        %v3894 = vadd.f32 %v3845, %v3893
        %v3895 = vpop.f32.mrf.mxu0
        %v3896 = vadd.f32 %v3847, %v3895
        %3897 = vmatmul.bf16.gmra.mxu0 %v1181
        %v3898 = vpop.f32.mrf.mxu0
        %v3899 = vadd.f32 %v3850, %v3898
        %v3900 = vpop.f32.mrf.mxu0
        %v3901 = vadd.f32 %v3852, %v3900
        %3902 = vmatmul.bf16.gmra.mxu0 %v1197
        %v3903 = vpop.f32.mrf.mxu0
        %v3904 = vadd.f32 %v3855, %v3903
        %v3905 = vpop.f32.mrf.mxu0
        %v3906 = vadd.f32 %v3857, %v3905
        %3907 = vmatmul.bf16.gmra.mxu0 %v1213
        %v3908 = vpop.f32.mrf.mxu0
        %v3909 = vadd.f32 %v3860, %v3908
        %v3910 = vpop.f32.mrf.mxu0
        %v3911 = vadd.f32 %v3862, %v3910
        %3912 = vmatmul.bf16.gmra.mxu0 %v1229
        %v3913 = vpop.f32.mrf.mxu0
        %v3914 = vadd.f32 %v3865, %v3913
        %v3915 = vpop.f32.mrf.mxu0
        %v3916 = vadd.f32 %v3867, %v3915
        %3917 = vdwg.mxu0
        %3918 = vmatpush.bf16.msra.mxu0 %v2307
        %3919 = vmatpush.bf16.msra.mxu0 %v2305
        %3920 = vmatpush.bf16.msra.mxu0 %v2303
        %3921 = vmatpush.bf16.msra.mxu0 %v2301
        %3922 = vmatpush.bf16.msra.mxu0 %v2299
        %3923 = vmatpush.bf16.msra.mxu0 %v2297
        %3924 = vmatpush.bf16.msra.mxu0 %v2295
        %3925 = vmatpush.bf16.msra.mxu0 %v2293
        %3926 = vmatmul.bf16.gmra.mxu0 %v1118
        %v3927 = vpop.f32.mrf.mxu0
        %v3928 = vadd.f32 %v3879, %v3927
        %v3929 = vpop.f32.mrf.mxu0
        %v3930 = vadd.f32 %v3881, %v3929
        %3931 = vmatmul.bf16.gmra.mxu0 %v1134
        %v3932 = vpop.f32.mrf.mxu0
        %v3933 = vadd.f32 %v3884, %v3932
        %v3934 = vpop.f32.mrf.mxu0
        %v3935 = vadd.f32 %v3886, %v3934
        %3936 = vmatmul.bf16.gmra.mxu0 %v1150
        %v3937 = vpop.f32.mrf.mxu0
        %v3938 = vadd.f32 %v3889, %v3937
        %v3939 = vpop.f32.mrf.mxu0
        %v3940 = vadd.f32 %v3891, %v3939
        %3941 = vmatmul.bf16.gmra.mxu0 %v1166
        %v3942 = vpop.f32.mrf.mxu0
        %v3943 = vadd.f32 %v3894, %v3942
        %v3944 = vpop.f32.mrf.mxu0
        %v3945 = vadd.f32 %v3896, %v3944
        %3946 = vmatmul.bf16.gmra.mxu0 %v1182
        %v3947 = vpop.f32.mrf.mxu0
        %v3948 = vadd.f32 %v3899, %v3947
        %v3949 = vpop.f32.mrf.mxu0
        %v3950 = vadd.f32 %v3901, %v3949
        %3951 = vmatmul.bf16.gmra.mxu0 %v1198
        %v3952 = vpop.f32.mrf.mxu0
        %v3953 = vadd.f32 %v3904, %v3952
        %v3954 = vpop.f32.mrf.mxu0
        %v3955 = vadd.f32 %v3906, %v3954
        %3956 = vmatmul.bf16.gmra.mxu0 %v1214
        %v3957 = vpop.f32.mrf.mxu0
        %v3958 = vadd.f32 %v3909, %v3957
        %v3959 = vpop.f32.mrf.mxu0
        %v3960 = vadd.f32 %v3911, %v3959
        %3961 = vmatmul.bf16.gmra.mxu0 %v1230
        %v3962 = vpop.f32.mrf.mxu0
        %v3963 = vadd.f32 %v3914, %v3962
        %v3964 = vpop.f32.mrf.mxu0
        %v3965 = vadd.f32 %v3916, %v3964
        %3966 = vdwg.mxu0
        %3967 = vmatpush.bf16.msra.mxu0 %v2323
        %3968 = vmatpush.bf16.msra.mxu0 %v2321
        %3969 = vmatpush.bf16.msra.mxu0 %v2319
        %3970 = vmatpush.bf16.msra.mxu0 %v2317
        %3971 = vmatpush.bf16.msra.mxu0 %v2315
        %3972 = vmatpush.bf16.msra.mxu0 %v2313
        %3973 = vmatpush.bf16.msra.mxu0 %v2311
        %3974 = vmatpush.bf16.msra.mxu0 %v2309
        %3975 = vmatmul.bf16.gmra.mxu0 %v1119
        %v3976 = vpop.f32.mrf.mxu0
        %v3977 = vadd.f32 %v3928, %v3976
        %v3978 = vpop.f32.mrf.mxu0
        %v3979 = vadd.f32 %v3930, %v3978
        %3980 = vmatmul.bf16.gmra.mxu0 %v1135
        %v3981 = vpop.f32.mrf.mxu0
        %v3982 = vadd.f32 %v3933, %v3981
        %v3983 = vpop.f32.mrf.mxu0
        %v3984 = vadd.f32 %v3935, %v3983
        %3985 = vmatmul.bf16.gmra.mxu0 %v1151
        %v3986 = vpop.f32.mrf.mxu0
        %v3987 = vadd.f32 %v3938, %v3986
        %v3988 = vpop.f32.mrf.mxu0
        %v3989 = vadd.f32 %v3940, %v3988
        %3990 = vmatmul.bf16.gmra.mxu0 %v1167
        %v3991 = vpop.f32.mrf.mxu0
        %v3992 = vadd.f32 %v3943, %v3991
        %v3993 = vpop.f32.mrf.mxu0
        %v3994 = vadd.f32 %v3945, %v3993
        %3995 = vmatmul.bf16.gmra.mxu0 %v1183
        %v3996 = vpop.f32.mrf.mxu0
        %v3997 = vadd.f32 %v3948, %v3996
        %v3998 = vpop.f32.mrf.mxu0
        %v3999 = vadd.f32 %v3950, %v3998
        %4000 = vmatmul.bf16.gmra.mxu0 %v1199
        %v4001 = vpop.f32.mrf.mxu0
        %v4002 = vadd.f32 %v3953, %v4001
        %v4003 = vpop.f32.mrf.mxu0
        %v4004 = vadd.f32 %v3955, %v4003
        %4005 = vmatmul.bf16.gmra.mxu0 %v1215
        %v4006 = vpop.f32.mrf.mxu0
        %v4007 = vadd.f32 %v3958, %v4006
        %v4008 = vpop.f32.mrf.mxu0
        %v4009 = vadd.f32 %v3960, %v4008
        %4010 = vmatmul.bf16.gmra.mxu0 %v1231
        %v4011 = vpop.f32.mrf.mxu0
        %v4012 = vadd.f32 %v3963, %v4011
        %v4013 = vpop.f32.mrf.mxu0
        %v4014 = vadd.f32 %v3965, %v4013
        %4015 = vdwg.mxu0
        %4016 = vmatpush.bf16.msra.mxu0 %v2339
        %4017 = vmatpush.bf16.msra.mxu0 %v2337
        %4018 = vmatpush.bf16.msra.mxu0 %v2335
        %4019 = vmatpush.bf16.msra.mxu0 %v2333
        %4020 = vmatpush.bf16.msra.mxu0 %v2331
        %4021 = vmatpush.bf16.msra.mxu0 %v2329
        %4022 = vmatpush.bf16.msra.mxu0 %v2327
        %4023 = vmatpush.bf16.msra.mxu0 %v2325
        %4024 = vmatmul.bf16.gmra.mxu0 %v1120
        %v4025 = vpop.f32.mrf.mxu0
        %v4026 = vadd.f32 %v3977, %v4025
        %v4027 = vpop.f32.mrf.mxu0
        %v4028 = vadd.f32 %v3979, %v4027
        %4029 = vmatmul.bf16.gmra.mxu0 %v1136
        %v4030 = vpop.f32.mrf.mxu0
        %v4031 = vadd.f32 %v3982, %v4030
        %v4032 = vpop.f32.mrf.mxu0
        %v4033 = vadd.f32 %v3984, %v4032
        %4034 = vmatmul.bf16.gmra.mxu0 %v1152
        %v4035 = vpop.f32.mrf.mxu0
        %v4036 = vadd.f32 %v3987, %v4035
        %v4037 = vpop.f32.mrf.mxu0
        %v4038 = vadd.f32 %v3989, %v4037
        %4039 = vmatmul.bf16.gmra.mxu0 %v1168
        %v4040 = vpop.f32.mrf.mxu0
        %v4041 = vadd.f32 %v3992, %v4040
        %v4042 = vpop.f32.mrf.mxu0
        %v4043 = vadd.f32 %v3994, %v4042
        %4044 = vmatmul.bf16.gmra.mxu0 %v1184
        %v4045 = vpop.f32.mrf.mxu0
        %v4046 = vadd.f32 %v3997, %v4045
        %v4047 = vpop.f32.mrf.mxu0
        %v4048 = vadd.f32 %v3999, %v4047
        %4049 = vmatmul.bf16.gmra.mxu0 %v1200
        %v4050 = vpop.f32.mrf.mxu0
        %v4051 = vadd.f32 %v4002, %v4050
        %v4052 = vpop.f32.mrf.mxu0
        %v4053 = vadd.f32 %v4004, %v4052
        %4054 = vmatmul.bf16.gmra.mxu0 %v1216
        %v4055 = vpop.f32.mrf.mxu0
        %v4056 = vadd.f32 %v4007, %v4055
        %v4057 = vpop.f32.mrf.mxu0
        %v4058 = vadd.f32 %v4009, %v4057
        %4059 = vmatmul.bf16.gmra.mxu0 %v1232
        %v4060 = vpop.f32.mrf.mxu0
        %v4061 = vadd.f32 %v4012, %v4060
        %v4062 = vpop.f32.mrf.mxu0
        %v4063 = vadd.f32 %v4014, %v4062
        %4064 = vdwg.mxu0
        %4065 = vmatpush.bf16.msra.mxu0 %v2355
        %4066 = vmatpush.bf16.msra.mxu0 %v2353
        %4067 = vmatpush.bf16.msra.mxu0 %v2351
        %4068 = vmatpush.bf16.msra.mxu0 %v2349
        %4069 = vmatpush.bf16.msra.mxu0 %v2347
        %4070 = vmatpush.bf16.msra.mxu0 %v2345
        %4071 = vmatpush.bf16.msra.mxu0 %v2343
        %4072 = vmatpush.bf16.msra.mxu0 %v2341
        %4073 = vmatmul.bf16.gmra.mxu0 %v1121
        %v4074 = vpop.f32.mrf.mxu0
        %v4075 = vadd.f32 %v4026, %v4074
        %v4076 = vpop.f32.mrf.mxu0
        %v4077 = vadd.f32 %v4028, %v4076
        %4078 = vmatmul.bf16.gmra.mxu0 %v1137
        %v4079 = vpop.f32.mrf.mxu0
        %v4080 = vadd.f32 %v4031, %v4079
        %v4081 = vpop.f32.mrf.mxu0
        %v4082 = vadd.f32 %v4033, %v4081
        %4083 = vmatmul.bf16.gmra.mxu0 %v1153
        %v4084 = vpop.f32.mrf.mxu0
        %v4085 = vadd.f32 %v4036, %v4084
        %v4086 = vpop.f32.mrf.mxu0
        %v4087 = vadd.f32 %v4038, %v4086
        %4088 = vmatmul.bf16.gmra.mxu0 %v1169
        %v4089 = vpop.f32.mrf.mxu0
        %v4090 = vadd.f32 %v4041, %v4089
        %v4091 = vpop.f32.mrf.mxu0
        %v4092 = vadd.f32 %v4043, %v4091
        %4093 = vmatmul.bf16.gmra.mxu0 %v1185
        %v4094 = vpop.f32.mrf.mxu0
        %v4095 = vadd.f32 %v4046, %v4094
        %v4096 = vpop.f32.mrf.mxu0
        %v4097 = vadd.f32 %v4048, %v4096
        %4098 = vmatmul.bf16.gmra.mxu0 %v1201
        %v4099 = vpop.f32.mrf.mxu0
        %v4100 = vadd.f32 %v4051, %v4099
        %v4101 = vpop.f32.mrf.mxu0
        %v4102 = vadd.f32 %v4053, %v4101
        %4103 = vmatmul.bf16.gmra.mxu0 %v1217
        %v4104 = vpop.f32.mrf.mxu0
        %v4105 = vadd.f32 %v4056, %v4104
        %v4106 = vpop.f32.mrf.mxu0
        %v4107 = vadd.f32 %v4058, %v4106
        %4108 = vmatmul.bf16.gmra.mxu0 %v1233
        %v4109 = vpop.f32.mrf.mxu0
        %v4110 = vadd.f32 %v4061, %v4109
        %v4111 = vpop.f32.mrf.mxu0
        %v4112 = vadd.f32 %v4063, %v4111
        %4113 = vdwg.mxu0
        %4114 = vmatpush.bf16.msra.mxu0 %v2371
        %4115 = vmatpush.bf16.msra.mxu0 %v2369
        %4116 = vmatpush.bf16.msra.mxu0 %v2367
        %4117 = vmatpush.bf16.msra.mxu0 %v2365
        %4118 = vmatpush.bf16.msra.mxu0 %v2363
        %4119 = vmatpush.bf16.msra.mxu0 %v2361
        %4120 = vmatpush.bf16.msra.mxu0 %v2359
        %4121 = vmatpush.bf16.msra.mxu0 %v2357
        %4122 = vmatmul.bf16.gmra.mxu0 %v1122
        %v4123 = vpop.f32.mrf.mxu0
        %v4124 = vadd.f32 %v4075, %v4123
        %v4125 = vpop.f32.mrf.mxu0
        %v4126 = vadd.f32 %v4077, %v4125
        %4127 = vmatmul.bf16.gmra.mxu0 %v1138
        %v4128 = vpop.f32.mrf.mxu0
        %v4129 = vadd.f32 %v4080, %v4128
        %v4130 = vpop.f32.mrf.mxu0
        %v4131 = vadd.f32 %v4082, %v4130
        %4132 = vmatmul.bf16.gmra.mxu0 %v1154
        %v4133 = vpop.f32.mrf.mxu0
        %v4134 = vadd.f32 %v4085, %v4133
        %v4135 = vpop.f32.mrf.mxu0
        %v4136 = vadd.f32 %v4087, %v4135
        %4137 = vmatmul.bf16.gmra.mxu0 %v1170
        %v4138 = vpop.f32.mrf.mxu0
        %v4139 = vadd.f32 %v4090, %v4138
        %v4140 = vpop.f32.mrf.mxu0
        %v4141 = vadd.f32 %v4092, %v4140
        %4142 = vmatmul.bf16.gmra.mxu0 %v1186
        %v4143 = vpop.f32.mrf.mxu0
        %v4144 = vadd.f32 %v4095, %v4143
        %v4145 = vpop.f32.mrf.mxu0
        %v4146 = vadd.f32 %v4097, %v4145
        %4147 = vmatmul.bf16.gmra.mxu0 %v1202
        %v4148 = vpop.f32.mrf.mxu0
        %v4149 = vadd.f32 %v4100, %v4148
        %v4150 = vpop.f32.mrf.mxu0
        %v4151 = vadd.f32 %v4102, %v4150
        %4152 = vmatmul.bf16.gmra.mxu0 %v1218
        %v4153 = vpop.f32.mrf.mxu0
        %v4154 = vadd.f32 %v4105, %v4153
        %v4155 = vpop.f32.mrf.mxu0
        %v4156 = vadd.f32 %v4107, %v4155
        %4157 = vmatmul.bf16.gmra.mxu0 %v1234
        %v4158 = vpop.f32.mrf.mxu0
        %v4159 = vadd.f32 %v4110, %v4158
        %v4160 = vpop.f32.mrf.mxu0
        %v4161 = vadd.f32 %v4112, %v4160
        %4162 = vdwg.mxu0
        %4163 = vmatpush.bf16.msra.mxu0 %v2387
        %4164 = vmatpush.bf16.msra.mxu0 %v2385
        %4165 = vmatpush.bf16.msra.mxu0 %v2383
        %4166 = vmatpush.bf16.msra.mxu0 %v2381
        %4167 = vmatpush.bf16.msra.mxu0 %v2379
        %4168 = vmatpush.bf16.msra.mxu0 %v2377
        %4169 = vmatpush.bf16.msra.mxu0 %v2375
        %4170 = vmatpush.bf16.msra.mxu0 %v2373
        %4171 = vmatmul.bf16.gmra.mxu0 %v1123
        %v4172 = vpop.f32.mrf.mxu0
        %v4173 = vadd.f32 %v4124, %v4172
        %v4174 = vpop.f32.mrf.mxu0
        %v4175 = vadd.f32 %v4126, %v4174
        %4176 = vmatmul.bf16.gmra.mxu0 %v1139
        %v4177 = vpop.f32.mrf.mxu0
        %v4178 = vadd.f32 %v4129, %v4177
        %v4179 = vpop.f32.mrf.mxu0
        %v4180 = vadd.f32 %v4131, %v4179
        %4181 = vmatmul.bf16.gmra.mxu0 %v1155
        %v4182 = vpop.f32.mrf.mxu0
        %v4183 = vadd.f32 %v4134, %v4182
        %v4184 = vpop.f32.mrf.mxu0
        %v4185 = vadd.f32 %v4136, %v4184
        %4186 = vmatmul.bf16.gmra.mxu0 %v1171
        %v4187 = vpop.f32.mrf.mxu0
        %v4188 = vadd.f32 %v4139, %v4187
        %v4189 = vpop.f32.mrf.mxu0
        %v4190 = vadd.f32 %v4141, %v4189
        %4191 = vmatmul.bf16.gmra.mxu0 %v1187
        %v4192 = vpop.f32.mrf.mxu0
        %v4193 = vadd.f32 %v4144, %v4192
        %v4194 = vpop.f32.mrf.mxu0
        %v4195 = vadd.f32 %v4146, %v4194
        %4196 = vmatmul.bf16.gmra.mxu0 %v1203
        %v4197 = vpop.f32.mrf.mxu0
        %v4198 = vadd.f32 %v4149, %v4197
        %v4199 = vpop.f32.mrf.mxu0
        %v4200 = vadd.f32 %v4151, %v4199
        %4201 = vmatmul.bf16.gmra.mxu0 %v1219
        %v4202 = vpop.f32.mrf.mxu0
        %v4203 = vadd.f32 %v4154, %v4202
        %v4204 = vpop.f32.mrf.mxu0
        %v4205 = vadd.f32 %v4156, %v4204
        %4206 = vmatmul.bf16.gmra.mxu0 %v1235
        %v4207 = vpop.f32.mrf.mxu0
        %v4208 = vadd.f32 %v4159, %v4207
        %v4209 = vpop.f32.mrf.mxu0
        %v4210 = vadd.f32 %v4161, %v4209
        %4211 = vdwg.mxu0
        %v4212 = vld [vmem:[%s326] sm:$0x3]
        %v4214 = vperm.slane %v4212, 0
        %v4215 = vperm.slane %v4212, 1
        %v4218 = vmul.f32 %v3389, %v4214
        %v4219 = vmul.f32 %v4173, %v4215
        %v4220 = vmul.f32 %v3391, %v4214
        %v4221 = vmul.f32 %v4175, %v4215
        %v4222 = vmul.f32 %v3394, %v4214
        %v4223 = vmul.f32 %v4178, %v4215
        %v4224 = vmul.f32 %v3396, %v4214
        %v4225 = vmul.f32 %v4180, %v4215
        %v4226 = vmul.f32 %v3399, %v4214
        %v4227 = vmul.f32 %v4183, %v4215
        %v4228 = vmul.f32 %v3401, %v4214
        %v4229 = vmul.f32 %v4185, %v4215
        %v4230 = vmul.f32 %v3404, %v4214
        %v4231 = vmul.f32 %v4188, %v4215
        %v4232 = vmul.f32 %v3406, %v4214
        %v4233 = vmul.f32 %v4190, %v4215
        %v4234 = vmul.f32 %v3409, %v4214
        %v4235 = vmul.f32 %v4193, %v4215
        %v4236 = vmul.f32 %v3411, %v4214
        %v4237 = vmul.f32 %v4195, %v4215
        %v4238 = vmul.f32 %v3414, %v4214
        %v4239 = vmul.f32 %v4198, %v4215
        %v4240 = vmul.f32 %v3416, %v4214
        %v4241 = vmul.f32 %v4200, %v4215
        %v4242 = vmul.f32 %v3419, %v4214
        %v4243 = vmul.f32 %v4203, %v4215
        %v4244 = vmul.f32 %v3421, %v4214
        %v4245 = vmul.f32 %v4205, %v4215
        %v4246 = vmul.f32 %v3424, %v4214
        %v4247 = vmul.f32 %v4208, %v4215
        %v4248 = vmul.f32 %v3426, %v4214
        %v4249 = vmul.f32 %v4210, %v4215
        %v4250 = vld [vmem:[%s331] sm:$0x3]
        %v4252 = vperm.slane %v4250, 0
        %v4253 = vperm.slane %v4250, 1
        %v4256 = vadd.f32 %v4218, %v4252
        %v4257 = vadd.f32 %v4219, %v4253
        %v4258 = vadd.f32 %v4220, %v4252
        %v4259 = vadd.f32 %v4221, %v4253
        %v4260 = vadd.f32 %v4222, %v4252
        %v4261 = vadd.f32 %v4223, %v4253
        %v4262 = vadd.f32 %v4224, %v4252
        %v4263 = vadd.f32 %v4225, %v4253
        %v4264 = vadd.f32 %v4226, %v4252
        %v4265 = vadd.f32 %v4227, %v4253
        %v4266 = vadd.f32 %v4228, %v4252
        %v4267 = vadd.f32 %v4229, %v4253
        %v4268 = vadd.f32 %v4230, %v4252
        %v4269 = vadd.f32 %v4231, %v4253
        %v4270 = vadd.f32 %v4232, %v4252
        %v4271 = vadd.f32 %v4233, %v4253
        %v4272 = vadd.f32 %v4234, %v4252
        %v4273 = vadd.f32 %v4235, %v4253
        %v4274 = vadd.f32 %v4236, %v4252
        %v4275 = vadd.f32 %v4237, %v4253
        %v4276 = vadd.f32 %v4238, %v4252
        %v4277 = vadd.f32 %v4239, %v4253
        %v4278 = vadd.f32 %v4240, %v4252
        %v4279 = vadd.f32 %v4241, %v4253
        %v4280 = vadd.f32 %v4242, %v4252
        %v4281 = vadd.f32 %v4243, %v4253
        %v4282 = vadd.f32 %v4244, %v4252
        %v4283 = vadd.f32 %v4245, %v4253
        %v4284 = vadd.f32 %v4246, %v4252
        %v4285 = vadd.f32 %v4247, %v4253
        %v4286 = vadd.f32 %v4248, %v4252
        %v4287 = vadd.f32 %v4249, %v4253
        %v4288 = vld [vmem:[%s336] sm:$0x3]
        %vm4289 = vcmp.gt.f32.partialorder %v4288, 0.5
        %v4290 = vmax.f32 %v4256, 0.0
        %v4291 = vmax.f32 %v4257, 0.0
        %v4292 = vmax.f32 %v4258, 0.0
        %v4293 = vmax.f32 %v4259, 0.0
        %v4294 = vmax.f32 %v4260, 0.0
        %v4295 = vmax.f32 %v4261, 0.0
        %v4296 = vmax.f32 %v4262, 0.0
        %v4297 = vmax.f32 %v4263, 0.0
        %v4298 = vmax.f32 %v4264, 0.0
        %v4299 = vmax.f32 %v4265, 0.0
        %v4300 = vmax.f32 %v4266, 0.0
        %v4301 = vmax.f32 %v4267, 0.0
        %v4302 = vmax.f32 %v4268, 0.0
        %v4303 = vmax.f32 %v4269, 0.0
        %v4304 = vmax.f32 %v4270, 0.0
        %v4305 = vmax.f32 %v4271, 0.0
        %v4306 = vmax.f32 %v4272, 0.0
        %v4307 = vmax.f32 %v4273, 0.0
        %v4308 = vmax.f32 %v4274, 0.0
        %v4309 = vmax.f32 %v4275, 0.0
        %v4310 = vmax.f32 %v4276, 0.0
        %v4311 = vmax.f32 %v4277, 0.0
        %v4312 = vmax.f32 %v4278, 0.0
        %v4313 = vmax.f32 %v4279, 0.0
        %v4314 = vmax.f32 %v4280, 0.0
        %v4315 = vmax.f32 %v4281, 0.0
        %v4316 = vmax.f32 %v4282, 0.0
        %v4317 = vmax.f32 %v4283, 0.0
        %v4318 = vmax.f32 %v4284, 0.0
        %v4319 = vmax.f32 %v4285, 0.0
        %v4320 = vmax.f32 %v4286, 0.0
        %v4321 = vmax.f32 %v4287, 0.0
        %v4322 = vsel %vm4289, 1, 0
        %v4323 = vperm.slane %v4322, 0
        %v4324 = vperm.slane %v4322, 1
        %vm4325 = vcmp.eq.s32.totalorder %v4323, 1
        %vm4326 = vcmp.eq.s32.totalorder %v4324, 1
        %v4327 = vsel %vm4325, %v4290, %v4256
        %v4328 = vsel %vm4326, %v4291, %v4257
        %v4329 = vsel %vm4325, %v4292, %v4258
        %v4330 = vsel %vm4326, %v4293, %v4259
        %v4331 = vsel %vm4325, %v4294, %v4260
        %v4332 = vsel %vm4326, %v4295, %v4261
        %v4333 = vsel %vm4325, %v4296, %v4262
        %v4334 = vsel %vm4326, %v4297, %v4263
        %v4335 = vsel %vm4325, %v4298, %v4264
        %v4336 = vsel %vm4326, %v4299, %v4265
        %v4337 = vsel %vm4325, %v4300, %v4266
        %v4338 = vsel %vm4326, %v4301, %v4267
        %v4339 = vsel %vm4325, %v4302, %v4268
        %v4340 = vsel %vm4326, %v4303, %v4269
        %v4341 = vsel %vm4325, %v4304, %v4270
        %v4342 = vsel %vm4326, %v4305, %v4271
        %v4343 = vsel %vm4325, %v4306, %v4272
        %v4344 = vsel %vm4326, %v4307, %v4273
        %v4345 = vsel %vm4325, %v4308, %v4274
        %v4346 = vsel %vm4326, %v4309, %v4275
        %v4347 = vsel %vm4325, %v4310, %v4276
        %v4348 = vsel %vm4326, %v4311, %v4277
        %v4349 = vsel %vm4325, %v4312, %v4278
        %v4350 = vsel %vm4326, %v4313, %v4279
        %v4351 = vsel %vm4325, %v4314, %v4280
        %v4352 = vsel %vm4326, %v4315, %v4281
        %v4353 = vsel %vm4325, %v4316, %v4282
        %v4354 = vsel %vm4326, %v4317, %v4283
        %v4355 = vsel %vm4325, %v4318, %v4284
        %v4356 = vsel %vm4326, %v4319, %v4285
        %v4357 = vsel %vm4325, %v4320, %v4286
        %v4358 = vsel %vm4326, %v4321, %v4287
        %v4359 = vpack.c.bf16 %v4328, %v4327
        %v4360 = vpack.c.bf16 %v4330, %v4329
        %v4361 = vpack.c.bf16 %v4332, %v4331
        %v4362 = vpack.c.bf16 %v4334, %v4333
        %v4363 = vpack.c.bf16 %v4336, %v4335
        %v4364 = vpack.c.bf16 %v4338, %v4337
        %v4365 = vpack.c.bf16 %v4340, %v4339
        %v4366 = vpack.c.bf16 %v4342, %v4341
        %v4367 = vpack.c.bf16 %v4344, %v4343
        %v4368 = vpack.c.bf16 %v4346, %v4345
        %v4369 = vpack.c.bf16 %v4348, %v4347
        %v4370 = vpack.c.bf16 %v4350, %v4349
        %v4371 = vpack.c.bf16 %v4352, %v4351
        %v4372 = vpack.c.bf16 %v4354, %v4353
        %v4373 = vpack.c.bf16 %v4356, %v4355
        %v4374 = vpack.c.bf16 %v4358, %v4357
        %4375 = vst [vmem:[%s314] sm:$0xff] %v4359
        %4376 = vst [vmem:[%s314 + $0x8] sm:$0xff] %v4360
        %4377 = vst [vmem:[%s314 + $0x10] sm:$0xff] %v4361
        %4378 = vst [vmem:[%s314 + $0x18] sm:$0xff] %v4362
        %4379 = vst [vmem:[%s314 + $0x20] sm:$0xff] %v4363
        %4380 = vst [vmem:[%s314 + $0x28] sm:$0xff] %v4364
        %4381 = vst [vmem:[%s314 + $0x30] sm:$0xff] %v4365
        %4382 = vst [vmem:[%s314 + $0x38] sm:$0xff] %v4366
        %4383 = vst [vmem:[%s314 + $0x40] sm:$0xff] %v4367
        %4384 = vst [vmem:[%s314 + $0x48] sm:$0xff] %v4368
        %4385 = vst [vmem:[%s314 + $0x50] sm:$0xff] %v4369
        %4386 = vst [vmem:[%s314 + $0x58] sm:$0xff] %v4370
        %4387 = vst [vmem:[%s314 + $0x60] sm:$0xff] %v4371
        %4388 = vst [vmem:[%s314 + $0x68] sm:$0xff] %v4372
        %4389 = vst [vmem:[%s314 + $0x70] sm:$0xff] %v4373
        %4390 = vst [vmem:[%s314 + $0x78] sm:$0xff] %v4374
        %s4391 = sand.u32 %s171, 1
        %s4392 = sand.u32 %s171, 1
        %s4393 = smul.addr %s4392, 128
        %s4394 = scalar_lea.vmem [#allocation4], %s4393
        // Predicated region
        $region45: #{aspp_bottleneck_forward.2} parent=39 // pred_check
          %p4395 = pneg %p181
        $region46: #{aspp_bottleneck_forward.2} parent=39 // pred_check_branch
          %4397 = sbr.rel (%p4395) target = $region48
        $region47: #{aspp_bottleneck_forward.2} parent=39 // pred_region
          %s4398 = smul.u32 16, %s23
          %s4399 = smul.u32 2, %s24
          %s4400 = smul.addr %s4398, 24
          %s4401 = sadd.s32 %s4399, %s4400
          %s4402 = smul.addr %s4401, 4
          %s4403 = scalar_lea.vmem %s5, %s4402
          // Predicated region
          $region49: #{aspp_bottleneck_forward.2} parent=47 // pred_check
            _
          $region50: #{aspp_bottleneck_forward.2} parent=47 // pred_check_branch
            %4405 = sbr.rel (0) target = $region52
          $region51: #{aspp_bottleneck_forward.2} parent=47 // pred_region
            // Predicated region
            $region53: #{aspp_bottleneck_forward.2} parent=51 // pred_check
              _
            $region54: #{aspp_bottleneck_forward.2} parent=51 // pred_check_branch
              %4407 = sbr.rel (0) target = $region56
            $region55: #{aspp_bottleneck_forward.2} parent=51 // pred_region
              // Predicated region
              $region68: #{aspp_bottleneck_forward.2} parent=55 // pred_check
                _
              $region69: #{aspp_bottleneck_forward.2} parent=55 // pred_check_branch
                %4453 = sbr.rel (0) target = $region71
              $region70: #{aspp_bottleneck_forward.2} parent=55 // pred_region
                loop: start=0, step=1, limit=1
                $region72: #{aspp_bottleneck_forward.2} parent=70 // loop_pre_header
                  _
                $region73: #{aspp_bottleneck_forward.2} parent=70 // loop_header
                  %s4455 = sphi 0, %s4459
                  %p4456 = scmp.ge.s32.totalorder %s4455, 1
                  %s4460 = sphi %s4394, %s4394
                  %s4461 = sphi %s4403, %s4403
                $region74: #{aspp_bottleneck_forward.2} parent=70 // loop_header_branch
                  %4458 = sbr.rel (%p4456) target = $region78
                $region75: #{aspp_bottleneck_forward.2} parent=70 // loop_body
                  %v4462 = vld [vmem:[%s4460] sm:$0xff]
                  %4463 = vst [vmem:[%s4461] sm:$0xff] %v4462
                  %v4464 = vld [vmem:[%s4460 + $0x8] sm:$0xff]
                  %4465 = vst [vmem:[%s4461 + $0x60] sm:$0xff] %v4464
                  %v4466 = vld [vmem:[%s4460 + $0x10] sm:$0xff]
                  %4467 = vst [vmem:[%s4461 + $0xc0] sm:$0xff] %v4466
                  %v4468 = vld [vmem:[%s4460 + $0x18] sm:$0xff]
                  %4469 = vst [vmem:[%s4461 + $0x120] sm:$0xff] %v4468
                  %v4470 = vld [vmem:[%s4460 + $0x20] sm:$0xff]
                  %4471 = vst [vmem:[%s4461 + $0x180] sm:$0xff] %v4470
                  %v4472 = vld [vmem:[%s4460 + $0x28] sm:$0xff]
                  %4473 = vst [vmem:[%s4461 + $0x1e0] sm:$0xff] %v4472
                  %v4474 = vld [vmem:[%s4460 + $0x30] sm:$0xff]
                  %4475 = vst [vmem:[%s4461 + $0x240] sm:$0xff] %v4474
                  %v4476 = vld [vmem:[%s4460 + $0x38] sm:$0xff]
                  %4477 = vst [vmem:[%s4461 + $0x2a0] sm:$0xff] %v4476
                  %v4478 = vld [vmem:[%s4460 + $0x40] sm:$0xff]
                  %4479 = vst [vmem:[%s4461 + $0x300] sm:$0xff] %v4478
                  %v4480 = vld [vmem:[%s4460 + $0x48] sm:$0xff]
                  %4481 = vst [vmem:[%s4461 + $0x360] sm:$0xff] %v4480
                  %v4482 = vld [vmem:[%s4460 + $0x50] sm:$0xff]
                  %4483 = vst [vmem:[%s4461 + $0x3c0] sm:$0xff] %v4482
                  %v4484 = vld [vmem:[%s4460 + $0x58] sm:$0xff]
                  %4485 = vst [vmem:[%s4461 + $0x420] sm:$0xff] %v4484
                  %v4486 = vld [vmem:[%s4460 + $0x60] sm:$0xff]
                  %4487 = vst [vmem:[%s4461 + $0x480] sm:$0xff] %v4486
                  %v4488 = vld [vmem:[%s4460 + $0x68] sm:$0xff]
                  %4489 = vst [vmem:[%s4461 + $0x4e0] sm:$0xff] %v4488
                  %v4490 = vld [vmem:[%s4460 + $0x70] sm:$0xff]
                  %4491 = vst [vmem:[%s4461 + $0x540] sm:$0xff] %v4490
                  %v4492 = vld [vmem:[%s4460 + $0x78] sm:$0xff]
                  %4493 = vst [vmem:[%s4461 + $0x5a0] sm:$0xff] %v4492
                $region76: #{aspp_bottleneck_forward.2} parent=70 // loop_footer
                  %s4459 = sadd.s32 1, %s4455
                $region77: #{aspp_bottleneck_forward.2} parent=70 // loop_footer_branch
                  %4454 = sbr.rel target = $region73
                $region78: #{aspp_bottleneck_forward.2} parent=70 // loop_exit
                  _
              $region71: #{aspp_bottleneck_forward.2} parent=55 // pred_fallthru
                _
              // Predicated region
              $region79: #{aspp_bottleneck_forward.2} parent=55 // pred_check
                _
              $region80: #{aspp_bottleneck_forward.2} parent=55 // pred_check_branch
                %4495 = sbr.rel target = $region82
              $region81: #{aspp_bottleneck_forward.2} parent=55 // pred_region
                _
              $region82: #{aspp_bottleneck_forward.2} parent=55 // pred_fallthru
                _
            $region56: #{aspp_bottleneck_forward.2} parent=51 // pred_fallthru
              _
            // Predicated region
            $region57: #{aspp_bottleneck_forward.2} parent=51 // pred_check
              _
            $region58: #{aspp_bottleneck_forward.2} parent=51 // pred_check_branch
              %4409 = sbr.rel target = $region60
            $region59: #{aspp_bottleneck_forward.2} parent=51 // pred_region
              %s4411 = ssub.s32 256, 1
              loop: start=0, step=1, limit=1
              $region61: #{aspp_bottleneck_forward.2} parent=59 // loop_pre_header
                _
              $region62: #{aspp_bottleneck_forward.2} parent=59 // loop_header
                %s4413 = sphi 0, %s4417
                %p4414 = scmp.ge.s32.totalorder %s4413, 1
                %s4418 = sphi %s4394, %s4394
                %s4419 = sphi %s4403, %s4403
              $region63: #{aspp_bottleneck_forward.2} parent=59 // loop_header_branch
                %4416 = sbr.rel (%p4414) target = $region67
              $region64: #{aspp_bottleneck_forward.2} parent=59 // loop_body
                %v4420 = vld [vmem:[%s4418] sm:%s4411]
                %4421 = vst [vmem:[%s4419] sm:%s4411] %v4420
                %v4422 = vld [vmem:[%s4418 + $0x8] sm:%s4411]
                %4423 = vst [vmem:[%s4419 + $0x60] sm:%s4411] %v4422
                %v4424 = vld [vmem:[%s4418 + $0x10] sm:%s4411]
                %4425 = vst [vmem:[%s4419 + $0xc0] sm:%s4411] %v4424
                %v4426 = vld [vmem:[%s4418 + $0x18] sm:%s4411]
                %4427 = vst [vmem:[%s4419 + $0x120] sm:%s4411] %v4426
                %v4428 = vld [vmem:[%s4418 + $0x20] sm:%s4411]
                %4429 = vst [vmem:[%s4419 + $0x180] sm:%s4411] %v4428
                %v4430 = vld [vmem:[%s4418 + $0x28] sm:%s4411]
                %4431 = vst [vmem:[%s4419 + $0x1e0] sm:%s4411] %v4430
                %v4432 = vld [vmem:[%s4418 + $0x30] sm:%s4411]
                %4433 = vst [vmem:[%s4419 + $0x240] sm:%s4411] %v4432
                %v4434 = vld [vmem:[%s4418 + $0x38] sm:%s4411]
                %4435 = vst [vmem:[%s4419 + $0x2a0] sm:%s4411] %v4434
                %v4436 = vld [vmem:[%s4418 + $0x40] sm:%s4411]
                %4437 = vst [vmem:[%s4419 + $0x300] sm:%s4411] %v4436
                %v4438 = vld [vmem:[%s4418 + $0x48] sm:%s4411]
                %4439 = vst [vmem:[%s4419 + $0x360] sm:%s4411] %v4438
                %v4440 = vld [vmem:[%s4418 + $0x50] sm:%s4411]
                %4441 = vst [vmem:[%s4419 + $0x3c0] sm:%s4411] %v4440
                %v4442 = vld [vmem:[%s4418 + $0x58] sm:%s4411]
                %4443 = vst [vmem:[%s4419 + $0x420] sm:%s4411] %v4442
                %v4444 = vld [vmem:[%s4418 + $0x60] sm:%s4411]
                %4445 = vst [vmem:[%s4419 + $0x480] sm:%s4411] %v4444
                %v4446 = vld [vmem:[%s4418 + $0x68] sm:%s4411]
                %4447 = vst [vmem:[%s4419 + $0x4e0] sm:%s4411] %v4446
                %v4448 = vld [vmem:[%s4418 + $0x70] sm:%s4411]
                %4449 = vst [vmem:[%s4419 + $0x540] sm:%s4411] %v4448
                %v4450 = vld [vmem:[%s4418 + $0x78] sm:%s4411]
                %4451 = vst [vmem:[%s4419 + $0x5a0] sm:%s4411] %v4450
              $region65: #{aspp_bottleneck_forward.2} parent=59 // loop_footer
                %s4417 = sadd.s32 1, %s4413
              $region66: #{aspp_bottleneck_forward.2} parent=59 // loop_footer_branch
                %4412 = sbr.rel target = $region62
              $region67: #{aspp_bottleneck_forward.2} parent=59 // loop_exit
                _
            $region60: #{aspp_bottleneck_forward.2} parent=51 // pred_fallthru
              _
          $region52: #{aspp_bottleneck_forward.2} parent=47 // pred_fallthru
            _
          %4496 = vnop
        $region48: #{aspp_bottleneck_forward.2} parent=39 // pred_fallthru
          _
      $region40: #{aspp_bottleneck_forward.2} parent=5 // pred_fallthru
        _
      %p4497 = scmp.le.s32.totalorder 2, %s14
      // Predicated region
      $region83: #{aspp_bottleneck_forward.2} parent=5 // pred_check
        %p4498 = pneg %p4497
      $region84: #{aspp_bottleneck_forward.2} parent=5 // pred_check_branch
        %4500 = sbr.rel (%p4498) target = $region86
      $region85: #{aspp_bottleneck_forward.2} parent=5 // pred_region
        %s4501 = ssub.s32 %s14, 2
        // Predicated region
        $region87: #{aspp_bottleneck_forward.2} parent=85 // pred_check
          %p4502 = pneg %p187
        $region88: #{aspp_bottleneck_forward.2} parent=85 // pred_check_branch
          %4504 = sbr.rel (%p4502) target = $region90
        $region89: #{aspp_bottleneck_forward.2} parent=85 // pred_region
          %s4505 = sand.u32 %s172, 1
          %s4506 = sand.u32 %s172, 1
          %s4507 = smul.addr %s4506, 128
          %s4508 = scalar_lea.vmem [#allocation4], %s4507
        $region90: #{aspp_bottleneck_forward.2} parent=85 // pred_fallthru
          _
      $region86: #{aspp_bottleneck_forward.2} parent=5 // pred_fallthru
        _
    $region6: #{aspp_bottleneck_forward.2} parent=1 // loop_footer
      %s18 = sadd.s32 1, %s14
    $region7: #{aspp_bottleneck_forward.2} parent=1 // loop_footer_branch
      %13 = sbr.rel target = $region3
    $region8: #{aspp_bottleneck_forward.2} parent=1 // loop_exit
      _
    %4509 = vsyncpa [#allocation3], 1
    %s4510 = scalar_lea.sflag [#allocation3], 1
    %4511 = vsyncpa %s4510, 1

</llo_original>
